<compile_context>
chip_gen: v6e
topology: v6e:2x2x1
jax: 0.10.0
libtpu: 0.0.40
codegen_flags: <defaults>
</compile_context>

<pallas_src>
import math
from functools import partial

import jax
import jax.numpy as jnp
from jax.experimental import pallas as pl
from jax.experimental.pallas import tpu as pltpu

F32 = jnp.float32
BF16 = jnp.bfloat16


def _vmem_limit():
    # ~3/4 of physical VMEM: ~96 MiB on v5e/v6e (128 MiB), ~48 MiB on v7x (64 MiB).
    try:
        cap = getattr(pltpu.get_tpu_info(), "vmem_capacity_bytes", None)
        if cap:
            return int(cap * 3 // 4)
    except Exception:
        pass
    return 48 * 1024 * 1024


# ----------------------------------------------------------------------------
# In-kernel helpers (traced Python)
# ----------------------------------------------------------------------------
def _ln(x, eps=1e-5):
    # TODO(synk): custom `LayerNorm()` definition not provided; standard
    # last-dim layernorm without affine parameters is assumed.
    x = x.astype(F32)
    mu = jnp.mean(x, axis=-1, keepdims=True)
    var = jnp.mean(jnp.square(x - mu), axis=-1, keepdims=True)
    return (x - mu) * jax.lax.rsqrt(var + eps)


def _mm(a, b):
    # bf16 MXU inputs, f32 accumulation (weights are pre-cast to bf16 on host).
    return jnp.dot(a.astype(BF16), b.astype(BF16), preferred_element_type=F32)


def _mha_heads(x, wqkv_ref, bqkv_ref, woh_ref, bo_ref, idx, nheads):
    """Dense multi-head self-attention over rows of x (S, A).

    Weights are pre-split per head on the host:
      wqkv: (..., 3, nheads, A, dh)   bqkv: (..., 3, nheads, 1, dh)
      woh:  (..., nheads, dh, A)      bo:   (..., 1, A)
    `idx` is a static leading-index prefix (e.g. (block,) or ()).
    The 1/sqrt(dh) softmax scale is folded into the Q weights/bias.
    No lane slicing of activations and no concat(heads): the output projection
    is an accumulated sum of per-head (S, dh) @ (dh, A) matmuls.
    """
    S, A = x.shape
    xb = x.astype(BF16)
    acc = jnp.zeros((S, A), F32)
    for h in range(nheads):                          # static unroll; nheads small
        q = jnp.dot(xb, wqkv_ref[idx + (0, h)].astype(BF16),
                    preferred_element_type=F32) + bqkv_ref[idx + (0, h)]
        k = jnp.dot(xb, wqkv_ref[idx + (1, h)].astype(BF16),
                    preferred_element_type=F32) + bqkv_ref[idx + (1, h)]
        v = jnp.dot(xb, wqkv_ref[idx + (2, h)].astype(BF16),
                    preferred_element_type=F32) + bqkv_ref[idx + (2, h)]
        # QK^T without a transpose: contract the head dim.
        s = jax.lax.dot_general(q.astype(BF16), k.astype(BF16),
                                (((1,), (1,)), ((), ())),
                                preferred_element_type=F32)              # (S, S)
        # TODO(synk): convert to a flash-style streamed softmax if E grows large.
        s = s - jnp.max(s, axis=-1, keepdims=True)
        p = jnp.exp(s)
        p = p * pl.reciprocal(jnp.sum(p, axis=-1, keepdims=True), approx=True)
        hv = jnp.dot(p.astype(BF16), v.astype(BF16),
                     preferred_element_type=F32)                          # (S, dh)
        acc = acc + jnp.dot(hv.astype(BF16), woh_ref[idx + (h,)].astype(BF16),
                            preferred_element_type=F32)                  # (S, A)
    bo = bo_ref[idx] if idx else bo_ref[...]
    return acc + bo


# ----------------------------------------------------------------------------
# Single fused kernel: the entire NoiseIdentifier core for one batch element
# ----------------------------------------------------------------------------
def _noise_identifier_kernel(
        cn_ref, cin_ref, x_ref, e_ref,
        freqs_ref, wcos_ref, wsin_ref, wxp_ref, bemb_ref,
        gi_ref, gj_ref, sc_ref,
        w1a_ref, w1b_ref, w1c_ref, b1_ref, w2_ref, b2_ref,
        wqkv_ref, bqkv_ref, woh_ref, boh_ref,
        wf1_ref, bf1_ref, wf2_ref, bf2_ref,
        wue_ref, wum_ref, bu_ref,
        dqkv_ref, dbqkv_ref, dwoh_ref, dbo_ref,
        o_ref, *, nheads, natts):
    # --- 1) Fourier embedding + Linear_emb + Linear_x, c_in*x fused (N rows) ---
    # concat([cos, sin]) @ We  and  concat([emb, x_proj]) are folded into
    # zero-padded split weights -> one lane-dense (N, 2C) result, no concats.
    phase = cn_ref[...] * freqs_ref[...]                         # (N,1)*(1,half)
    xs = cin_ref[...] * x_ref[...]                               # (N, 3)
    xh = (_mm(jnp.cos(phase), wcos_ref[...])
          + _mm(jnp.sin(phase), wsin_ref[...])
          + _mm(xs, wxp_ref[...])
          + bemb_ref[...])                                       # (N, 2C) f32

    # --- 2) gather x[:, i_node] / x[:, j_node] + Prj_preAtt (E rows) ---
    # Exact f32 one-hot matmul gathers (no HBM round-trip of (E, 2C) tensors).
    xi = jnp.dot(gi_ref[...], xh, preferred_element_type=F32)    # (E, 2C)
    xj = jnp.dot(gj_ref[...], xh, preferred_element_type=F32)    # (E, 2C)
    e_in = e_ref[...].astype(F32)                                # (E, A)
    # Linear over [x_i ; x_j ; edge] realized as split-weight partial matmuls.
    h = (_mm(xi, w1a_ref[...]) + _mm(xj, w1b_ref[...])
         + _mm(e_in, w1c_ref[...]) + b1_ref[...])
    h = jnp.maximum(h, 0.0)
    h = jnp.maximum(_mm(h, w2_ref[...]) + b2_ref[...], 0.0)
    # TODO(synk): ResLayer residual skipped because in/out dims differ (4C+A -> A).
    edge = _ln(h)                                                # (E, A)
    mem = edge

    # --- 3) natts attention blocks + UFO (static unroll, state stays in VMEM) ---
    for l in range(natts):
        # TODO(synk): sparse idx_i_edge/idx_j_edge attention pattern not defined
        # in the reference; dense multi-head self-attention over edges is used.
        attn = _mha_heads(edge, wqkv_ref, bqkv_ref, woh_ref, boh_ref, (l,), nheads)
        y = _ln(edge + attn)                                     # post-norm residual
        # FFN ResLayer (A -> A): relu / relu / residual / layernorm
        h1 = jnp.maximum(_mm(y, wf1_ref[l]) + bf1_ref[l], 0.0)
        h2 = jnp.maximum(_mm(h1, wf2_ref[l]) + bf2_ref[l], 0.0)
        y = _ln(h2 + y)
        # TODO(synk): UFO definition not provided; gated residual memory assumed:
        # g = sigmoid(W [edge;mem] + b) (split weights); new = g*edge + (1-g)*mem,
        # and both the edge state and the memory are set to the gated result.
        g = jax.nn.sigmoid(_mm(y, wue_ref[...]) + _mm(mem, wum_ref[...]) + bu_ref[...])
        edge = g * y + (1.0 - g) * mem
        mem = edge

    # --- 4) scatter-add + LN1 + decoder MHA + residual + LN2 (N rows) ---
    # scatter(edge, i_node, dim=1, reduce='add') as an exact f32 one-hot matmul.
    node = jnp.dot(sc_ref[...], edge, preferred_element_type=F32)   # (N, A)
    x1 = _ln(node)
    # TODO(synk): NodeAttentionLayer i_node/j_node sparsity not defined; dense
    # multi-head self-attention over nodes is used instead.
    dec = _mha_heads(x1, dqkv_ref, dbqkv_ref, dwoh_ref, dbo_ref, (), nheads)
    o_ref[...] = _ln(dec + x1).astype(o_ref.dtype)


def _run_fused(packed, c_noise, c_in, x, edge_ij, i_node, j_node, *, nheads, natts):
    B, N, _ = x.shape
    _, E, A = edge_ij.shape

    # One-hot gather/scatter matrices built once per call in XLA (tiny).
    nrange = jnp.arange(N, dtype=i_node.dtype)
    gi = (i_node[:, None] == nrange[None, :]).astype(F32)       # (E, N)
    gj = (j_node[:, None] == nrange[None, :]).astype(F32)       # (E, N)
    sc = (nrange[:, None] == i_node[None, :]).astype(F32)       # (N, E)

    args = [
        c_noise.reshape(B, N, 1), c_in, x, edge_ij,
        packed["freqs"], packed["w_cos"], packed["w_sin"], packed["w_x"], packed["b_emb"],
        gi, gj, sc,
        packed["w1a"], packed["w1b"], packed["w1c"], packed["b1"], packed["w2"], packed["b2"],
        packed["wqkv"], packed["bqkv"], packed["woh"], packed["boh"],
        packed["wf1"], packed["bf1"], packed["wf2"], packed["bf2"],
        packed["wue"], packed["wum"], packed["bu"],
        packed["dqkv"], packed["dbqkv"], packed["dwoh"], packed["dbo"],
    ]

    def bat(shape):   # per-batch block; size-1 batch dim squeezed out of the ref
        nd = len(shape)
        return pl.BlockSpec((None,) + shape, lambda b, _nd=nd: (b,) + (0,) * _nd)

    def const(shape):  # shared weights/tables: block index never changes
        # NOTE: for large att_dim, pipeline_mode=pl.Buffered(1) here would halve
        # the weight VMEM footprint (block index is constant); not needed at
        # these sizes.
        nd = len(shape)
        return pl.BlockSpec(shape, lambda b, _nd=nd: (0,) * _nd)

    in_specs = [bat((N, 1)), bat((N, 1)), bat((N, 3)), bat((E, A))]
    in_specs += [const(a.shape) for a in args[4:]]

    return pl.pallas_call(
        partial(_noise_identifier_kernel, nheads=nheads, natts=natts),
        grid=(B,),
        out_shape=jax.ShapeDtypeStruct((B, N, A), F32),
        in_specs=in_specs,
        out_specs=bat((N, A)),
        compiler_params=pltpu.CompilerParams(
            dimension_semantics=("parallel",),       # >=2 steps -> v7x megacore
            vmem_limit_bytes=_vmem_limit(),
        ),
    )(*args)


# ----------------------------------------------------------------------------
# Host-side parameter packing (one-time; lane-dense, per-head split, stacked)
# ----------------------------------------------------------------------------
def pack_params(p, *, nheads, natts, num_channels, att_dim):
    C, A = num_channels, att_dim
    half, twoC = C // 2, 2 * C
    dh = A // nheads
    scale = 1.0 / math.sqrt(dh)        # folded into Q projection

    we, be = p["lin_emb"]["w"], p["lin_emb"]["b"]
    wx, bx = p["lin_x"]["w"], p["lin_x"]["b"]
    zC = jnp.zeros((half, C), F32)
    packed = {
        "freqs": p["freqs"].reshape(1, half),
        # emb = [cos|sin];  out = [emb@We + be  |  (c_in*x)@Wx + bx]  is realized
        # as three zero-padded partial matmuls into the full 2C-wide output.
        "w_cos": jnp.concatenate([we[:half], zC], axis=1).astype(BF16),       # (half, 2C)
        "w_sin": jnp.concatenate([we[half:], zC], axis=1).astype(BF16),       # (half, 2C)
        "w_x": jnp.concatenate([jnp.zeros((3, C), F32), wx], axis=1).astype(BF16),  # (3, 2C)
        "b_emb": jnp.concatenate([be, bx]).reshape(1, twoC),
    }

    w1 = p["prj_pre"]["lin1"]["w"]                     # (4C + A, A) split by input block
    packed.update({
        "w1a": w1[:twoC].astype(BF16),
        "w1b": w1[twoC:2 * twoC].astype(BF16),
        "w1c": w1[2 * twoC:].astype(BF16),
        "b1": p["prj_pre"]["lin1"]["b"].reshape(1, A),
        "w2": p["prj_pre"]["lin2"]["w"].astype(BF16),
        "b2": p["prj_pre"]["lin2"]["b"].reshape(1, A),
    })

    def heads_in(w):   # (A, A) -> (nheads, A, dh): per-head column blocks
        return w.reshape(A, nheads, dh).transpose(1, 0, 2)

    def heads_b(b):    # (A,) -> (nheads, 1, dh)
        return b.reshape(nheads, 1, dh)

    def mha_pack(mha):
        wqkv = jnp.stack([heads_in(mha["q"]["w"] * scale),
                          heads_in(mha["k"]["w"]),
                          heads_in(mha["v"]["w"])])              # (3, nheads, A, dh)
        bqkv = jnp.stack([heads_b(mha["q"]["b"] * scale),
                          heads_b(mha["k"]["b"]),
                          heads_b(mha["v"]["b"])])               # (3, nheads, 1, dh)
        woh = mha["o"]["w"].reshape(nheads, dh, A)               # per-head row blocks
        bo = mha["o"]["b"].reshape(1, A)
        return wqkv, bqkv, woh, bo

    att = [mha_pack(p["att"][l]["attn"]) for l in range(natts)]
    packed.update({
        "wqkv": jnp.stack([a[0] for a in att]).astype(BF16),     # (natts,3,nheads,A,dh)
        "bqkv": jnp.stack([a[1] for a in att]),
        "woh": jnp.stack([a[2] for a in att]).astype(BF16),      # (natts,nheads,dh,A)
        "boh": jnp.stack([a[3] for a in att]),                   # (natts,1,A)
        "wf1": jnp.stack([p["att"][l]["ffn"]["lin1"]["w"] for l in range(natts)]).astype(BF16),
        "bf1": jnp.stack([p["att"][l]["ffn"]["lin1"]["b"].reshape(1, A) for l in range(natts)]),
        "wf2": jnp.stack([p["att"][l]["ffn"]["lin2"]["w"] for l in range(natts)]).astype(BF16),
        "bf2": jnp.stack([p["att"][l]["ffn"]["lin2"]["b"].reshape(1, A) for l in range(natts)]),
    })

    wu = p["ufo"]["w"]                                           # (2A, A) split weights
    packed.update({"wue": wu[:A].astype(BF16), "wum": wu[A:].astype(BF16),
                   "bu": p["ufo"]["b"].reshape(1, A)})

    dq, db, dwo, dbo = mha_pack(p["decoder"])
    packed.update({"dqkv": dq.astype(BF16), "dbqkv": db,
                   "dwoh": dwo.astype(BF16), "dbo": dbo})
    packed["prj_out"] = p["prj_out"]                             # stays in plain JAX
    return packed


# ----------------------------------------------------------------------------
# Forward pass
# ----------------------------------------------------------------------------
def denoiser_forward(packed, sigma_data, x, sigma, edge_ij, i_node, j_node,
                     idx_i_edge, idx_j_edge, *, nheads, natts):
    del idx_i_edge, idx_j_edge   # TODO(synk): sparse attention indices unused (dense attn)

    # EDM preconditioning scalars: (B,N,1) math, pure XLA.
    sd2 = sigma_data ** 2
    c_skip = sd2 / (sigma ** 2 + sd2)
    c_out = sigma * sigma_data / jnp.sqrt(sigma ** 2 + sd2)
    c_in = 1.0 / jnp.sqrt(sd2 + sigma ** 2)
    c_noise = (jnp.log(sigma) / 4.0).reshape(sigma.shape[0], -1)          # (B, N)

    node = _run_fused(packed, c_noise, c_in, x, edge_ij, i_node, j_node,
                      nheads=nheads, natts=natts)                         # (B, N, A)

    # Prj_out (ResLayer A -> 3, act2=None, norm=None): sub-lane output width ->
    # cheaper as plain JAX than as a dedicated masked-store pallas_call.
    po = packed["prj_out"]
    h = jnp.maximum(node @ po["lin1"]["w"] + po["lin1"]["b"], 0.0)
    F_x = h @ po["lin2"]["w"] + po["lin2"]["b"]                           # (B, N, 3)

    return c_skip * x + c_out * F_x


# ----------------------------------------------------------------------------
# Deterministic parameter initialization (synthetic; no checkpoint loading)
# ----------------------------------------------------------------------------
def _glorot(key, din, dout):
    std = math.sqrt(2.0 / (din + dout))
    return std * jax.random.normal(key, (din, dout), F32)


def init_linear(key, din, dout):
    return {"w": _glorot(key, din, dout), "b": jnp.zeros((dout,), F32)}


def init_res(key, din, dout):
    k1, k2 = jax.random.split(key)
    return {"lin1": init_linear(k1, din, dout), "lin2": init_linear(k2, dout, dout)}


def init_mha(key, dim):
    kq, kk, kv, ko = jax.random.split(key, 4)
    return {"q": init_linear(kq, dim, dim), "k": init_linear(kk, dim, dim),
            "v": init_linear(kv, dim, dim), "o": init_linear(ko, dim, dim)}


def init_params(key, num_channels, att_dim, natts, fourier_scale=16.0):
    keys = jax.random.split(key, 8 + 2 * natts)
    C, A = num_channels, att_dim
    params = {
        "freqs": jax.random.normal(keys[0], (C // 2,), F32) * fourier_scale * 2.0 * math.pi,
        "lin_emb": init_linear(keys[1], C, C),
        "lin_x": init_linear(keys[2], 3, C),
        "prj_pre": init_res(keys[3], 4 * C + A, A),
        "ufo": init_linear(keys[4], 2 * A, A),
        "decoder": init_mha(keys[5], A),
        "prj_out": init_res(keys[6], A, 3),
        "att": [],
    }
    for i in range(natts):
        params["att"].append({
            "attn": init_mha(keys[7 + 2 * i], A),
            "ffn": init_res(keys[8 + 2 * i], A, A),
        })
    return params


# ----------------------------------------------------------------------------
if __name__ == "__main__":
    B, N, E = 2, 8, 16
    # Lane-dense small config: 2*num_channels = 128 and att_dim = 128.
    NUM_CHANNELS, ATT_DIM, NHEADS, NATTS = 64, 128, 2, 2
    SIGMA_DATA = 0.5

    root = jax.random.PRNGKey(0)
    kp, kx, ks, ke, ki, kj, kie, kje = jax.random.split(root, 8)

    params = init_params(kp, NUM_CHANNELS, ATT_DIM, NATTS)
    packed = pack_params(params, nheads=NHEADS, natts=NATTS,
                         num_channels=NUM_CHANNELS, att_dim=ATT_DIM)

    x = jax.random.normal(kx, (B, N, 3), F32)
    sigma = jnp.exp(0.5 * jax.random.normal(ks, (B, N, 1), F32))          # positive
    edge_ij = jax.random.normal(ke, (B, E, ATT_DIM), F32)
    # ensure every node appears at least once so the scatter output spans N nodes
    i_node = jnp.concatenate(
        [jnp.arange(N, dtype=jnp.int32),
         jax.random.randint(ki, (E - N,), 0, N, dtype=jnp.int32)])
    j_node = jax.random.randint(kj, (E,), 0, N, dtype=jnp.int32)
    idx_i_edge = jax.random.randint(kie, (E,), 0, E, dtype=jnp.int32)
    idx_j_edge = jax.random.randint(kje, (E,), 0, E, dtype=jnp.int32)

    fwd = jax.jit(partial(denoiser_forward, nheads=NHEADS, natts=NATTS))
    out = fwd(packed, SIGMA_DATA, x, sigma, edge_ij,
              i_node, j_node, idx_i_edge, idx_j_edge)
    out = jax.block_until_ready(out)

    assert out.shape == (B, N, 3) and out.dtype == F32
    assert bool(jnp.all(jnp.isfinite(out)))
    print("KERNEL_OK")
</pallas_src>

<mosaic_0001>
module attributes {stable_mosaic.version = 11 : i64} {
  func.func @_noise_identifier_kernel(%arg0: i32, %arg1: memref<1x8x1xf32, #tpu.memory_space<vmem>>, %arg2: memref<1x8x1xf32, #tpu.memory_space<vmem>>, %arg3: memref<1x8x3xf32, #tpu.memory_space<vmem>>, %arg4: memref<1x16x128xf32, #tpu.memory_space<vmem>>, %arg5: memref<1x32xf32, #tpu.memory_space<vmem>>, %arg6: memref<32x128xbf16, #tpu.memory_space<vmem>>, %arg7: memref<32x128xbf16, #tpu.memory_space<vmem>>, %arg8: memref<3x128xbf16, #tpu.memory_space<vmem>>, %arg9: memref<1x128xf32, #tpu.memory_space<vmem>>, %arg10: memref<16x8xf32, #tpu.memory_space<vmem>>, %arg11: memref<16x8xf32, #tpu.memory_space<vmem>>, %arg12: memref<8x16xf32, #tpu.memory_space<vmem>>, %arg13: memref<128x128xbf16, #tpu.memory_space<vmem>>, %arg14: memref<128x128xbf16, #tpu.memory_space<vmem>>, %arg15: memref<128x128xbf16, #tpu.memory_space<vmem>>, %arg16: memref<1x128xf32, #tpu.memory_space<vmem>>, %arg17: memref<128x128xbf16, #tpu.memory_space<vmem>>, %arg18: memref<1x128xf32, #tpu.memory_space<vmem>>, %arg19: memref<2x3x2x128x64xbf16, #tpu.memory_space<vmem>>, %arg20: memref<2x3x2x1x64xf32, #tpu.memory_space<vmem>>, %arg21: memref<2x2x64x128xbf16, #tpu.memory_space<vmem>>, %arg22: memref<2x1x128xf32, #tpu.memory_space<vmem>>, %arg23: memref<2x128x128xbf16, #tpu.memory_space<vmem>>, %arg24: memref<2x1x128xf32, #tpu.memory_space<vmem>>, %arg25: memref<2x128x128xbf16, #tpu.memory_space<vmem>>, %arg26: memref<2x1x128xf32, #tpu.memory_space<vmem>>, %arg27: memref<128x128xbf16, #tpu.memory_space<vmem>>, %arg28: memref<128x128xbf16, #tpu.memory_space<vmem>>, %arg29: memref<1x128xf32, #tpu.memory_space<vmem>>, %arg30: memref<3x2x128x64xbf16, #tpu.memory_space<vmem>>, %arg31: memref<3x2x1x64xf32, #tpu.memory_space<vmem>>, %arg32: memref<2x64x128xbf16, #tpu.memory_space<vmem>>, %arg33: memref<1x128xf32, #tpu.memory_space<vmem>>, %arg34: memref<1x8x128xf32, #tpu.memory_space<vmem>>) attributes {dimension_semantics = [#tpu.dimension_semantics<parallel>], iteration_bounds = array<i64: 2>, scalar_prefetch = 0 : i64, scratch_operands = 0 : i64, tpu.core_type = #tpu.core_type<tc>, window_params = [{transform_indices = @transform_0, window_bounds = array<i64: 1, 8, 1>}, {transform_indices = @transform_1, window_bounds = array<i64: 1, 8, 1>}, {transform_indices = @transform_2, window_bounds = array<i64: 1, 8, 3>}, {transform_indices = @transform_3, window_bounds = array<i64: 1, 16, 128>}, {pipeline_mode = #tpu.pipeline_mode<synchronous>, transform_indices = @transform_4, window_bounds = array<i64: 1, 32>}, {pipeline_mode = #tpu.pipeline_mode<synchronous>, transform_indices = @transform_5, window_bounds = array<i64: 32, 128>}, {pipeline_mode = #tpu.pipeline_mode<synchronous>, transform_indices = @transform_6, window_bounds = array<i64: 32, 128>}, {pipeline_mode = #tpu.pipeline_mode<synchronous>, transform_indices = @transform_7, window_bounds = array<i64: 3, 128>}, {pipeline_mode = #tpu.pipeline_mode<synchronous>, transform_indices = @transform_8, window_bounds = array<i64: 1, 128>}, {pipeline_mode = #tpu.pipeline_mode<synchronous>, transform_indices = @transform_9, window_bounds = array<i64: 16, 8>}, {pipeline_mode = #tpu.pipeline_mode<synchronous>, transform_indices = @transform_10, window_bounds = array<i64: 16, 8>}, {pipeline_mode = #tpu.pipeline_mode<synchronous>, transform_indices = @transform_11, window_bounds = array<i64: 8, 16>}, {pipeline_mode = #tpu.pipeline_mode<synchronous>, transform_indices = @transform_12, window_bounds = array<i64: 128, 128>}, {pipeline_mode = #tpu.pipeline_mode<synchronous>, transform_indices = @transform_13, window_bounds = array<i64: 128, 128>}, {pipeline_mode = #tpu.pipeline_mode<synchronous>, transform_indices = @transform_14, window_bounds = array<i64: 128, 128>}, {pipeline_mode = #tpu.pipeline_mode<synchronous>, transform_indices = @transform_15, window_bounds = array<i64: 1, 128>}, {pipeline_mode = #tpu.pipeline_mode<synchronous>, transform_indices = @transform_16, window_bounds = array<i64: 128, 128>}, {pipeline_mode = #tpu.pipeline_mode<synchronous>, transform_indices = @transform_17, window_bounds = array<i64: 1, 128>}, {pipeline_mode = #tpu.pipeline_mode<synchronous>, transform_indices = @transform_18, window_bounds = array<i64: 2, 3, 2, 128, 64>}, {pipeline_mode = #tpu.pipeline_mode<synchronous>, transform_indices = @transform_19, window_bounds = array<i64: 2, 3, 2, 1, 64>}, {pipeline_mode = #tpu.pipeline_mode<synchronous>, transform_indices = @transform_20, window_bounds = array<i64: 2, 2, 64, 128>}, {pipeline_mode = #tpu.pipeline_mode<synchronous>, transform_indices = @transform_21, window_bounds = array<i64: 2, 1, 128>}, {pipeline_mode = #tpu.pipeline_mode<synchronous>, transform_indices = @transform_22, window_bounds = array<i64: 2, 128, 128>}, {pipeline_mode = #tpu.pipeline_mode<synchronous>, transform_indices = @transform_23, window_bounds = array<i64: 2, 1, 128>}, {pipeline_mode = #tpu.pipeline_mode<synchronous>, transform_indices = @transform_24, window_bounds = array<i64: 2, 128, 128>}, {pipeline_mode = #tpu.pipeline_mode<synchronous>, transform_indices = @transform_25, window_bounds = array<i64: 2, 1, 128>}, {pipeline_mode = #tpu.pipeline_mode<synchronous>, transform_indices = @transform_26, window_bounds = array<i64: 128, 128>}, {pipeline_mode = #tpu.pipeline_mode<synchronous>, transform_indices = @transform_27, window_bounds = array<i64: 128, 128>}, {pipeline_mode = #tpu.pipeline_mode<synchronous>, transform_indices = @transform_28, window_bounds = array<i64: 1, 128>}, {pipeline_mode = #tpu.pipeline_mode<synchronous>, transform_indices = @transform_29, window_bounds = array<i64: 3, 2, 128, 64>}, {pipeline_mode = #tpu.pipeline_mode<synchronous>, transform_indices = @transform_30, window_bounds = array<i64: 3, 2, 1, 64>}, {pipeline_mode = #tpu.pipeline_mode<synchronous>, transform_indices = @transform_31, window_bounds = array<i64: 2, 64, 128>}, {pipeline_mode = #tpu.pipeline_mode<synchronous>, transform_indices = @transform_32, window_bounds = array<i64: 1, 128>}, {transform_indices = @transform_33, window_bounds = array<i64: 1, 8, 128>}]} {
    %c0 = arith.constant 0 : index
    %c0_0 = arith.constant 0 : index
    %c0_1 = arith.constant 0 : index
    %0 = vector.load %arg1[%c0, %c0_0, %c0_1] : memref<1x8x1xf32, #tpu.memory_space<vmem>>, vector<1x8x1xf32>
    %1 = vector.shape_cast %0 : vector<1x8x1xf32> to vector<8x1xf32>
    %c0_2 = arith.constant 0 : index
    %c0_3 = arith.constant 0 : index
    %2 = vector.load %arg5[%c0_2, %c0_3] : memref<1x32xf32, #tpu.memory_space<vmem>>, vector<1x32xf32>
    %3 = vector.broadcast %1 : vector<8x1xf32> to vector<8x32xf32>
    %4 = vector.broadcast %2 : vector<1x32xf32> to vector<8x32xf32>
    %5 = arith.mulf %3, %4 : vector<8x32xf32>
    %c0_4 = arith.constant 0 : index
    %c0_5 = arith.constant 0 : index
    %c0_6 = arith.constant 0 : index
    %6 = vector.load %arg2[%c0_4, %c0_5, %c0_6] : memref<1x8x1xf32, #tpu.memory_space<vmem>>, vector<1x8x1xf32>
    %7 = vector.shape_cast %6 : vector<1x8x1xf32> to vector<8x1xf32>
    %c0_7 = arith.constant 0 : index
    %c0_8 = arith.constant 0 : index
    %c0_9 = arith.constant 0 : index
    %8 = vector.load %arg3[%c0_7, %c0_8, %c0_9] : memref<1x8x3xf32, #tpu.memory_space<vmem>>, vector<1x8x3xf32>
    %9 = vector.shape_cast %8 : vector<1x8x3xf32> to vector<8x3xf32>
    %10 = vector.broadcast %7 : vector<8x1xf32> to vector<8x3xf32>
    %11 = arith.mulf %10, %9 : vector<8x3xf32>
    %12 = math.cos %5 : vector<8x32xf32>
    %c0_10 = arith.constant 0 : index
    %c0_11 = arith.constant 0 : index
    %13 = vector.load %arg6[%c0_10, %c0_11] : memref<32x128xbf16, #tpu.memory_space<vmem>>, vector<32x128xbf16>
    %14 = arith.truncf %12 : vector<8x32xf32> to vector<8x32xbf16>
    %cst = arith.constant dense<0.000000e+00> : vector<8x128xf32>
    %15 = tpu.matmul %14, %13, %cst {dimension_numbers = #tpu.dot_dimension_numbers<[1], [0], [0], [1], [0, 0, 1, 1], [], []>} : vector<8x32xbf16>, vector<32x128xbf16>, vector<8x128xf32> -> vector<8x128xf32>
    %16 = math.sin %5 : vector<8x32xf32>
    %c0_12 = arith.constant 0 : index
    %c0_13 = arith.constant 0 : index
    %17 = vector.load %arg7[%c0_12, %c0_13] : memref<32x128xbf16, #tpu.memory_space<vmem>>, vector<32x128xbf16>
    %18 = arith.truncf %16 : vector<8x32xf32> to vector<8x32xbf16>
    %cst_14 = arith.constant dense<0.000000e+00> : vector<8x128xf32>
    %19 = tpu.matmul %18, %17, %cst_14 {dimension_numbers = #tpu.dot_dimension_numbers<[1], [0], [0], [1], [0, 0, 1, 1], [], []>} : vector<8x32xbf16>, vector<32x128xbf16>, vector<8x128xf32> -> vector<8x128xf32>
    %20 = arith.addf %15, %19 : vector<8x128xf32>
    %c0_15 = arith.constant 0 : index
    %c0_16 = arith.constant 0 : index
    %21 = vector.load %arg8[%c0_15, %c0_16] : memref<3x128xbf16, #tpu.memory_space<vmem>>, vector<3x128xbf16>
    %22 = arith.truncf %11 : vector<8x3xf32> to vector<8x3xbf16>
    %cst_17 = arith.constant dense<0.000000e+00> : vector<8x128xf32>
    %23 = tpu.matmul %22, %21, %cst_17 {dimension_numbers = #tpu.dot_dimension_numbers<[1], [0], [0], [1], [0, 0, 1, 1], [], []>} : vector<8x3xbf16>, vector<3x128xbf16>, vector<8x128xf32> -> vector<8x128xf32>
    %24 = arith.addf %20, %23 : vector<8x128xf32>
    %c0_18 = arith.constant 0 : index
    %c0_19 = arith.constant 0 : index
    %25 = vector.load %arg9[%c0_18, %c0_19] : memref<1x128xf32, #tpu.memory_space<vmem>>, vector<1x128xf32>
    %26 = vector.broadcast %25 : vector<1x128xf32> to vector<8x128xf32>
    %27 = arith.addf %24, %26 : vector<8x128xf32>
    %c0_20 = arith.constant 0 : index
    %c0_21 = arith.constant 0 : index
    %28 = vector.load %arg10[%c0_20, %c0_21] : memref<16x8xf32, #tpu.memory_space<vmem>>, vector<16x8xf32>
    %cst_22 = arith.constant dense<0.000000e+00> : vector<16x128xf32>
    %29 = tpu.matmul %28, %27, %cst_22 {dimension_numbers = #tpu.dot_dimension_numbers<[1], [0], [0], [1], [0, 0, 1, 1], [], []>} : vector<16x8xf32>, vector<8x128xf32>, vector<16x128xf32> -> vector<16x128xf32>
    %c0_23 = arith.constant 0 : index
    %c0_24 = arith.constant 0 : index
    %30 = vector.load %arg11[%c0_23, %c0_24] : memref<16x8xf32, #tpu.memory_space<vmem>>, vector<16x8xf32>
    %cst_25 = arith.constant dense<0.000000e+00> : vector<16x128xf32>
    %31 = tpu.matmul %30, %27, %cst_25 {dimension_numbers = #tpu.dot_dimension_numbers<[1], [0], [0], [1], [0, 0, 1, 1], [], []>} : vector<16x8xf32>, vector<8x128xf32>, vector<16x128xf32> -> vector<16x128xf32>
    %c0_26 = arith.constant 0 : index
    %c0_27 = arith.constant 0 : index
    %c0_28 = arith.constant 0 : index
    %32 = vector.load %arg4[%c0_26, %c0_27, %c0_28] : memref<1x16x128xf32, #tpu.memory_space<vmem>>, vector<1x16x128xf32>
    %33 = vector.shape_cast %32 : vector<1x16x128xf32> to vector<16x128xf32>
    %c0_29 = arith.constant 0 : index
    %c0_30 = arith.constant 0 : index
    %34 = vector.load %arg13[%c0_29, %c0_30] : memref<128x128xbf16, #tpu.memory_space<vmem>>, vector<128x128xbf16>
    %35 = arith.truncf %29 : vector<16x128xf32> to vector<16x128xbf16>
    %cst_31 = arith.constant dense<0.000000e+00> : vector<16x128xf32>
    %36 = tpu.matmul %35, %34, %cst_31 {dimension_numbers = #tpu.dot_dimension_numbers<[1], [0], [0], [1], [0, 0, 1, 1], [], []>} : vector<16x128xbf16>, vector<128x128xbf16>, vector<16x128xf32> -> vector<16x128xf32>
    %c0_32 = arith.constant 0 : index
    %c0_33 = arith.constant 0 : index
    %37 = vector.load %arg14[%c0_32, %c0_33] : memref<128x128xbf16, #tpu.memory_space<vmem>>, vector<128x128xbf16>
    %38 = arith.truncf %31 : vector<16x128xf32> to vector<16x128xbf16>
    %cst_34 = arith.constant dense<0.000000e+00> : vector<16x128xf32>
    %39 = tpu.matmul %38, %37, %cst_34 {dimension_numbers = #tpu.dot_dimension_numbers<[1], [0], [0], [1], [0, 0, 1, 1], [], []>} : vector<16x128xbf16>, vector<128x128xbf16>, vector<16x128xf32> -> vector<16x128xf32>
    %40 = arith.addf %36, %39 : vector<16x128xf32>
    %c0_35 = arith.constant 0 : index
    %c0_36 = arith.constant 0 : index
    %41 = vector.load %arg15[%c0_35, %c0_36] : memref<128x128xbf16, #tpu.memory_space<vmem>>, vector<128x128xbf16>
    %42 = arith.truncf %33 : vector<16x128xf32> to vector<16x128xbf16>
    %cst_37 = arith.constant dense<0.000000e+00> : vector<16x128xf32>
    %43 = tpu.matmul %42, %41, %cst_37 {dimension_numbers = #tpu.dot_dimension_numbers<[1], [0], [0], [1], [0, 0, 1, 1], [], []>} : vector<16x128xbf16>, vector<128x128xbf16>, vector<16x128xf32> -> vector<16x128xf32>
    %44 = arith.addf %40, %43 : vector<16x128xf32>
    %c0_38 = arith.constant 0 : index
    %c0_39 = arith.constant 0 : index
    %45 = vector.load %arg16[%c0_38, %c0_39] : memref<1x128xf32, #tpu.memory_space<vmem>>, vector<1x128xf32>
    %46 = vector.broadcast %45 : vector<1x128xf32> to vector<16x128xf32>
    %47 = arith.addf %44, %46 : vector<16x128xf32>
    %cst_40 = arith.constant 0.000000e+00 : f32
    %48 = vector.broadcast %cst_40 : f32 to vector<16x128xf32>
    %49 = arith.maximumf %47, %48 : vector<16x128xf32>
    %c0_41 = arith.constant 0 : index
    %c0_42 = arith.constant 0 : index
    %50 = vector.load %arg17[%c0_41, %c0_42] : memref<128x128xbf16, #tpu.memory_space<vmem>>, vector<128x128xbf16>
    %51 = arith.truncf %49 : vector<16x128xf32> to vector<16x128xbf16>
    %cst_43 = arith.constant dense<0.000000e+00> : vector<16x128xf32>
    %52 = tpu.matmul %51, %50, %cst_43 {dimension_numbers = #tpu.dot_dimension_numbers<[1], [0], [0], [1], [0, 0, 1, 1], [], []>} : vector<16x128xbf16>, vector<128x128xbf16>, vector<16x128xf32> -> vector<16x128xf32>
    %c0_44 = arith.constant 0 : index
    %c0_45 = arith.constant 0 : index
    %53 = vector.load %arg18[%c0_44, %c0_45] : memref<1x128xf32, #tpu.memory_space<vmem>>, vector<1x128xf32>
    %54 = vector.broadcast %53 : vector<1x128xf32> to vector<16x128xf32>
    %55 = arith.addf %52, %54 : vector<16x128xf32>
    %cst_46 = arith.constant 0.000000e+00 : f32
    %56 = vector.broadcast %cst_46 : f32 to vector<16x128xf32>
    %57 = arith.maximumf %55, %56 : vector<16x128xf32>
    %cst_47 = arith.constant dense<0.000000e+00> : vector<16xf32>
    %58 = vector.multi_reduction <add>, %57, %cst_47 [1] : vector<16x128xf32> to vector<16xf32>
    %59 = vector.shape_cast %58 : vector<16xf32> to vector<16x1xf32>
    %cst_48 = arith.constant 1.280000e+02 : f32
    %60 = vector.broadcast %cst_48 : f32 to vector<16x1xf32>
    %61 = arith.divf %59, %60 : vector<16x1xf32>
    %62 = vector.broadcast %61 : vector<16x1xf32> to vector<16x128xf32>
    %63 = arith.subf %57, %62 : vector<16x128xf32>
    %64 = arith.mulf %63, %63 : vector<16x128xf32>
    %cst_49 = arith.constant dense<0.000000e+00> : vector<16xf32>
    %65 = vector.multi_reduction <add>, %64, %cst_49 [1] : vector<16x128xf32> to vector<16xf32>
    %66 = vector.shape_cast %65 : vector<16xf32> to vector<16x1xf32>
    %cst_50 = arith.constant 1.280000e+02 : f32
    %67 = vector.broadcast %cst_50 : f32 to vector<16x1xf32>
    %68 = arith.divf %66, %67 : vector<16x1xf32>
    %69 = vector.broadcast %61 : vector<16x1xf32> to vector<16x128xf32>
    %70 = arith.subf %57, %69 : vector<16x128xf32>
    %cst_51 = arith.constant 9.99999974E-6 : f32
    %71 = vector.broadcast %cst_51 : f32 to vector<16x1xf32>
    %72 = arith.addf %68, %71 : vector<16x1xf32>
    %73 = math.rsqrt %72 : vector<16x1xf32>
    %74 = vector.broadcast %73 : vector<16x1xf32> to vector<16x128xf32>
    %75 = arith.mulf %70, %74 : vector<16x128xf32>
    %76 = arith.truncf %75 : vector<16x128xf32> to vector<16x128xbf16>
    %cst_52 = arith.constant 0.000000e+00 : f32
    %77 = vector.broadcast %cst_52 : f32 to vector<16x128xf32>
    %c0_53 = arith.constant 0 : index
    %c0_54 = arith.constant 0 : index
    %c0_55 = arith.constant 0 : index
    %c0_56 = arith.constant 0 : index
    %c0_57 = arith.constant 0 : index
    %78 = vector.load %arg19[%c0_53, %c0_54, %c0_55, %c0_56, %c0_57] : memref<2x3x2x128x64xbf16, #tpu.memory_space<vmem>>, vector<1x1x1x128x64xbf16>
    %79 = vector.shape_cast %78 : vector<1x1x1x128x64xbf16> to vector<128x64xbf16>
    %cst_58 = arith.constant dense<0.000000e+00> : vector<16x64xf32>
    %80 = tpu.matmul %76, %79, %cst_58 {dimension_numbers = #tpu.dot_dimension_numbers<[1], [0], [0], [1], [0, 0, 1, 1], [], []>} : vector<16x128xbf16>, vector<128x64xbf16>, vector<16x64xf32> -> vector<16x64xf32>
    %c0_59 = arith.constant 0 : index
    %c0_60 = arith.constant 0 : index
    %c0_61 = arith.constant 0 : index
    %c0_62 = arith.constant 0 : index
    %c0_63 = arith.constant 0 : index
    %81 = vector.load %arg20[%c0_59, %c0_60, %c0_61, %c0_62, %c0_63] : memref<2x3x2x1x64xf32, #tpu.memory_space<vmem>>, vector<1x1x1x1x64xf32>
    %82 = vector.shape_cast %81 : vector<1x1x1x1x64xf32> to vector<1x64xf32>
    %83 = vector.broadcast %82 : vector<1x64xf32> to vector<16x64xf32>
    %84 = arith.addf %80, %83 : vector<16x64xf32>
    %c0_64 = arith.constant 0 : index
    %c1 = arith.constant 1 : index
    %c0_65 = arith.constant 0 : index
    %c0_66 = arith.constant 0 : index
    %c0_67 = arith.constant 0 : index
    %85 = vector.load %arg19[%c0_64, %c1, %c0_65, %c0_66, %c0_67] : memref<2x3x2x128x64xbf16, #tpu.memory_space<vmem>>, vector<1x1x1x128x64xbf16>
    %86 = vector.shape_cast %85 : vector<1x1x1x128x64xbf16> to vector<128x64xbf16>
    %cst_68 = arith.constant dense<0.000000e+00> : vector<16x64xf32>
    %87 = tpu.matmul %76, %86, %cst_68 {dimension_numbers = #tpu.dot_dimension_numbers<[1], [0], [0], [1], [0, 0, 1, 1], [], []>} : vector<16x128xbf16>, vector<128x64xbf16>, vector<16x64xf32> -> vector<16x64xf32>
    %c0_69 = arith.constant 0 : index
    %c1_70 = arith.constant 1 : index
    %c0_71 = arith.constant 0 : index
    %c0_72 = arith.constant 0 : index
    %c0_73 = arith.constant 0 : index
    %88 = vector.load %arg20[%c0_69, %c1_70, %c0_71, %c0_72, %c0_73] : memref<2x3x2x1x64xf32, #tpu.memory_space<vmem>>, vector<1x1x1x1x64xf32>
    %89 = vector.shape_cast %88 : vector<1x1x1x1x64xf32> to vector<1x64xf32>
    %90 = vector.broadcast %89 : vector<1x64xf32> to vector<16x64xf32>
    %91 = arith.addf %87, %90 : vector<16x64xf32>
    %c0_74 = arith.constant 0 : index
    %c2 = arith.constant 2 : index
    %c0_75 = arith.constant 0 : index
    %c0_76 = arith.constant 0 : index
    %c0_77 = arith.constant 0 : index
    %92 = vector.load %arg19[%c0_74, %c2, %c0_75, %c0_76, %c0_77] : memref<2x3x2x128x64xbf16, #tpu.memory_space<vmem>>, vector<1x1x1x128x64xbf16>
    %93 = vector.shape_cast %92 : vector<1x1x1x128x64xbf16> to vector<128x64xbf16>
    %cst_78 = arith.constant dense<0.000000e+00> : vector<16x64xf32>
    %94 = tpu.matmul %76, %93, %cst_78 {dimension_numbers = #tpu.dot_dimension_numbers<[1], [0], [0], [1], [0, 0, 1, 1], [], []>} : vector<16x128xbf16>, vector<128x64xbf16>, vector<16x64xf32> -> vector<16x64xf32>
    %c0_79 = arith.constant 0 : index
    %c2_80 = arith.constant 2 : index
    %c0_81 = arith.constant 0 : index
    %c0_82 = arith.constant 0 : index
    %c0_83 = arith.constant 0 : index
    %95 = vector.load %arg20[%c0_79, %c2_80, %c0_81, %c0_82, %c0_83] : memref<2x3x2x1x64xf32, #tpu.memory_space<vmem>>, vector<1x1x1x1x64xf32>
    %96 = vector.shape_cast %95 : vector<1x1x1x1x64xf32> to vector<1x64xf32>
    %97 = vector.broadcast %96 : vector<1x64xf32> to vector<16x64xf32>
    %98 = arith.addf %94, %97 : vector<16x64xf32>
    %99 = arith.truncf %84 : vector<16x64xf32> to vector<16x64xbf16>
    %100 = arith.truncf %91 : vector<16x64xf32> to vector<16x64xbf16>
    %cst_84 = arith.constant dense<0.000000e+00> : vector<16x16xf32>
    %101 = tpu.matmul %99, %100, %cst_84 {dimension_numbers = #tpu.dot_dimension_numbers<[1], [1], [0], [0], [0, 0, 1, 0], [], []>} : vector<16x64xbf16>, vector<16x64xbf16>, vector<16x16xf32> -> vector<16x16xf32>
    %cst_85 = arith.constant dense<0xFF800000> : vector<16xf32>
    %102 = vector.multi_reduction <maximumf>, %101, %cst_85 [1] : vector<16x16xf32> to vector<16xf32>
    %103 = vector.shape_cast %102 : vector<16xf32> to vector<16x1xf32>
    %104 = vector.broadcast %103 : vector<16x1xf32> to vector<16x16xf32>
    %105 = arith.subf %101, %104 : vector<16x16xf32>
    %106 = math.exp %105 : vector<16x16xf32>
    %cst_86 = arith.constant dense<0.000000e+00> : vector<16xf32>
    %107 = vector.multi_reduction <add>, %106, %cst_86 [1] : vector<16x16xf32> to vector<16xf32>
    %108 = vector.shape_cast %107 : vector<16xf32> to vector<16x1xf32>
    %109 = tpu.reciprocal %108 {approx = true} : vector<16x1xf32> -> vector<16x1xf32>
    %110 = vector.broadcast %109 : vector<16x1xf32> to vector<16x16xf32>
    %111 = arith.mulf %106, %110 : vector<16x16xf32>
    %112 = arith.truncf %111 : vector<16x16xf32> to vector<16x16xbf16>
    %113 = arith.truncf %98 : vector<16x64xf32> to vector<16x64xbf16>
    %cst_87 = arith.constant dense<0.000000e+00> : vector<16x64xf32>
    %114 = tpu.matmul %112, %113, %cst_87 {dimension_numbers = #tpu.dot_dimension_numbers<[1], [0], [0], [1], [0, 0, 1, 1], [], []>} : vector<16x16xbf16>, vector<16x64xbf16>, vector<16x64xf32> -> vector<16x64xf32>
    %115 = arith.truncf %114 : vector<16x64xf32> to vector<16x64xbf16>
    %c0_88 = arith.constant 0 : index
    %c0_89 = arith.constant 0 : index
    %c0_90 = arith.constant 0 : index
    %c0_91 = arith.constant 0 : index
    %116 = vector.load %arg21[%c0_88, %c0_89, %c0_90, %c0_91] : memref<2x2x64x128xbf16, #tpu.memory_space<vmem>>, vector<1x1x64x128xbf16>
    %117 = vector.shape_cast %116 : vector<1x1x64x128xbf16> to vector<64x128xbf16>
    %cst_92 = arith.constant dense<0.000000e+00> : vector<16x128xf32>
    %118 = tpu.matmul %115, %117, %cst_92 {dimension_numbers = #tpu.dot_dimension_numbers<[1], [0], [0], [1], [0, 0, 1, 1], [], []>} : vector<16x64xbf16>, vector<64x128xbf16>, vector<16x128xf32> -> vector<16x128xf32>
    %119 = arith.addf %77, %118 : vector<16x128xf32>
    %c0_93 = arith.constant 0 : index
    %c0_94 = arith.constant 0 : index
    %c1_95 = arith.constant 1 : index
    %c0_96 = arith.constant 0 : index
    %c0_97 = arith.constant 0 : index
    %120 = vector.load %arg19[%c0_93, %c0_94, %c1_95, %c0_96, %c0_97] : memref<2x3x2x128x64xbf16, #tpu.memory_space<vmem>>, vector<1x1x1x128x64xbf16>
    %121 = vector.shape_cast %120 : vector<1x1x1x128x64xbf16> to vector<128x64xbf16>
    %cst_98 = arith.constant dense<0.000000e+00> : vector<16x64xf32>
    %122 = tpu.matmul %76, %121, %cst_98 {dimension_numbers = #tpu.dot_dimension_numbers<[1], [0], [0], [1], [0, 0, 1, 1], [], []>} : vector<16x128xbf16>, vector<128x64xbf16>, vector<16x64xf32> -> vector<16x64xf32>
    %c0_99 = arith.constant 0 : index
    %c0_100 = arith.constant 0 : index
    %c1_101 = arith.constant 1 : index
    %c0_102 = arith.constant 0 : index
    %c0_103 = arith.constant 0 : index
    %123 = vector.load %arg20[%c0_99, %c0_100, %c1_101, %c0_102, %c0_103] : memref<2x3x2x1x64xf32, #tpu.memory_space<vmem>>, vector<1x1x1x1x64xf32>
    %124 = vector.shape_cast %123 : vector<1x1x1x1x64xf32> to vector<1x64xf32>
    %125 = vector.broadcast %124 : vector<1x64xf32> to vector<16x64xf32>
    %126 = arith.addf %122, %125 : vector<16x64xf32>
    %c0_104 = arith.constant 0 : index
    %c1_105 = arith.constant 1 : index
    %c1_106 = arith.constant 1 : index
    %c0_107 = arith.constant 0 : index
    %c0_108 = arith.constant 0 : index
    %127 = vector.load %arg19[%c0_104, %c1_105, %c1_106, %c0_107, %c0_108] : memref<2x3x2x128x64xbf16, #tpu.memory_space<vmem>>, vector<1x1x1x128x64xbf16>
    %128 = vector.shape_cast %127 : vector<1x1x1x128x64xbf16> to vector<128x64xbf16>
    %cst_109 = arith.constant dense<0.000000e+00> : vector<16x64xf32>
    %129 = tpu.matmul %76, %128, %cst_109 {dimension_numbers = #tpu.dot_dimension_numbers<[1], [0], [0], [1], [0, 0, 1, 1], [], []>} : vector<16x128xbf16>, vector<128x64xbf16>, vector<16x64xf32> -> vector<16x64xf32>
    %c0_110 = arith.constant 0 : index
    %c1_111 = arith.constant 1 : index
    %c1_112 = arith.constant 1 : index
    %c0_113 = arith.constant 0 : index
    %c0_114 = arith.constant 0 : index
    %130 = vector.load %arg20[%c0_110, %c1_111, %c1_112, %c0_113, %c0_114] : memref<2x3x2x1x64xf32, #tpu.memory_space<vmem>>, vector<1x1x1x1x64xf32>
    %131 = vector.shape_cast %130 : vector<1x1x1x1x64xf32> to vector<1x64xf32>
    %132 = vector.broadcast %131 : vector<1x64xf32> to vector<16x64xf32>
    %133 = arith.addf %129, %132 : vector<16x64xf32>
    %c0_115 = arith.constant 0 : index
    %c2_116 = arith.constant 2 : index
    %c1_117 = arith.constant 1 : index
    %c0_118 = arith.constant 0 : index
    %c0_119 = arith.constant 0 : index
    %134 = vector.load %arg19[%c0_115, %c2_116, %c1_117, %c0_118, %c0_119] : memref<2x3x2x128x64xbf16, #tpu.memory_space<vmem>>, vector<1x1x1x128x64xbf16>
    %135 = vector.shape_cast %134 : vector<1x1x1x128x64xbf16> to vector<128x64xbf16>
    %cst_120 = arith.constant dense<0.000000e+00> : vector<16x64xf32>
    %136 = tpu.matmul %76, %135, %cst_120 {dimension_numbers = #tpu.dot_dimension_numbers<[1], [0], [0], [1], [0, 0, 1, 1], [], []>} : vector<16x128xbf16>, vector<128x64xbf16>, vector<16x64xf32> -> vector<16x64xf32>
    %c0_121 = arith.constant 0 : index
    %c2_122 = arith.constant 2 : index
    %c1_123 = arith.constant 1 : index
    %c0_124 = arith.constant 0 : index
    %c0_125 = arith.constant 0 : index
    %137 = vector.load %arg20[%c0_121, %c2_122, %c1_123, %c0_124, %c0_125] : memref<2x3x2x1x64xf32, #tpu.memory_space<vmem>>, vector<1x1x1x1x64xf32>
    %138 = vector.shape_cast %137 : vector<1x1x1x1x64xf32> to vector<1x64xf32>
    %139 = vector.broadcast %138 : vector<1x64xf32> to vector<16x64xf32>
    %140 = arith.addf %136, %139 : vector<16x64xf32>
    %141 = arith.truncf %126 : vector<16x64xf32> to vector<16x64xbf16>
    %142 = arith.truncf %133 : vector<16x64xf32> to vector<16x64xbf16>
    %cst_126 = arith.constant dense<0.000000e+00> : vector<16x16xf32>
    %143 = tpu.matmul %141, %142, %cst_126 {dimension_numbers = #tpu.dot_dimension_numbers<[1], [1], [0], [0], [0, 0, 1, 0], [], []>} : vector<16x64xbf16>, vector<16x64xbf16>, vector<16x16xf32> -> vector<16x16xf32>
    %cst_127 = arith.constant dense<0xFF800000> : vector<16xf32>
    %144 = vector.multi_reduction <maximumf>, %143, %cst_127 [1] : vector<16x16xf32> to vector<16xf32>
    %145 = vector.shape_cast %144 : vector<16xf32> to vector<16x1xf32>
    %146 = vector.broadcast %145 : vector<16x1xf32> to vector<16x16xf32>
    %147 = arith.subf %143, %146 : vector<16x16xf32>
    %148 = math.exp %147 : vector<16x16xf32>
    %cst_128 = arith.constant dense<0.000000e+00> : vector<16xf32>
    %149 = vector.multi_reduction <add>, %148, %cst_128 [1] : vector<16x16xf32> to vector<16xf32>
    %150 = vector.shape_cast %149 : vector<16xf32> to vector<16x1xf32>
    %151 = tpu.reciprocal %150 {approx = true} : vector<16x1xf32> -> vector<16x1xf32>
    %152 = vector.broadcast %151 : vector<16x1xf32> to vector<16x16xf32>
    %153 = arith.mulf %148, %152 : vector<16x16xf32>
    %154 = arith.truncf %153 : vector<16x16xf32> to vector<16x16xbf16>
    %155 = arith.truncf %140 : vector<16x64xf32> to vector<16x64xbf16>
    %cst_129 = arith.constant dense<0.000000e+00> : vector<16x64xf32>
    %156 = tpu.matmul %154, %155, %cst_129 {dimension_numbers = #tpu.dot_dimension_numbers<[1], [0], [0], [1], [0, 0, 1, 1], [], []>} : vector<16x16xbf16>, vector<16x64xbf16>, vector<16x64xf32> -> vector<16x64xf32>
    %157 = arith.truncf %156 : vector<16x64xf32> to vector<16x64xbf16>
    %c0_130 = arith.constant 0 : index
    %c1_131 = arith.constant 1 : index
    %c0_132 = arith.constant 0 : index
    %c0_133 = arith.constant 0 : index
    %158 = vector.load %arg21[%c0_130, %c1_131, %c0_132, %c0_133] : memref<2x2x64x128xbf16, #tpu.memory_space<vmem>>, vector<1x1x64x128xbf16>
    %159 = vector.shape_cast %158 : vector<1x1x64x128xbf16> to vector<64x128xbf16>
    %cst_134 = arith.constant dense<0.000000e+00> : vector<16x128xf32>
    %160 = tpu.matmul %157, %159, %cst_134 {dimension_numbers = #tpu.dot_dimension_numbers<[1], [0], [0], [1], [0, 0, 1, 1], [], []>} : vector<16x64xbf16>, vector<64x128xbf16>, vector<16x128xf32> -> vector<16x128xf32>
    %161 = arith.addf %119, %160 : vector<16x128xf32>
    %c0_135 = arith.constant 0 : index
    %c0_136 = arith.constant 0 : index
    %c0_137 = arith.constant 0 : index
    %162 = vector.load %arg22[%c0_135, %c0_136, %c0_137] : memref<2x1x128xf32, #tpu.memory_space<vmem>>, vector<1x1x128xf32>
    %163 = vector.shape_cast %162 : vector<1x1x128xf32> to vector<1x128xf32>
    %164 = vector.broadcast %163 : vector<1x128xf32> to vector<16x128xf32>
    %165 = arith.addf %161, %164 : vector<16x128xf32>
    %166 = arith.addf %75, %165 : vector<16x128xf32>
    %cst_138 = arith.constant dense<0.000000e+00> : vector<16xf32>
    %167 = vector.multi_reduction <add>, %166, %cst_138 [1] : vector<16x128xf32> to vector<16xf32>
    %168 = vector.shape_cast %167 : vector<16xf32> to vector<16x1xf32>
    %cst_139 = arith.constant 1.280000e+02 : f32
    %169 = vector.broadcast %cst_139 : f32 to vector<16x1xf32>
    %170 = arith.divf %168, %169 : vector<16x1xf32>
    %171 = vector.broadcast %170 : vector<16x1xf32> to vector<16x128xf32>
    %172 = arith.subf %166, %171 : vector<16x128xf32>
    %173 = arith.mulf %172, %172 : vector<16x128xf32>
    %cst_140 = arith.constant dense<0.000000e+00> : vector<16xf32>
    %174 = vector.multi_reduction <add>, %173, %cst_140 [1] : vector<16x128xf32> to vector<16xf32>
    %175 = vector.shape_cast %174 : vector<16xf32> to vector<16x1xf32>
    %cst_141 = arith.constant 1.280000e+02 : f32
    %176 = vector.broadcast %cst_141 : f32 to vector<16x1xf32>
    %177 = arith.divf %175, %176 : vector<16x1xf32>
    %178 = vector.broadcast %170 : vector<16x1xf32> to vector<16x128xf32>
    %179 = arith.subf %166, %178 : vector<16x128xf32>
    %cst_142 = arith.constant 9.99999974E-6 : f32
    %180 = vector.broadcast %cst_142 : f32 to vector<16x1xf32>
    %181 = arith.addf %177, %180 : vector<16x1xf32>
    %182 = math.rsqrt %181 : vector<16x1xf32>
    %183 = vector.broadcast %182 : vector<16x1xf32> to vector<16x128xf32>
    %184 = arith.mulf %179, %183 : vector<16x128xf32>
    %c0_143 = arith.constant 0 : index
    %c0_144 = arith.constant 0 : index
    %c0_145 = arith.constant 0 : index
    %185 = vector.load %arg23[%c0_143, %c0_144, %c0_145] : memref<2x128x128xbf16, #tpu.memory_space<vmem>>, vector<1x128x128xbf16>
    %186 = vector.shape_cast %185 : vector<1x128x128xbf16> to vector<128x128xbf16>
    %187 = arith.truncf %184 : vector<16x128xf32> to vector<16x128xbf16>
    %cst_146 = arith.constant dense<0.000000e+00> : vector<16x128xf32>
    %188 = tpu.matmul %187, %186, %cst_146 {dimension_numbers = #tpu.dot_dimension_numbers<[1], [0], [0], [1], [0, 0, 1, 1], [], []>} : vector<16x128xbf16>, vector<128x128xbf16>, vector<16x128xf32> -> vector<16x128xf32>
    %c0_147 = arith.constant 0 : index
    %c0_148 = arith.constant 0 : index
    %c0_149 = arith.constant 0 : index
    %189 = vector.load %arg24[%c0_147, %c0_148, %c0_149] : memref<2x1x128xf32, #tpu.memory_space<vmem>>, vector<1x1x128xf32>
    %190 = vector.shape_cast %189 : vector<1x1x128xf32> to vector<1x128xf32>
    %191 = vector.broadcast %190 : vector<1x128xf32> to vector<16x128xf32>
    %192 = arith.addf %188, %191 : vector<16x128xf32>
    %cst_150 = arith.constant 0.000000e+00 : f32
    %193 = vector.broadcast %cst_150 : f32 to vector<16x128xf32>
    %194 = arith.maximumf %192, %193 : vector<16x128xf32>
    %c0_151 = arith.constant 0 : index
    %c0_152 = arith.constant 0 : index
    %c0_153 = arith.constant 0 : index
    %195 = vector.load %arg25[%c0_151, %c0_152, %c0_153] : memref<2x128x128xbf16, #tpu.memory_space<vmem>>, vector<1x128x128xbf16>
    %196 = vector.shape_cast %195 : vector<1x128x128xbf16> to vector<128x128xbf16>
    %197 = arith.truncf %194 : vector<16x128xf32> to vector<16x128xbf16>
    %cst_154 = arith.constant dense<0.000000e+00> : vector<16x128xf32>
    %198 = tpu.matmul %197, %196, %cst_154 {dimension_numbers = #tpu.dot_dimension_numbers<[1], [0], [0], [1], [0, 0, 1, 1], [], []>} : vector<16x128xbf16>, vector<128x128xbf16>, vector<16x128xf32> -> vector<16x128xf32>
    %c0_155 = arith.constant 0 : index
    %c0_156 = arith.constant 0 : index
    %c0_157 = arith.constant 0 : index
    %199 = vector.load %arg26[%c0_155, %c0_156, %c0_157] : memref<2x1x128xf32, #tpu.memory_space<vmem>>, vector<1x1x128xf32>
    %200 = vector.shape_cast %199 : vector<1x1x128xf32> to vector<1x128xf32>
    %201 = vector.broadcast %200 : vector<1x128xf32> to vector<16x128xf32>
    %202 = arith.addf %198, %201 : vector<16x128xf32>
    %cst_158 = arith.constant 0.000000e+00 : f32
    %203 = vector.broadcast %cst_158 : f32 to vector<16x128xf32>
    %204 = arith.maximumf %202, %203 : vector<16x128xf32>
    %205 = arith.addf %204, %184 : vector<16x128xf32>
    %cst_159 = arith.constant dense<0.000000e+00> : vector<16xf32>
    %206 = vector.multi_reduction <add>, %205, %cst_159 [1] : vector<16x128xf32> to vector<16xf32>
    %207 = vector.shape_cast %206 : vector<16xf32> to vector<16x1xf32>
    %cst_160 = arith.constant 1.280000e+02 : f32
    %208 = vector.broadcast %cst_160 : f32 to vector<16x1xf32>
    %209 = arith.divf %207, %208 : vector<16x1xf32>
    %210 = vector.broadcast %209 : vector<16x1xf32> to vector<16x128xf32>
    %211 = arith.subf %205, %210 : vector<16x128xf32>
    %212 = arith.mulf %211, %211 : vector<16x128xf32>
    %cst_161 = arith.constant dense<0.000000e+00> : vector<16xf32>
    %213 = vector.multi_reduction <add>, %212, %cst_161 [1] : vector<16x128xf32> to vector<16xf32>
    %214 = vector.shape_cast %213 : vector<16xf32> to vector<16x1xf32>
    %cst_162 = arith.constant 1.280000e+02 : f32
    %215 = vector.broadcast %cst_162 : f32 to vector<16x1xf32>
    %216 = arith.divf %214, %215 : vector<16x1xf32>
    %217 = vector.broadcast %209 : vector<16x1xf32> to vector<16x128xf32>
    %218 = arith.subf %205, %217 : vector<16x128xf32>
    %cst_163 = arith.constant 9.99999974E-6 : f32
    %219 = vector.broadcast %cst_163 : f32 to vector<16x1xf32>
    %220 = arith.addf %216, %219 : vector<16x1xf32>
    %221 = math.rsqrt %220 : vector<16x1xf32>
    %222 = vector.broadcast %221 : vector<16x1xf32> to vector<16x128xf32>
    %223 = arith.mulf %218, %222 : vector<16x128xf32>
    %c0_164 = arith.constant 0 : index
    %c0_165 = arith.constant 0 : index
    %224 = vector.load %arg27[%c0_164, %c0_165] : memref<128x128xbf16, #tpu.memory_space<vmem>>, vector<128x128xbf16>
    %225 = arith.truncf %223 : vector<16x128xf32> to vector<16x128xbf16>
    %cst_166 = arith.constant dense<0.000000e+00> : vector<16x128xf32>
    %226 = tpu.matmul %225, %224, %cst_166 {dimension_numbers = #tpu.dot_dimension_numbers<[1], [0], [0], [1], [0, 0, 1, 1], [], []>} : vector<16x128xbf16>, vector<128x128xbf16>, vector<16x128xf32> -> vector<16x128xf32>
    %c0_167 = arith.constant 0 : index
    %c0_168 = arith.constant 0 : index
    %227 = vector.load %arg28[%c0_167, %c0_168] : memref<128x128xbf16, #tpu.memory_space<vmem>>, vector<128x128xbf16>
    %228 = arith.truncf %75 : vector<16x128xf32> to vector<16x128xbf16>
    %cst_169 = arith.constant dense<0.000000e+00> : vector<16x128xf32>
    %229 = tpu.matmul %228, %227, %cst_169 {dimension_numbers = #tpu.dot_dimension_numbers<[1], [0], [0], [1], [0, 0, 1, 1], [], []>} : vector<16x128xbf16>, vector<128x128xbf16>, vector<16x128xf32> -> vector<16x128xf32>
    %230 = arith.addf %226, %229 : vector<16x128xf32>
    %c0_170 = arith.constant 0 : index
    %c0_171 = arith.constant 0 : index
    %231 = vector.load %arg29[%c0_170, %c0_171] : memref<1x128xf32, #tpu.memory_space<vmem>>, vector<1x128xf32>
    %232 = vector.broadcast %231 : vector<1x128xf32> to vector<16x128xf32>
    %233 = arith.addf %230, %232 : vector<16x128xf32>
    %234 = arith.negf %233 : vector<16x128xf32>
    %235 = math.exp %234 : vector<16x128xf32>
    %cst_172 = arith.constant 1.000000e+00 : f32
    %236 = vector.broadcast %cst_172 : f32 to vector<16x128xf32>
    %237 = arith.addf %236, %235 : vector<16x128xf32>
    %238 = arith.divf %236, %237 : vector<16x128xf32>
    %239 = arith.mulf %238, %223 : vector<16x128xf32>
    %cst_173 = arith.constant 1.000000e+00 : f32
    %240 = vector.broadcast %cst_173 : f32 to vector<16x128xf32>
    %241 = arith.subf %240, %238 : vector<16x128xf32>
    %242 = arith.mulf %241, %75 : vector<16x128xf32>
    %243 = arith.addf %239, %242 : vector<16x128xf32>
    %244 = arith.truncf %243 : vector<16x128xf32> to vector<16x128xbf16>
    %cst_174 = arith.constant 0.000000e+00 : f32
    %245 = vector.broadcast %cst_174 : f32 to vector<16x128xf32>
    %c1_175 = arith.constant 1 : index
    %c0_176 = arith.constant 0 : index
    %c0_177 = arith.constant 0 : index
    %c0_178 = arith.constant 0 : index
    %c0_179 = arith.constant 0 : index
    %246 = vector.load %arg19[%c1_175, %c0_176, %c0_177, %c0_178, %c0_179] : memref<2x3x2x128x64xbf16, #tpu.memory_space<vmem>>, vector<1x1x1x128x64xbf16>
    %247 = vector.shape_cast %246 : vector<1x1x1x128x64xbf16> to vector<128x64xbf16>
    %cst_180 = arith.constant dense<0.000000e+00> : vector<16x64xf32>
    %248 = tpu.matmul %244, %247, %cst_180 {dimension_numbers = #tpu.dot_dimension_numbers<[1], [0], [0], [1], [0, 0, 1, 1], [], []>} : vector<16x128xbf16>, vector<128x64xbf16>, vector<16x64xf32> -> vector<16x64xf32>
    %c1_181 = arith.constant 1 : index
    %c0_182 = arith.constant 0 : index
    %c0_183 = arith.constant 0 : index
    %c0_184 = arith.constant 0 : index
    %c0_185 = arith.constant 0 : index
    %249 = vector.load %arg20[%c1_181, %c0_182, %c0_183, %c0_184, %c0_185] : memref<2x3x2x1x64xf32, #tpu.memory_space<vmem>>, vector<1x1x1x1x64xf32>
    %250 = vector.shape_cast %249 : vector<1x1x1x1x64xf32> to vector<1x64xf32>
    %251 = vector.broadcast %250 : vector<1x64xf32> to vector<16x64xf32>
    %252 = arith.addf %248, %251 : vector<16x64xf32>
    %c1_186 = arith.constant 1 : index
    %c1_187 = arith.constant 1 : index
    %c0_188 = arith.constant 0 : index
    %c0_189 = arith.constant 0 : index
    %c0_190 = arith.constant 0 : index
    %253 = vector.load %arg19[%c1_186, %c1_187, %c0_188, %c0_189, %c0_190] : memref<2x3x2x128x64xbf16, #tpu.memory_space<vmem>>, vector<1x1x1x128x64xbf16>
    %254 = vector.shape_cast %253 : vector<1x1x1x128x64xbf16> to vector<128x64xbf16>
    %cst_191 = arith.constant dense<0.000000e+00> : vector<16x64xf32>
    %255 = tpu.matmul %244, %254, %cst_191 {dimension_numbers = #tpu.dot_dimension_numbers<[1], [0], [0], [1], [0, 0, 1, 1], [], []>} : vector<16x128xbf16>, vector<128x64xbf16>, vector<16x64xf32> -> vector<16x64xf32>
    %c1_192 = arith.constant 1 : index
    %c1_193 = arith.constant 1 : index
    %c0_194 = arith.constant 0 : index
    %c0_195 = arith.constant 0 : index
    %c0_196 = arith.constant 0 : index
    %256 = vector.load %arg20[%c1_192, %c1_193, %c0_194, %c0_195, %c0_196] : memref<2x3x2x1x64xf32, #tpu.memory_space<vmem>>, vector<1x1x1x1x64xf32>
    %257 = vector.shape_cast %256 : vector<1x1x1x1x64xf32> to vector<1x64xf32>
    %258 = vector.broadcast %257 : vector<1x64xf32> to vector<16x64xf32>
    %259 = arith.addf %255, %258 : vector<16x64xf32>
    %c1_197 = arith.constant 1 : index
    %c2_198 = arith.constant 2 : index
    %c0_199 = arith.constant 0 : index
    %c0_200 = arith.constant 0 : index
    %c0_201 = arith.constant 0 : index
    %260 = vector.load %arg19[%c1_197, %c2_198, %c0_199, %c0_200, %c0_201] : memref<2x3x2x128x64xbf16, #tpu.memory_space<vmem>>, vector<1x1x1x128x64xbf16>
    %261 = vector.shape_cast %260 : vector<1x1x1x128x64xbf16> to vector<128x64xbf16>
    %cst_202 = arith.constant dense<0.000000e+00> : vector<16x64xf32>
    %262 = tpu.matmul %244, %261, %cst_202 {dimension_numbers = #tpu.dot_dimension_numbers<[1], [0], [0], [1], [0, 0, 1, 1], [], []>} : vector<16x128xbf16>, vector<128x64xbf16>, vector<16x64xf32> -> vector<16x64xf32>
    %c1_203 = arith.constant 1 : index
    %c2_204 = arith.constant 2 : index
    %c0_205 = arith.constant 0 : index
    %c0_206 = arith.constant 0 : index
    %c0_207 = arith.constant 0 : index
    %263 = vector.load %arg20[%c1_203, %c2_204, %c0_205, %c0_206, %c0_207] : memref<2x3x2x1x64xf32, #tpu.memory_space<vmem>>, vector<1x1x1x1x64xf32>
    %264 = vector.shape_cast %263 : vector<1x1x1x1x64xf32> to vector<1x64xf32>
    %265 = vector.broadcast %264 : vector<1x64xf32> to vector<16x64xf32>
    %266 = arith.addf %262, %265 : vector<16x64xf32>
    %267 = arith.truncf %252 : vector<16x64xf32> to vector<16x64xbf16>
    %268 = arith.truncf %259 : vector<16x64xf32> to vector<16x64xbf16>
    %cst_208 = arith.constant dense<0.000000e+00> : vector<16x16xf32>
    %269 = tpu.matmul %267, %268, %cst_208 {dimension_numbers = #tpu.dot_dimension_numbers<[1], [1], [0], [0], [0, 0, 1, 0], [], []>} : vector<16x64xbf16>, vector<16x64xbf16>, vector<16x16xf32> -> vector<16x16xf32>
    %cst_209 = arith.constant dense<0xFF800000> : vector<16xf32>
    %270 = vector.multi_reduction <maximumf>, %269, %cst_209 [1] : vector<16x16xf32> to vector<16xf32>
    %271 = vector.shape_cast %270 : vector<16xf32> to vector<16x1xf32>
    %272 = vector.broadcast %271 : vector<16x1xf32> to vector<16x16xf32>
    %273 = arith.subf %269, %272 : vector<16x16xf32>
    %274 = math.exp %273 : vector<16x16xf32>
    %cst_210 = arith.constant dense<0.000000e+00> : vector<16xf32>
    %275 = vector.multi_reduction <add>, %274, %cst_210 [1] : vector<16x16xf32> to vector<16xf32>
    %276 = vector.shape_cast %275 : vector<16xf32> to vector<16x1xf32>
    %277 = tpu.reciprocal %276 {approx = true} : vector<16x1xf32> -> vector<16x1xf32>
    %278 = vector.broadcast %277 : vector<16x1xf32> to vector<16x16xf32>
    %279 = arith.mulf %274, %278 : vector<16x16xf32>
    %280 = arith.truncf %279 : vector<16x16xf32> to vector<16x16xbf16>
    %281 = arith.truncf %266 : vector<16x64xf32> to vector<16x64xbf16>
    %cst_211 = arith.constant dense<0.000000e+00> : vector<16x64xf32>
    %282 = tpu.matmul %280, %281, %cst_211 {dimension_numbers = #tpu.dot_dimension_numbers<[1], [0], [0], [1], [0, 0, 1, 1], [], []>} : vector<16x16xbf16>, vector<16x64xbf16>, vector<16x64xf32> -> vector<16x64xf32>
    %283 = arith.truncf %282 : vector<16x64xf32> to vector<16x64xbf16>
    %c1_212 = arith.constant 1 : index
    %c0_213 = arith.constant 0 : index
    %c0_214 = arith.constant 0 : index
    %c0_215 = arith.constant 0 : index
    %284 = vector.load %arg21[%c1_212, %c0_213, %c0_214, %c0_215] : memref<2x2x64x128xbf16, #tpu.memory_space<vmem>>, vector<1x1x64x128xbf16>
    %285 = vector.shape_cast %284 : vector<1x1x64x128xbf16> to vector<64x128xbf16>
    %cst_216 = arith.constant dense<0.000000e+00> : vector<16x128xf32>
    %286 = tpu.matmul %283, %285, %cst_216 {dimension_numbers = #tpu.dot_dimension_numbers<[1], [0], [0], [1], [0, 0, 1, 1], [], []>} : vector<16x64xbf16>, vector<64x128xbf16>, vector<16x128xf32> -> vector<16x128xf32>
    %287 = arith.addf %245, %286 : vector<16x128xf32>
    %c1_217 = arith.constant 1 : index
    %c0_218 = arith.constant 0 : index
    %c1_219 = arith.constant 1 : index
    %c0_220 = arith.constant 0 : index
    %c0_221 = arith.constant 0 : index
    %288 = vector.load %arg19[%c1_217, %c0_218, %c1_219, %c0_220, %c0_221] : memref<2x3x2x128x64xbf16, #tpu.memory_space<vmem>>, vector<1x1x1x128x64xbf16>
    %289 = vector.shape_cast %288 : vector<1x1x1x128x64xbf16> to vector<128x64xbf16>
    %cst_222 = arith.constant dense<0.000000e+00> : vector<16x64xf32>
    %290 = tpu.matmul %244, %289, %cst_222 {dimension_numbers = #tpu.dot_dimension_numbers<[1], [0], [0], [1], [0, 0, 1, 1], [], []>} : vector<16x128xbf16>, vector<128x64xbf16>, vector<16x64xf32> -> vector<16x64xf32>
    %c1_223 = arith.constant 1 : index
    %c0_224 = arith.constant 0 : index
    %c1_225 = arith.constant 1 : index
    %c0_226 = arith.constant 0 : index
    %c0_227 = arith.constant 0 : index
    %291 = vector.load %arg20[%c1_223, %c0_224, %c1_225, %c0_226, %c0_227] : memref<2x3x2x1x64xf32, #tpu.memory_space<vmem>>, vector<1x1x1x1x64xf32>
    %292 = vector.shape_cast %291 : vector<1x1x1x1x64xf32> to vector<1x64xf32>
    %293 = vector.broadcast %292 : vector<1x64xf32> to vector<16x64xf32>
    %294 = arith.addf %290, %293 : vector<16x64xf32>
    %c1_228 = arith.constant 1 : index
    %c1_229 = arith.constant 1 : index
    %c1_230 = arith.constant 1 : index
    %c0_231 = arith.constant 0 : index
    %c0_232 = arith.constant 0 : index
    %295 = vector.load %arg19[%c1_228, %c1_229, %c1_230, %c0_231, %c0_232] : memref<2x3x2x128x64xbf16, #tpu.memory_space<vmem>>, vector<1x1x1x128x64xbf16>
    %296 = vector.shape_cast %295 : vector<1x1x1x128x64xbf16> to vector<128x64xbf16>
    %cst_233 = arith.constant dense<0.000000e+00> : vector<16x64xf32>
    %297 = tpu.matmul %244, %296, %cst_233 {dimension_numbers = #tpu.dot_dimension_numbers<[1], [0], [0], [1], [0, 0, 1, 1], [], []>} : vector<16x128xbf16>, vector<128x64xbf16>, vector<16x64xf32> -> vector<16x64xf32>
    %c1_234 = arith.constant 1 : index
    %c1_235 = arith.constant 1 : index
    %c1_236 = arith.constant 1 : index
    %c0_237 = arith.constant 0 : index
    %c0_238 = arith.constant 0 : index
    %298 = vector.load %arg20[%c1_234, %c1_235, %c1_236, %c0_237, %c0_238] : memref<2x3x2x1x64xf32, #tpu.memory_space<vmem>>, vector<1x1x1x1x64xf32>
    %299 = vector.shape_cast %298 : vector<1x1x1x1x64xf32> to vector<1x64xf32>
    %300 = vector.broadcast %299 : vector<1x64xf32> to vector<16x64xf32>
    %301 = arith.addf %297, %300 : vector<16x64xf32>
    %c1_239 = arith.constant 1 : index
    %c2_240 = arith.constant 2 : index
    %c1_241 = arith.constant 1 : index
    %c0_242 = arith.constant 0 : index
    %c0_243 = arith.constant 0 : index
    %302 = vector.load %arg19[%c1_239, %c2_240, %c1_241, %c0_242, %c0_243] : memref<2x3x2x128x64xbf16, #tpu.memory_space<vmem>>, vector<1x1x1x128x64xbf16>
    %303 = vector.shape_cast %302 : vector<1x1x1x128x64xbf16> to vector<128x64xbf16>
    %cst_244 = arith.constant dense<0.000000e+00> : vector<16x64xf32>
    %304 = tpu.matmul %244, %303, %cst_244 {dimension_numbers = #tpu.dot_dimension_numbers<[1], [0], [0], [1], [0, 0, 1, 1], [], []>} : vector<16x128xbf16>, vector<128x64xbf16>, vector<16x64xf32> -> vector<16x64xf32>
    %c1_245 = arith.constant 1 : index
    %c2_246 = arith.constant 2 : index
    %c1_247 = arith.constant 1 : index
    %c0_248 = arith.constant 0 : index
    %c0_249 = arith.constant 0 : index
    %305 = vector.load %arg20[%c1_245, %c2_246, %c1_247, %c0_248, %c0_249] : memref<2x3x2x1x64xf32, #tpu.memory_space<vmem>>, vector<1x1x1x1x64xf32>
    %306 = vector.shape_cast %305 : vector<1x1x1x1x64xf32> to vector<1x64xf32>
    %307 = vector.broadcast %306 : vector<1x64xf32> to vector<16x64xf32>
    %308 = arith.addf %304, %307 : vector<16x64xf32>
    %309 = arith.truncf %294 : vector<16x64xf32> to vector<16x64xbf16>
    %310 = arith.truncf %301 : vector<16x64xf32> to vector<16x64xbf16>
    %cst_250 = arith.constant dense<0.000000e+00> : vector<16x16xf32>
    %311 = tpu.matmul %309, %310, %cst_250 {dimension_numbers = #tpu.dot_dimension_numbers<[1], [1], [0], [0], [0, 0, 1, 0], [], []>} : vector<16x64xbf16>, vector<16x64xbf16>, vector<16x16xf32> -> vector<16x16xf32>
    %cst_251 = arith.constant dense<0xFF800000> : vector<16xf32>
    %312 = vector.multi_reduction <maximumf>, %311, %cst_251 [1] : vector<16x16xf32> to vector<16xf32>
    %313 = vector.shape_cast %312 : vector<16xf32> to vector<16x1xf32>
    %314 = vector.broadcast %313 : vector<16x1xf32> to vector<16x16xf32>
    %315 = arith.subf %311, %314 : vector<16x16xf32>
    %316 = math.exp %315 : vector<16x16xf32>
    %cst_252 = arith.constant dense<0.000000e+00> : vector<16xf32>
    %317 = vector.multi_reduction <add>, %316, %cst_252 [1] : vector<16x16xf32> to vector<16xf32>
    %318 = vector.shape_cast %317 : vector<16xf32> to vector<16x1xf32>
    %319 = tpu.reciprocal %318 {approx = true} : vector<16x1xf32> -> vector<16x1xf32>
    %320 = vector.broadcast %319 : vector<16x1xf32> to vector<16x16xf32>
    %321 = arith.mulf %316, %320 : vector<16x16xf32>
    %322 = arith.truncf %321 : vector<16x16xf32> to vector<16x16xbf16>
    %323 = arith.truncf %308 : vector<16x64xf32> to vector<16x64xbf16>
    %cst_253 = arith.constant dense<0.000000e+00> : vector<16x64xf32>
    %324 = tpu.matmul %322, %323, %cst_253 {dimension_numbers = #tpu.dot_dimension_numbers<[1], [0], [0], [1], [0, 0, 1, 1], [], []>} : vector<16x16xbf16>, vector<16x64xbf16>, vector<16x64xf32> -> vector<16x64xf32>
    %325 = arith.truncf %324 : vector<16x64xf32> to vector<16x64xbf16>
    %c1_254 = arith.constant 1 : index
    %c1_255 = arith.constant 1 : index
    %c0_256 = arith.constant 0 : index
    %c0_257 = arith.constant 0 : index
    %326 = vector.load %arg21[%c1_254, %c1_255, %c0_256, %c0_257] : memref<2x2x64x128xbf16, #tpu.memory_space<vmem>>, vector<1x1x64x128xbf16>
    %327 = vector.shape_cast %326 : vector<1x1x64x128xbf16> to vector<64x128xbf16>
    %cst_258 = arith.constant dense<0.000000e+00> : vector<16x128xf32>
    %328 = tpu.matmul %325, %327, %cst_258 {dimension_numbers = #tpu.dot_dimension_numbers<[1], [0], [0], [1], [0, 0, 1, 1], [], []>} : vector<16x64xbf16>, vector<64x128xbf16>, vector<16x128xf32> -> vector<16x128xf32>
    %329 = arith.addf %287, %328 : vector<16x128xf32>
    %c1_259 = arith.constant 1 : index
    %c0_260 = arith.constant 0 : index
    %c0_261 = arith.constant 0 : index
    %330 = vector.load %arg22[%c1_259, %c0_260, %c0_261] : memref<2x1x128xf32, #tpu.memory_space<vmem>>, vector<1x1x128xf32>
    %331 = vector.shape_cast %330 : vector<1x1x128xf32> to vector<1x128xf32>
    %332 = vector.broadcast %331 : vector<1x128xf32> to vector<16x128xf32>
    %333 = arith.addf %329, %332 : vector<16x128xf32>
    %334 = arith.addf %243, %333 : vector<16x128xf32>
    %cst_262 = arith.constant dense<0.000000e+00> : vector<16xf32>
    %335 = vector.multi_reduction <add>, %334, %cst_262 [1] : vector<16x128xf32> to vector<16xf32>
    %336 = vector.shape_cast %335 : vector<16xf32> to vector<16x1xf32>
    %cst_263 = arith.constant 1.280000e+02 : f32
    %337 = vector.broadcast %cst_263 : f32 to vector<16x1xf32>
    %338 = arith.divf %336, %337 : vector<16x1xf32>
    %339 = vector.broadcast %338 : vector<16x1xf32> to vector<16x128xf32>
    %340 = arith.subf %334, %339 : vector<16x128xf32>
    %341 = arith.mulf %340, %340 : vector<16x128xf32>
    %cst_264 = arith.constant dense<0.000000e+00> : vector<16xf32>
    %342 = vector.multi_reduction <add>, %341, %cst_264 [1] : vector<16x128xf32> to vector<16xf32>
    %343 = vector.shape_cast %342 : vector<16xf32> to vector<16x1xf32>
    %cst_265 = arith.constant 1.280000e+02 : f32
    %344 = vector.broadcast %cst_265 : f32 to vector<16x1xf32>
    %345 = arith.divf %343, %344 : vector<16x1xf32>
    %346 = vector.broadcast %338 : vector<16x1xf32> to vector<16x128xf32>
    %347 = arith.subf %334, %346 : vector<16x128xf32>
    %cst_266 = arith.constant 9.99999974E-6 : f32
    %348 = vector.broadcast %cst_266 : f32 to vector<16x1xf32>
    %349 = arith.addf %345, %348 : vector<16x1xf32>
    %350 = math.rsqrt %349 : vector<16x1xf32>
    %351 = vector.broadcast %350 : vector<16x1xf32> to vector<16x128xf32>
    %352 = arith.mulf %347, %351 : vector<16x128xf32>
    %c1_267 = arith.constant 1 : index
    %c0_268 = arith.constant 0 : index
    %c0_269 = arith.constant 0 : index
    %353 = vector.load %arg23[%c1_267, %c0_268, %c0_269] : memref<2x128x128xbf16, #tpu.memory_space<vmem>>, vector<1x128x128xbf16>
    %354 = vector.shape_cast %353 : vector<1x128x128xbf16> to vector<128x128xbf16>
    %355 = arith.truncf %352 : vector<16x128xf32> to vector<16x128xbf16>
    %cst_270 = arith.constant dense<0.000000e+00> : vector<16x128xf32>
    %356 = tpu.matmul %355, %354, %cst_270 {dimension_numbers = #tpu.dot_dimension_numbers<[1], [0], [0], [1], [0, 0, 1, 1], [], []>} : vector<16x128xbf16>, vector<128x128xbf16>, vector<16x128xf32> -> vector<16x128xf32>
    %c1_271 = arith.constant 1 : index
    %c0_272 = arith.constant 0 : index
    %c0_273 = arith.constant 0 : index
    %357 = vector.load %arg24[%c1_271, %c0_272, %c0_273] : memref<2x1x128xf32, #tpu.memory_space<vmem>>, vector<1x1x128xf32>
    %358 = vector.shape_cast %357 : vector<1x1x128xf32> to vector<1x128xf32>
    %359 = vector.broadcast %358 : vector<1x128xf32> to vector<16x128xf32>
    %360 = arith.addf %356, %359 : vector<16x128xf32>
    %cst_274 = arith.constant 0.000000e+00 : f32
    %361 = vector.broadcast %cst_274 : f32 to vector<16x128xf32>
    %362 = arith.maximumf %360, %361 : vector<16x128xf32>
    %c1_275 = arith.constant 1 : index
    %c0_276 = arith.constant 0 : index
    %c0_277 = arith.constant 0 : index
    %363 = vector.load %arg25[%c1_275, %c0_276, %c0_277] : memref<2x128x128xbf16, #tpu.memory_space<vmem>>, vector<1x128x128xbf16>
    %364 = vector.shape_cast %363 : vector<1x128x128xbf16> to vector<128x128xbf16>
    %365 = arith.truncf %362 : vector<16x128xf32> to vector<16x128xbf16>
    %cst_278 = arith.constant dense<0.000000e+00> : vector<16x128xf32>
    %366 = tpu.matmul %365, %364, %cst_278 {dimension_numbers = #tpu.dot_dimension_numbers<[1], [0], [0], [1], [0, 0, 1, 1], [], []>} : vector<16x128xbf16>, vector<128x128xbf16>, vector<16x128xf32> -> vector<16x128xf32>
    %c1_279 = arith.constant 1 : index
    %c0_280 = arith.constant 0 : index
    %c0_281 = arith.constant 0 : index
    %367 = vector.load %arg26[%c1_279, %c0_280, %c0_281] : memref<2x1x128xf32, #tpu.memory_space<vmem>>, vector<1x1x128xf32>
    %368 = vector.shape_cast %367 : vector<1x1x128xf32> to vector<1x128xf32>
    %369 = vector.broadcast %368 : vector<1x128xf32> to vector<16x128xf32>
    %370 = arith.addf %366, %369 : vector<16x128xf32>
    %cst_282 = arith.constant 0.000000e+00 : f32
    %371 = vector.broadcast %cst_282 : f32 to vector<16x128xf32>
    %372 = arith.maximumf %370, %371 : vector<16x128xf32>
    %373 = arith.addf %372, %352 : vector<16x128xf32>
    %cst_283 = arith.constant dense<0.000000e+00> : vector<16xf32>
    %374 = vector.multi_reduction <add>, %373, %cst_283 [1] : vector<16x128xf32> to vector<16xf32>
    %375 = vector.shape_cast %374 : vector<16xf32> to vector<16x1xf32>
    %cst_284 = arith.constant 1.280000e+02 : f32
    %376 = vector.broadcast %cst_284 : f32 to vector<16x1xf32>
    %377 = arith.divf %375, %376 : vector<16x1xf32>
    %378 = vector.broadcast %377 : vector<16x1xf32> to vector<16x128xf32>
    %379 = arith.subf %373, %378 : vector<16x128xf32>
    %380 = arith.mulf %379, %379 : vector<16x128xf32>
    %cst_285 = arith.constant dense<0.000000e+00> : vector<16xf32>
    %381 = vector.multi_reduction <add>, %380, %cst_285 [1] : vector<16x128xf32> to vector<16xf32>
    %382 = vector.shape_cast %381 : vector<16xf32> to vector<16x1xf32>
    %cst_286 = arith.constant 1.280000e+02 : f32
    %383 = vector.broadcast %cst_286 : f32 to vector<16x1xf32>
    %384 = arith.divf %382, %383 : vector<16x1xf32>
    %385 = vector.broadcast %377 : vector<16x1xf32> to vector<16x128xf32>
    %386 = arith.subf %373, %385 : vector<16x128xf32>
    %cst_287 = arith.constant 9.99999974E-6 : f32
    %387 = vector.broadcast %cst_287 : f32 to vector<16x1xf32>
    %388 = arith.addf %384, %387 : vector<16x1xf32>
    %389 = math.rsqrt %388 : vector<16x1xf32>
    %390 = vector.broadcast %389 : vector<16x1xf32> to vector<16x128xf32>
    %391 = arith.mulf %386, %390 : vector<16x128xf32>
    %c0_288 = arith.constant 0 : index
    %c0_289 = arith.constant 0 : index
    %392 = vector.load %arg27[%c0_288, %c0_289] : memref<128x128xbf16, #tpu.memory_space<vmem>>, vector<128x128xbf16>
    %393 = arith.truncf %391 : vector<16x128xf32> to vector<16x128xbf16>
    %cst_290 = arith.constant dense<0.000000e+00> : vector<16x128xf32>
    %394 = tpu.matmul %393, %392, %cst_290 {dimension_numbers = #tpu.dot_dimension_numbers<[1], [0], [0], [1], [0, 0, 1, 1], [], []>} : vector<16x128xbf16>, vector<128x128xbf16>, vector<16x128xf32> -> vector<16x128xf32>
    %c0_291 = arith.constant 0 : index
    %c0_292 = arith.constant 0 : index
    %395 = vector.load %arg28[%c0_291, %c0_292] : memref<128x128xbf16, #tpu.memory_space<vmem>>, vector<128x128xbf16>
    %396 = arith.truncf %243 : vector<16x128xf32> to vector<16x128xbf16>
    %cst_293 = arith.constant dense<0.000000e+00> : vector<16x128xf32>
    %397 = tpu.matmul %396, %395, %cst_293 {dimension_numbers = #tpu.dot_dimension_numbers<[1], [0], [0], [1], [0, 0, 1, 1], [], []>} : vector<16x128xbf16>, vector<128x128xbf16>, vector<16x128xf32> -> vector<16x128xf32>
    %398 = arith.addf %394, %397 : vector<16x128xf32>
    %c0_294 = arith.constant 0 : index
    %c0_295 = arith.constant 0 : index
    %399 = vector.load %arg29[%c0_294, %c0_295] : memref<1x128xf32, #tpu.memory_space<vmem>>, vector<1x128xf32>
    %400 = vector.broadcast %399 : vector<1x128xf32> to vector<16x128xf32>
    %401 = arith.addf %398, %400 : vector<16x128xf32>
    %402 = arith.negf %401 : vector<16x128xf32>
    %403 = math.exp %402 : vector<16x128xf32>
    %cst_296 = arith.constant 1.000000e+00 : f32
    %404 = vector.broadcast %cst_296 : f32 to vector<16x128xf32>
    %405 = arith.addf %404, %403 : vector<16x128xf32>
    %406 = arith.divf %404, %405 : vector<16x128xf32>
    %407 = arith.mulf %406, %391 : vector<16x128xf32>
    %cst_297 = arith.constant 1.000000e+00 : f32
    %408 = vector.broadcast %cst_297 : f32 to vector<16x128xf32>
    %409 = arith.subf %408, %406 : vector<16x128xf32>
    %410 = arith.mulf %409, %243 : vector<16x128xf32>
    %411 = arith.addf %407, %410 : vector<16x128xf32>
    %c0_298 = arith.constant 0 : index
    %c0_299 = arith.constant 0 : index
    %412 = vector.load %arg12[%c0_298, %c0_299] : memref<8x16xf32, #tpu.memory_space<vmem>>, vector<8x16xf32>
    %cst_300 = arith.constant dense<0.000000e+00> : vector<8x128xf32>
    %413 = tpu.matmul %412, %411, %cst_300 {dimension_numbers = #tpu.dot_dimension_numbers<[1], [0], [0], [1], [0, 0, 1, 1], [], []>} : vector<8x16xf32>, vector<16x128xf32>, vector<8x128xf32> -> vector<8x128xf32>
    %cst_301 = arith.constant dense<0.000000e+00> : vector<8xf32>
    %414 = vector.multi_reduction <add>, %413, %cst_301 [1] : vector<8x128xf32> to vector<8xf32>
    %415 = vector.shape_cast %414 : vector<8xf32> to vector<8x1xf32>
    %cst_302 = arith.constant 1.280000e+02 : f32
    %416 = vector.broadcast %cst_302 : f32 to vector<8x1xf32>
    %417 = arith.divf %415, %416 : vector<8x1xf32>
    %418 = vector.broadcast %417 : vector<8x1xf32> to vector<8x128xf32>
    %419 = arith.subf %413, %418 : vector<8x128xf32>
    %420 = arith.mulf %419, %419 : vector<8x128xf32>
    %cst_303 = arith.constant dense<0.000000e+00> : vector<8xf32>
    %421 = vector.multi_reduction <add>, %420, %cst_303 [1] : vector<8x128xf32> to vector<8xf32>
    %422 = vector.shape_cast %421 : vector<8xf32> to vector<8x1xf32>
    %cst_304 = arith.constant 1.280000e+02 : f32
    %423 = vector.broadcast %cst_304 : f32 to vector<8x1xf32>
    %424 = arith.divf %422, %423 : vector<8x1xf32>
    %425 = vector.broadcast %417 : vector<8x1xf32> to vector<8x128xf32>
    %426 = arith.subf %413, %425 : vector<8x128xf32>
    %cst_305 = arith.constant 9.99999974E-6 : f32
    %427 = vector.broadcast %cst_305 : f32 to vector<8x1xf32>
    %428 = arith.addf %424, %427 : vector<8x1xf32>
    %429 = math.rsqrt %428 : vector<8x1xf32>
    %430 = vector.broadcast %429 : vector<8x1xf32> to vector<8x128xf32>
    %431 = arith.mulf %426, %430 : vector<8x128xf32>
    %432 = arith.truncf %431 : vector<8x128xf32> to vector<8x128xbf16>
    %cst_306 = arith.constant 0.000000e+00 : f32
    %433 = vector.broadcast %cst_306 : f32 to vector<8x128xf32>
    %c0_307 = arith.constant 0 : index
    %c0_308 = arith.constant 0 : index
    %c0_309 = arith.constant 0 : index
    %c0_310 = arith.constant 0 : index
    %434 = vector.load %arg30[%c0_307, %c0_308, %c0_309, %c0_310] : memref<3x2x128x64xbf16, #tpu.memory_space<vmem>>, vector<1x1x128x64xbf16>
    %435 = vector.shape_cast %434 : vector<1x1x128x64xbf16> to vector<128x64xbf16>
    %cst_311 = arith.constant dense<0.000000e+00> : vector<8x64xf32>
    %436 = tpu.matmul %432, %435, %cst_311 {dimension_numbers = #tpu.dot_dimension_numbers<[1], [0], [0], [1], [0, 0, 1, 1], [], []>} : vector<8x128xbf16>, vector<128x64xbf16>, vector<8x64xf32> -> vector<8x64xf32>
    %c0_312 = arith.constant 0 : index
    %c0_313 = arith.constant 0 : index
    %c0_314 = arith.constant 0 : index
    %c0_315 = arith.constant 0 : index
    %437 = vector.load %arg31[%c0_312, %c0_313, %c0_314, %c0_315] : memref<3x2x1x64xf32, #tpu.memory_space<vmem>>, vector<1x1x1x64xf32>
    %438 = vector.shape_cast %437 : vector<1x1x1x64xf32> to vector<1x64xf32>
    %439 = vector.broadcast %438 : vector<1x64xf32> to vector<8x64xf32>
    %440 = arith.addf %436, %439 : vector<8x64xf32>
    %c1_316 = arith.constant 1 : index
    %c0_317 = arith.constant 0 : index
    %c0_318 = arith.constant 0 : index
    %c0_319 = arith.constant 0 : index
    %441 = vector.load %arg30[%c1_316, %c0_317, %c0_318, %c0_319] : memref<3x2x128x64xbf16, #tpu.memory_space<vmem>>, vector<1x1x128x64xbf16>
    %442 = vector.shape_cast %441 : vector<1x1x128x64xbf16> to vector<128x64xbf16>
    %cst_320 = arith.constant dense<0.000000e+00> : vector<8x64xf32>
    %443 = tpu.matmul %432, %442, %cst_320 {dimension_numbers = #tpu.dot_dimension_numbers<[1], [0], [0], [1], [0, 0, 1, 1], [], []>} : vector<8x128xbf16>, vector<128x64xbf16>, vector<8x64xf32> -> vector<8x64xf32>
    %c1_321 = arith.constant 1 : index
    %c0_322 = arith.constant 0 : index
    %c0_323 = arith.constant 0 : index
    %c0_324 = arith.constant 0 : index
    %444 = vector.load %arg31[%c1_321, %c0_322, %c0_323, %c0_324] : memref<3x2x1x64xf32, #tpu.memory_space<vmem>>, vector<1x1x1x64xf32>
    %445 = vector.shape_cast %444 : vector<1x1x1x64xf32> to vector<1x64xf32>
    %446 = vector.broadcast %445 : vector<1x64xf32> to vector<8x64xf32>
    %447 = arith.addf %443, %446 : vector<8x64xf32>
    %c2_325 = arith.constant 2 : index
    %c0_326 = arith.constant 0 : index
    %c0_327 = arith.constant 0 : index
    %c0_328 = arith.constant 0 : index
    %448 = vector.load %arg30[%c2_325, %c0_326, %c0_327, %c0_328] : memref<3x2x128x64xbf16, #tpu.memory_space<vmem>>, vector<1x1x128x64xbf16>
    %449 = vector.shape_cast %448 : vector<1x1x128x64xbf16> to vector<128x64xbf16>
    %cst_329 = arith.constant dense<0.000000e+00> : vector<8x64xf32>
    %450 = tpu.matmul %432, %449, %cst_329 {dimension_numbers = #tpu.dot_dimension_numbers<[1], [0], [0], [1], [0, 0, 1, 1], [], []>} : vector<8x128xbf16>, vector<128x64xbf16>, vector<8x64xf32> -> vector<8x64xf32>
    %c2_330 = arith.constant 2 : index
    %c0_331 = arith.constant 0 : index
    %c0_332 = arith.constant 0 : index
    %c0_333 = arith.constant 0 : index
    %451 = vector.load %arg31[%c2_330, %c0_331, %c0_332, %c0_333] : memref<3x2x1x64xf32, #tpu.memory_space<vmem>>, vector<1x1x1x64xf32>
    %452 = vector.shape_cast %451 : vector<1x1x1x64xf32> to vector<1x64xf32>
    %453 = vector.broadcast %452 : vector<1x64xf32> to vector<8x64xf32>
    %454 = arith.addf %450, %453 : vector<8x64xf32>
    %455 = arith.truncf %440 : vector<8x64xf32> to vector<8x64xbf16>
    %456 = arith.truncf %447 : vector<8x64xf32> to vector<8x64xbf16>
    %cst_334 = arith.constant dense<0.000000e+00> : vector<8x8xf32>
    %457 = tpu.matmul %455, %456, %cst_334 {dimension_numbers = #tpu.dot_dimension_numbers<[1], [1], [0], [0], [0, 0, 1, 0], [], []>} : vector<8x64xbf16>, vector<8x64xbf16>, vector<8x8xf32> -> vector<8x8xf32>
    %cst_335 = arith.constant dense<0xFF800000> : vector<8xf32>
    %458 = vector.multi_reduction <maximumf>, %457, %cst_335 [1] : vector<8x8xf32> to vector<8xf32>
    %459 = vector.shape_cast %458 : vector<8xf32> to vector<8x1xf32>
    %460 = vector.broadcast %459 : vector<8x1xf32> to vector<8x8xf32>
    %461 = arith.subf %457, %460 : vector<8x8xf32>
    %462 = math.exp %461 : vector<8x8xf32>
    %cst_336 = arith.constant dense<0.000000e+00> : vector<8xf32>
    %463 = vector.multi_reduction <add>, %462, %cst_336 [1] : vector<8x8xf32> to vector<8xf32>
    %464 = vector.shape_cast %463 : vector<8xf32> to vector<8x1xf32>
    %465 = tpu.reciprocal %464 {approx = true} : vector<8x1xf32> -> vector<8x1xf32>
    %466 = vector.broadcast %465 : vector<8x1xf32> to vector<8x8xf32>
    %467 = arith.mulf %462, %466 : vector<8x8xf32>
    %468 = arith.truncf %467 : vector<8x8xf32> to vector<8x8xbf16>
    %469 = arith.truncf %454 : vector<8x64xf32> to vector<8x64xbf16>
    %cst_337 = arith.constant dense<0.000000e+00> : vector<8x64xf32>
    %470 = tpu.matmul %468, %469, %cst_337 {dimension_numbers = #tpu.dot_dimension_numbers<[1], [0], [0], [1], [0, 0, 1, 1], [], []>} : vector<8x8xbf16>, vector<8x64xbf16>, vector<8x64xf32> -> vector<8x64xf32>
    %471 = arith.truncf %470 : vector<8x64xf32> to vector<8x64xbf16>
    %c0_338 = arith.constant 0 : index
    %c0_339 = arith.constant 0 : index
    %c0_340 = arith.constant 0 : index
    %472 = vector.load %arg32[%c0_338, %c0_339, %c0_340] : memref<2x64x128xbf16, #tpu.memory_space<vmem>>, vector<1x64x128xbf16>
    %473 = vector.shape_cast %472 : vector<1x64x128xbf16> to vector<64x128xbf16>
    %cst_341 = arith.constant dense<0.000000e+00> : vector<8x128xf32>
    %474 = tpu.matmul %471, %473, %cst_341 {dimension_numbers = #tpu.dot_dimension_numbers<[1], [0], [0], [1], [0, 0, 1, 1], [], []>} : vector<8x64xbf16>, vector<64x128xbf16>, vector<8x128xf32> -> vector<8x128xf32>
    %475 = arith.addf %433, %474 : vector<8x128xf32>
    %c0_342 = arith.constant 0 : index
    %c1_343 = arith.constant 1 : index
    %c0_344 = arith.constant 0 : index
    %c0_345 = arith.constant 0 : index
    %476 = vector.load %arg30[%c0_342, %c1_343, %c0_344, %c0_345] : memref<3x2x128x64xbf16, #tpu.memory_space<vmem>>, vector<1x1x128x64xbf16>
    %477 = vector.shape_cast %476 : vector<1x1x128x64xbf16> to vector<128x64xbf16>
    %cst_346 = arith.constant dense<0.000000e+00> : vector<8x64xf32>
    %478 = tpu.matmul %432, %477, %cst_346 {dimension_numbers = #tpu.dot_dimension_numbers<[1], [0], [0], [1], [0, 0, 1, 1], [], []>} : vector<8x128xbf16>, vector<128x64xbf16>, vector<8x64xf32> -> vector<8x64xf32>
    %c0_347 = arith.constant 0 : index
    %c1_348 = arith.constant 1 : index
    %c0_349 = arith.constant 0 : index
    %c0_350 = arith.constant 0 : index
    %479 = vector.load %arg31[%c0_347, %c1_348, %c0_349, %c0_350] : memref<3x2x1x64xf32, #tpu.memory_space<vmem>>, vector<1x1x1x64xf32>
    %480 = vector.shape_cast %479 : vector<1x1x1x64xf32> to vector<1x64xf32>
    %481 = vector.broadcast %480 : vector<1x64xf32> to vector<8x64xf32>
    %482 = arith.addf %478, %481 : vector<8x64xf32>
    %c1_351 = arith.constant 1 : index
    %c1_352 = arith.constant 1 : index
    %c0_353 = arith.constant 0 : index
    %c0_354 = arith.constant 0 : index
    %483 = vector.load %arg30[%c1_351, %c1_352, %c0_353, %c0_354] : memref<3x2x128x64xbf16, #tpu.memory_space<vmem>>, vector<1x1x128x64xbf16>
    %484 = vector.shape_cast %483 : vector<1x1x128x64xbf16> to vector<128x64xbf16>
    %cst_355 = arith.constant dense<0.000000e+00> : vector<8x64xf32>
    %485 = tpu.matmul %432, %484, %cst_355 {dimension_numbers = #tpu.dot_dimension_numbers<[1], [0], [0], [1], [0, 0, 1, 1], [], []>} : vector<8x128xbf16>, vector<128x64xbf16>, vector<8x64xf32> -> vector<8x64xf32>
    %c1_356 = arith.constant 1 : index
    %c1_357 = arith.constant 1 : index
    %c0_358 = arith.constant 0 : index
    %c0_359 = arith.constant 0 : index
    %486 = vector.load %arg31[%c1_356, %c1_357, %c0_358, %c0_359] : memref<3x2x1x64xf32, #tpu.memory_space<vmem>>, vector<1x1x1x64xf32>
    %487 = vector.shape_cast %486 : vector<1x1x1x64xf32> to vector<1x64xf32>
    %488 = vector.broadcast %487 : vector<1x64xf32> to vector<8x64xf32>
    %489 = arith.addf %485, %488 : vector<8x64xf32>
    %c2_360 = arith.constant 2 : index
    %c1_361 = arith.constant 1 : index
    %c0_362 = arith.constant 0 : index
    %c0_363 = arith.constant 0 : index
    %490 = vector.load %arg30[%c2_360, %c1_361, %c0_362, %c0_363] : memref<3x2x128x64xbf16, #tpu.memory_space<vmem>>, vector<1x1x128x64xbf16>
    %491 = vector.shape_cast %490 : vector<1x1x128x64xbf16> to vector<128x64xbf16>
    %cst_364 = arith.constant dense<0.000000e+00> : vector<8x64xf32>
    %492 = tpu.matmul %432, %491, %cst_364 {dimension_numbers = #tpu.dot_dimension_numbers<[1], [0], [0], [1], [0, 0, 1, 1], [], []>} : vector<8x128xbf16>, vector<128x64xbf16>, vector<8x64xf32> -> vector<8x64xf32>
    %c2_365 = arith.constant 2 : index
    %c1_366 = arith.constant 1 : index
    %c0_367 = arith.constant 0 : index
    %c0_368 = arith.constant 0 : index
    %493 = vector.load %arg31[%c2_365, %c1_366, %c0_367, %c0_368] : memref<3x2x1x64xf32, #tpu.memory_space<vmem>>, vector<1x1x1x64xf32>
    %494 = vector.shape_cast %493 : vector<1x1x1x64xf32> to vector<1x64xf32>
    %495 = vector.broadcast %494 : vector<1x64xf32> to vector<8x64xf32>
    %496 = arith.addf %492, %495 : vector<8x64xf32>
    %497 = arith.truncf %482 : vector<8x64xf32> to vector<8x64xbf16>
    %498 = arith.truncf %489 : vector<8x64xf32> to vector<8x64xbf16>
    %cst_369 = arith.constant dense<0.000000e+00> : vector<8x8xf32>
    %499 = tpu.matmul %497, %498, %cst_369 {dimension_numbers = #tpu.dot_dimension_numbers<[1], [1], [0], [0], [0, 0, 1, 0], [], []>} : vector<8x64xbf16>, vector<8x64xbf16>, vector<8x8xf32> -> vector<8x8xf32>
    %cst_370 = arith.constant dense<0xFF800000> : vector<8xf32>
    %500 = vector.multi_reduction <maximumf>, %499, %cst_370 [1] : vector<8x8xf32> to vector<8xf32>
    %501 = vector.shape_cast %500 : vector<8xf32> to vector<8x1xf32>
    %502 = vector.broadcast %501 : vector<8x1xf32> to vector<8x8xf32>
    %503 = arith.subf %499, %502 : vector<8x8xf32>
    %504 = math.exp %503 : vector<8x8xf32>
    %cst_371 = arith.constant dense<0.000000e+00> : vector<8xf32>
    %505 = vector.multi_reduction <add>, %504, %cst_371 [1] : vector<8x8xf32> to vector<8xf32>
    %506 = vector.shape_cast %505 : vector<8xf32> to vector<8x1xf32>
    %507 = tpu.reciprocal %506 {approx = true} : vector<8x1xf32> -> vector<8x1xf32>
    %508 = vector.broadcast %507 : vector<8x1xf32> to vector<8x8xf32>
    %509 = arith.mulf %504, %508 : vector<8x8xf32>
    %510 = arith.truncf %509 : vector<8x8xf32> to vector<8x8xbf16>
    %511 = arith.truncf %496 : vector<8x64xf32> to vector<8x64xbf16>
    %cst_372 = arith.constant dense<0.000000e+00> : vector<8x64xf32>
    %512 = tpu.matmul %510, %511, %cst_372 {dimension_numbers = #tpu.dot_dimension_numbers<[1], [0], [0], [1], [0, 0, 1, 1], [], []>} : vector<8x8xbf16>, vector<8x64xbf16>, vector<8x64xf32> -> vector<8x64xf32>
    %513 = arith.truncf %512 : vector<8x64xf32> to vector<8x64xbf16>
    %c1_373 = arith.constant 1 : index
    %c0_374 = arith.constant 0 : index
    %c0_375 = arith.constant 0 : index
    %514 = vector.load %arg32[%c1_373, %c0_374, %c0_375] : memref<2x64x128xbf16, #tpu.memory_space<vmem>>, vector<1x64x128xbf16>
    %515 = vector.shape_cast %514 : vector<1x64x128xbf16> to vector<64x128xbf16>
    %cst_376 = arith.constant dense<0.000000e+00> : vector<8x128xf32>
    %516 = tpu.matmul %513, %515, %cst_376 {dimension_numbers = #tpu.dot_dimension_numbers<[1], [0], [0], [1], [0, 0, 1, 1], [], []>} : vector<8x64xbf16>, vector<64x128xbf16>, vector<8x128xf32> -> vector<8x128xf32>
    %517 = arith.addf %475, %516 : vector<8x128xf32>
    %c0_377 = arith.constant 0 : index
    %c0_378 = arith.constant 0 : index
    %518 = vector.load %arg33[%c0_377, %c0_378] : memref<1x128xf32, #tpu.memory_space<vmem>>, vector<1x128xf32>
    %519 = vector.broadcast %518 : vector<1x128xf32> to vector<8x128xf32>
    %520 = arith.addf %517, %519 : vector<8x128xf32>
    %521 = arith.addf %520, %431 : vector<8x128xf32>
    %cst_379 = arith.constant dense<0.000000e+00> : vector<8xf32>
    %522 = vector.multi_reduction <add>, %521, %cst_379 [1] : vector<8x128xf32> to vector<8xf32>
    %523 = vector.shape_cast %522 : vector<8xf32> to vector<8x1xf32>
    %cst_380 = arith.constant 1.280000e+02 : f32
    %524 = vector.broadcast %cst_380 : f32 to vector<8x1xf32>
    %525 = arith.divf %523, %524 : vector<8x1xf32>
    %526 = vector.broadcast %525 : vector<8x1xf32> to vector<8x128xf32>
    %527 = arith.subf %521, %526 : vector<8x128xf32>
    %528 = arith.mulf %527, %527 : vector<8x128xf32>
    %cst_381 = arith.constant dense<0.000000e+00> : vector<8xf32>
    %529 = vector.multi_reduction <add>, %528, %cst_381 [1] : vector<8x128xf32> to vector<8xf32>
    %530 = vector.shape_cast %529 : vector<8xf32> to vector<8x1xf32>
    %cst_382 = arith.constant 1.280000e+02 : f32
    %531 = vector.broadcast %cst_382 : f32 to vector<8x1xf32>
    %532 = arith.divf %530, %531 : vector<8x1xf32>
    %533 = vector.broadcast %525 : vector<8x1xf32> to vector<8x128xf32>
    %534 = arith.subf %521, %533 : vector<8x128xf32>
    %cst_383 = arith.constant 9.99999974E-6 : f32
    %535 = vector.broadcast %cst_383 : f32 to vector<8x1xf32>
    %536 = arith.addf %532, %535 : vector<8x1xf32>
    %537 = math.rsqrt %536 : vector<8x1xf32>
    %538 = vector.broadcast %537 : vector<8x1xf32> to vector<8x128xf32>
    %539 = arith.mulf %534, %538 : vector<8x128xf32>
    %c0_384 = arith.constant 0 : index
    %c0_385 = arith.constant 0 : index
    %c0_386 = arith.constant 0 : index
    %540 = vector.load %arg34[%c0_384, %c0_385, %c0_386] : memref<1x8x128xf32, #tpu.memory_space<vmem>>, vector<1x8x128xf32>
    %541 = vector.shape_cast %540 : vector<1x8x128xf32> to vector<8x128xf32>
    %542 = vector.shape_cast %539 : vector<8x128xf32> to vector<1x8x128xf32>
    tpu.vector_store %arg34[%c0_384, %c0_385, %c0_386], %542 {strides = array<i32>} : memref<1x8x128xf32, #tpu.memory_space<vmem>>, vector<1x8x128xf32>,
    return
  }
  func.func @transform_0(%arg0: i32) -> (i32, i32, i32) {
    %c0_i32 = arith.constant 0 : i32
    %c0_i32_0 = arith.constant 0 : i32
    %c0_i32_1 = arith.constant 0 : i32
    return %arg0, %c0_i32, %c0_i32_0 : i32, i32, i32
  }
  func.func @transform_1(%arg0: i32) -> (i32, i32, i32) {
    %c0_i32 = arith.constant 0 : i32
    %c0_i32_0 = arith.constant 0 : i32
    %c0_i32_1 = arith.constant 0 : i32
    return %arg0, %c0_i32, %c0_i32_0 : i32, i32, i32
  }
  func.func @transform_2(%arg0: i32) -> (i32, i32, i32) {
    %c0_i32 = arith.constant 0 : i32
    %c0_i32_0 = arith.constant 0 : i32
    %c0_i32_1 = arith.constant 0 : i32
    return %arg0, %c0_i32, %c0_i32_0 : i32, i32, i32
  }
  func.func @transform_3(%arg0: i32) -> (i32, i32, i32) {
    %c0_i32 = arith.constant 0 : i32
    %c0_i32_0 = arith.constant 0 : i32
    %c0_i32_1 = arith.constant 0 : i32
    return %arg0, %c0_i32, %c0_i32_0 : i32, i32, i32
  }
  func.func @transform_4(%arg0: i32) -> (i32, i32) {
    %c0_i32 = arith.constant 0 : i32
    %c0_i32_0 = arith.constant 0 : i32
    %c0_i32_1 = arith.constant 0 : i32
    return %c0_i32, %c0_i32_0 : i32, i32
  }
  func.func @transform_5(%arg0: i32) -> (i32, i32) {
    %c0_i32 = arith.constant 0 : i32
    %c0_i32_0 = arith.constant 0 : i32
    %c0_i32_1 = arith.constant 0 : i32
    return %c0_i32, %c0_i32_0 : i32, i32
  }
  func.func @transform_6(%arg0: i32) -> (i32, i32) {
    %c0_i32 = arith.constant 0 : i32
    %c0_i32_0 = arith.constant 0 : i32
    %c0_i32_1 = arith.constant 0 : i32
    return %c0_i32, %c0_i32_0 : i32, i32
  }
  func.func @transform_7(%arg0: i32) -> (i32, i32) {
    %c0_i32 = arith.constant 0 : i32
    %c0_i32_0 = arith.constant 0 : i32
    %c0_i32_1 = arith.constant 0 : i32
    return %c0_i32, %c0_i32_0 : i32, i32
  }
  func.func @transform_8(%arg0: i32) -> (i32, i32) {
    %c0_i32 = arith.constant 0 : i32
    %c0_i32_0 = arith.constant 0 : i32
    %c0_i32_1 = arith.constant 0 : i32
    return %c0_i32, %c0_i32_0 : i32, i32
  }
  func.func @transform_9(%arg0: i32) -> (i32, i32) {
    %c0_i32 = arith.constant 0 : i32
    %c0_i32_0 = arith.constant 0 : i32
    %c0_i32_1 = arith.constant 0 : i32
    return %c0_i32, %c0_i32_0 : i32, i32
  }
  func.func @transform_10(%arg0: i32) -> (i32, i32) {
    %c0_i32 = arith.constant 0 : i32
    %c0_i32_0 = arith.constant 0 : i32
    %c0_i32_1 = arith.constant 0 : i32
    return %c0_i32, %c0_i32_0 : i32, i32
  }
  func.func @transform_11(%arg0: i32) -> (i32, i32) {
    %c0_i32 = arith.constant 0 : i32
    %c0_i32_0 = arith.constant 0 : i32
    %c0_i32_1 = arith.constant 0 : i32
    return %c0_i32, %c0_i32_0 : i32, i32
  }
  func.func @transform_12(%arg0: i32) -> (i32, i32) {
    %c0_i32 = arith.constant 0 : i32
    %c0_i32_0 = arith.constant 0 : i32
    %c0_i32_1 = arith.constant 0 : i32
    return %c0_i32, %c0_i32_0 : i32, i32
  }
  func.func @transform_13(%arg0: i32) -> (i32, i32) {
    %c0_i32 = arith.constant 0 : i32
    %c0_i32_0 = arith.constant 0 : i32
    %c0_i32_1 = arith.constant 0 : i32
    return %c0_i32, %c0_i32_0 : i32, i32
  }
  func.func @transform_14(%arg0: i32) -> (i32, i32) {
    %c0_i32 = arith.constant 0 : i32
    %c0_i32_0 = arith.constant 0 : i32
    %c0_i32_1 = arith.constant 0 : i32
    return %c0_i32, %c0_i32_0 : i32, i32
  }
  func.func @transform_15(%arg0: i32) -> (i32, i32) {
    %c0_i32 = arith.constant 0 : i32
    %c0_i32_0 = arith.constant 0 : i32
    %c0_i32_1 = arith.constant 0 : i32
    return %c0_i32, %c0_i32_0 : i32, i32
  }
  func.func @transform_16(%arg0: i32) -> (i32, i32) {
    %c0_i32 = arith.constant 0 : i32
    %c0_i32_0 = arith.constant 0 : i32
    %c0_i32_1 = arith.constant 0 : i32
    return %c0_i32, %c0_i32_0 : i32, i32
  }
  func.func @transform_17(%arg0: i32) -> (i32, i32) {
    %c0_i32 = arith.constant 0 : i32
    %c0_i32_0 = arith.constant 0 : i32
    %c0_i32_1 = arith.constant 0 : i32
    return %c0_i32, %c0_i32_0 : i32, i32
  }
  func.func @transform_18(%arg0: i32) -> (i32, i32, i32, i32, i32) {
    %c0_i32 = arith.constant 0 : i32
    %c0_i32_0 = arith.constant 0 : i32
    %c0_i32_1 = arith.constant 0 : i32
    %c0_i32_2 = arith.constant 0 : i32
    %c0_i32_3 = arith.constant 0 : i32
    %c0_i32_4 = arith.constant 0 : i32
    return %c0_i32, %c0_i32_0, %c0_i32_1, %c0_i32_2, %c0_i32_3 : i32, i32, i32, i32, i32
  }
  func.func @transform_19(%arg0: i32) -> (i32, i32, i32, i32, i32) {
    %c0_i32 = arith.constant 0 : i32
    %c0_i32_0 = arith.constant 0 : i32
    %c0_i32_1 = arith.constant 0 : i32
    %c0_i32_2 = arith.constant 0 : i32
    %c0_i32_3 = arith.constant 0 : i32
    %c0_i32_4 = arith.constant 0 : i32
    return %c0_i32, %c0_i32_0, %c0_i32_1, %c0_i32_2, %c0_i32_3 : i32, i32, i32, i32, i32
  }
  func.func @transform_20(%arg0: i32) -> (i32, i32, i32, i32) {
    %c0_i32 = arith.constant 0 : i32
    %c0_i32_0 = arith.constant 0 : i32
    %c0_i32_1 = arith.constant 0 : i32
    %c0_i32_2 = arith.constant 0 : i32
    %c0_i32_3 = arith.constant 0 : i32
    return %c0_i32, %c0_i32_0, %c0_i32_1, %c0_i32_2 : i32, i32, i32, i32
  }
  func.func @transform_21(%arg0: i32) -> (i32, i32, i32) {
    %c0_i32 = arith.constant 0 : i32
    %c0_i32_0 = arith.constant 0 : i32
    %c0_i32_1 = arith.constant 0 : i32
    %c0_i32_2 = arith.constant 0 : i32
    return %c0_i32, %c0_i32_0, %c0_i32_1 : i32, i32, i32
  }
  func.func @transform_22(%arg0: i32) -> (i32, i32, i32) {
    %c0_i32 = arith.constant 0 : i32
    %c0_i32_0 = arith.constant 0 : i32
    %c0_i32_1 = arith.constant 0 : i32
    %c0_i32_2 = arith.constant 0 : i32
    return %c0_i32, %c0_i32_0, %c0_i32_1 : i32, i32, i32
  }
  func.func @transform_23(%arg0: i32) -> (i32, i32, i32) {
    %c0_i32 = arith.constant 0 : i32
    %c0_i32_0 = arith.constant 0 : i32
    %c0_i32_1 = arith.constant 0 : i32
    %c0_i32_2 = arith.constant 0 : i32
    return %c0_i32, %c0_i32_0, %c0_i32_1 : i32, i32, i32
  }
  func.func @transform_24(%arg0: i32) -> (i32, i32, i32) {
    %c0_i32 = arith.constant 0 : i32
    %c0_i32_0 = arith.constant 0 : i32
    %c0_i32_1 = arith.constant 0 : i32
    %c0_i32_2 = arith.constant 0 : i32
    return %c0_i32, %c0_i32_0, %c0_i32_1 : i32, i32, i32
  }
  func.func @transform_25(%arg0: i32) -> (i32, i32, i32) {
    %c0_i32 = arith.constant 0 : i32
    %c0_i32_0 = arith.constant 0 : i32
    %c0_i32_1 = arith.constant 0 : i32
    %c0_i32_2 = arith.constant 0 : i32
    return %c0_i32, %c0_i32_0, %c0_i32_1 : i32, i32, i32
  }
  func.func @transform_26(%arg0: i32) -> (i32, i32) {
    %c0_i32 = arith.constant 0 : i32
    %c0_i32_0 = arith.constant 0 : i32
    %c0_i32_1 = arith.constant 0 : i32
    return %c0_i32, %c0_i32_0 : i32, i32
  }
  func.func @transform_27(%arg0: i32) -> (i32, i32) {
    %c0_i32 = arith.constant 0 : i32
    %c0_i32_0 = arith.constant 0 : i32
    %c0_i32_1 = arith.constant 0 : i32
    return %c0_i32, %c0_i32_0 : i32, i32
  }
  func.func @transform_28(%arg0: i32) -> (i32, i32) {
    %c0_i32 = arith.constant 0 : i32
    %c0_i32_0 = arith.constant 0 : i32
    %c0_i32_1 = arith.constant 0 : i32
    return %c0_i32, %c0_i32_0 : i32, i32
  }
  func.func @transform_29(%arg0: i32) -> (i32, i32, i32, i32) {
    %c0_i32 = arith.constant 0 : i32
    %c0_i32_0 = arith.constant 0 : i32
    %c0_i32_1 = arith.constant 0 : i32
    %c0_i32_2 = arith.constant 0 : i32
    %c0_i32_3 = arith.constant 0 : i32
    return %c0_i32, %c0_i32_0, %c0_i32_1, %c0_i32_2 : i32, i32, i32, i32
  }
  func.func @transform_30(%arg0: i32) -> (i32, i32, i32, i32) {
    %c0_i32 = arith.constant 0 : i32
    %c0_i32_0 = arith.constant 0 : i32
    %c0_i32_1 = arith.constant 0 : i32
    %c0_i32_2 = arith.constant 0 : i32
    %c0_i32_3 = arith.constant 0 : i32
    return %c0_i32, %c0_i32_0, %c0_i32_1, %c0_i32_2 : i32, i32, i32, i32
  }
  func.func @transform_31(%arg0: i32) -> (i32, i32, i32) {
    %c0_i32 = arith.constant 0 : i32
    %c0_i32_0 = arith.constant 0 : i32
    %c0_i32_1 = arith.constant 0 : i32
    %c0_i32_2 = arith.constant 0 : i32
    return %c0_i32, %c0_i32_0, %c0_i32_1 : i32, i32, i32
  }
  func.func @transform_32(%arg0: i32) -> (i32, i32) {
    %c0_i32 = arith.constant 0 : i32
    %c0_i32_0 = arith.constant 0 : i32
    %c0_i32_1 = arith.constant 0 : i32
    return %c0_i32, %c0_i32_0 : i32, i32
  }
  func.func @transform_33(%arg0: i32) -> (i32, i32, i32) {
    %c0_i32 = arith.constant 0 : i32
    %c0_i32_0 = arith.constant 0 : i32
    %c0_i32_1 = arith.constant 0 : i32
    return %arg0, %c0_i32, %c0_i32_0 : i32, i32, i32
  }
}

</mosaic_0001>

<llo_original>
// kernel: mul.10
$region0: #{mul.10}
  #allocation0 [shape = 's32[1]{0}', space=sflag, size = 0x4, scoped, tag = 'scoped memory for mul.10']
  %s0 = inlined_call_operand.<no memory space> [shape: f32[], index: 0, kind: input, shape index: {}]
  %s1 = inlined_call_operand.vmem [shape: f32[2,8,1], index: 1, kind: output, shape index: {}]
  %v2 = vstv %s0
  %3 = vst [vmem:[%s1] sm:$0x3] %v2

// kernel: denoiser_forward.1
$region0: #{denoiser_forward.1}
  #allocation0 [shape = 'u32[]', space=smem, size = 0x4, offset = 0x4, fixed_abs, tag = 'smem constant byte address 0x4 - core index']
  #allocation1 [shape = 'u32[144,128]{1,0:T(1,128)}', space=vmem, size = 0x12000, scoped, tag = 'internal scratch']
  %s0 = inlined_call_operand.smem [shape: u32[34], index: -1, kind: input, shape index: {}]
  %s1 = sld [smem:[%s0]]
  %s2 = scalar_lea.smem %s0, 1
  %s3 = sld [smem:[%s2]]
  %s4 = scalar_lea.smem %s0, 2
  %s5 = sld [smem:[%s4]]
  %s6 = scalar_lea.smem %s0, 3
  %s7 = sld [smem:[%s6]]
  %s8 = scalar_lea.smem %s0, 4
  %s9 = sld [smem:[%s8]]
  %s10 = scalar_lea.smem %s0, 5
  %s11 = sld [smem:[%s10]]
  %s12 = scalar_lea.smem %s0, 6
  %s13 = sld [smem:[%s12]]
  %s14 = scalar_lea.smem %s0, 7
  %s15 = sld [smem:[%s14]]
  %s16 = scalar_lea.smem %s0, 8
  %s17 = sld [smem:[%s16]]
  %s18 = scalar_lea.smem %s0, 9
  %s19 = sld [smem:[%s18]]
  %s20 = scalar_lea.smem %s0, 10
  %s21 = sld [smem:[%s20]]
  %s22 = scalar_lea.smem %s0, 11
  %s23 = sld [smem:[%s22]]
  %s24 = scalar_lea.smem %s0, 12
  %s25 = sld [smem:[%s24]]
  %s26 = scalar_lea.smem %s0, 13
  %s27 = sld [smem:[%s26]]
  %s28 = scalar_lea.smem %s0, 14
  %s29 = sld [smem:[%s28]]
  %s30 = scalar_lea.smem %s0, 15
  %s31 = sld [smem:[%s30]]
  %s32 = scalar_lea.smem %s0, 16
  %s33 = sld [smem:[%s32]]
  %s34 = scalar_lea.smem %s0, 17
  %s35 = sld [smem:[%s34]]
  %s36 = scalar_lea.smem %s0, 18
  %s37 = sld [smem:[%s36]]
  %s38 = scalar_lea.smem %s0, 19
  %s39 = sld [smem:[%s38]]
  %s40 = scalar_lea.smem %s0, 20
  %s41 = sld [smem:[%s40]]
  %s42 = scalar_lea.smem %s0, 21
  %s43 = sld [smem:[%s42]]
  %s44 = scalar_lea.smem %s0, 22
  %s45 = sld [smem:[%s44]]
  %s46 = scalar_lea.smem %s0, 23
  %s47 = sld [smem:[%s46]]
  %s48 = scalar_lea.smem %s0, 24
  %s49 = sld [smem:[%s48]]
  %s50 = scalar_lea.smem %s0, 25
  %s51 = sld [smem:[%s50]]
  %s52 = scalar_lea.smem %s0, 26
  %s53 = sld [smem:[%s52]]
  %s54 = scalar_lea.smem %s0, 27
  %s55 = sld [smem:[%s54]]
  %s56 = scalar_lea.smem %s0, 28
  %s57 = sld [smem:[%s56]]
  %s58 = scalar_lea.smem %s0, 29
  %s59 = sld [smem:[%s58]]
  %s60 = scalar_lea.smem %s0, 30
  %s61 = sld [smem:[%s60]]
  %s62 = scalar_lea.smem %s0, 31
  %s63 = sld [smem:[%s62]]
  %s64 = scalar_lea.smem %s0, 32
  %s65 = sld [smem:[%s64]]
  %s66 = scalar_lea.smem %s0, 33
  %s67 = sld [smem:[%s66]]
  %s68 = sld [smem:[#allocation0]]
  $region165: #{denoiser_forward.1} parent=0
    _
  %s70 = ssub.s32 1, %s68
  %s71 = scalar_select 0, %s70, %s68
  loop: start=0, step=1, limit=4
  $region2: #{denoiser_forward.1} parent=0 // loop_pre_header
    _
  $region3: #{denoiser_forward.1} parent=0 // loop_header
    %s73 = sphi 0, %s77
    %p74 = scmp.ge.s32.totalorder %s73, 4
    %s83 = sphi 0, %s85
    %s86 = sphi 0, %s83
    %s87 = sphi 0, %s86
    %s103 = sphi 0, %s87
    %s109 = sphi 0, %s111
    %s112 = sphi 0, %s109
    %s113 = sphi 0, %s112
    %s129 = sphi 0, %s113
    %s135 = sphi 0, %s137
    %s138 = sphi 0, %s135
    %s139 = sphi 0, %s138
    %s155 = sphi 0, %s139
    %s161 = sphi 0, %s163
    %s164 = sphi 0, %s161
    %s165 = sphi 0, %s164
    %s181 = sphi 0, %s165
    %s185 = sphi 0, %s185
    %s187 = sphi 0, %s185
    %s188 = sphi 0, %s187
    %s202 = sphi 0, %s188
    %s206 = sphi 0, %s206
    %s208 = sphi 0, %s206
    %s209 = sphi 0, %s208
    %s223 = sphi 0, %s209
    %s227 = sphi 0, %s227
    %s229 = sphi 0, %s227
    %s230 = sphi 0, %s229
    %s244 = sphi 0, %s230
    %s248 = sphi 0, %s248
    %s250 = sphi 0, %s248
    %s251 = sphi 0, %s250
    %s265 = sphi 0, %s251
    %s269 = sphi 0, %s269
    %s271 = sphi 0, %s269
    %s272 = sphi 0, %s271
    %s286 = sphi 0, %s272
    %s290 = sphi 0, %s290
    %s292 = sphi 0, %s290
    %s293 = sphi 0, %s292
    %s307 = sphi 0, %s293
    %s311 = sphi 0, %s311
    %s313 = sphi 0, %s311
    %s314 = sphi 0, %s313
    %s328 = sphi 0, %s314
    %s332 = sphi 0, %s332
    %s334 = sphi 0, %s332
    %s335 = sphi 0, %s334
    %s349 = sphi 0, %s335
    %s353 = sphi 0, %s353
    %s355 = sphi 0, %s353
    %s356 = sphi 0, %s355
    %s370 = sphi 0, %s356
    %s374 = sphi 0, %s374
    %s376 = sphi 0, %s374
    %s377 = sphi 0, %s376
    %s391 = sphi 0, %s377
    %s395 = sphi 0, %s395
    %s397 = sphi 0, %s395
    %s398 = sphi 0, %s397
    %s412 = sphi 0, %s398
    %s416 = sphi 0, %s416
    %s418 = sphi 0, %s416
    %s419 = sphi 0, %s418
    %s433 = sphi 0, %s419
    %s437 = sphi 0, %s437
    %s439 = sphi 0, %s437
    %s440 = sphi 0, %s439
    %s454 = sphi 0, %s440
    %s458 = sphi 0, %s458
    %s460 = sphi 0, %s458
    %s461 = sphi 0, %s460
    %s475 = sphi 0, %s461
    %s479 = sphi 0, %s479
    %s481 = sphi 0, %s479
    %s482 = sphi 0, %s481
    %s496 = sphi 0, %s482
    %s500 = sphi 0, %s500
    %s502 = sphi 0, %s500
    %s503 = sphi 0, %s502
    %s517 = sphi 0, %s503
    %s521 = sphi 0, %s521
    %s523 = sphi 0, %s521
    %s524 = sphi 0, %s523
    %s538 = sphi 0, %s524
    %s542 = sphi 0, %s542
    %s544 = sphi 0, %s542
    %s545 = sphi 0, %s544
    %s559 = sphi 0, %s545
    %s563 = sphi 0, %s563
    %s565 = sphi 0, %s563
    %s566 = sphi 0, %s565
    %s580 = sphi 0, %s566
    %s584 = sphi 0, %s584
    %s586 = sphi 0, %s584
    %s587 = sphi 0, %s586
    %s601 = sphi 0, %s587
    %s605 = sphi 0, %s605
    %s607 = sphi 0, %s605
    %s608 = sphi 0, %s607
    %s622 = sphi 0, %s608
    %s626 = sphi 0, %s626
    %s628 = sphi 0, %s626
    %s629 = sphi 0, %s628
    %s643 = sphi 0, %s629
    %s647 = sphi 0, %s647
    %s649 = sphi 0, %s647
    %s650 = sphi 0, %s649
    %s664 = sphi 0, %s650
    %s668 = sphi 0, %s668
    %s670 = sphi 0, %s668
    %s671 = sphi 0, %s670
    %s685 = sphi 0, %s671
    %s689 = sphi 0, %s689
    %s691 = sphi 0, %s689
    %s692 = sphi 0, %s691
    %s706 = sphi 0, %s692
    %s710 = sphi 0, %s710
    %s712 = sphi 0, %s710
    %s713 = sphi 0, %s712
    %s727 = sphi 0, %s713
    %s731 = sphi 0, %s731
    %s733 = sphi 0, %s731
    %s734 = sphi 0, %s733
    %s748 = sphi 0, %s734
    %s752 = sphi 0, %s752
    %s754 = sphi 0, %s752
    %s755 = sphi 0, %s754
    %s769 = sphi 0, %s755
    %s773 = sphi 0, %s773
    %s775 = sphi 0, %s773
    %s776 = sphi 0, %s775
    %s790 = sphi 0, %s776
    %s796 = sphi 0, %s798
    %s799 = sphi 0, %s796
    %s800 = sphi 0, %s799
    %s816 = sphi 0, %s800
  $region4: #{denoiser_forward.1} parent=0 // loop_header_branch
    %76 = sbr.rel (%p74) target = $region8
  $region5: #{denoiser_forward.1} parent=0 // loop_body
    %s78 = ssub.s32 %s73, 1
    %s79 = ssub.s32 %s73, 2
    %s80 = sadd.s32 %s73, 1
    %s81 = ssub.s32 %s73, %s80
    %p82 = scmp.eq.s32.totalorder %s81, 0
    %s84 = sadd.s32 %s83, 1
    %s85 = scalar_select %p82, %s83, %s84
    %p88 = pneg %p82
    %p89 = scmp.eq.s32.totalorder %s73, 1
    %p90 = por %p88, %p89
    %p91 = scmp.ne.s32.totalorder %s83, %s86
    %p92 = scmp.eq.s32.totalorder %s73, 0
    %p93 = por %p91, %p92
    %p94 = scmp.ne.s32.totalorder %s83, %s86
    %p95 = scmp.eq.s32.totalorder %s78, 1
    %p96 = por %p94, %p95
    %p97 = scmp.ne.s32.totalorder %s86, %s87
    %p98 = scmp.eq.s32.totalorder %s78, 0
    %p99 = por %p97, %p98
    %p100 = scmp.ne.s32.totalorder %s86, %s87
    %p101 = scmp.eq.s32.totalorder %s79, 1
    %p102 = por %p100, %p101
    %p104 = scmp.ne.s32.totalorder %s87, %s103
    %p105 = scmp.eq.s32.totalorder %s79, 0
    %p106 = por %p104, %p105
    %s107 = ssub.s32 %s73, %s80
    %p108 = scmp.eq.s32.totalorder %s107, 0
    %s110 = sadd.s32 %s109, 1
    %s111 = scalar_select %p108, %s109, %s110
    %p114 = pneg %p108
    %p115 = scmp.eq.s32.totalorder %s73, 1
    %p116 = por %p114, %p115
    %p117 = scmp.ne.s32.totalorder %s109, %s112
    %p118 = scmp.eq.s32.totalorder %s73, 0
    %p119 = por %p117, %p118
    %p120 = scmp.ne.s32.totalorder %s109, %s112
    %p121 = scmp.eq.s32.totalorder %s78, 1
    %p122 = por %p120, %p121
    %p123 = scmp.ne.s32.totalorder %s112, %s113
    %p124 = scmp.eq.s32.totalorder %s78, 0
    %p125 = por %p123, %p124
    %p126 = scmp.ne.s32.totalorder %s112, %s113
    %p127 = scmp.eq.s32.totalorder %s79, 1
    %p128 = por %p126, %p127
    %p130 = scmp.ne.s32.totalorder %s113, %s129
    %p131 = scmp.eq.s32.totalorder %s79, 0
    %p132 = por %p130, %p131
    %s133 = ssub.s32 %s73, %s80
    %p134 = scmp.eq.s32.totalorder %s133, 0
    %s136 = sadd.s32 %s135, 1
    %s137 = scalar_select %p134, %s135, %s136
    %p140 = pneg %p134
    %p141 = scmp.eq.s32.totalorder %s73, 1
    %p142 = por %p140, %p141
    %p143 = scmp.ne.s32.totalorder %s135, %s138
    %p144 = scmp.eq.s32.totalorder %s73, 0
    %p145 = por %p143, %p144
    %p146 = scmp.ne.s32.totalorder %s135, %s138
    %p147 = scmp.eq.s32.totalorder %s78, 1
    %p148 = por %p146, %p147
    %p149 = scmp.ne.s32.totalorder %s138, %s139
    %p150 = scmp.eq.s32.totalorder %s78, 0
    %p151 = por %p149, %p150
    %p152 = scmp.ne.s32.totalorder %s138, %s139
    %p153 = scmp.eq.s32.totalorder %s79, 1
    %p154 = por %p152, %p153
    %p156 = scmp.ne.s32.totalorder %s139, %s155
    %p157 = scmp.eq.s32.totalorder %s79, 0
    %p158 = por %p156, %p157
    %s159 = ssub.s32 %s73, %s80
    %p160 = scmp.eq.s32.totalorder %s159, 0
    %s162 = sadd.s32 %s161, 1
    %s163 = scalar_select %p160, %s161, %s162
    %p166 = pneg %p160
    %p167 = scmp.eq.s32.totalorder %s73, 1
    %p168 = por %p166, %p167
    %p169 = scmp.ne.s32.totalorder %s161, %s164
    %p170 = scmp.eq.s32.totalorder %s73, 0
    %p171 = por %p169, %p170
    %p172 = scmp.ne.s32.totalorder %s161, %s164
    %p173 = scmp.eq.s32.totalorder %s78, 1
    %p174 = por %p172, %p173
    %p175 = scmp.ne.s32.totalorder %s164, %s165
    %p176 = scmp.eq.s32.totalorder %s78, 0
    %p177 = por %p175, %p176
    %p178 = scmp.ne.s32.totalorder %s164, %s165
    %p179 = scmp.eq.s32.totalorder %s79, 1
    %p180 = por %p178, %p179
    %p182 = scmp.ne.s32.totalorder %s165, %s181
    %p183 = scmp.eq.s32.totalorder %s79, 0
    %p184 = por %p182, %p183
    %s186 = sadd.s32 %s185, 1
    %p189 = scmp.eq.s32.totalorder %s73, 1
    %p190 = scmp.ne.s32.totalorder %s185, %s187
    %p191 = scmp.eq.s32.totalorder %s73, 0
    %p192 = por %p190, %p191
    %p193 = scmp.ne.s32.totalorder %s185, %s187
    %p194 = scmp.eq.s32.totalorder %s78, 1
    %p195 = por %p193, %p194
    %p196 = scmp.ne.s32.totalorder %s187, %s188
    %p197 = scmp.eq.s32.totalorder %s78, 0
    %p198 = por %p196, %p197
    %p199 = scmp.ne.s32.totalorder %s187, %s188
    %p200 = scmp.eq.s32.totalorder %s79, 1
    %p201 = por %p199, %p200
    %p203 = scmp.ne.s32.totalorder %s188, %s202
    %p204 = scmp.eq.s32.totalorder %s79, 0
    %p205 = por %p203, %p204
    %s207 = sadd.s32 %s206, 1
    %p210 = scmp.eq.s32.totalorder %s73, 1
    %p211 = scmp.ne.s32.totalorder %s206, %s208
    %p212 = scmp.eq.s32.totalorder %s73, 0
    %p213 = por %p211, %p212
    %p214 = scmp.ne.s32.totalorder %s206, %s208
    %p215 = scmp.eq.s32.totalorder %s78, 1
    %p216 = por %p214, %p215
    %p217 = scmp.ne.s32.totalorder %s208, %s209
    %p218 = scmp.eq.s32.totalorder %s78, 0
    %p219 = por %p217, %p218
    %p220 = scmp.ne.s32.totalorder %s208, %s209
    %p221 = scmp.eq.s32.totalorder %s79, 1
    %p222 = por %p220, %p221
    %p224 = scmp.ne.s32.totalorder %s209, %s223
    %p225 = scmp.eq.s32.totalorder %s79, 0
    %p226 = por %p224, %p225
    %s228 = sadd.s32 %s227, 1
    %p231 = scmp.eq.s32.totalorder %s73, 1
    %p232 = scmp.ne.s32.totalorder %s227, %s229
    %p233 = scmp.eq.s32.totalorder %s73, 0
    %p234 = por %p232, %p233
    %p235 = scmp.ne.s32.totalorder %s227, %s229
    %p236 = scmp.eq.s32.totalorder %s78, 1
    %p237 = por %p235, %p236
    %p238 = scmp.ne.s32.totalorder %s229, %s230
    %p239 = scmp.eq.s32.totalorder %s78, 0
    %p240 = por %p238, %p239
    %p241 = scmp.ne.s32.totalorder %s229, %s230
    %p242 = scmp.eq.s32.totalorder %s79, 1
    %p243 = por %p241, %p242
    %p245 = scmp.ne.s32.totalorder %s230, %s244
    %p246 = scmp.eq.s32.totalorder %s79, 0
    %p247 = por %p245, %p246
    %s249 = sadd.s32 %s248, 1
    %p252 = scmp.eq.s32.totalorder %s73, 1
    %p253 = scmp.ne.s32.totalorder %s248, %s250
    %p254 = scmp.eq.s32.totalorder %s73, 0
    %p255 = por %p253, %p254
    %p256 = scmp.ne.s32.totalorder %s248, %s250
    %p257 = scmp.eq.s32.totalorder %s78, 1
    %p258 = por %p256, %p257
    %p259 = scmp.ne.s32.totalorder %s250, %s251
    %p260 = scmp.eq.s32.totalorder %s78, 0
    %p261 = por %p259, %p260
    %p262 = scmp.ne.s32.totalorder %s250, %s251
    %p263 = scmp.eq.s32.totalorder %s79, 1
    %p264 = por %p262, %p263
    %p266 = scmp.ne.s32.totalorder %s251, %s265
    %p267 = scmp.eq.s32.totalorder %s79, 0
    %p268 = por %p266, %p267
    %s270 = sadd.s32 %s269, 1
    %p273 = scmp.eq.s32.totalorder %s73, 1
    %p274 = scmp.ne.s32.totalorder %s269, %s271
    %p275 = scmp.eq.s32.totalorder %s73, 0
    %p276 = por %p274, %p275
    %p277 = scmp.ne.s32.totalorder %s269, %s271
    %p278 = scmp.eq.s32.totalorder %s78, 1
    %p279 = por %p277, %p278
    %p280 = scmp.ne.s32.totalorder %s271, %s272
    %p281 = scmp.eq.s32.totalorder %s78, 0
    %p282 = por %p280, %p281
    %p283 = scmp.ne.s32.totalorder %s271, %s272
    %p284 = scmp.eq.s32.totalorder %s79, 1
    %p285 = por %p283, %p284
    %p287 = scmp.ne.s32.totalorder %s272, %s286
    %p288 = scmp.eq.s32.totalorder %s79, 0
    %p289 = por %p287, %p288
    %s291 = sadd.s32 %s290, 1
    %p294 = scmp.eq.s32.totalorder %s73, 1
    %p295 = scmp.ne.s32.totalorder %s290, %s292
    %p296 = scmp.eq.s32.totalorder %s73, 0
    %p297 = por %p295, %p296
    %p298 = scmp.ne.s32.totalorder %s290, %s292
    %p299 = scmp.eq.s32.totalorder %s78, 1
    %p300 = por %p298, %p299
    %p301 = scmp.ne.s32.totalorder %s292, %s293
    %p302 = scmp.eq.s32.totalorder %s78, 0
    %p303 = por %p301, %p302
    %p304 = scmp.ne.s32.totalorder %s292, %s293
    %p305 = scmp.eq.s32.totalorder %s79, 1
    %p306 = por %p304, %p305
    %p308 = scmp.ne.s32.totalorder %s293, %s307
    %p309 = scmp.eq.s32.totalorder %s79, 0
    %p310 = por %p308, %p309
    %s312 = sadd.s32 %s311, 1
    %p315 = scmp.eq.s32.totalorder %s73, 1
    %p316 = scmp.ne.s32.totalorder %s311, %s313
    %p317 = scmp.eq.s32.totalorder %s73, 0
    %p318 = por %p316, %p317
    %p319 = scmp.ne.s32.totalorder %s311, %s313
    %p320 = scmp.eq.s32.totalorder %s78, 1
    %p321 = por %p319, %p320
    %p322 = scmp.ne.s32.totalorder %s313, %s314
    %p323 = scmp.eq.s32.totalorder %s78, 0
    %p324 = por %p322, %p323
    %p325 = scmp.ne.s32.totalorder %s313, %s314
    %p326 = scmp.eq.s32.totalorder %s79, 1
    %p327 = por %p325, %p326
    %p329 = scmp.ne.s32.totalorder %s314, %s328
    %p330 = scmp.eq.s32.totalorder %s79, 0
    %p331 = por %p329, %p330
    %s333 = sadd.s32 %s332, 1
    %p336 = scmp.eq.s32.totalorder %s73, 1
    %p337 = scmp.ne.s32.totalorder %s332, %s334
    %p338 = scmp.eq.s32.totalorder %s73, 0
    %p339 = por %p337, %p338
    %p340 = scmp.ne.s32.totalorder %s332, %s334
    %p341 = scmp.eq.s32.totalorder %s78, 1
    %p342 = por %p340, %p341
    %p343 = scmp.ne.s32.totalorder %s334, %s335
    %p344 = scmp.eq.s32.totalorder %s78, 0
    %p345 = por %p343, %p344
    %p346 = scmp.ne.s32.totalorder %s334, %s335
    %p347 = scmp.eq.s32.totalorder %s79, 1
    %p348 = por %p346, %p347
    %p350 = scmp.ne.s32.totalorder %s335, %s349
    %p351 = scmp.eq.s32.totalorder %s79, 0
    %p352 = por %p350, %p351
    %s354 = sadd.s32 %s353, 1
    %p357 = scmp.eq.s32.totalorder %s73, 1
    %p358 = scmp.ne.s32.totalorder %s353, %s355
    %p359 = scmp.eq.s32.totalorder %s73, 0
    %p360 = por %p358, %p359
    %p361 = scmp.ne.s32.totalorder %s353, %s355
    %p362 = scmp.eq.s32.totalorder %s78, 1
    %p363 = por %p361, %p362
    %p364 = scmp.ne.s32.totalorder %s355, %s356
    %p365 = scmp.eq.s32.totalorder %s78, 0
    %p366 = por %p364, %p365
    %p367 = scmp.ne.s32.totalorder %s355, %s356
    %p368 = scmp.eq.s32.totalorder %s79, 1
    %p369 = por %p367, %p368
    %p371 = scmp.ne.s32.totalorder %s356, %s370
    %p372 = scmp.eq.s32.totalorder %s79, 0
    %p373 = por %p371, %p372
    %s375 = sadd.s32 %s374, 1
    %p378 = scmp.eq.s32.totalorder %s73, 1
    %p379 = scmp.ne.s32.totalorder %s374, %s376
    %p380 = scmp.eq.s32.totalorder %s73, 0
    %p381 = por %p379, %p380
    %p382 = scmp.ne.s32.totalorder %s374, %s376
    %p383 = scmp.eq.s32.totalorder %s78, 1
    %p384 = por %p382, %p383
    %p385 = scmp.ne.s32.totalorder %s376, %s377
    %p386 = scmp.eq.s32.totalorder %s78, 0
    %p387 = por %p385, %p386
    %p388 = scmp.ne.s32.totalorder %s376, %s377
    %p389 = scmp.eq.s32.totalorder %s79, 1
    %p390 = por %p388, %p389
    %p392 = scmp.ne.s32.totalorder %s377, %s391
    %p393 = scmp.eq.s32.totalorder %s79, 0
    %p394 = por %p392, %p393
    %s396 = sadd.s32 %s395, 1
    %p399 = scmp.eq.s32.totalorder %s73, 1
    %p400 = scmp.ne.s32.totalorder %s395, %s397
    %p401 = scmp.eq.s32.totalorder %s73, 0
    %p402 = por %p400, %p401
    %p403 = scmp.ne.s32.totalorder %s395, %s397
    %p404 = scmp.eq.s32.totalorder %s78, 1
    %p405 = por %p403, %p404
    %p406 = scmp.ne.s32.totalorder %s397, %s398
    %p407 = scmp.eq.s32.totalorder %s78, 0
    %p408 = por %p406, %p407
    %p409 = scmp.ne.s32.totalorder %s397, %s398
    %p410 = scmp.eq.s32.totalorder %s79, 1
    %p411 = por %p409, %p410
    %p413 = scmp.ne.s32.totalorder %s398, %s412
    %p414 = scmp.eq.s32.totalorder %s79, 0
    %p415 = por %p413, %p414
    %s417 = sadd.s32 %s416, 1
    %p420 = scmp.eq.s32.totalorder %s73, 1
    %p421 = scmp.ne.s32.totalorder %s416, %s418
    %p422 = scmp.eq.s32.totalorder %s73, 0
    %p423 = por %p421, %p422
    %p424 = scmp.ne.s32.totalorder %s416, %s418
    %p425 = scmp.eq.s32.totalorder %s78, 1
    %p426 = por %p424, %p425
    %p427 = scmp.ne.s32.totalorder %s418, %s419
    %p428 = scmp.eq.s32.totalorder %s78, 0
    %p429 = por %p427, %p428
    %p430 = scmp.ne.s32.totalorder %s418, %s419
    %p431 = scmp.eq.s32.totalorder %s79, 1
    %p432 = por %p430, %p431
    %p434 = scmp.ne.s32.totalorder %s419, %s433
    %p435 = scmp.eq.s32.totalorder %s79, 0
    %p436 = por %p434, %p435
    %s438 = sadd.s32 %s437, 1
    %p441 = scmp.eq.s32.totalorder %s73, 1
    %p442 = scmp.ne.s32.totalorder %s437, %s439
    %p443 = scmp.eq.s32.totalorder %s73, 0
    %p444 = por %p442, %p443
    %p445 = scmp.ne.s32.totalorder %s437, %s439
    %p446 = scmp.eq.s32.totalorder %s78, 1
    %p447 = por %p445, %p446
    %p448 = scmp.ne.s32.totalorder %s439, %s440
    %p449 = scmp.eq.s32.totalorder %s78, 0
    %p450 = por %p448, %p449
    %p451 = scmp.ne.s32.totalorder %s439, %s440
    %p452 = scmp.eq.s32.totalorder %s79, 1
    %p453 = por %p451, %p452
    %p455 = scmp.ne.s32.totalorder %s440, %s454
    %p456 = scmp.eq.s32.totalorder %s79, 0
    %p457 = por %p455, %p456
    %s459 = sadd.s32 %s458, 1
    %p462 = scmp.eq.s32.totalorder %s73, 1
    %p463 = scmp.ne.s32.totalorder %s458, %s460
    %p464 = scmp.eq.s32.totalorder %s73, 0
    %p465 = por %p463, %p464
    %p466 = scmp.ne.s32.totalorder %s458, %s460
    %p467 = scmp.eq.s32.totalorder %s78, 1
    %p468 = por %p466, %p467
    %p469 = scmp.ne.s32.totalorder %s460, %s461
    %p470 = scmp.eq.s32.totalorder %s78, 0
    %p471 = por %p469, %p470
    %p472 = scmp.ne.s32.totalorder %s460, %s461
    %p473 = scmp.eq.s32.totalorder %s79, 1
    %p474 = por %p472, %p473
    %p476 = scmp.ne.s32.totalorder %s461, %s475
    %p477 = scmp.eq.s32.totalorder %s79, 0
    %p478 = por %p476, %p477
    %s480 = sadd.s32 %s479, 1
    %p483 = scmp.eq.s32.totalorder %s73, 1
    %p484 = scmp.ne.s32.totalorder %s479, %s481
    %p485 = scmp.eq.s32.totalorder %s73, 0
    %p486 = por %p484, %p485
    %p487 = scmp.ne.s32.totalorder %s479, %s481
    %p488 = scmp.eq.s32.totalorder %s78, 1
    %p489 = por %p487, %p488
    %p490 = scmp.ne.s32.totalorder %s481, %s482
    %p491 = scmp.eq.s32.totalorder %s78, 0
    %p492 = por %p490, %p491
    %p493 = scmp.ne.s32.totalorder %s481, %s482
    %p494 = scmp.eq.s32.totalorder %s79, 1
    %p495 = por %p493, %p494
    %p497 = scmp.ne.s32.totalorder %s482, %s496
    %p498 = scmp.eq.s32.totalorder %s79, 0
    %p499 = por %p497, %p498
    %s501 = sadd.s32 %s500, 1
    %p504 = scmp.eq.s32.totalorder %s73, 1
    %p505 = scmp.ne.s32.totalorder %s500, %s502
    %p506 = scmp.eq.s32.totalorder %s73, 0
    %p507 = por %p505, %p506
    %p508 = scmp.ne.s32.totalorder %s500, %s502
    %p509 = scmp.eq.s32.totalorder %s78, 1
    %p510 = por %p508, %p509
    %p511 = scmp.ne.s32.totalorder %s502, %s503
    %p512 = scmp.eq.s32.totalorder %s78, 0
    %p513 = por %p511, %p512
    %p514 = scmp.ne.s32.totalorder %s502, %s503
    %p515 = scmp.eq.s32.totalorder %s79, 1
    %p516 = por %p514, %p515
    %p518 = scmp.ne.s32.totalorder %s503, %s517
    %p519 = scmp.eq.s32.totalorder %s79, 0
    %p520 = por %p518, %p519
    %s522 = sadd.s32 %s521, 1
    %p525 = scmp.eq.s32.totalorder %s73, 1
    %p526 = scmp.ne.s32.totalorder %s521, %s523
    %p527 = scmp.eq.s32.totalorder %s73, 0
    %p528 = por %p526, %p527
    %p529 = scmp.ne.s32.totalorder %s521, %s523
    %p530 = scmp.eq.s32.totalorder %s78, 1
    %p531 = por %p529, %p530
    %p532 = scmp.ne.s32.totalorder %s523, %s524
    %p533 = scmp.eq.s32.totalorder %s78, 0
    %p534 = por %p532, %p533
    %p535 = scmp.ne.s32.totalorder %s523, %s524
    %p536 = scmp.eq.s32.totalorder %s79, 1
    %p537 = por %p535, %p536
    %p539 = scmp.ne.s32.totalorder %s524, %s538
    %p540 = scmp.eq.s32.totalorder %s79, 0
    %p541 = por %p539, %p540
    %s543 = sadd.s32 %s542, 1
    %p546 = scmp.eq.s32.totalorder %s73, 1
    %p547 = scmp.ne.s32.totalorder %s542, %s544
    %p548 = scmp.eq.s32.totalorder %s73, 0
    %p549 = por %p547, %p548
    %p550 = scmp.ne.s32.totalorder %s542, %s544
    %p551 = scmp.eq.s32.totalorder %s78, 1
    %p552 = por %p550, %p551
    %p553 = scmp.ne.s32.totalorder %s544, %s545
    %p554 = scmp.eq.s32.totalorder %s78, 0
    %p555 = por %p553, %p554
    %p556 = scmp.ne.s32.totalorder %s544, %s545
    %p557 = scmp.eq.s32.totalorder %s79, 1
    %p558 = por %p556, %p557
    %p560 = scmp.ne.s32.totalorder %s545, %s559
    %p561 = scmp.eq.s32.totalorder %s79, 0
    %p562 = por %p560, %p561
    %s564 = sadd.s32 %s563, 1
    %p567 = scmp.eq.s32.totalorder %s73, 1
    %p568 = scmp.ne.s32.totalorder %s563, %s565
    %p569 = scmp.eq.s32.totalorder %s73, 0
    %p570 = por %p568, %p569
    %p571 = scmp.ne.s32.totalorder %s563, %s565
    %p572 = scmp.eq.s32.totalorder %s78, 1
    %p573 = por %p571, %p572
    %p574 = scmp.ne.s32.totalorder %s565, %s566
    %p575 = scmp.eq.s32.totalorder %s78, 0
    %p576 = por %p574, %p575
    %p577 = scmp.ne.s32.totalorder %s565, %s566
    %p578 = scmp.eq.s32.totalorder %s79, 1
    %p579 = por %p577, %p578
    %p581 = scmp.ne.s32.totalorder %s566, %s580
    %p582 = scmp.eq.s32.totalorder %s79, 0
    %p583 = por %p581, %p582
    %s585 = sadd.s32 %s584, 1
    %p588 = scmp.eq.s32.totalorder %s73, 1
    %p589 = scmp.ne.s32.totalorder %s584, %s586
    %p590 = scmp.eq.s32.totalorder %s73, 0
    %p591 = por %p589, %p590
    %p592 = scmp.ne.s32.totalorder %s584, %s586
    %p593 = scmp.eq.s32.totalorder %s78, 1
    %p594 = por %p592, %p593
    %p595 = scmp.ne.s32.totalorder %s586, %s587
    %p596 = scmp.eq.s32.totalorder %s78, 0
    %p597 = por %p595, %p596
    %p598 = scmp.ne.s32.totalorder %s586, %s587
    %p599 = scmp.eq.s32.totalorder %s79, 1
    %p600 = por %p598, %p599
    %p602 = scmp.ne.s32.totalorder %s587, %s601
    %p603 = scmp.eq.s32.totalorder %s79, 0
    %p604 = por %p602, %p603
    %s606 = sadd.s32 %s605, 1
    %p609 = scmp.eq.s32.totalorder %s73, 1
    %p610 = scmp.ne.s32.totalorder %s605, %s607
    %p611 = scmp.eq.s32.totalorder %s73, 0
    %p612 = por %p610, %p611
    %p613 = scmp.ne.s32.totalorder %s605, %s607
    %p614 = scmp.eq.s32.totalorder %s78, 1
    %p615 = por %p613, %p614
    %p616 = scmp.ne.s32.totalorder %s607, %s608
    %p617 = scmp.eq.s32.totalorder %s78, 0
    %p618 = por %p616, %p617
    %p619 = scmp.ne.s32.totalorder %s607, %s608
    %p620 = scmp.eq.s32.totalorder %s79, 1
    %p621 = por %p619, %p620
    %p623 = scmp.ne.s32.totalorder %s608, %s622
    %p624 = scmp.eq.s32.totalorder %s79, 0
    %p625 = por %p623, %p624
    %s627 = sadd.s32 %s626, 1
    %p630 = scmp.eq.s32.totalorder %s73, 1
    %p631 = scmp.ne.s32.totalorder %s626, %s628
    %p632 = scmp.eq.s32.totalorder %s73, 0
    %p633 = por %p631, %p632
    %p634 = scmp.ne.s32.totalorder %s626, %s628
    %p635 = scmp.eq.s32.totalorder %s78, 1
    %p636 = por %p634, %p635
    %p637 = scmp.ne.s32.totalorder %s628, %s629
    %p638 = scmp.eq.s32.totalorder %s78, 0
    %p639 = por %p637, %p638
    %p640 = scmp.ne.s32.totalorder %s628, %s629
    %p641 = scmp.eq.s32.totalorder %s79, 1
    %p642 = por %p640, %p641
    %p644 = scmp.ne.s32.totalorder %s629, %s643
    %p645 = scmp.eq.s32.totalorder %s79, 0
    %p646 = por %p644, %p645
    %s648 = sadd.s32 %s647, 1
    %p651 = scmp.eq.s32.totalorder %s73, 1
    %p652 = scmp.ne.s32.totalorder %s647, %s649
    %p653 = scmp.eq.s32.totalorder %s73, 0
    %p654 = por %p652, %p653
    %p655 = scmp.ne.s32.totalorder %s647, %s649
    %p656 = scmp.eq.s32.totalorder %s78, 1
    %p657 = por %p655, %p656
    %p658 = scmp.ne.s32.totalorder %s649, %s650
    %p659 = scmp.eq.s32.totalorder %s78, 0
    %p660 = por %p658, %p659
    %p661 = scmp.ne.s32.totalorder %s649, %s650
    %p662 = scmp.eq.s32.totalorder %s79, 1
    %p663 = por %p661, %p662
    %p665 = scmp.ne.s32.totalorder %s650, %s664
    %p666 = scmp.eq.s32.totalorder %s79, 0
    %p667 = por %p665, %p666
    %s669 = sadd.s32 %s668, 1
    %p672 = scmp.eq.s32.totalorder %s73, 1
    %p673 = scmp.ne.s32.totalorder %s668, %s670
    %p674 = scmp.eq.s32.totalorder %s73, 0
    %p675 = por %p673, %p674
    %p676 = scmp.ne.s32.totalorder %s668, %s670
    %p677 = scmp.eq.s32.totalorder %s78, 1
    %p678 = por %p676, %p677
    %p679 = scmp.ne.s32.totalorder %s670, %s671
    %p680 = scmp.eq.s32.totalorder %s78, 0
    %p681 = por %p679, %p680
    %p682 = scmp.ne.s32.totalorder %s670, %s671
    %p683 = scmp.eq.s32.totalorder %s79, 1
    %p684 = por %p682, %p683
    %p686 = scmp.ne.s32.totalorder %s671, %s685
    %p687 = scmp.eq.s32.totalorder %s79, 0
    %p688 = por %p686, %p687
    %s690 = sadd.s32 %s689, 1
    %p693 = scmp.eq.s32.totalorder %s73, 1
    %p694 = scmp.ne.s32.totalorder %s689, %s691
    %p695 = scmp.eq.s32.totalorder %s73, 0
    %p696 = por %p694, %p695
    %p697 = scmp.ne.s32.totalorder %s689, %s691
    %p698 = scmp.eq.s32.totalorder %s78, 1
    %p699 = por %p697, %p698
    %p700 = scmp.ne.s32.totalorder %s691, %s692
    %p701 = scmp.eq.s32.totalorder %s78, 0
    %p702 = por %p700, %p701
    %p703 = scmp.ne.s32.totalorder %s691, %s692
    %p704 = scmp.eq.s32.totalorder %s79, 1
    %p705 = por %p703, %p704
    %p707 = scmp.ne.s32.totalorder %s692, %s706
    %p708 = scmp.eq.s32.totalorder %s79, 0
    %p709 = por %p707, %p708
    %s711 = sadd.s32 %s710, 1
    %p714 = scmp.eq.s32.totalorder %s73, 1
    %p715 = scmp.ne.s32.totalorder %s710, %s712
    %p716 = scmp.eq.s32.totalorder %s73, 0
    %p717 = por %p715, %p716
    %p718 = scmp.ne.s32.totalorder %s710, %s712
    %p719 = scmp.eq.s32.totalorder %s78, 1
    %p720 = por %p718, %p719
    %p721 = scmp.ne.s32.totalorder %s712, %s713
    %p722 = scmp.eq.s32.totalorder %s78, 0
    %p723 = por %p721, %p722
    %p724 = scmp.ne.s32.totalorder %s712, %s713
    %p725 = scmp.eq.s32.totalorder %s79, 1
    %p726 = por %p724, %p725
    %p728 = scmp.ne.s32.totalorder %s713, %s727
    %p729 = scmp.eq.s32.totalorder %s79, 0
    %p730 = por %p728, %p729
    %s732 = sadd.s32 %s731, 1
    %p735 = scmp.eq.s32.totalorder %s73, 1
    %p736 = scmp.ne.s32.totalorder %s731, %s733
    %p737 = scmp.eq.s32.totalorder %s73, 0
    %p738 = por %p736, %p737
    %p739 = scmp.ne.s32.totalorder %s731, %s733
    %p740 = scmp.eq.s32.totalorder %s78, 1
    %p741 = por %p739, %p740
    %p742 = scmp.ne.s32.totalorder %s733, %s734
    %p743 = scmp.eq.s32.totalorder %s78, 0
    %p744 = por %p742, %p743
    %p745 = scmp.ne.s32.totalorder %s733, %s734
    %p746 = scmp.eq.s32.totalorder %s79, 1
    %p747 = por %p745, %p746
    %p749 = scmp.ne.s32.totalorder %s734, %s748
    %p750 = scmp.eq.s32.totalorder %s79, 0
    %p751 = por %p749, %p750
    %s753 = sadd.s32 %s752, 1
    %p756 = scmp.eq.s32.totalorder %s73, 1
    %p757 = scmp.ne.s32.totalorder %s752, %s754
    %p758 = scmp.eq.s32.totalorder %s73, 0
    %p759 = por %p757, %p758
    %p760 = scmp.ne.s32.totalorder %s752, %s754
    %p761 = scmp.eq.s32.totalorder %s78, 1
    %p762 = por %p760, %p761
    %p763 = scmp.ne.s32.totalorder %s754, %s755
    %p764 = scmp.eq.s32.totalorder %s78, 0
    %p765 = por %p763, %p764
    %p766 = scmp.ne.s32.totalorder %s754, %s755
    %p767 = scmp.eq.s32.totalorder %s79, 1
    %p768 = por %p766, %p767
    %p770 = scmp.ne.s32.totalorder %s755, %s769
    %p771 = scmp.eq.s32.totalorder %s79, 0
    %p772 = por %p770, %p771
    %s774 = sadd.s32 %s773, 1
    %p777 = scmp.eq.s32.totalorder %s73, 1
    %p778 = scmp.ne.s32.totalorder %s773, %s775
    %p779 = scmp.eq.s32.totalorder %s73, 0
    %p780 = por %p778, %p779
    %p781 = scmp.ne.s32.totalorder %s773, %s775
    %p782 = scmp.eq.s32.totalorder %s78, 1
    %p783 = por %p781, %p782
    %p784 = scmp.ne.s32.totalorder %s775, %s776
    %p785 = scmp.eq.s32.totalorder %s78, 0
    %p786 = por %p784, %p785
    %p787 = scmp.ne.s32.totalorder %s775, %s776
    %p788 = scmp.eq.s32.totalorder %s79, 1
    %p789 = por %p787, %p788
    %p791 = scmp.ne.s32.totalorder %s776, %s790
    %p792 = scmp.eq.s32.totalorder %s79, 0
    %p793 = por %p791, %p792
    %s794 = ssub.s32 %s73, %s80
    %p795 = scmp.eq.s32.totalorder %s794, 0
    %s797 = sadd.s32 %s796, 1
    %s798 = scalar_select %p795, %s796, %s797
    %p801 = pneg %p795
    %p802 = scmp.eq.s32.totalorder %s73, 1
    %p803 = por %p801, %p802
    %p804 = scmp.ne.s32.totalorder %s796, %s799
    %p805 = scmp.eq.s32.totalorder %s73, 0
    %p806 = por %p804, %p805
    %p807 = scmp.ne.s32.totalorder %s796, %s799
    %p808 = scmp.eq.s32.totalorder %s78, 1
    %p809 = por %p807, %p808
    %p810 = scmp.ne.s32.totalorder %s799, %s800
    %p811 = scmp.eq.s32.totalorder %s78, 0
    %p812 = por %p810, %p811
    %p813 = scmp.ne.s32.totalorder %s799, %s800
    %p814 = scmp.eq.s32.totalorder %s79, 1
    %p815 = por %p813, %p814
    %p817 = scmp.ne.s32.totalorder %s800, %s816
    %p818 = scmp.eq.s32.totalorder %s79, 0
    %p819 = por %p817, %p818
    %p820 = scmp.le.s32.totalorder 1, %s73
    %p821 = scmp.lt.s32.totalorder %s73, 3
    %p822 = pnand %p820, %p821
    %p823 = pneg %p822
    // Predicated region
    $region9: #{denoiser_forward.1} parent=5 // pred_check
      _
    $region10: #{denoiser_forward.1} parent=5 // pred_check_branch
      %825 = sbr.rel (%p822) target = $region12
    $region11: #{denoiser_forward.1} parent=5 // pred_region
      %s826 = ssub.s32 %s73, 1
      // Predicated region
      $region13: #{denoiser_forward.1} parent=11 // pred_check
        %p827 = pneg %p198
      $region14: #{denoiser_forward.1} parent=11 // pred_check_branch
        %829 = sbr.rel (%p827) target = $region16
      $region15: #{denoiser_forward.1} parent=11 // pred_region
        _
      $region16: #{denoiser_forward.1} parent=11 // pred_fallthru
        _
      // Predicated region
      $region17: #{denoiser_forward.1} parent=11 // pred_check
        %p830 = pneg %p219
      $region18: #{denoiser_forward.1} parent=11 // pred_check_branch
        %832 = sbr.rel (%p830) target = $region20
      $region19: #{denoiser_forward.1} parent=11 // pred_region
        _
      $region20: #{denoiser_forward.1} parent=11 // pred_fallthru
        _
      // Predicated region
      $region21: #{denoiser_forward.1} parent=11 // pred_check
        %p833 = pneg %p240
      $region22: #{denoiser_forward.1} parent=11 // pred_check_branch
        %835 = sbr.rel (%p833) target = $region24
      $region23: #{denoiser_forward.1} parent=11 // pred_region
        _
      $region24: #{denoiser_forward.1} parent=11 // pred_fallthru
        _
      // Predicated region
      $region25: #{denoiser_forward.1} parent=11 // pred_check
        %p836 = pneg %p261
      $region26: #{denoiser_forward.1} parent=11 // pred_check_branch
        %838 = sbr.rel (%p836) target = $region28
      $region27: #{denoiser_forward.1} parent=11 // pred_region
        _
      $region28: #{denoiser_forward.1} parent=11 // pred_fallthru
        _
      // Predicated region
      $region29: #{denoiser_forward.1} parent=11 // pred_check
        %p839 = pneg %p282
      $region30: #{denoiser_forward.1} parent=11 // pred_check_branch
        %841 = sbr.rel (%p839) target = $region32
      $region31: #{denoiser_forward.1} parent=11 // pred_region
        _
      $region32: #{denoiser_forward.1} parent=11 // pred_fallthru
        _
      // Predicated region
      $region33: #{denoiser_forward.1} parent=11 // pred_check
        %p842 = pneg %p303
      $region34: #{denoiser_forward.1} parent=11 // pred_check_branch
        %844 = sbr.rel (%p842) target = $region36
      $region35: #{denoiser_forward.1} parent=11 // pred_region
        _
      $region36: #{denoiser_forward.1} parent=11 // pred_fallthru
        _
      // Predicated region
      $region37: #{denoiser_forward.1} parent=11 // pred_check
        %p845 = pneg %p324
      $region38: #{denoiser_forward.1} parent=11 // pred_check_branch
        %847 = sbr.rel (%p845) target = $region40
      $region39: #{denoiser_forward.1} parent=11 // pred_region
        _
      $region40: #{denoiser_forward.1} parent=11 // pred_fallthru
        _
      // Predicated region
      $region41: #{denoiser_forward.1} parent=11 // pred_check
        %p848 = pneg %p345
      $region42: #{denoiser_forward.1} parent=11 // pred_check_branch
        %850 = sbr.rel (%p848) target = $region44
      $region43: #{denoiser_forward.1} parent=11 // pred_region
        _
      $region44: #{denoiser_forward.1} parent=11 // pred_fallthru
        _
      // Predicated region
      $region45: #{denoiser_forward.1} parent=11 // pred_check
        %p851 = pneg %p366
      $region46: #{denoiser_forward.1} parent=11 // pred_check_branch
        %853 = sbr.rel (%p851) target = $region48
      $region47: #{denoiser_forward.1} parent=11 // pred_region
        _
      $region48: #{denoiser_forward.1} parent=11 // pred_fallthru
        _
      // Predicated region
      $region49: #{denoiser_forward.1} parent=11 // pred_check
        %p854 = pneg %p387
      $region50: #{denoiser_forward.1} parent=11 // pred_check_branch
        %856 = sbr.rel (%p854) target = $region52
      $region51: #{denoiser_forward.1} parent=11 // pred_region
        _
      $region52: #{denoiser_forward.1} parent=11 // pred_fallthru
        _
      // Predicated region
      $region53: #{denoiser_forward.1} parent=11 // pred_check
        %p857 = pneg %p408
      $region54: #{denoiser_forward.1} parent=11 // pred_check_branch
        %859 = sbr.rel (%p857) target = $region56
      $region55: #{denoiser_forward.1} parent=11 // pred_region
        _
      $region56: #{denoiser_forward.1} parent=11 // pred_fallthru
        _
      // Predicated region
      $region57: #{denoiser_forward.1} parent=11 // pred_check
        %p860 = pneg %p429
      $region58: #{denoiser_forward.1} parent=11 // pred_check_branch
        %862 = sbr.rel (%p860) target = $region60
      $region59: #{denoiser_forward.1} parent=11 // pred_region
        _
      $region60: #{denoiser_forward.1} parent=11 // pred_fallthru
        _
      // Predicated region
      $region61: #{denoiser_forward.1} parent=11 // pred_check
        %p863 = pneg %p450
      $region62: #{denoiser_forward.1} parent=11 // pred_check_branch
        %865 = sbr.rel (%p863) target = $region64
      $region63: #{denoiser_forward.1} parent=11 // pred_region
        _
      $region64: #{denoiser_forward.1} parent=11 // pred_fallthru
        _
      // Predicated region
      $region65: #{denoiser_forward.1} parent=11 // pred_check
        %p866 = pneg %p471
      $region66: #{denoiser_forward.1} parent=11 // pred_check_branch
        %868 = sbr.rel (%p866) target = $region68
      $region67: #{denoiser_forward.1} parent=11 // pred_region
        _
      $region68: #{denoiser_forward.1} parent=11 // pred_fallthru
        _
      // Predicated region
      $region69: #{denoiser_forward.1} parent=11 // pred_check
        %p869 = pneg %p492
      $region70: #{denoiser_forward.1} parent=11 // pred_check_branch
        %871 = sbr.rel (%p869) target = $region72
      $region71: #{denoiser_forward.1} parent=11 // pred_region
        _
      $region72: #{denoiser_forward.1} parent=11 // pred_fallthru
        _
      // Predicated region
      $region73: #{denoiser_forward.1} parent=11 // pred_check
        %p872 = pneg %p513
      $region74: #{denoiser_forward.1} parent=11 // pred_check_branch
        %874 = sbr.rel (%p872) target = $region76
      $region75: #{denoiser_forward.1} parent=11 // pred_region
        _
      $region76: #{denoiser_forward.1} parent=11 // pred_fallthru
        _
      // Predicated region
      $region77: #{denoiser_forward.1} parent=11 // pred_check
        %p875 = pneg %p534
      $region78: #{denoiser_forward.1} parent=11 // pred_check_branch
        %877 = sbr.rel (%p875) target = $region80
      $region79: #{denoiser_forward.1} parent=11 // pred_region
        _
      $region80: #{denoiser_forward.1} parent=11 // pred_fallthru
        _
      // Predicated region
      $region81: #{denoiser_forward.1} parent=11 // pred_check
        %p878 = pneg %p555
      $region82: #{denoiser_forward.1} parent=11 // pred_check_branch
        %880 = sbr.rel (%p878) target = $region84
      $region83: #{denoiser_forward.1} parent=11 // pred_region
        _
      $region84: #{denoiser_forward.1} parent=11 // pred_fallthru
        _
      // Predicated region
      $region85: #{denoiser_forward.1} parent=11 // pred_check
        %p881 = pneg %p576
      $region86: #{denoiser_forward.1} parent=11 // pred_check_branch
        %883 = sbr.rel (%p881) target = $region88
      $region87: #{denoiser_forward.1} parent=11 // pred_region
        _
      $region88: #{denoiser_forward.1} parent=11 // pred_fallthru
        _
      // Predicated region
      $region89: #{denoiser_forward.1} parent=11 // pred_check
        %p884 = pneg %p597
      $region90: #{denoiser_forward.1} parent=11 // pred_check_branch
        %886 = sbr.rel (%p884) target = $region92
      $region91: #{denoiser_forward.1} parent=11 // pred_region
        _
      $region92: #{denoiser_forward.1} parent=11 // pred_fallthru
        _
      // Predicated region
      $region93: #{denoiser_forward.1} parent=11 // pred_check
        %p887 = pneg %p618
      $region94: #{denoiser_forward.1} parent=11 // pred_check_branch
        %889 = sbr.rel (%p887) target = $region96
      $region95: #{denoiser_forward.1} parent=11 // pred_region
        _
      $region96: #{denoiser_forward.1} parent=11 // pred_fallthru
        _
      // Predicated region
      $region97: #{denoiser_forward.1} parent=11 // pred_check
        %p890 = pneg %p639
      $region98: #{denoiser_forward.1} parent=11 // pred_check_branch
        %892 = sbr.rel (%p890) target = $region100
      $region99: #{denoiser_forward.1} parent=11 // pred_region
        _
      $region100: #{denoiser_forward.1} parent=11 // pred_fallthru
        _
      // Predicated region
      $region101: #{denoiser_forward.1} parent=11 // pred_check
        %p893 = pneg %p660
      $region102: #{denoiser_forward.1} parent=11 // pred_check_branch
        %895 = sbr.rel (%p893) target = $region104
      $region103: #{denoiser_forward.1} parent=11 // pred_region
        _
      $region104: #{denoiser_forward.1} parent=11 // pred_fallthru
        _
      // Predicated region
      $region105: #{denoiser_forward.1} parent=11 // pred_check
        %p896 = pneg %p681
      $region106: #{denoiser_forward.1} parent=11 // pred_check_branch
        %898 = sbr.rel (%p896) target = $region108
      $region107: #{denoiser_forward.1} parent=11 // pred_region
        _
      $region108: #{denoiser_forward.1} parent=11 // pred_fallthru
        _
      // Predicated region
      $region109: #{denoiser_forward.1} parent=11 // pred_check
        %p899 = pneg %p702
      $region110: #{denoiser_forward.1} parent=11 // pred_check_branch
        %901 = sbr.rel (%p899) target = $region112
      $region111: #{denoiser_forward.1} parent=11 // pred_region
        _
      $region112: #{denoiser_forward.1} parent=11 // pred_fallthru
        _
      // Predicated region
      $region113: #{denoiser_forward.1} parent=11 // pred_check
        %p902 = pneg %p723
      $region114: #{denoiser_forward.1} parent=11 // pred_check_branch
        %904 = sbr.rel (%p902) target = $region116
      $region115: #{denoiser_forward.1} parent=11 // pred_region
        _
      $region116: #{denoiser_forward.1} parent=11 // pred_fallthru
        _
      // Predicated region
      $region117: #{denoiser_forward.1} parent=11 // pred_check
        %p905 = pneg %p744
      $region118: #{denoiser_forward.1} parent=11 // pred_check_branch
        %907 = sbr.rel (%p905) target = $region120
      $region119: #{denoiser_forward.1} parent=11 // pred_region
        _
      $region120: #{denoiser_forward.1} parent=11 // pred_fallthru
        _
      // Predicated region
      $region121: #{denoiser_forward.1} parent=11 // pred_check
        %p908 = pneg %p765
      $region122: #{denoiser_forward.1} parent=11 // pred_check_branch
        %910 = sbr.rel (%p908) target = $region124
      $region123: #{denoiser_forward.1} parent=11 // pred_region
        _
      $region124: #{denoiser_forward.1} parent=11 // pred_fallthru
        _
      // Predicated region
      $region125: #{denoiser_forward.1} parent=11 // pred_check
        %p911 = pneg %p786
      $region126: #{denoiser_forward.1} parent=11 // pred_check_branch
        %913 = sbr.rel (%p911) target = $region128
      $region127: #{denoiser_forward.1} parent=11 // pred_region
        _
      $region128: #{denoiser_forward.1} parent=11 // pred_fallthru
        _
    $region12: #{denoiser_forward.1} parent=5 // pred_fallthru
      _
    %p914 = scmp.lt.s32.totalorder %s73, 2
    // Predicated region
    $region129: #{denoiser_forward.1} parent=5 // pred_check
      %p915 = pneg %p914
    $region130: #{denoiser_forward.1} parent=5 // pred_check_branch
      %917 = sbr.rel (%p915) target = $region132
    $region131: #{denoiser_forward.1} parent=5 // pred_region
      // Predicated region
      $region133: #{denoiser_forward.1} parent=131 // pred_check
        %p918 = pneg %p93
      $region134: #{denoiser_forward.1} parent=131 // pred_check_branch
        %920 = sbr.rel (%p918) target = $region136
      $region135: #{denoiser_forward.1} parent=131 // pred_region
        %p921 = scmp.lt.s32.totalorder %s73, 1
        %s922 = scalar_select %p921, %s73, 1
        %s923 = smul.addr %s922, 8
        %s924 = scalar_lea.vmem %s1, %s923
      $region136: #{denoiser_forward.1} parent=131 // pred_fallthru
        _
      // Predicated region
      $region137: #{denoiser_forward.1} parent=131 // pred_check
        %p925 = pneg %p119
      $region138: #{denoiser_forward.1} parent=131 // pred_check_branch
        %927 = sbr.rel (%p925) target = $region140
      $region139: #{denoiser_forward.1} parent=131 // pred_region
        %p928 = scmp.lt.s32.totalorder %s73, 1
        %s929 = scalar_select %p928, %s73, 1
        %s930 = smul.addr %s929, 8
        %s931 = scalar_lea.vmem %s3, %s930
      $region140: #{denoiser_forward.1} parent=131 // pred_fallthru
        _
      // Predicated region
      $region141: #{denoiser_forward.1} parent=131 // pred_check
        %p932 = pneg %p145
      $region142: #{denoiser_forward.1} parent=131 // pred_check_branch
        %934 = sbr.rel (%p932) target = $region144
      $region143: #{denoiser_forward.1} parent=131 // pred_region
        %p935 = scmp.lt.s32.totalorder %s73, 1
        %s936 = scalar_select %p935, %s73, 1
        %s937 = smul.addr %s936, 8
        %s938 = scalar_lea.vmem %s5, %s937
      $region144: #{denoiser_forward.1} parent=131 // pred_fallthru
        _
      // Predicated region
      $region145: #{denoiser_forward.1} parent=131 // pred_check
        %p939 = pneg %p171
      $region146: #{denoiser_forward.1} parent=131 // pred_check_branch
        %941 = sbr.rel (%p939) target = $region148
      $region147: #{denoiser_forward.1} parent=131 // pred_region
        %p942 = scmp.lt.s32.totalorder %s73, 1
        %s943 = scalar_select %p942, %s73, 1
        %s944 = smul.addr %s943, 2
        %s945 = smul.addr %s944, 8
        %s946 = scalar_lea.vmem %s7, %s945
      $region148: #{denoiser_forward.1} parent=131 // pred_fallthru
        _
    $region132: #{denoiser_forward.1} parent=5 // pred_fallthru
      _
    %p947 = scmp.le.s32.totalorder 1, %s73
    %p948 = scmp.lt.s32.totalorder %s73, 3
    %p949 = pnand %p947, %p948
    %p950 = pneg %p949
    // Predicated region
    $region149: #{denoiser_forward.1} parent=5 // pred_check
      _
    $region150: #{denoiser_forward.1} parent=5 // pred_check_branch
      %952 = sbr.rel (%p949) target = $region152
    $region151: #{denoiser_forward.1} parent=5 // pred_region
      %s953 = ssub.s32 %s73, 1
      %p954 = scmp.lt.s32.totalorder %s78, 1
      %s955 = scalar_select %p954, %s78, 1
      %s956 = smul.addr %s955, 8
      %s957 = scalar_lea.vmem %s1, %s956
      %p958 = pneg %p99
      %p959 = pneg %p96
      %p960 = scmp.lt.s32.totalorder %s78, 1
      %s961 = scalar_select %p960, %s78, 1
      %s962 = smul.addr %s961, 8
      %s963 = scalar_lea.vmem %s3, %s962
      %p964 = pneg %p125
      %p965 = pneg %p122
      %p966 = scmp.lt.s32.totalorder %s78, 1
      %s967 = scalar_select %p966, %s78, 1
      %s968 = smul.addr %s967, 8
      %s969 = scalar_lea.vmem %s5, %s968
      %p970 = pneg %p151
      %p971 = pneg %p148
      %p972 = scmp.lt.s32.totalorder %s78, 1
      %s973 = scalar_select %p972, %s78, 1
      %s974 = smul.addr %s973, 2
      %s975 = smul.addr %s974, 8
      %s976 = scalar_lea.vmem %s7, %s975
      %p977 = pneg %p177
      %p978 = pneg %p174
      %p979 = pneg %p198
      %p980 = pneg %p195
      %p981 = pneg %p219
      %p982 = pneg %p216
      %p983 = pneg %p240
      %p984 = pneg %p237
      %p985 = pneg %p261
      %p986 = pneg %p258
      %p987 = pneg %p282
      %p988 = pneg %p279
      %p989 = pneg %p303
      %p990 = pneg %p300
      %p991 = pneg %p324
      %p992 = pneg %p321
      %p993 = pneg %p345
      %p994 = pneg %p342
      %p995 = pneg %p366
      %p996 = pneg %p363
      %p997 = pneg %p387
      %p998 = pneg %p384
      %p999 = pneg %p408
      %p1000 = pneg %p405
      %p1001 = pneg %p429
      %p1002 = pneg %p426
      %p1003 = pneg %p450
      %p1004 = pneg %p447
      %p1005 = pneg %p471
      %p1006 = pneg %p468
      %p1007 = pneg %p492
      %p1008 = pneg %p489
      %p1009 = pneg %p513
      %p1010 = pneg %p510
      %p1011 = pneg %p534
      %p1012 = pneg %p531
      %p1013 = pneg %p555
      %p1014 = pneg %p552
      %p1015 = pneg %p576
      %p1016 = pneg %p573
      %p1017 = pneg %p597
      %p1018 = pneg %p594
      %p1019 = pneg %p618
      %p1020 = pneg %p615
      %p1021 = pneg %p639
      %p1022 = pneg %p636
      %p1023 = pneg %p660
      %p1024 = pneg %p657
      %p1025 = pneg %p681
      %p1026 = pneg %p678
      %p1027 = pneg %p702
      %p1028 = pneg %p699
      %p1029 = pneg %p723
      %p1030 = pneg %p720
      %p1031 = pneg %p744
      %p1032 = pneg %p741
      %p1033 = pneg %p765
      %p1034 = pneg %p762
      %p1035 = pneg %p786
      %p1036 = pneg %p783
      %p1037 = pneg %p812
      %p1038 = pneg %p809
      %p1039 = scmp.lt.s32.totalorder %s78, 1
      %s1040 = scalar_select %p1039, %s78, 1
      %s1041 = smul.addr %s1040, 8
      %s1042 = scalar_lea.vmem %s67, %s1041
      %p1043 = scmp.lt.s32.totalorder %s78, 1
      %s1044 = scalar_select %p1043, %s78, 1
      %s1045 = smul.addr %s1044, 8
      %s1046 = scalar_lea.vmem %s1, %s1045
      %p1047 = scmp.lt.s32.totalorder %s78, 1
      %s1048 = scalar_select %p1047, %s78, 1
      %s1049 = smul.addr %s1048, 8
      %s1050 = scalar_lea.vmem %s3, %s1049
      %p1051 = scmp.lt.s32.totalorder %s78, 1
      %s1052 = scalar_select %p1051, %s78, 1
      %s1053 = smul.addr %s1052, 8
      %s1054 = scalar_lea.vmem %s5, %s1053
      %p1055 = scmp.lt.s32.totalorder %s78, 1
      %s1056 = scalar_select %p1055, %s78, 1
      %s1057 = smul.addr %s1056, 2
      %s1058 = smul.addr %s1057, 8
      %s1059 = scalar_lea.vmem %s7, %s1058
      %p1060 = scmp.lt.s32.totalorder %s78, 1
      %s1061 = scalar_select %p1060, %s78, 1
      %s1062 = smul.addr %s1061, 8
      %s1063 = scalar_lea.vmem %s67, %s1062
      %v1065 = vld [vmem:[%s1046] sm:$0xff]
      %v1066 = vld [vmem:[%s9] sm:$0x1]
      %1068 = vset.pattern.permute.xlu0 0
      %1069 = vperm.xlu0 %1068, %v1065
      %v1070 = vpop.permute.xlu0 %1069
      %v1073 = vlaneseq
      %v1074 = vshrl.u32 %v1073, 7
      %v1075 = vsub.s32 0, %v1074
      %v1076 = vrot.slane %v1066, %v1075
      %v1078 = vmul.f32 %v1070, %v1076
      %v1079 = vld [vmem:[%s1050] sm:$0xff]
      %v1080 = vld [vmem:[%s1054] sm:$0xff]
      %1082 = vset.pattern.permute.xlu0 0
      %1083 = vperm.xlu0 %1082, %v1079
      %v1084 = vpop.permute.xlu0 %1083
      %v1086 = vmul.f32 %v1084, %v1080
      %v1087 = vand.u32 2147483647, %v1078
      %vm1088 = vcmp.le.f32.partialorder %v1087, 0.7853982
      %vm1089 = vcmp.lt.s32.totalorder %v1078, 0
      %v1090 = vand.u32 %v1078, 2139095040
      %v1091 = vshrl.u32 %v1090, 23
      %v1092 = vsub.s32 %v1091, 127
      %v1093 = vand.u32 2147483647, %v1078
      %v1094 = vand.u32 %v1093, 8388607
      %v1095 = vor.u32 %v1094, 8388608
      %v1096 = vsub.s32 0, %v1095
      %v1097 = vadd.s32 %v1092, 1
      %vm1098 = vcmp.gt.s32.totalorder %v1097, 0
      %v1099 = vsel %vm1098, %v1097, 0
      %v1100 = vshrl.u32 %v1099, 5
      %v1101 = vand.u32 %v1099, 31
      %v1102 = vsub.s32 32, %v1101
      %v1103 = vshrl.u32 683565275, %v1102
      %v1104 = vshll.u32 683565275, %v1101
      %v1105 = vshrl.u32 2475754826, %v1102
      %v1106 = vor.u32 %v1104, %v1105
      %v1107 = vshll.u32 2475754826, %v1101
      %v1108 = vshrl.u32 2131351028, %v1102
      %v1109 = vor.u32 %v1107, %v1108
      %v1110 = vshll.u32 2131351028, %v1101
      %v1111 = vshrl.u32 2102212464, %v1102
      %v1112 = vor.u32 %v1110, %v1111
      %v1113 = vshll.u32 2102212464, %v1101
      %v1114 = vshrl.u32 920167782, %v1102
      %v1115 = vor.u32 %v1113, %v1114
      %v1116 = vshll.u32 920167782, %v1101
      %v1117 = vshrl.u32 1326507024, %v1102
      %v1118 = vor.u32 %v1116, %v1117
      %vm1119 = vcmp.lt.s32.totalorder %v1100, 1
      %vm1120 = vcmp.lt.s32.totalorder %v1100, 2
      %vm1121 = vcmp.lt.s32.totalorder %v1100, 3
      %vm1122 = vcmp.lt.s32.totalorder %v1100, 4
      %v1123 = vsel %vm1119, %v1103, %v1106
      %v1124 = vsel %vm1122, %v1112, 2102212464
      %v1125 = vsel %vm1121, %v1109, %v1124
      %v1126 = vsel %vm1120, %v1123, %v1125
      %v1127 = vsel %vm1119, %v1106, %v1109
      %v1128 = vsel %vm1122, %v1115, 920167782
      %v1129 = vsel %vm1121, %v1112, %v1128
      %v1130 = vsel %vm1120, %v1127, %v1129
      %v1131 = vsel %vm1119, %v1109, %v1112
      %v1132 = vsel %vm1122, %v1118, 1326507024
      %v1133 = vsel %vm1121, %v1115, %v1132
      %v1134 = vsel %vm1120, %v1131, %v1133
      %v1135 = vshll.u32 %v1095, 8
      %v1136 = vmul.u32.u64.compose %v1135, %v1134
      %v1137 = vextract.low.u32 %v1136
      %v1138 = vextract.high.u32 %v1136
      %v1139 = vmul.u32.u64.compose %v1135, %v1130
      %v1140 = vextract.low.u32 %v1139
      %v1141 = vextract.high.u32 %v1139
      %v1142 = vmul.u32 %v1135, %v1126
      %v1143 = vadd.s32 %v1138, %v1140
      %vm1144 = vc.u32 %v1138, %v1140
      %v1145 = vadd.s32 %v1141, 1
      %v1146 = vsel %vm1144, %v1145, %v1141
      %v1147 = vadd.s32 %v1142, %v1146
      %v1148 = vadd.s32 %v1147, 536870912
      %v1149 = vshrl.u32 %v1148, 30
      %v1150 = vshll.u32 %v1149, 30
      %v1151 = vsub.s32 %v1147, %v1150
      %vm1152 = vcmp.lt.s32.totalorder %v1151, 0
      %v1153 = vsub.s32 0, %v1151
      %v1154 = vsel %vm1152, %v1153, %v1151
      %v1155 = vclz %v1154
      %v1156 = vsub.s32 %v1155, 2
      %vm1157 = vcmp.gt.s32.totalorder 0, %v1156
      %v1158 = vsel %vm1157, 0, %v1156
      %v1159 = vsub.s32 32, %v1158
      %v1160 = vshll.u32 %v1151, %v1158
      %v1161 = vshrl.u32 %v1143, %v1159
      %v1162 = vor.u32 %v1160, %v1161
      %v1163 = vsub.s32 4294967266, %v1158
      %v1164 = vadd.s32 %v1163, 127
      %v1165 = vshll.u32 %v1164, 23
      %v1166 = vor.u32 4788187, %v1165
      %v1167 = vand.u32 2147483647, %v1166
      %v1169 = vcvt.s32.f32 %v1162
      %v1170 = vmul.f32 %v1169, %v1167
      %v1171 = vxor.u32 %v1170, 2147483648
      %v1172 = vsel %vm1089, %v1171, %v1170
      %v1173 = vsub.s32 4, %v1149
      %v1174 = vsel %vm1089, %v1173, %v1149
      %v1175 = vsel %vm1088, %v1078, %v1172
      %v1176 = vsel %vm1088, 0, %v1174
      %v1177 = vcosq.f32.pop %v1175
      %v1178 = vsinq.f32.pop %v1175
      %vm1179 = vweird.f32 %v1078
      %v1180 = vand.u32 %v1176, 3
      %vm1181 = vcmp.lt.s32.totalorder %v1180, 2
      %vm1182 = vcmp.eq.s32.totalorder %v1180, 0
      %v1183 = vxor.u32 %v1178, 2147483648
      %v1184 = vsel %vm1182, %v1177, %v1183
      %vm1185 = vcmp.eq.s32.totalorder %v1180, 2
      %v1186 = vxor.u32 %v1177, 2147483648
      %v1187 = vsel %vm1185, %v1186, %v1178
      %v1188 = vsel %vm1181, %v1184, %v1187
      %v1189 = vsel %vm1179, nan, %v1188
      %v1190 = vld [vmem:[%s11] sm:$0xf]
      %v1191 = vld [vmem:[%s11 + $0x4] sm:$0xf]
      %v1192 = vld [vmem:[%s11 + $0x8] sm:$0xf]
      %v1193 = vld [vmem:[%s11 + $0xc] sm:$0xf]
      %v1194 = vpack.c.bf16 %v1189, %v1189
      %v1195 = vand.u32 2147483647, %v1078
      %vm1196 = vcmp.le.f32.partialorder %v1195, 0.7853982
      %vm1197 = vcmp.lt.s32.totalorder %v1078, 0
      %v1198 = vand.u32 %v1078, 2139095040
      %v1199 = vshrl.u32 %v1198, 23
      %v1200 = vsub.s32 %v1199, 127
      %v1201 = vand.u32 2147483647, %v1078
      %v1202 = vand.u32 %v1201, 8388607
      %v1203 = vor.u32 %v1202, 8388608
      %v1204 = vsub.s32 0, %v1203
      %v1205 = vadd.s32 %v1200, 1
      %vm1206 = vcmp.gt.s32.totalorder %v1205, 0
      %v1207 = vsel %vm1206, %v1205, 0
      %v1208 = vshrl.u32 %v1207, 5
      %v1209 = vand.u32 %v1207, 31
      %v1210 = vsub.s32 32, %v1209
      %v1211 = vshrl.u32 683565275, %v1210
      %v1212 = vshll.u32 683565275, %v1209
      %v1213 = vshrl.u32 2475754826, %v1210
      %v1214 = vor.u32 %v1212, %v1213
      %v1215 = vshll.u32 2475754826, %v1209
      %v1216 = vshrl.u32 2131351028, %v1210
      %v1217 = vor.u32 %v1215, %v1216
      %v1218 = vshll.u32 2131351028, %v1209
      %v1219 = vshrl.u32 2102212464, %v1210
      %v1220 = vor.u32 %v1218, %v1219
      %v1221 = vshll.u32 2102212464, %v1209
      %v1222 = vshrl.u32 920167782, %v1210
      %v1223 = vor.u32 %v1221, %v1222
      %v1224 = vshll.u32 920167782, %v1209
      %v1225 = vshrl.u32 1326507024, %v1210
      %v1226 = vor.u32 %v1224, %v1225
      %vm1227 = vcmp.lt.s32.totalorder %v1208, 1
      %vm1228 = vcmp.lt.s32.totalorder %v1208, 2
      %vm1229 = vcmp.lt.s32.totalorder %v1208, 3
      %vm1230 = vcmp.lt.s32.totalorder %v1208, 4
      %v1231 = vsel %vm1227, %v1211, %v1214
      %v1232 = vsel %vm1230, %v1220, 2102212464
      %v1233 = vsel %vm1229, %v1217, %v1232
      %v1234 = vsel %vm1228, %v1231, %v1233
      %v1235 = vsel %vm1227, %v1214, %v1217
      %v1236 = vsel %vm1230, %v1223, 920167782
      %v1237 = vsel %vm1229, %v1220, %v1236
      %v1238 = vsel %vm1228, %v1235, %v1237
      %v1239 = vsel %vm1227, %v1217, %v1220
      %v1240 = vsel %vm1230, %v1226, 1326507024
      %v1241 = vsel %vm1229, %v1223, %v1240
      %v1242 = vsel %vm1228, %v1239, %v1241
      %v1243 = vshll.u32 %v1203, 8
      %v1244 = vmul.u32.u64.compose %v1243, %v1242
      %v1245 = vextract.low.u32 %v1244
      %v1246 = vextract.high.u32 %v1244
      %v1247 = vmul.u32.u64.compose %v1243, %v1238
      %v1248 = vextract.low.u32 %v1247
      %v1249 = vextract.high.u32 %v1247
      %v1250 = vmul.u32 %v1243, %v1234
      %v1251 = vadd.s32 %v1246, %v1248
      %vm1252 = vc.u32 %v1246, %v1248
      %v1253 = vadd.s32 %v1249, 1
      %v1254 = vsel %vm1252, %v1253, %v1249
      %v1255 = vadd.s32 %v1250, %v1254
      %v1256 = vadd.s32 %v1255, 536870912
      %v1257 = vshrl.u32 %v1256, 30
      %v1258 = vshll.u32 %v1257, 30
      %v1259 = vsub.s32 %v1255, %v1258
      %vm1260 = vcmp.lt.s32.totalorder %v1259, 0
      %v1261 = vsub.s32 0, %v1259
      %v1262 = vsel %vm1260, %v1261, %v1259
      %v1263 = vclz %v1262
      %v1264 = vsub.s32 %v1263, 2
      %vm1265 = vcmp.gt.s32.totalorder 0, %v1264
      %v1266 = vsel %vm1265, 0, %v1264
      %v1267 = vsub.s32 32, %v1266
      %v1268 = vshll.u32 %v1259, %v1266
      %v1269 = vshrl.u32 %v1251, %v1267
      %v1270 = vor.u32 %v1268, %v1269
      %v1271 = vsub.s32 4294967266, %v1266
      %v1272 = vadd.s32 %v1271, 127
      %v1273 = vshll.u32 %v1272, 23
      %v1274 = vor.u32 4788187, %v1273
      %v1275 = vand.u32 2147483647, %v1274
      %v1277 = vcvt.s32.f32 %v1270
      %v1278 = vmul.f32 %v1277, %v1275
      %v1279 = vxor.u32 %v1278, 2147483648
      %v1280 = vsel %vm1197, %v1279, %v1278
      %v1281 = vsub.s32 4, %v1257
      %v1282 = vsel %vm1197, %v1281, %v1257
      %v1283 = vsel %vm1196, %v1078, %v1280
      %v1284 = vsel %vm1196, 0, %v1282
      %v1285 = vcosq.f32.pop %v1283
      %v1286 = vsinq.f32.pop %v1283
      %vm1287 = vweird.f32 %v1078
      %v1288 = vadd.s32 %v1284, 3
      %v1289 = vand.u32 %v1288, 3
      %vm1290 = vcmp.lt.s32.totalorder %v1289, 2
      %vm1291 = vcmp.eq.s32.totalorder %v1289, 0
      %v1292 = vxor.u32 %v1286, 2147483648
      %v1293 = vsel %vm1291, %v1285, %v1292
      %vm1294 = vcmp.eq.s32.totalorder %v1289, 2
      %v1295 = vxor.u32 %v1285, 2147483648
      %v1296 = vsel %vm1294, %v1295, %v1286
      %v1297 = vsel %vm1290, %v1293, %v1296
      %v1298 = vsel %vm1287, nan, %v1297
      %v1299 = vld [vmem:[%s13] sm:$0xf]
      %v1300 = vld [vmem:[%s13 + $0x4] sm:$0xf]
      %v1301 = vld [vmem:[%s13 + $0x8] sm:$0xf]
      %v1302 = vld [vmem:[%s13 + $0xc] sm:$0xf]
      %v1303 = vpack.c.bf16 %v1298, %v1298
      %v1308 = vunpack.c.l.b16 %v1299
      %v1309 = vunpack.c.l.b16 %v1300
      %v1310 = vunpack.c.l.b16 %v1301
      %v1311 = vunpack.c.l.b16 %v1302
      %v1312 = vpack.c.b16 %v1309, %v1308
      %v1313 = vpack.c.b16 %v1311, %v1310
      %vm1316 = vcmask 261120
      %v1318 = vsel %vm1316, %v1303, 0
      %1320 = vmatprep.subr.bf16.mxu0 0
      %1321 = vmatpush1.bf16.msra.mxu0 0
      %1322 = vmatprep.subr.bf16.mxu0 0
      %1323 = vmatpush1.bf16.msra.mxu0 0
      %1324 = vmatprep.subr.bf16.mxu0 0
      %1325 = vmatpush1.bf16.msra.mxu0 0
      %1326 = vmatprep.subr.bf16.mxu0 0
      %1327 = vmatpush1.bf16.msra.mxu0 0
      %1328 = vmatprep.subr.bf16.mxu0 0
      %1329 = vmatpush1.bf16.msra.mxu0 0
      %1330 = vmatprep.subr.bf16.mxu0 0
      %1331 = vmatpush1.bf16.msra.mxu0 0
      %1332 = vmatprep.subr.bf16.mxu0 0
      %1333 = vmatpush1.bf16.msra.mxu0 %v1313
      %1334 = vmatprep.subr.bf16.mxu0 0
      %1335 = vmatpush1.bf16.msra.mxu0 %v1312
      %1336 = vmatprep.subr.bf16.mxu0 0
      %1337 = vmatpush2.bf16.msra.mxu0 0
      %1338 = vmatprep.subr.bf16.mxu0 0
      %1339 = vmatpush2.bf16.msra.mxu0 0
      %1340 = vmatprep.subr.bf16.mxu0 0
      %1341 = vmatpush2.bf16.msra.mxu0 0
      %1342 = vmatprep.subr.bf16.mxu0 0
      %1343 = vmatpush2.bf16.msra.mxu0 0
      %1344 = vmatprep.subr.bf16.mxu0 0
      %1345 = vmatpush2.bf16.msra.mxu0 0
      %1346 = vmatprep.subr.bf16.mxu0 0
      %1347 = vmatpush2.bf16.msra.mxu0 0
      %1348 = vmatprep.subr.bf16.mxu0 0
      %1349 = vmatpush2.bf16.msra.mxu0 0
      %1350 = vmatprep.subr.bf16.mxu0 0
      %1351 = vmatpush2.bf16.msra.mxu0 0
      %1352 = vmatprep.mubr.bf16.mxu0 0
      %1353 = vmatmul.mubr.bf16.gmra.mxu0 %v1318
      %v1354 = vpop.f32.mrf.mxu0
      %v1355 = vadd.f32 0.0, %v1354
      %v1356 = vpop.f32.mrf.mxu0
      %v1357 = vpop.f32.mrf.mxu0
      %v1358 = vpop.f32.mrf.mxu0
      %1359 = vdwg.mxu0
      %v1364 = vunpack.c.l.b16 %v1190
      %v1365 = vunpack.c.l.b16 %v1191
      %v1366 = vunpack.c.l.b16 %v1192
      %v1367 = vunpack.c.l.b16 %v1193
      %v1368 = vpack.c.b16 %v1365, %v1364
      %v1369 = vpack.c.b16 %v1367, %v1366
      %v1373 = vsel %vm1316, %v1194, 0
      %1375 = vmatprep.subr.bf16.mxu0 0
      %1376 = vmatpush1.bf16.msra.mxu0 0
      %1377 = vmatprep.subr.bf16.mxu0 0
      %1378 = vmatpush1.bf16.msra.mxu0 0
      %1379 = vmatprep.subr.bf16.mxu0 0
      %1380 = vmatpush1.bf16.msra.mxu0 0
      %1381 = vmatprep.subr.bf16.mxu0 0
      %1382 = vmatpush1.bf16.msra.mxu0 0
      %1383 = vmatprep.subr.bf16.mxu0 0
      %1384 = vmatpush1.bf16.msra.mxu0 0
      %1385 = vmatprep.subr.bf16.mxu0 0
      %1386 = vmatpush1.bf16.msra.mxu0 0
      %1387 = vmatprep.subr.bf16.mxu0 0
      %1388 = vmatpush1.bf16.msra.mxu0 %v1369
      %1389 = vmatprep.subr.bf16.mxu0 0
      %1390 = vmatpush1.bf16.msra.mxu0 %v1368
      %1391 = vmatprep.subr.bf16.mxu0 0
      %1392 = vmatpush2.bf16.msra.mxu0 0
      %1393 = vmatprep.subr.bf16.mxu0 0
      %1394 = vmatpush2.bf16.msra.mxu0 0
      %1395 = vmatprep.subr.bf16.mxu0 0
      %1396 = vmatpush2.bf16.msra.mxu0 0
      %1397 = vmatprep.subr.bf16.mxu0 0
      %1398 = vmatpush2.bf16.msra.mxu0 0
      %1399 = vmatprep.subr.bf16.mxu0 0
      %1400 = vmatpush2.bf16.msra.mxu0 0
      %1401 = vmatprep.subr.bf16.mxu0 0
      %1402 = vmatpush2.bf16.msra.mxu0 0
      %1403 = vmatprep.subr.bf16.mxu0 0
      %1404 = vmatpush2.bf16.msra.mxu0 0
      %1405 = vmatprep.subr.bf16.mxu0 0
      %1406 = vmatpush2.bf16.msra.mxu0 0
      %1407 = vmatprep.mubr.bf16.mxu0 0
      %1408 = vmatmul.mubr.bf16.gmra.mxu0 %v1373
      %v1409 = vpop.f32.mrf.mxu0
      %v1410 = vadd.f32 %v1355, %v1409
      %v1411 = vpop.f32.mrf.mxu0
      %v1412 = vpop.f32.mrf.mxu0
      %v1413 = vpop.f32.mrf.mxu0
      %1414 = vdwg.mxu0
      %v1415 = vld [vmem:[%s15] sm:$0x3]
      %v1416 = vpack.c.bf16 %v1086, %v1086
      %vm1417 = vcmask 23552
      %v1419 = vsel %vm1417, %v1416, 0
      %vm1421 = vcmask 1040384
      %vm1422 = vcmask 1041408
      %v1423 = vsel %vm1421, 4294967295, 65535
      %v1424 = vsel %vm1422, %v1423, 0
      %v1426 = vand.u32 %v1415, %v1424
      %1428 = vmatprep.subr.bf16.mxu0 0
      %1429 = vmatpush1.bf16.msra.mxu0 0
      %1430 = vmatprep.subr.bf16.mxu0 0
      %1431 = vmatpush1.bf16.msra.mxu0 0
      %1432 = vmatprep.subr.bf16.mxu0 0
      %1433 = vmatpush1.bf16.msra.mxu0 0
      %1434 = vmatprep.subr.bf16.mxu0 0
      %1435 = vmatpush1.bf16.msra.mxu0 0
      %1436 = vmatprep.subr.bf16.mxu0 0
      %1437 = vmatpush1.bf16.msra.mxu0 0
      %1438 = vmatprep.subr.bf16.mxu0 0
      %1439 = vmatpush1.bf16.msra.mxu0 0
      %1440 = vmatprep.subr.bf16.mxu0 0
      %1441 = vmatpush1.bf16.msra.mxu0 0
      %1442 = vmatprep.subr.bf16.mxu0 0
      %1443 = vmatpush1.bf16.msra.mxu0 %v1426
      %1444 = vmatprep.subr.bf16.mxu0 0
      %1445 = vmatpush2.bf16.msra.mxu0 0
      %1446 = vmatprep.subr.bf16.mxu0 0
      %1447 = vmatpush2.bf16.msra.mxu0 0
      %1448 = vmatprep.subr.bf16.mxu0 0
      %1449 = vmatpush2.bf16.msra.mxu0 0
      %1450 = vmatprep.subr.bf16.mxu0 0
      %1451 = vmatpush2.bf16.msra.mxu0 0
      %1452 = vmatprep.subr.bf16.mxu0 0
      %1453 = vmatpush2.bf16.msra.mxu0 0
      %1454 = vmatprep.subr.bf16.mxu0 0
      %1455 = vmatpush2.bf16.msra.mxu0 0
      %1456 = vmatprep.subr.bf16.mxu0 0
      %1457 = vmatpush2.bf16.msra.mxu0 0
      %1458 = vmatprep.subr.bf16.mxu0 0
      %1459 = vmatpush2.bf16.msra.mxu0 0
      %1460 = vmatprep.mubr.bf16.mxu0 0
      %1461 = vmatmul.mubr.bf16.gmra.mxu0 %v1419
      %v1462 = vpop.f32.mrf.mxu0
      %v1463 = vadd.f32 0.0, %v1462
      %v1464 = vpop.f32.mrf.mxu0
      %v1465 = vpop.f32.mrf.mxu0
      %v1466 = vpop.f32.mrf.mxu0
      %1467 = vdwg.mxu0
      %v1468 = vadd.f32 %v1410, %v1463
      %v1469 = vld [vmem:[%s17] sm:$0x1]
      %v1471 = vlaneseq
      %v1472 = vshrl.u32 %v1471, 7
      %v1473 = vsub.s32 0, %v1472
      %v1474 = vrot.slane %v1469, %v1473
      %v1476 = vadd.f32 %v1468, %v1474
      %v1477 = vld [vmem:[%s19] sm:$0xff]
      %v1478 = vld [vmem:[%s19 + $0x8] sm:$0xff]
      %vm1479 = vcmask 64512
      %v1481 = vsel %vm1479, %v1477, 0
      %v1484 = vsel %vm1479, %v1478, 0
      %1486 = vmatprep.subr.mxu0 0.0
      %1487 = vmatpush1.msra.mxu0 0.0
      %1488 = vmatprep.subr.mxu0 0.0
      %1489 = vmatpush1.msra.mxu0 0.0
      %1490 = vmatprep.subr.mxu0 0.0
      %1491 = vmatpush1.msra.mxu0 0.0
      %1492 = vmatprep.subr.mxu0 0.0
      %1493 = vmatpush1.msra.mxu0 0.0
      %1494 = vmatprep.subr.mxu0 0.0
      %1495 = vmatpush1.msra.mxu0 0.0
      %1496 = vmatprep.subr.mxu0 0.0
      %1497 = vmatpush1.msra.mxu0 0.0
      %1498 = vmatprep.subr.mxu0 0.0
      %1499 = vmatpush1.msra.mxu0 0.0
      %1500 = vmatprep.subr.mxu0 0.0
      %1501 = vmatpush1.msra.mxu0 0.0
      %1502 = vmatprep.subr.mxu0 0.0
      %1503 = vmatpush1.msra.mxu0 0.0
      %1504 = vmatprep.subr.mxu0 0.0
      %1505 = vmatpush1.msra.mxu0 0.0
      %1506 = vmatprep.subr.mxu0 0.0
      %1507 = vmatpush1.msra.mxu0 0.0
      %1508 = vmatprep.subr.mxu0 0.0
      %1509 = vmatpush1.msra.mxu0 0.0
      %1510 = vmatprep.subr.mxu0 0.0
      %1511 = vmatpush1.msra.mxu0 0.0
      %1512 = vmatprep.subr.mxu0 0.0
      %1513 = vmatpush1.msra.mxu0 0.0
      %1514 = vmatprep.subr.mxu0 0.0
      %1515 = vmatpush1.msra.mxu0 0.0
      %1516 = vmatprep.subr.mxu0 0.0
      %1517 = vmatpush1.msra.mxu0 %v1476
      %1518 = vmatprep.subr.mxu0 0.0
      %1519 = vmatpush2.msra.mxu0 0.0
      %1520 = vmatprep.subr.mxu0 0.0
      %1521 = vmatpush2.msra.mxu0 0.0
      %1522 = vmatprep.subr.mxu0 0.0
      %1523 = vmatpush2.msra.mxu0 0.0
      %1524 = vmatprep.subr.mxu0 0.0
      %1525 = vmatpush2.msra.mxu0 0.0
      %1526 = vmatprep.subr.mxu0 0.0
      %1527 = vmatpush2.msra.mxu0 0.0
      %1528 = vmatprep.subr.mxu0 0.0
      %1529 = vmatpush2.msra.mxu0 0.0
      %1530 = vmatprep.subr.mxu0 0.0
      %1531 = vmatpush2.msra.mxu0 0.0
      %1532 = vmatprep.subr.mxu0 0.0
      %1533 = vmatpush2.msra.mxu0 0.0
      %1534 = vmatprep.subr.mxu0 0.0
      %1535 = vmatpush2.msra.mxu0 0.0
      %1536 = vmatprep.subr.mxu0 0.0
      %1537 = vmatpush2.msra.mxu0 0.0
      %1538 = vmatprep.subr.mxu0 0.0
      %1539 = vmatpush2.msra.mxu0 0.0
      %1540 = vmatprep.subr.mxu0 0.0
      %1541 = vmatpush2.msra.mxu0 0.0
      %1542 = vmatprep.subr.mxu0 0.0
      %1543 = vmatpush2.msra.mxu0 0.0
      %1544 = vmatprep.subr.mxu0 0.0
      %1545 = vmatpush2.msra.mxu0 0.0
      %1546 = vmatprep.subr.mxu0 0.0
      %1547 = vmatpush2.msra.mxu0 0.0
      %1548 = vmatprep.subr.mxu0 0.0
      %1549 = vmatpush2.msra.mxu0 0.0
      %1550 = vmatprep.mubr.f32.mxu0 0.0
      %1551 = vmatmul.mubr.f32.gmra.mxu0 %v1481
      %v1552 = vpop.f32.mrf.mxu0
      %v1553 = vadd.f32 0.0, %v1552
      %v1554 = vpop.f32.mrf.mxu0
      %1555 = vmatprep.mubr.f32.mxu0 0.0
      %1556 = vmatmul.mubr.f32.gmra.mxu0 %v1484
      %v1557 = vpop.f32.mrf.mxu0
      %v1558 = vadd.f32 0.0, %v1557
      %v1559 = vpop.f32.mrf.mxu0
      %1560 = vdwg.mxu0
      %v1561 = vld [vmem:[%s21] sm:$0xff]
      %v1562 = vld [vmem:[%s21 + $0x8] sm:$0xff]
      %v1564 = vsel %vm1479, %v1561, 0
      %v1567 = vsel %vm1479, %v1562, 0
      %1569 = vmatprep.subr.mxu0 0.0
      %1570 = vmatpush1.msra.mxu0 0.0
      %1571 = vmatprep.subr.mxu0 0.0
      %1572 = vmatpush1.msra.mxu0 0.0
      %1573 = vmatprep.subr.mxu0 0.0
      %1574 = vmatpush1.msra.mxu0 0.0
      %1575 = vmatprep.subr.mxu0 0.0
      %1576 = vmatpush1.msra.mxu0 0.0
      %1577 = vmatprep.subr.mxu0 0.0
      %1578 = vmatpush1.msra.mxu0 0.0
      %1579 = vmatprep.subr.mxu0 0.0
      %1580 = vmatpush1.msra.mxu0 0.0
      %1581 = vmatprep.subr.mxu0 0.0
      %1582 = vmatpush1.msra.mxu0 0.0
      %1583 = vmatprep.subr.mxu0 0.0
      %1584 = vmatpush1.msra.mxu0 0.0
      %1585 = vmatprep.subr.mxu0 0.0
      %1586 = vmatpush1.msra.mxu0 0.0
      %1587 = vmatprep.subr.mxu0 0.0
      %1588 = vmatpush1.msra.mxu0 0.0
      %1589 = vmatprep.subr.mxu0 0.0
      %1590 = vmatpush1.msra.mxu0 0.0
      %1591 = vmatprep.subr.mxu0 0.0
      %1592 = vmatpush1.msra.mxu0 0.0
      %1593 = vmatprep.subr.mxu0 0.0
      %1594 = vmatpush1.msra.mxu0 0.0
      %1595 = vmatprep.subr.mxu0 0.0
      %1596 = vmatpush1.msra.mxu0 0.0
      %1597 = vmatprep.subr.mxu0 0.0
      %1598 = vmatpush1.msra.mxu0 0.0
      %1599 = vmatprep.subr.mxu0 0.0
      %1600 = vmatpush1.msra.mxu0 %v1476
      %1601 = vmatprep.subr.mxu0 0.0
      %1602 = vmatpush2.msra.mxu0 0.0
      %1603 = vmatprep.subr.mxu0 0.0
      %1604 = vmatpush2.msra.mxu0 0.0
      %1605 = vmatprep.subr.mxu0 0.0
      %1606 = vmatpush2.msra.mxu0 0.0
      %1607 = vmatprep.subr.mxu0 0.0
      %1608 = vmatpush2.msra.mxu0 0.0
      %1609 = vmatprep.subr.mxu0 0.0
      %1610 = vmatpush2.msra.mxu0 0.0
      %1611 = vmatprep.subr.mxu0 0.0
      %1612 = vmatpush2.msra.mxu0 0.0
      %1613 = vmatprep.subr.mxu0 0.0
      %1614 = vmatpush2.msra.mxu0 0.0
      %1615 = vmatprep.subr.mxu0 0.0
      %1616 = vmatpush2.msra.mxu0 0.0
      %1617 = vmatprep.subr.mxu0 0.0
      %1618 = vmatpush2.msra.mxu0 0.0
      %1619 = vmatprep.subr.mxu0 0.0
      %1620 = vmatpush2.msra.mxu0 0.0
      %1621 = vmatprep.subr.mxu0 0.0
      %1622 = vmatpush2.msra.mxu0 0.0
      %1623 = vmatprep.subr.mxu0 0.0
      %1624 = vmatpush2.msra.mxu0 0.0
      %1625 = vmatprep.subr.mxu0 0.0
      %1626 = vmatpush2.msra.mxu0 0.0
      %1627 = vmatprep.subr.mxu0 0.0
      %1628 = vmatpush2.msra.mxu0 0.0
      %1629 = vmatprep.subr.mxu0 0.0
      %1630 = vmatpush2.msra.mxu0 0.0
      %1631 = vmatprep.subr.mxu0 0.0
      %1632 = vmatpush2.msra.mxu0 0.0
      %1633 = vmatprep.mubr.f32.mxu0 0.0
      %1634 = vmatmul.mubr.f32.gmra.mxu0 %v1564
      %v1635 = vpop.f32.mrf.mxu0
      %v1636 = vadd.f32 0.0, %v1635
      %v1637 = vpop.f32.mrf.mxu0
      %1638 = vmatprep.mubr.f32.mxu0 0.0
      %1639 = vmatmul.mubr.f32.gmra.mxu0 %v1567
      %v1640 = vpop.f32.mrf.mxu0
      %v1641 = vadd.f32 0.0, %v1640
      %v1642 = vpop.f32.mrf.mxu0
      %1643 = vdwg.mxu0
      %v1644 = vld [vmem:[%s1059] sm:$0xff]
      %v1645 = vld [vmem:[%s1059 + $0x8] sm:$0xff]
      %v1646 = vld [vmem:[%s25] sm:$0xf]
      %v1647 = vld [vmem:[%s25 + $0x4] sm:$0xf]
      %v1648 = vld [vmem:[%s25 + $0x8] sm:$0xf]
      %v1649 = vld [vmem:[%s25 + $0xc] sm:$0xf]
      %v1650 = vld [vmem:[%s25 + $0x10] sm:$0xf]
      %v1651 = vld [vmem:[%s25 + $0x14] sm:$0xf]
      %v1652 = vld [vmem:[%s25 + $0x18] sm:$0xf]
      %v1653 = vld [vmem:[%s25 + $0x1c] sm:$0xf]
      %v1654 = vld [vmem:[%s25 + $0x20] sm:$0xf]
      %v1655 = vld [vmem:[%s25 + $0x24] sm:$0xf]
      %v1656 = vld [vmem:[%s25 + $0x28] sm:$0xf]
      %v1657 = vld [vmem:[%s25 + $0x2c] sm:$0xf]
      %v1658 = vld [vmem:[%s25 + $0x30] sm:$0xf]
      %v1659 = vld [vmem:[%s25 + $0x34] sm:$0xf]
      %v1660 = vld [vmem:[%s25 + $0x38] sm:$0xf]
      %v1661 = vld [vmem:[%s25 + $0x3c] sm:$0xf]
      %v1662 = vpack.c.bf16 %v1558, %v1553
      %v1663 = vld [vmem:[%s27] sm:$0xf]
      %v1664 = vld [vmem:[%s27 + $0x4] sm:$0xf]
      %v1665 = vld [vmem:[%s27 + $0x8] sm:$0xf]
      %v1666 = vld [vmem:[%s27 + $0xc] sm:$0xf]
      %v1667 = vld [vmem:[%s27 + $0x10] sm:$0xf]
      %v1668 = vld [vmem:[%s27 + $0x14] sm:$0xf]
      %v1669 = vld [vmem:[%s27 + $0x18] sm:$0xf]
      %v1670 = vld [vmem:[%s27 + $0x1c] sm:$0xf]
      %v1671 = vld [vmem:[%s27 + $0x20] sm:$0xf]
      %v1672 = vld [vmem:[%s27 + $0x24] sm:$0xf]
      %v1673 = vld [vmem:[%s27 + $0x28] sm:$0xf]
      %v1674 = vld [vmem:[%s27 + $0x2c] sm:$0xf]
      %v1675 = vld [vmem:[%s27 + $0x30] sm:$0xf]
      %v1676 = vld [vmem:[%s27 + $0x34] sm:$0xf]
      %v1677 = vld [vmem:[%s27 + $0x38] sm:$0xf]
      %v1678 = vld [vmem:[%s27 + $0x3c] sm:$0xf]
      %v1679 = vpack.c.bf16 %v1641, %v1636
      %v1696 = vunpack.c.l.b16 %v1663
      %v1697 = vunpack.c.l.b16 %v1664
      %v1698 = vunpack.c.l.b16 %v1665
      %v1699 = vunpack.c.l.b16 %v1666
      %v1700 = vunpack.c.l.b16 %v1667
      %v1701 = vunpack.c.l.b16 %v1668
      %v1702 = vunpack.c.l.b16 %v1669
      %v1703 = vunpack.c.l.b16 %v1670
      %v1704 = vunpack.c.l.b16 %v1671
      %v1705 = vunpack.c.l.b16 %v1672
      %v1706 = vunpack.c.l.b16 %v1673
      %v1707 = vunpack.c.l.b16 %v1674
      %v1708 = vunpack.c.l.b16 %v1675
      %v1709 = vunpack.c.l.b16 %v1676
      %v1710 = vunpack.c.l.b16 %v1677
      %v1711 = vunpack.c.l.b16 %v1678
      %v1712 = vpack.c.b16 %v1697, %v1696
      %v1713 = vpack.c.b16 %v1699, %v1698
      %v1714 = vpack.c.b16 %v1701, %v1700
      %v1715 = vpack.c.b16 %v1703, %v1702
      %v1716 = vpack.c.b16 %v1705, %v1704
      %v1717 = vpack.c.b16 %v1707, %v1706
      %v1718 = vpack.c.b16 %v1709, %v1708
      %v1719 = vpack.c.b16 %v1711, %v1710
      %1728 = vmatprep.subr.bf16.mxu0 0
      %1729 = vmatpush1.bf16.msra.mxu0 %v1719
      %1730 = vmatprep.subr.bf16.mxu0 0
      %1731 = vmatpush1.bf16.msra.mxu0 %v1718
      %1732 = vmatprep.subr.bf16.mxu0 0
      %1733 = vmatpush1.bf16.msra.mxu0 %v1717
      %1734 = vmatprep.subr.bf16.mxu0 0
      %1735 = vmatpush1.bf16.msra.mxu0 %v1716
      %1736 = vmatprep.subr.bf16.mxu0 0
      %1737 = vmatpush1.bf16.msra.mxu0 %v1715
      %1738 = vmatprep.subr.bf16.mxu0 0
      %1739 = vmatpush1.bf16.msra.mxu0 %v1714
      %1740 = vmatprep.subr.bf16.mxu0 0
      %1741 = vmatpush1.bf16.msra.mxu0 %v1713
      %1742 = vmatprep.subr.bf16.mxu0 0
      %1743 = vmatpush1.bf16.msra.mxu0 %v1712
      %1744 = vmatprep.subr.bf16.mxu0 0
      %1745 = vmatpush2.bf16.msra.mxu0 0
      %1746 = vmatprep.subr.bf16.mxu0 0
      %1747 = vmatpush2.bf16.msra.mxu0 0
      %1748 = vmatprep.subr.bf16.mxu0 0
      %1749 = vmatpush2.bf16.msra.mxu0 0
      %1750 = vmatprep.subr.bf16.mxu0 0
      %1751 = vmatpush2.bf16.msra.mxu0 0
      %1752 = vmatprep.subr.bf16.mxu0 0
      %1753 = vmatpush2.bf16.msra.mxu0 0
      %1754 = vmatprep.subr.bf16.mxu0 0
      %1755 = vmatpush2.bf16.msra.mxu0 0
      %1756 = vmatprep.subr.bf16.mxu0 0
      %1757 = vmatpush2.bf16.msra.mxu0 0
      %1758 = vmatprep.subr.bf16.mxu0 0
      %1759 = vmatpush2.bf16.msra.mxu0 0
      %1760 = vmatprep.mubr.bf16.mxu0 0
      %1761 = vmatmul.mubr.bf16.gmra.mxu0 %v1679
      %v1762 = vpop.f32.mrf.mxu0
      %v1763 = vadd.f32 0.0, %v1762
      %v1764 = vpop.f32.mrf.mxu0
      %v1765 = vpop.f32.mrf.mxu0
      %v1766 = vadd.f32 0.0, %v1765
      %v1767 = vpop.f32.mrf.mxu0
      %1768 = vdwg.mxu0
      %v1785 = vunpack.c.l.b16 %v1646
      %v1786 = vunpack.c.l.b16 %v1647
      %v1787 = vunpack.c.l.b16 %v1648
      %v1788 = vunpack.c.l.b16 %v1649
      %v1789 = vunpack.c.l.b16 %v1650
      %v1790 = vunpack.c.l.b16 %v1651
      %v1791 = vunpack.c.l.b16 %v1652
      %v1792 = vunpack.c.l.b16 %v1653
      %v1793 = vunpack.c.l.b16 %v1654
      %v1794 = vunpack.c.l.b16 %v1655
      %v1795 = vunpack.c.l.b16 %v1656
      %v1796 = vunpack.c.l.b16 %v1657
      %v1797 = vunpack.c.l.b16 %v1658
      %v1798 = vunpack.c.l.b16 %v1659
      %v1799 = vunpack.c.l.b16 %v1660
      %v1800 = vunpack.c.l.b16 %v1661
      %v1801 = vpack.c.b16 %v1786, %v1785
      %v1802 = vpack.c.b16 %v1788, %v1787
      %v1803 = vpack.c.b16 %v1790, %v1789
      %v1804 = vpack.c.b16 %v1792, %v1791
      %v1805 = vpack.c.b16 %v1794, %v1793
      %v1806 = vpack.c.b16 %v1796, %v1795
      %v1807 = vpack.c.b16 %v1798, %v1797
      %v1808 = vpack.c.b16 %v1800, %v1799
      %1817 = vmatprep.subr.bf16.mxu0 0
      %1818 = vmatpush1.bf16.msra.mxu0 %v1808
      %1819 = vmatprep.subr.bf16.mxu0 0
      %1820 = vmatpush1.bf16.msra.mxu0 %v1807
      %1821 = vmatprep.subr.bf16.mxu0 0
      %1822 = vmatpush1.bf16.msra.mxu0 %v1806
      %1823 = vmatprep.subr.bf16.mxu0 0
      %1824 = vmatpush1.bf16.msra.mxu0 %v1805
      %1825 = vmatprep.subr.bf16.mxu0 0
      %1826 = vmatpush1.bf16.msra.mxu0 %v1804
      %1827 = vmatprep.subr.bf16.mxu0 0
      %1828 = vmatpush1.bf16.msra.mxu0 %v1803
      %1829 = vmatprep.subr.bf16.mxu0 0
      %1830 = vmatpush1.bf16.msra.mxu0 %v1802
      %1831 = vmatprep.subr.bf16.mxu0 0
      %1832 = vmatpush1.bf16.msra.mxu0 %v1801
      %1833 = vmatprep.subr.bf16.mxu0 0
      %1834 = vmatpush2.bf16.msra.mxu0 0
      %1835 = vmatprep.subr.bf16.mxu0 0
      %1836 = vmatpush2.bf16.msra.mxu0 0
      %1837 = vmatprep.subr.bf16.mxu0 0
      %1838 = vmatpush2.bf16.msra.mxu0 0
      %1839 = vmatprep.subr.bf16.mxu0 0
      %1840 = vmatpush2.bf16.msra.mxu0 0
      %1841 = vmatprep.subr.bf16.mxu0 0
      %1842 = vmatpush2.bf16.msra.mxu0 0
      %1843 = vmatprep.subr.bf16.mxu0 0
      %1844 = vmatpush2.bf16.msra.mxu0 0
      %1845 = vmatprep.subr.bf16.mxu0 0
      %1846 = vmatpush2.bf16.msra.mxu0 0
      %1847 = vmatprep.subr.bf16.mxu0 0
      %1848 = vmatpush2.bf16.msra.mxu0 0
      %1849 = vmatprep.mubr.bf16.mxu0 0
      %1850 = vmatmul.mubr.bf16.gmra.mxu0 %v1662
      %v1851 = vpop.f32.mrf.mxu0
      %v1852 = vadd.f32 %v1763, %v1851
      %v1853 = vpop.f32.mrf.mxu0
      %v1854 = vpop.f32.mrf.mxu0
      %v1855 = vadd.f32 %v1766, %v1854
      %v1856 = vpop.f32.mrf.mxu0
      %1857 = vdwg.mxu0
      %v1858 = vld [vmem:[%s29] sm:$0xf]
      %v1859 = vld [vmem:[%s29 + $0x4] sm:$0xf]
      %v1860 = vld [vmem:[%s29 + $0x8] sm:$0xf]
      %v1861 = vld [vmem:[%s29 + $0xc] sm:$0xf]
      %v1862 = vld [vmem:[%s29 + $0x10] sm:$0xf]
      %v1863 = vld [vmem:[%s29 + $0x14] sm:$0xf]
      %v1864 = vld [vmem:[%s29 + $0x18] sm:$0xf]
      %v1865 = vld [vmem:[%s29 + $0x1c] sm:$0xf]
      %v1866 = vld [vmem:[%s29 + $0x20] sm:$0xf]
      %v1867 = vld [vmem:[%s29 + $0x24] sm:$0xf]
      %v1868 = vld [vmem:[%s29 + $0x28] sm:$0xf]
      %v1869 = vld [vmem:[%s29 + $0x2c] sm:$0xf]
      %v1870 = vld [vmem:[%s29 + $0x30] sm:$0xf]
      %v1871 = vld [vmem:[%s29 + $0x34] sm:$0xf]
      %v1872 = vld [vmem:[%s29 + $0x38] sm:$0xf]
      %v1873 = vld [vmem:[%s29 + $0x3c] sm:$0xf]
      %v1874 = vpack.c.bf16 %v1645, %v1644
      %v1891 = vunpack.c.l.b16 %v1858
      %v1892 = vunpack.c.l.b16 %v1859
      %v1893 = vunpack.c.l.b16 %v1860
      %v1894 = vunpack.c.l.b16 %v1861
      %v1895 = vunpack.c.l.b16 %v1862
      %v1896 = vunpack.c.l.b16 %v1863
      %v1897 = vunpack.c.l.b16 %v1864
      %v1898 = vunpack.c.l.b16 %v1865
      %v1899 = vunpack.c.l.b16 %v1866
      %v1900 = vunpack.c.l.b16 %v1867
      %v1901 = vunpack.c.l.b16 %v1868
      %v1902 = vunpack.c.l.b16 %v1869
      %v1903 = vunpack.c.l.b16 %v1870
      %v1904 = vunpack.c.l.b16 %v1871
      %v1905 = vunpack.c.l.b16 %v1872
      %v1906 = vunpack.c.l.b16 %v1873
      %v1907 = vpack.c.b16 %v1892, %v1891
      %v1908 = vpack.c.b16 %v1894, %v1893
      %v1909 = vpack.c.b16 %v1896, %v1895
      %v1910 = vpack.c.b16 %v1898, %v1897
      %v1911 = vpack.c.b16 %v1900, %v1899
      %v1912 = vpack.c.b16 %v1902, %v1901
      %v1913 = vpack.c.b16 %v1904, %v1903
      %v1914 = vpack.c.b16 %v1906, %v1905
      %1923 = vmatprep.subr.bf16.mxu0 0
      %1924 = vmatpush1.bf16.msra.mxu0 %v1914
      %1925 = vmatprep.subr.bf16.mxu0 0
      %1926 = vmatpush1.bf16.msra.mxu0 %v1913
      %1927 = vmatprep.subr.bf16.mxu0 0
      %1928 = vmatpush1.bf16.msra.mxu0 %v1912
      %1929 = vmatprep.subr.bf16.mxu0 0
      %1930 = vmatpush1.bf16.msra.mxu0 %v1911
      %1931 = vmatprep.subr.bf16.mxu0 0
      %1932 = vmatpush1.bf16.msra.mxu0 %v1910
      %1933 = vmatprep.subr.bf16.mxu0 0
      %1934 = vmatpush1.bf16.msra.mxu0 %v1909
      %1935 = vmatprep.subr.bf16.mxu0 0
      %1936 = vmatpush1.bf16.msra.mxu0 %v1908
      %1937 = vmatprep.subr.bf16.mxu0 0
      %1938 = vmatpush1.bf16.msra.mxu0 %v1907
      %1939 = vmatprep.subr.bf16.mxu0 0
      %1940 = vmatpush2.bf16.msra.mxu0 0
      %1941 = vmatprep.subr.bf16.mxu0 0
      %1942 = vmatpush2.bf16.msra.mxu0 0
      %1943 = vmatprep.subr.bf16.mxu0 0
      %1944 = vmatpush2.bf16.msra.mxu0 0
      %1945 = vmatprep.subr.bf16.mxu0 0
      %1946 = vmatpush2.bf16.msra.mxu0 0
      %1947 = vmatprep.subr.bf16.mxu0 0
      %1948 = vmatpush2.bf16.msra.mxu0 0
      %1949 = vmatprep.subr.bf16.mxu0 0
      %1950 = vmatpush2.bf16.msra.mxu0 0
      %1951 = vmatprep.subr.bf16.mxu0 0
      %1952 = vmatpush2.bf16.msra.mxu0 0
      %1953 = vmatprep.subr.bf16.mxu0 0
      %1954 = vmatpush2.bf16.msra.mxu0 0
      %1955 = vmatprep.mubr.bf16.mxu0 0
      %1956 = vmatmul.mubr.bf16.gmra.mxu0 %v1874
      %v1957 = vpop.f32.mrf.mxu0
      %v1958 = vadd.f32 0.0, %v1957
      %v1959 = vpop.f32.mrf.mxu0
      %v1960 = vpop.f32.mrf.mxu0
      %v1961 = vadd.f32 0.0, %v1960
      %v1962 = vpop.f32.mrf.mxu0
      %1963 = vdwg.mxu0
      %v1964 = vadd.f32 %v1852, %v1958
      %v1965 = vadd.f32 %v1855, %v1961
      %v1966 = vld [vmem:[%s31] sm:$0x1]
      %v1968 = vlaneseq
      %v1969 = vshrl.u32 %v1968, 7
      %v1970 = vsub.s32 0, %v1969
      %v1971 = vrot.slane %v1966, %v1970
      %v1973 = vadd.f32 %v1964, %v1971
      %v1974 = vadd.f32 %v1965, %v1971
      %v1975 = vmax.f32 %v1973, 0.0
      %v1976 = vmax.f32 %v1974, 0.0
      %v1977 = vld [vmem:[%s33] sm:$0xf]
      %v1978 = vld [vmem:[%s33 + $0x4] sm:$0xf]
      %v1979 = vld [vmem:[%s33 + $0x8] sm:$0xf]
      %v1980 = vld [vmem:[%s33 + $0xc] sm:$0xf]
      %v1981 = vld [vmem:[%s33 + $0x10] sm:$0xf]
      %v1982 = vld [vmem:[%s33 + $0x14] sm:$0xf]
      %v1983 = vld [vmem:[%s33 + $0x18] sm:$0xf]
      %v1984 = vld [vmem:[%s33 + $0x1c] sm:$0xf]
      %v1985 = vld [vmem:[%s33 + $0x20] sm:$0xf]
      %v1986 = vld [vmem:[%s33 + $0x24] sm:$0xf]
      %v1987 = vld [vmem:[%s33 + $0x28] sm:$0xf]
      %v1988 = vld [vmem:[%s33 + $0x2c] sm:$0xf]
      %v1989 = vld [vmem:[%s33 + $0x30] sm:$0xf]
      %v1990 = vld [vmem:[%s33 + $0x34] sm:$0xf]
      %v1991 = vld [vmem:[%s33 + $0x38] sm:$0xf]
      %v1992 = vld [vmem:[%s33 + $0x3c] sm:$0xf]
      %v1993 = vpack.c.bf16 %v1976, %v1975
      %v1994 = vld [vmem:[%s35] sm:$0x1]
      %v1996 = vlaneseq
      %v1997 = vshrl.u32 %v1996, 7
      %v1998 = vsub.s32 0, %v1997
      %v1999 = vrot.slane %v1994, %v1998
      %v2017 = vunpack.c.l.b16 %v1977
      %v2018 = vunpack.c.l.b16 %v1978
      %v2019 = vunpack.c.l.b16 %v1979
      %v2020 = vunpack.c.l.b16 %v1980
      %v2021 = vunpack.c.l.b16 %v1981
      %v2022 = vunpack.c.l.b16 %v1982
      %v2023 = vunpack.c.l.b16 %v1983
      %v2024 = vunpack.c.l.b16 %v1984
      %v2025 = vunpack.c.l.b16 %v1985
      %v2026 = vunpack.c.l.b16 %v1986
      %v2027 = vunpack.c.l.b16 %v1987
      %v2028 = vunpack.c.l.b16 %v1988
      %v2029 = vunpack.c.l.b16 %v1989
      %v2030 = vunpack.c.l.b16 %v1990
      %v2031 = vunpack.c.l.b16 %v1991
      %v2032 = vunpack.c.l.b16 %v1992
      %v2033 = vpack.c.b16 %v2018, %v2017
      %v2034 = vpack.c.b16 %v2020, %v2019
      %v2035 = vpack.c.b16 %v2022, %v2021
      %v2036 = vpack.c.b16 %v2024, %v2023
      %v2037 = vpack.c.b16 %v2026, %v2025
      %v2038 = vpack.c.b16 %v2028, %v2027
      %v2039 = vpack.c.b16 %v2030, %v2029
      %v2040 = vpack.c.b16 %v2032, %v2031
      %2049 = vmatprep.subr.bf16.mxu0 0
      %2050 = vmatpush1.bf16.msra.mxu0 %v2040
      %2051 = vmatprep.subr.bf16.mxu0 0
      %2052 = vmatpush1.bf16.msra.mxu0 %v2039
      %2053 = vmatprep.subr.bf16.mxu0 0
      %2054 = vmatpush1.bf16.msra.mxu0 %v2038
      %2055 = vmatprep.subr.bf16.mxu0 0
      %2056 = vmatpush1.bf16.msra.mxu0 %v2037
      %2057 = vmatprep.subr.bf16.mxu0 0
      %2058 = vmatpush1.bf16.msra.mxu0 %v2036
      %2059 = vmatprep.subr.bf16.mxu0 0
      %2060 = vmatpush1.bf16.msra.mxu0 %v2035
      %2061 = vmatprep.subr.bf16.mxu0 0
      %2062 = vmatpush1.bf16.msra.mxu0 %v2034
      %2063 = vmatprep.subr.bf16.mxu0 0
      %2064 = vmatpush1.bf16.msra.mxu0 %v2033
      %2065 = vmatprep.subr.bf16.mxu0 0
      %2066 = vmatpush2.bf16.msra.mxu0 0
      %2067 = vmatprep.subr.bf16.mxu0 0
      %2068 = vmatpush2.bf16.msra.mxu0 0
      %2069 = vmatprep.subr.bf16.mxu0 0
      %2070 = vmatpush2.bf16.msra.mxu0 0
      %2071 = vmatprep.subr.bf16.mxu0 0
      %2072 = vmatpush2.bf16.msra.mxu0 0
      %2073 = vmatprep.subr.bf16.mxu0 0
      %2074 = vmatpush2.bf16.msra.mxu0 0
      %2075 = vmatprep.subr.bf16.mxu0 0
      %2076 = vmatpush2.bf16.msra.mxu0 0
      %2077 = vmatprep.subr.bf16.mxu0 0
      %2078 = vmatpush2.bf16.msra.mxu0 0
      %2079 = vmatprep.subr.bf16.mxu0 0
      %2080 = vmatpush2.bf16.msra.mxu0 0
      %2081 = vmatprep.mubr.bf16.mxu0 0
      %2082 = vmatmul.mubr.bf16.gmra.mxu0 %v1993
      %v2083 = vpop.f32.mrf.mxu0
      %v2084 = vadd.f32 %v1999, %v2083
      %v2085 = vpop.f32.mrf.mxu0
      %v2086 = vpop.f32.mrf.mxu0
      %v2087 = vadd.f32 %v1999, %v2086
      %v2088 = vpop.f32.mrf.mxu0
      %2089 = vdwg.mxu0
      %v2090 = vmax.f32 %v2084, 0.0
      %v2091 = vmax.f32 %v2087, 0.0
      %2092 = vadd.xlane.f32.xlu0 %v2090
      %v2093 = vpop.xlane.xlu0 %2092
      %2094 = vadd.xlane.f32.xlu0 %v2091
      %v2095 = vpop.xlane.xlu0 %2094
      %v2096 = vrcp.pop 128.0
      %v2097 = vmul.f32 %v2093, %v2096
      %v2098 = vmul.f32 %v2095, %v2096
      %v2099 = vsub.f32 %v2090, %v2097
      %v2100 = vsub.f32 %v2091, %v2098
      %v2101 = vmul.f32 %v2099, %v2099
      %v2102 = vmul.f32 %v2100, %v2100
      %2103 = vadd.xlane.f32.xlu0 %v2101
      %v2104 = vpop.xlane.xlu0 %2103
      %2105 = vadd.xlane.f32.xlu0 %v2102
      %v2106 = vpop.xlane.xlu0 %2105
      %v2107 = vmul.f32 %v2104, %v2096
      %v2108 = vmul.f32 %v2106, %v2096
      %v2109 = vadd.f32 %v2107, 1e-05
      %v2110 = vadd.f32 %v2108, 1e-05
      %v2111 = vrsqrt.pop %v2109
      %v2112 = vrsqrt.pop %v2110
      %v2113 = vmul.f32 %v2099, %v2111
      %v2114 = vmul.f32 %v2100, %v2112
      %v2115 = vpack.c.bf16 %v2114, %v2113
      %v2116 = vld [vmem:[%s37] sm:$0xf]
      %v2117 = vld [vmem:[%s37 + $0x4] sm:$0xf]
      %v2118 = vld [vmem:[%s37 + $0x8] sm:$0xf]
      %v2119 = vld [vmem:[%s37 + $0xc] sm:$0xf]
      %v2120 = vld [vmem:[%s37 + $0x10] sm:$0xf]
      %v2121 = vld [vmem:[%s37 + $0x14] sm:$0xf]
      %v2122 = vld [vmem:[%s37 + $0x18] sm:$0xf]
      %v2123 = vld [vmem:[%s37 + $0x1c] sm:$0xf]
      %v2124 = vld [vmem:[%s37 + $0x20] sm:$0xf]
      %v2125 = vld [vmem:[%s37 + $0x24] sm:$0xf]
      %v2126 = vld [vmem:[%s37 + $0x28] sm:$0xf]
      %v2127 = vld [vmem:[%s37 + $0x2c] sm:$0xf]
      %v2128 = vld [vmem:[%s37 + $0x30] sm:$0xf]
      %v2129 = vld [vmem:[%s37 + $0x34] sm:$0xf]
      %v2130 = vld [vmem:[%s37 + $0x38] sm:$0xf]
      %v2131 = vld [vmem:[%s37 + $0x3c] sm:$0xf]
      %v2132 = vld [vmem:[%s39] sm:$0x1]
      %v2134 = vlaneseq
      %v2135 = vshrl.u32 %v2134, 7
      %v2136 = vsub.s32 0, %v2135
      %v2137 = vrot.slane %v2132, %v2136
      %v2155 = vunpack.c.l.b16 %v2116
      %v2156 = vunpack.c.l.b16 %v2117
      %v2157 = vunpack.c.l.b16 %v2118
      %v2158 = vunpack.c.l.b16 %v2119
      %v2159 = vunpack.c.l.b16 %v2120
      %v2160 = vunpack.c.l.b16 %v2121
      %v2161 = vunpack.c.l.b16 %v2122
      %v2162 = vunpack.c.l.b16 %v2123
      %v2163 = vunpack.c.l.b16 %v2124
      %v2164 = vunpack.c.l.b16 %v2125
      %v2165 = vunpack.c.l.b16 %v2126
      %v2166 = vunpack.c.l.b16 %v2127
      %v2167 = vunpack.c.l.b16 %v2128
      %v2168 = vunpack.c.l.b16 %v2129
      %v2169 = vunpack.c.l.b16 %v2130
      %v2170 = vunpack.c.l.b16 %v2131
      %v2171 = vpack.c.b16 %v2156, %v2155
      %v2172 = vpack.c.b16 %v2158, %v2157
      %v2173 = vpack.c.b16 %v2160, %v2159
      %v2174 = vpack.c.b16 %v2162, %v2161
      %v2175 = vpack.c.b16 %v2164, %v2163
      %v2176 = vpack.c.b16 %v2166, %v2165
      %v2177 = vpack.c.b16 %v2168, %v2167
      %v2178 = vpack.c.b16 %v2170, %v2169
      %2187 = vmatprep.subr.bf16.mxu0 0
      %2188 = vmatpush1.bf16.msra.mxu0 %v2178
      %2189 = vmatprep.subr.bf16.mxu0 0
      %2190 = vmatpush1.bf16.msra.mxu0 %v2177
      %2191 = vmatprep.subr.bf16.mxu0 0
      %2192 = vmatpush1.bf16.msra.mxu0 %v2176
      %2193 = vmatprep.subr.bf16.mxu0 0
      %2194 = vmatpush1.bf16.msra.mxu0 %v2175
      %2195 = vmatprep.subr.bf16.mxu0 0
      %2196 = vmatpush1.bf16.msra.mxu0 %v2174
      %2197 = vmatprep.subr.bf16.mxu0 0
      %2198 = vmatpush1.bf16.msra.mxu0 %v2173
      %2199 = vmatprep.subr.bf16.mxu0 0
      %2200 = vmatpush1.bf16.msra.mxu0 %v2172
      %2201 = vmatprep.subr.bf16.mxu0 0
      %2202 = vmatpush1.bf16.msra.mxu0 %v2171
      %2203 = vmatprep.subr.bf16.mxu0 0
      %2204 = vmatpush2.bf16.msra.mxu0 0
      %2205 = vmatprep.subr.bf16.mxu0 0
      %2206 = vmatpush2.bf16.msra.mxu0 0
      %2207 = vmatprep.subr.bf16.mxu0 0
      %2208 = vmatpush2.bf16.msra.mxu0 0
      %2209 = vmatprep.subr.bf16.mxu0 0
      %2210 = vmatpush2.bf16.msra.mxu0 0
      %2211 = vmatprep.subr.bf16.mxu0 0
      %2212 = vmatpush2.bf16.msra.mxu0 0
      %2213 = vmatprep.subr.bf16.mxu0 0
      %2214 = vmatpush2.bf16.msra.mxu0 0
      %2215 = vmatprep.subr.bf16.mxu0 0
      %2216 = vmatpush2.bf16.msra.mxu0 0
      %2217 = vmatprep.subr.bf16.mxu0 0
      %2218 = vmatpush2.bf16.msra.mxu0 0
      %2219 = vmatprep.mubr.bf16.mxu0 0
      %2220 = vmatmul.mubr.bf16.gmra.mxu0 %v2115
      %v2221 = vpop.f32.mrf.mxu0
      %v2222 = vadd.f32 %v2137, %v2221
      %v2223 = vpop.f32.mrf.mxu0
      %v2224 = vpop.f32.mrf.mxu0
      %v2225 = vadd.f32 %v2137, %v2224
      %v2226 = vpop.f32.mrf.mxu0
      %2227 = vdwg.mxu0
      %s2228 = scalar_lea.vmem %s37, 128
      %v2229 = vld [vmem:[%s2228] sm:$0xf]
      %v2230 = vld [vmem:[%s2228 + $0x4] sm:$0xf]
      %v2231 = vld [vmem:[%s2228 + $0x8] sm:$0xf]
      %v2232 = vld [vmem:[%s2228 + $0xc] sm:$0xf]
      %v2233 = vld [vmem:[%s2228 + $0x10] sm:$0xf]
      %v2234 = vld [vmem:[%s2228 + $0x14] sm:$0xf]
      %v2235 = vld [vmem:[%s2228 + $0x18] sm:$0xf]
      %v2236 = vld [vmem:[%s2228 + $0x1c] sm:$0xf]
      %v2237 = vld [vmem:[%s2228 + $0x20] sm:$0xf]
      %v2238 = vld [vmem:[%s2228 + $0x24] sm:$0xf]
      %v2239 = vld [vmem:[%s2228 + $0x28] sm:$0xf]
      %v2240 = vld [vmem:[%s2228 + $0x2c] sm:$0xf]
      %v2241 = vld [vmem:[%s2228 + $0x30] sm:$0xf]
      %v2242 = vld [vmem:[%s2228 + $0x34] sm:$0xf]
      %v2243 = vld [vmem:[%s2228 + $0x38] sm:$0xf]
      %v2244 = vld [vmem:[%s2228 + $0x3c] sm:$0xf]
      %s2245 = scalar_lea.vmem %s39, 2
      %v2246 = vld [vmem:[%s2245] sm:$0x1]
      %v2248 = vlaneseq
      %v2249 = vshrl.u32 %v2248, 7
      %v2250 = vsub.s32 0, %v2249
      %v2251 = vrot.slane %v2246, %v2250
      %v2269 = vunpack.c.l.b16 %v2229
      %v2270 = vunpack.c.l.b16 %v2230
      %v2271 = vunpack.c.l.b16 %v2231
      %v2272 = vunpack.c.l.b16 %v2232
      %v2273 = vunpack.c.l.b16 %v2233
      %v2274 = vunpack.c.l.b16 %v2234
      %v2275 = vunpack.c.l.b16 %v2235
      %v2276 = vunpack.c.l.b16 %v2236
      %v2277 = vunpack.c.l.b16 %v2237
      %v2278 = vunpack.c.l.b16 %v2238
      %v2279 = vunpack.c.l.b16 %v2239
      %v2280 = vunpack.c.l.b16 %v2240
      %v2281 = vunpack.c.l.b16 %v2241
      %v2282 = vunpack.c.l.b16 %v2242
      %v2283 = vunpack.c.l.b16 %v2243
      %v2284 = vunpack.c.l.b16 %v2244
      %v2285 = vpack.c.b16 %v2270, %v2269
      %v2286 = vpack.c.b16 %v2272, %v2271
      %v2287 = vpack.c.b16 %v2274, %v2273
      %v2288 = vpack.c.b16 %v2276, %v2275
      %v2289 = vpack.c.b16 %v2278, %v2277
      %v2290 = vpack.c.b16 %v2280, %v2279
      %v2291 = vpack.c.b16 %v2282, %v2281
      %v2292 = vpack.c.b16 %v2284, %v2283
      %2301 = vmatprep.subr.bf16.mxu0 0
      %2302 = vmatpush1.bf16.msra.mxu0 %v2292
      %2303 = vmatprep.subr.bf16.mxu0 0
      %2304 = vmatpush1.bf16.msra.mxu0 %v2291
      %2305 = vmatprep.subr.bf16.mxu0 0
      %2306 = vmatpush1.bf16.msra.mxu0 %v2290
      %2307 = vmatprep.subr.bf16.mxu0 0
      %2308 = vmatpush1.bf16.msra.mxu0 %v2289
      %2309 = vmatprep.subr.bf16.mxu0 0
      %2310 = vmatpush1.bf16.msra.mxu0 %v2288
      %2311 = vmatprep.subr.bf16.mxu0 0
      %2312 = vmatpush1.bf16.msra.mxu0 %v2287
      %2313 = vmatprep.subr.bf16.mxu0 0
      %2314 = vmatpush1.bf16.msra.mxu0 %v2286
      %2315 = vmatprep.subr.bf16.mxu0 0
      %2316 = vmatpush1.bf16.msra.mxu0 %v2285
      %2317 = vmatprep.subr.bf16.mxu0 0
      %2318 = vmatpush2.bf16.msra.mxu0 0
      %2319 = vmatprep.subr.bf16.mxu0 0
      %2320 = vmatpush2.bf16.msra.mxu0 0
      %2321 = vmatprep.subr.bf16.mxu0 0
      %2322 = vmatpush2.bf16.msra.mxu0 0
      %2323 = vmatprep.subr.bf16.mxu0 0
      %2324 = vmatpush2.bf16.msra.mxu0 0
      %2325 = vmatprep.subr.bf16.mxu0 0
      %2326 = vmatpush2.bf16.msra.mxu0 0
      %2327 = vmatprep.subr.bf16.mxu0 0
      %2328 = vmatpush2.bf16.msra.mxu0 0
      %2329 = vmatprep.subr.bf16.mxu0 0
      %2330 = vmatpush2.bf16.msra.mxu0 0
      %2331 = vmatprep.subr.bf16.mxu0 0
      %2332 = vmatpush2.bf16.msra.mxu0 0
      %2333 = vmatprep.mubr.bf16.mxu0 0
      %2334 = vmatmul.mubr.bf16.gmra.mxu0 %v2115
      %v2335 = vpop.f32.mrf.mxu0
      %v2336 = vadd.f32 %v2251, %v2335
      %v2337 = vpop.f32.mrf.mxu0
      %v2338 = vpop.f32.mrf.mxu0
      %v2339 = vadd.f32 %v2251, %v2338
      %v2340 = vpop.f32.mrf.mxu0
      %2341 = vdwg.mxu0
      %s2342 = scalar_lea.vmem %s37, 256
      %v2343 = vld [vmem:[%s2342] sm:$0xf]
      %v2344 = vld [vmem:[%s2342 + $0x4] sm:$0xf]
      %v2345 = vld [vmem:[%s2342 + $0x8] sm:$0xf]
      %v2346 = vld [vmem:[%s2342 + $0xc] sm:$0xf]
      %v2347 = vld [vmem:[%s2342 + $0x10] sm:$0xf]
      %v2348 = vld [vmem:[%s2342 + $0x14] sm:$0xf]
      %v2349 = vld [vmem:[%s2342 + $0x18] sm:$0xf]
      %v2350 = vld [vmem:[%s2342 + $0x1c] sm:$0xf]
      %v2351 = vld [vmem:[%s2342 + $0x20] sm:$0xf]
      %v2352 = vld [vmem:[%s2342 + $0x24] sm:$0xf]
      %v2353 = vld [vmem:[%s2342 + $0x28] sm:$0xf]
      %v2354 = vld [vmem:[%s2342 + $0x2c] sm:$0xf]
      %v2355 = vld [vmem:[%s2342 + $0x30] sm:$0xf]
      %v2356 = vld [vmem:[%s2342 + $0x34] sm:$0xf]
      %v2357 = vld [vmem:[%s2342 + $0x38] sm:$0xf]
      %v2358 = vld [vmem:[%s2342 + $0x3c] sm:$0xf]
      %s2359 = scalar_lea.vmem %s39, 4
      %v2360 = vld [vmem:[%s2359] sm:$0x1]
      %v2362 = vlaneseq
      %v2363 = vshrl.u32 %v2362, 7
      %v2364 = vsub.s32 0, %v2363
      %v2365 = vrot.slane %v2360, %v2364
      %v2383 = vunpack.c.l.b16 %v2343
      %v2384 = vunpack.c.l.b16 %v2344
      %v2385 = vunpack.c.l.b16 %v2345
      %v2386 = vunpack.c.l.b16 %v2346
      %v2387 = vunpack.c.l.b16 %v2347
      %v2388 = vunpack.c.l.b16 %v2348
      %v2389 = vunpack.c.l.b16 %v2349
      %v2390 = vunpack.c.l.b16 %v2350
      %v2391 = vunpack.c.l.b16 %v2351
      %v2392 = vunpack.c.l.b16 %v2352
      %v2393 = vunpack.c.l.b16 %v2353
      %v2394 = vunpack.c.l.b16 %v2354
      %v2395 = vunpack.c.l.b16 %v2355
      %v2396 = vunpack.c.l.b16 %v2356
      %v2397 = vunpack.c.l.b16 %v2357
      %v2398 = vunpack.c.l.b16 %v2358
      %v2399 = vpack.c.b16 %v2384, %v2383
      %v2400 = vpack.c.b16 %v2386, %v2385
      %v2401 = vpack.c.b16 %v2388, %v2387
      %v2402 = vpack.c.b16 %v2390, %v2389
      %v2403 = vpack.c.b16 %v2392, %v2391
      %v2404 = vpack.c.b16 %v2394, %v2393
      %v2405 = vpack.c.b16 %v2396, %v2395
      %v2406 = vpack.c.b16 %v2398, %v2397
      %2415 = vmatprep.subr.bf16.mxu0 0
      %2416 = vmatpush1.bf16.msra.mxu0 %v2406
      %2417 = vmatprep.subr.bf16.mxu0 0
      %2418 = vmatpush1.bf16.msra.mxu0 %v2405
      %2419 = vmatprep.subr.bf16.mxu0 0
      %2420 = vmatpush1.bf16.msra.mxu0 %v2404
      %2421 = vmatprep.subr.bf16.mxu0 0
      %2422 = vmatpush1.bf16.msra.mxu0 %v2403
      %2423 = vmatprep.subr.bf16.mxu0 0
      %2424 = vmatpush1.bf16.msra.mxu0 %v2402
      %2425 = vmatprep.subr.bf16.mxu0 0
      %2426 = vmatpush1.bf16.msra.mxu0 %v2401
      %2427 = vmatprep.subr.bf16.mxu0 0
      %2428 = vmatpush1.bf16.msra.mxu0 %v2400
      %2429 = vmatprep.subr.bf16.mxu0 0
      %2430 = vmatpush1.bf16.msra.mxu0 %v2399
      %2431 = vmatprep.subr.bf16.mxu0 0
      %2432 = vmatpush2.bf16.msra.mxu0 0
      %2433 = vmatprep.subr.bf16.mxu0 0
      %2434 = vmatpush2.bf16.msra.mxu0 0
      %2435 = vmatprep.subr.bf16.mxu0 0
      %2436 = vmatpush2.bf16.msra.mxu0 0
      %2437 = vmatprep.subr.bf16.mxu0 0
      %2438 = vmatpush2.bf16.msra.mxu0 0
      %2439 = vmatprep.subr.bf16.mxu0 0
      %2440 = vmatpush2.bf16.msra.mxu0 0
      %2441 = vmatprep.subr.bf16.mxu0 0
      %2442 = vmatpush2.bf16.msra.mxu0 0
      %2443 = vmatprep.subr.bf16.mxu0 0
      %2444 = vmatpush2.bf16.msra.mxu0 0
      %2445 = vmatprep.subr.bf16.mxu0 0
      %2446 = vmatpush2.bf16.msra.mxu0 0
      %2447 = vmatprep.mubr.bf16.mxu0 0
      %2448 = vmatmul.mubr.bf16.gmra.mxu0 %v2115
      %v2449 = vpop.f32.mrf.mxu0
      %v2450 = vadd.f32 %v2365, %v2449
      %v2451 = vpop.f32.mrf.mxu0
      %v2452 = vpop.f32.mrf.mxu0
      %v2453 = vadd.f32 %v2365, %v2452
      %v2454 = vpop.f32.mrf.mxu0
      %2455 = vdwg.mxu0
      %v2456 = vpack.c.bf16 %v2225, %v2222
      %v2457 = vpack.c.bf16 %v2339, %v2336
      %vm2458 = vcmask 523264
      %v2460 = vsel %vm2458, %v2456, 0
      %v2463 = vsel %vm2458, %v2457, 0
      %2465 = vmatprep.subr.bf16.mxu0 0
      %2466 = vmatpush1.bf16.xpose.msra.mxu0 0
      %2467 = vmatprep.subr.bf16.mxu0 0
      %2468 = vmatpush1.bf16.xpose.msra.mxu0 0
      %2469 = vmatprep.subr.bf16.mxu0 0
      %2470 = vmatpush1.bf16.xpose.msra.mxu0 0
      %2471 = vmatprep.subr.bf16.mxu0 0
      %2472 = vmatpush1.bf16.xpose.msra.mxu0 0
      %2473 = vmatprep.subr.bf16.mxu0 0
      %2474 = vmatpush1.bf16.xpose.msra.mxu0 0
      %2475 = vmatprep.subr.bf16.mxu0 0
      %2476 = vmatpush1.bf16.xpose.msra.mxu0 0
      %2477 = vmatprep.subr.bf16.mxu0 0
      %2478 = vmatpush1.bf16.xpose.msra.mxu0 0
      %2479 = vmatprep.subr.bf16.mxu0 0
      %2480 = vmatpush1.bf16.xpose.msra.mxu0 %v2463
      %2481 = vmatprep.subr.bf16.mxu0 0
      %2482 = vmatpush2.bf16.xpose.msra.mxu0 0
      %2483 = vmatprep.subr.bf16.mxu0 0
      %2484 = vmatpush2.bf16.xpose.msra.mxu0 0
      %2485 = vmatprep.subr.bf16.mxu0 0
      %2486 = vmatpush2.bf16.xpose.msra.mxu0 0
      %2487 = vmatprep.subr.bf16.mxu0 0
      %2488 = vmatpush2.bf16.xpose.msra.mxu0 0
      %2489 = vmatprep.subr.bf16.mxu0 0
      %2490 = vmatpush2.bf16.xpose.msra.mxu0 0
      %2491 = vmatprep.subr.bf16.mxu0 0
      %2492 = vmatpush2.bf16.xpose.msra.mxu0 0
      %2493 = vmatprep.subr.bf16.mxu0 0
      %2494 = vmatpush2.bf16.xpose.msra.mxu0 0
      %2495 = vmatprep.subr.bf16.mxu0 0
      %2496 = vmatpush2.bf16.xpose.msra.mxu0 0
      %2497 = vmatprep.mubr.bf16.mxu0 0
      %2498 = vmatmul.mubr.bf16.gmra.mxu0 %v2460
      %v2499 = vpop.f32.mrf.mxu0
      %v2500 = vadd.f32 0.0, %v2499
      %v2501 = vpop.f32.mrf.mxu0
      %v2502 = vpop.f32.mrf.mxu0
      %v2503 = vadd.f32 0.0, %v2502
      %v2504 = vpop.f32.mrf.mxu0
      %2505 = vdwg.mxu0
      %vm2506 = vcmask 130048
      %v2507 = vsel %vm2506, %v2500, -inf
      %2508 = vmax.xlane.f32.xlu0 %v2507
      %v2509 = vpop.xlane.xlu0 %2508
      %v2510 = vsel %vm2506, %v2503, -inf
      %2511 = vmax.xlane.f32.xlu0 %v2510
      %v2512 = vpop.xlane.xlu0 %2511
      %v2513 = vsub.f32 %v2500, %v2509
      %v2514 = vsub.f32 %v2503, %v2512
      %v2515 = vmul.f32 %v2513, 1.442695
      %v2516 = vpow.pop %v2515
      %v2517 = vmul.f32 %v2514, 1.442695
      %v2518 = vpow.pop %v2517
      %v2519 = vsel %vm2506, %v2516, 0.0
      %2520 = vadd.xlane.f32.xlu0 %v2519
      %v2521 = vpop.xlane.xlu0 %2520
      %v2522 = vsel %vm2506, %v2518, 0.0
      %2523 = vadd.xlane.f32.xlu0 %v2522
      %v2524 = vpop.xlane.xlu0 %2523
      %v2525 = vrcp.pop %v2521
      %v2526 = vrcp.pop %v2524
      %v2527 = vmul.f32 %v2516, %v2525
      %v2528 = vmul.f32 %v2518, %v2526
      %v2529 = vpack.c.bf16 %v2528, %v2527
      %v2530 = vpack.c.bf16 %v2453, %v2450
      %v2532 = vsel %vm2506, %v2529, 0
      %2534 = vmatprep.subr.bf16.mxu0 0
      %2535 = vmatpush1.bf16.msra.mxu0 0
      %2536 = vmatprep.subr.bf16.mxu0 0
      %2537 = vmatpush1.bf16.msra.mxu0 0
      %2538 = vmatprep.subr.bf16.mxu0 0
      %2539 = vmatpush1.bf16.msra.mxu0 0
      %2540 = vmatprep.subr.bf16.mxu0 0
      %2541 = vmatpush1.bf16.msra.mxu0 0
      %2542 = vmatprep.subr.bf16.mxu0 0
      %2543 = vmatpush1.bf16.msra.mxu0 0
      %2544 = vmatprep.subr.bf16.mxu0 0
      %2545 = vmatpush1.bf16.msra.mxu0 0
      %2546 = vmatprep.subr.bf16.mxu0 0
      %2547 = vmatpush1.bf16.msra.mxu0 0
      %2548 = vmatprep.subr.bf16.mxu0 0
      %2549 = vmatpush1.bf16.msra.mxu0 %v2530
      %2550 = vmatprep.subr.bf16.mxu0 0
      %2551 = vmatpush2.bf16.msra.mxu0 0
      %2552 = vmatprep.subr.bf16.mxu0 0
      %2553 = vmatpush2.bf16.msra.mxu0 0
      %2554 = vmatprep.subr.bf16.mxu0 0
      %2555 = vmatpush2.bf16.msra.mxu0 0
      %2556 = vmatprep.subr.bf16.mxu0 0
      %2557 = vmatpush2.bf16.msra.mxu0 0
      %2558 = vmatprep.subr.bf16.mxu0 0
      %2559 = vmatpush2.bf16.msra.mxu0 0
      %2560 = vmatprep.subr.bf16.mxu0 0
      %2561 = vmatpush2.bf16.msra.mxu0 0
      %2562 = vmatprep.subr.bf16.mxu0 0
      %2563 = vmatpush2.bf16.msra.mxu0 0
      %2564 = vmatprep.subr.bf16.mxu0 0
      %2565 = vmatpush2.bf16.msra.mxu0 0
      %2566 = vmatprep.mubr.bf16.mxu0 0
      %2567 = vmatmul.mubr.bf16.gmra.mxu0 %v2532
      %v2568 = vpop.f32.mrf.mxu0
      %v2569 = vadd.f32 0.0, %v2568
      %v2570 = vpop.f32.mrf.mxu0
      %v2571 = vpop.f32.mrf.mxu0
      %v2572 = vadd.f32 0.0, %v2571
      %v2573 = vpop.f32.mrf.mxu0
      %2574 = vdwg.mxu0
      %v2575 = vpack.c.bf16 %v2572, %v2569
      %v2576 = vld [vmem:[%s41] sm:$0xf]
      %v2577 = vld [vmem:[%s41 + $0x4] sm:$0xf]
      %v2578 = vld [vmem:[%s41 + $0x8] sm:$0xf]
      %v2579 = vld [vmem:[%s41 + $0xc] sm:$0xf]
      %v2580 = vld [vmem:[%s41 + $0x10] sm:$0xf]
      %v2581 = vld [vmem:[%s41 + $0x14] sm:$0xf]
      %v2582 = vld [vmem:[%s41 + $0x18] sm:$0xf]
      %v2583 = vld [vmem:[%s41 + $0x1c] sm:$0xf]
      %s2584 = scalar_lea.vmem %s37, 64
      %v2585 = vld [vmem:[%s2584] sm:$0xf]
      %v2586 = vld [vmem:[%s2584 + $0x4] sm:$0xf]
      %v2587 = vld [vmem:[%s2584 + $0x8] sm:$0xf]
      %v2588 = vld [vmem:[%s2584 + $0xc] sm:$0xf]
      %v2589 = vld [vmem:[%s2584 + $0x10] sm:$0xf]
      %v2590 = vld [vmem:[%s2584 + $0x14] sm:$0xf]
      %v2591 = vld [vmem:[%s2584 + $0x18] sm:$0xf]
      %v2592 = vld [vmem:[%s2584 + $0x1c] sm:$0xf]
      %v2593 = vld [vmem:[%s2584 + $0x20] sm:$0xf]
      %v2594 = vld [vmem:[%s2584 + $0x24] sm:$0xf]
      %v2595 = vld [vmem:[%s2584 + $0x28] sm:$0xf]
      %v2596 = vld [vmem:[%s2584 + $0x2c] sm:$0xf]
      %v2597 = vld [vmem:[%s2584 + $0x30] sm:$0xf]
      %v2598 = vld [vmem:[%s2584 + $0x34] sm:$0xf]
      %v2599 = vld [vmem:[%s2584 + $0x38] sm:$0xf]
      %v2600 = vld [vmem:[%s2584 + $0x3c] sm:$0xf]
      %s2601 = scalar_lea.vmem %s39, 1
      %v2602 = vld [vmem:[%s2601] sm:$0x1]
      %v2604 = vlaneseq
      %v2605 = vshrl.u32 %v2604, 7
      %v2606 = vsub.s32 0, %v2605
      %v2607 = vrot.slane %v2602, %v2606
      %v2625 = vunpack.c.l.b16 %v2585
      %v2626 = vunpack.c.l.b16 %v2586
      %v2627 = vunpack.c.l.b16 %v2587
      %v2628 = vunpack.c.l.b16 %v2588
      %v2629 = vunpack.c.l.b16 %v2589
      %v2630 = vunpack.c.l.b16 %v2590
      %v2631 = vunpack.c.l.b16 %v2591
      %v2632 = vunpack.c.l.b16 %v2592
      %v2633 = vunpack.c.l.b16 %v2593
      %v2634 = vunpack.c.l.b16 %v2594
      %v2635 = vunpack.c.l.b16 %v2595
      %v2636 = vunpack.c.l.b16 %v2596
      %v2637 = vunpack.c.l.b16 %v2597
      %v2638 = vunpack.c.l.b16 %v2598
      %v2639 = vunpack.c.l.b16 %v2599
      %v2640 = vunpack.c.l.b16 %v2600
      %v2641 = vpack.c.b16 %v2626, %v2625
      %v2642 = vpack.c.b16 %v2628, %v2627
      %v2643 = vpack.c.b16 %v2630, %v2629
      %v2644 = vpack.c.b16 %v2632, %v2631
      %v2645 = vpack.c.b16 %v2634, %v2633
      %v2646 = vpack.c.b16 %v2636, %v2635
      %v2647 = vpack.c.b16 %v2638, %v2637
      %v2648 = vpack.c.b16 %v2640, %v2639
      %2657 = vmatprep.subr.bf16.mxu0 0
      %2658 = vmatpush1.bf16.msra.mxu0 %v2648
      %2659 = vmatprep.subr.bf16.mxu0 0
      %2660 = vmatpush1.bf16.msra.mxu0 %v2647
      %2661 = vmatprep.subr.bf16.mxu0 0
      %2662 = vmatpush1.bf16.msra.mxu0 %v2646
      %2663 = vmatprep.subr.bf16.mxu0 0
      %2664 = vmatpush1.bf16.msra.mxu0 %v2645
      %2665 = vmatprep.subr.bf16.mxu0 0
      %2666 = vmatpush1.bf16.msra.mxu0 %v2644
      %2667 = vmatprep.subr.bf16.mxu0 0
      %2668 = vmatpush1.bf16.msra.mxu0 %v2643
      %2669 = vmatprep.subr.bf16.mxu0 0
      %2670 = vmatpush1.bf16.msra.mxu0 %v2642
      %2671 = vmatprep.subr.bf16.mxu0 0
      %2672 = vmatpush1.bf16.msra.mxu0 %v2641
      %2673 = vmatprep.subr.bf16.mxu0 0
      %2674 = vmatpush2.bf16.msra.mxu0 0
      %2675 = vmatprep.subr.bf16.mxu0 0
      %2676 = vmatpush2.bf16.msra.mxu0 0
      %2677 = vmatprep.subr.bf16.mxu0 0
      %2678 = vmatpush2.bf16.msra.mxu0 0
      %2679 = vmatprep.subr.bf16.mxu0 0
      %2680 = vmatpush2.bf16.msra.mxu0 0
      %2681 = vmatprep.subr.bf16.mxu0 0
      %2682 = vmatpush2.bf16.msra.mxu0 0
      %2683 = vmatprep.subr.bf16.mxu0 0
      %2684 = vmatpush2.bf16.msra.mxu0 0
      %2685 = vmatprep.subr.bf16.mxu0 0
      %2686 = vmatpush2.bf16.msra.mxu0 0
      %2687 = vmatprep.subr.bf16.mxu0 0
      %2688 = vmatpush2.bf16.msra.mxu0 0
      %2689 = vmatprep.mubr.bf16.mxu0 0
      %2690 = vmatmul.mubr.bf16.gmra.mxu0 %v2115
      %v2691 = vpop.f32.mrf.mxu0
      %v2692 = vadd.f32 %v2607, %v2691
      %v2693 = vpop.f32.mrf.mxu0
      %v2694 = vpop.f32.mrf.mxu0
      %v2695 = vadd.f32 %v2607, %v2694
      %v2696 = vpop.f32.mrf.mxu0
      %2697 = vdwg.mxu0
      %s2698 = scalar_lea.vmem %s37, 192
      %v2699 = vld [vmem:[%s2698] sm:$0xf]
      %v2700 = vld [vmem:[%s2698 + $0x4] sm:$0xf]
      %v2701 = vld [vmem:[%s2698 + $0x8] sm:$0xf]
      %v2702 = vld [vmem:[%s2698 + $0xc] sm:$0xf]
      %v2703 = vld [vmem:[%s2698 + $0x10] sm:$0xf]
      %v2704 = vld [vmem:[%s2698 + $0x14] sm:$0xf]
      %v2705 = vld [vmem:[%s2698 + $0x18] sm:$0xf]
      %v2706 = vld [vmem:[%s2698 + $0x1c] sm:$0xf]
      %v2707 = vld [vmem:[%s2698 + $0x20] sm:$0xf]
      %v2708 = vld [vmem:[%s2698 + $0x24] sm:$0xf]
      %v2709 = vld [vmem:[%s2698 + $0x28] sm:$0xf]
      %v2710 = vld [vmem:[%s2698 + $0x2c] sm:$0xf]
      %v2711 = vld [vmem:[%s2698 + $0x30] sm:$0xf]
      %v2712 = vld [vmem:[%s2698 + $0x34] sm:$0xf]
      %v2713 = vld [vmem:[%s2698 + $0x38] sm:$0xf]
      %v2714 = vld [vmem:[%s2698 + $0x3c] sm:$0xf]
      %s2715 = scalar_lea.vmem %s39, 3
      %v2716 = vld [vmem:[%s2715] sm:$0x1]
      %v2718 = vlaneseq
      %v2719 = vshrl.u32 %v2718, 7
      %v2720 = vsub.s32 0, %v2719
      %v2721 = vrot.slane %v2716, %v2720
      %v2739 = vunpack.c.l.b16 %v2699
      %v2740 = vunpack.c.l.b16 %v2700
      %v2741 = vunpack.c.l.b16 %v2701
      %v2742 = vunpack.c.l.b16 %v2702
      %v2743 = vunpack.c.l.b16 %v2703
      %v2744 = vunpack.c.l.b16 %v2704
      %v2745 = vunpack.c.l.b16 %v2705
      %v2746 = vunpack.c.l.b16 %v2706
      %v2747 = vunpack.c.l.b16 %v2707
      %v2748 = vunpack.c.l.b16 %v2708
      %v2749 = vunpack.c.l.b16 %v2709
      %v2750 = vunpack.c.l.b16 %v2710
      %v2751 = vunpack.c.l.b16 %v2711
      %v2752 = vunpack.c.l.b16 %v2712
      %v2753 = vunpack.c.l.b16 %v2713
      %v2754 = vunpack.c.l.b16 %v2714
      %v2755 = vpack.c.b16 %v2740, %v2739
      %v2756 = vpack.c.b16 %v2742, %v2741
      %v2757 = vpack.c.b16 %v2744, %v2743
      %v2758 = vpack.c.b16 %v2746, %v2745
      %v2759 = vpack.c.b16 %v2748, %v2747
      %v2760 = vpack.c.b16 %v2750, %v2749
      %v2761 = vpack.c.b16 %v2752, %v2751
      %v2762 = vpack.c.b16 %v2754, %v2753
      %2771 = vmatprep.subr.bf16.mxu0 0
      %2772 = vmatpush1.bf16.msra.mxu0 %v2762
      %2773 = vmatprep.subr.bf16.mxu0 0
      %2774 = vmatpush1.bf16.msra.mxu0 %v2761
      %2775 = vmatprep.subr.bf16.mxu0 0
      %2776 = vmatpush1.bf16.msra.mxu0 %v2760
      %2777 = vmatprep.subr.bf16.mxu0 0
      %2778 = vmatpush1.bf16.msra.mxu0 %v2759
      %2779 = vmatprep.subr.bf16.mxu0 0
      %2780 = vmatpush1.bf16.msra.mxu0 %v2758
      %2781 = vmatprep.subr.bf16.mxu0 0
      %2782 = vmatpush1.bf16.msra.mxu0 %v2757
      %2783 = vmatprep.subr.bf16.mxu0 0
      %2784 = vmatpush1.bf16.msra.mxu0 %v2756
      %2785 = vmatprep.subr.bf16.mxu0 0
      %2786 = vmatpush1.bf16.msra.mxu0 %v2755
      %2787 = vmatprep.subr.bf16.mxu0 0
      %2788 = vmatpush2.bf16.msra.mxu0 0
      %2789 = vmatprep.subr.bf16.mxu0 0
      %2790 = vmatpush2.bf16.msra.mxu0 0
      %2791 = vmatprep.subr.bf16.mxu0 0
      %2792 = vmatpush2.bf16.msra.mxu0 0
      %2793 = vmatprep.subr.bf16.mxu0 0
      %2794 = vmatpush2.bf16.msra.mxu0 0
      %2795 = vmatprep.subr.bf16.mxu0 0
      %2796 = vmatpush2.bf16.msra.mxu0 0
      %2797 = vmatprep.subr.bf16.mxu0 0
      %2798 = vmatpush2.bf16.msra.mxu0 0
      %2799 = vmatprep.subr.bf16.mxu0 0
      %2800 = vmatpush2.bf16.msra.mxu0 0
      %2801 = vmatprep.subr.bf16.mxu0 0
      %2802 = vmatpush2.bf16.msra.mxu0 0
      %2803 = vmatprep.mubr.bf16.mxu0 0
      %2804 = vmatmul.mubr.bf16.gmra.mxu0 %v2115
      %v2805 = vpop.f32.mrf.mxu0
      %v2806 = vadd.f32 %v2721, %v2805
      %v2807 = vpop.f32.mrf.mxu0
      %v2808 = vpop.f32.mrf.mxu0
      %v2809 = vadd.f32 %v2721, %v2808
      %v2810 = vpop.f32.mrf.mxu0
      %2811 = vdwg.mxu0
      %s2812 = scalar_lea.vmem %s37, 320
      %v2813 = vld [vmem:[%s2812] sm:$0xf]
      %v2814 = vld [vmem:[%s2812 + $0x4] sm:$0xf]
      %v2815 = vld [vmem:[%s2812 + $0x8] sm:$0xf]
      %v2816 = vld [vmem:[%s2812 + $0xc] sm:$0xf]
      %v2817 = vld [vmem:[%s2812 + $0x10] sm:$0xf]
      %v2818 = vld [vmem:[%s2812 + $0x14] sm:$0xf]
      %v2819 = vld [vmem:[%s2812 + $0x18] sm:$0xf]
      %v2820 = vld [vmem:[%s2812 + $0x1c] sm:$0xf]
      %v2821 = vld [vmem:[%s2812 + $0x20] sm:$0xf]
      %v2822 = vld [vmem:[%s2812 + $0x24] sm:$0xf]
      %v2823 = vld [vmem:[%s2812 + $0x28] sm:$0xf]
      %v2824 = vld [vmem:[%s2812 + $0x2c] sm:$0xf]
      %v2825 = vld [vmem:[%s2812 + $0x30] sm:$0xf]
      %v2826 = vld [vmem:[%s2812 + $0x34] sm:$0xf]
      %v2827 = vld [vmem:[%s2812 + $0x38] sm:$0xf]
      %v2828 = vld [vmem:[%s2812 + $0x3c] sm:$0xf]
      %s2829 = scalar_lea.vmem %s39, 5
      %v2830 = vld [vmem:[%s2829] sm:$0x1]
      %v2832 = vlaneseq
      %v2833 = vshrl.u32 %v2832, 7
      %v2834 = vsub.s32 0, %v2833
      %v2835 = vrot.slane %v2830, %v2834
      %v2853 = vunpack.c.l.b16 %v2813
      %v2854 = vunpack.c.l.b16 %v2814
      %v2855 = vunpack.c.l.b16 %v2815
      %v2856 = vunpack.c.l.b16 %v2816
      %v2857 = vunpack.c.l.b16 %v2817
      %v2858 = vunpack.c.l.b16 %v2818
      %v2859 = vunpack.c.l.b16 %v2819
      %v2860 = vunpack.c.l.b16 %v2820
      %v2861 = vunpack.c.l.b16 %v2821
      %v2862 = vunpack.c.l.b16 %v2822
      %v2863 = vunpack.c.l.b16 %v2823
      %v2864 = vunpack.c.l.b16 %v2824
      %v2865 = vunpack.c.l.b16 %v2825
      %v2866 = vunpack.c.l.b16 %v2826
      %v2867 = vunpack.c.l.b16 %v2827
      %v2868 = vunpack.c.l.b16 %v2828
      %v2869 = vpack.c.b16 %v2854, %v2853
      %v2870 = vpack.c.b16 %v2856, %v2855
      %v2871 = vpack.c.b16 %v2858, %v2857
      %v2872 = vpack.c.b16 %v2860, %v2859
      %v2873 = vpack.c.b16 %v2862, %v2861
      %v2874 = vpack.c.b16 %v2864, %v2863
      %v2875 = vpack.c.b16 %v2866, %v2865
      %v2876 = vpack.c.b16 %v2868, %v2867
      %2885 = vmatprep.subr.bf16.mxu0 0
      %2886 = vmatpush1.bf16.msra.mxu0 %v2876
      %2887 = vmatprep.subr.bf16.mxu0 0
      %2888 = vmatpush1.bf16.msra.mxu0 %v2875
      %2889 = vmatprep.subr.bf16.mxu0 0
      %2890 = vmatpush1.bf16.msra.mxu0 %v2874
      %2891 = vmatprep.subr.bf16.mxu0 0
      %2892 = vmatpush1.bf16.msra.mxu0 %v2873
      %2893 = vmatprep.subr.bf16.mxu0 0
      %2894 = vmatpush1.bf16.msra.mxu0 %v2872
      %2895 = vmatprep.subr.bf16.mxu0 0
      %2896 = vmatpush1.bf16.msra.mxu0 %v2871
      %2897 = vmatprep.subr.bf16.mxu0 0
      %2898 = vmatpush1.bf16.msra.mxu0 %v2870
      %2899 = vmatprep.subr.bf16.mxu0 0
      %2900 = vmatpush1.bf16.msra.mxu0 %v2869
      %2901 = vmatprep.subr.bf16.mxu0 0
      %2902 = vmatpush2.bf16.msra.mxu0 0
      %2903 = vmatprep.subr.bf16.mxu0 0
      %2904 = vmatpush2.bf16.msra.mxu0 0
      %2905 = vmatprep.subr.bf16.mxu0 0
      %2906 = vmatpush2.bf16.msra.mxu0 0
      %2907 = vmatprep.subr.bf16.mxu0 0
      %2908 = vmatpush2.bf16.msra.mxu0 0
      %2909 = vmatprep.subr.bf16.mxu0 0
      %2910 = vmatpush2.bf16.msra.mxu0 0
      %2911 = vmatprep.subr.bf16.mxu0 0
      %2912 = vmatpush2.bf16.msra.mxu0 0
      %2913 = vmatprep.subr.bf16.mxu0 0
      %2914 = vmatpush2.bf16.msra.mxu0 0
      %2915 = vmatprep.subr.bf16.mxu0 0
      %2916 = vmatpush2.bf16.msra.mxu0 0
      %2917 = vmatprep.mubr.bf16.mxu0 0
      %2918 = vmatmul.mubr.bf16.gmra.mxu0 %v2115
      %v2919 = vpop.f32.mrf.mxu0
      %v2920 = vadd.f32 %v2835, %v2919
      %v2921 = vpop.f32.mrf.mxu0
      %v2922 = vpop.f32.mrf.mxu0
      %v2923 = vadd.f32 %v2835, %v2922
      %v2924 = vpop.f32.mrf.mxu0
      %2925 = vdwg.mxu0
      %v2926 = vpack.c.bf16 %v2695, %v2692
      %v2927 = vpack.c.bf16 %v2809, %v2806
      %v2929 = vsel %vm2458, %v2926, 0
      %v2932 = vsel %vm2458, %v2927, 0
      %2934 = vmatprep.subr.bf16.mxu0 0
      %2935 = vmatpush1.bf16.xpose.msra.mxu0 0
      %2936 = vmatprep.subr.bf16.mxu0 0
      %2937 = vmatpush1.bf16.xpose.msra.mxu0 0
      %2938 = vmatprep.subr.bf16.mxu0 0
      %2939 = vmatpush1.bf16.xpose.msra.mxu0 0
      %2940 = vmatprep.subr.bf16.mxu0 0
      %2941 = vmatpush1.bf16.xpose.msra.mxu0 0
      %2942 = vmatprep.subr.bf16.mxu0 0
      %2943 = vmatpush1.bf16.xpose.msra.mxu0 0
      %2944 = vmatprep.subr.bf16.mxu0 0
      %2945 = vmatpush1.bf16.xpose.msra.mxu0 0
      %2946 = vmatprep.subr.bf16.mxu0 0
      %2947 = vmatpush1.bf16.xpose.msra.mxu0 0
      %2948 = vmatprep.subr.bf16.mxu0 0
      %2949 = vmatpush1.bf16.xpose.msra.mxu0 %v2932
      %2950 = vmatprep.subr.bf16.mxu0 0
      %2951 = vmatpush2.bf16.xpose.msra.mxu0 0
      %2952 = vmatprep.subr.bf16.mxu0 0
      %2953 = vmatpush2.bf16.xpose.msra.mxu0 0
      %2954 = vmatprep.subr.bf16.mxu0 0
      %2955 = vmatpush2.bf16.xpose.msra.mxu0 0
      %2956 = vmatprep.subr.bf16.mxu0 0
      %2957 = vmatpush2.bf16.xpose.msra.mxu0 0
      %2958 = vmatprep.subr.bf16.mxu0 0
      %2959 = vmatpush2.bf16.xpose.msra.mxu0 0
      %2960 = vmatprep.subr.bf16.mxu0 0
      %2961 = vmatpush2.bf16.xpose.msra.mxu0 0
      %2962 = vmatprep.subr.bf16.mxu0 0
      %2963 = vmatpush2.bf16.xpose.msra.mxu0 0
      %2964 = vmatprep.subr.bf16.mxu0 0
      %2965 = vmatpush2.bf16.xpose.msra.mxu0 0
      %2966 = vmatprep.mubr.bf16.mxu0 0
      %2967 = vmatmul.mubr.bf16.gmra.mxu0 %v2929
      %v2968 = vpop.f32.mrf.mxu0
      %v2969 = vadd.f32 0.0, %v2968
      %v2970 = vpop.f32.mrf.mxu0
      %v2971 = vpop.f32.mrf.mxu0
      %v2972 = vadd.f32 0.0, %v2971
      %v2973 = vpop.f32.mrf.mxu0
      %2974 = vdwg.mxu0
      %v2975 = vsel %vm2506, %v2969, -inf
      %2976 = vmax.xlane.f32.xlu0 %v2975
      %v2977 = vpop.xlane.xlu0 %2976
      %v2978 = vsel %vm2506, %v2972, -inf
      %2979 = vmax.xlane.f32.xlu0 %v2978
      %v2980 = vpop.xlane.xlu0 %2979
      %v2981 = vsub.f32 %v2969, %v2977
      %v2982 = vsub.f32 %v2972, %v2980
      %v2983 = vmul.f32 %v2981, 1.442695
      %v2984 = vpow.pop %v2983
      %v2985 = vmul.f32 %v2982, 1.442695
      %v2986 = vpow.pop %v2985
      %v2987 = vsel %vm2506, %v2984, 0.0
      %2988 = vadd.xlane.f32.xlu0 %v2987
      %v2989 = vpop.xlane.xlu0 %2988
      %v2990 = vsel %vm2506, %v2986, 0.0
      %2991 = vadd.xlane.f32.xlu0 %v2990
      %v2992 = vpop.xlane.xlu0 %2991
      %v2993 = vrcp.pop %v2989
      %v2994 = vrcp.pop %v2992
      %v2995 = vmul.f32 %v2984, %v2993
      %v2996 = vmul.f32 %v2986, %v2994
      %v2997 = vpack.c.bf16 %v2996, %v2995
      %v2998 = vpack.c.bf16 %v2923, %v2920
      %v3000 = vsel %vm2506, %v2997, 0
      %3002 = vmatprep.subr.bf16.mxu0 0
      %3003 = vmatpush1.bf16.msra.mxu0 0
      %3004 = vmatprep.subr.bf16.mxu0 0
      %3005 = vmatpush1.bf16.msra.mxu0 0
      %3006 = vmatprep.subr.bf16.mxu0 0
      %3007 = vmatpush1.bf16.msra.mxu0 0
      %3008 = vmatprep.subr.bf16.mxu0 0
      %3009 = vmatpush1.bf16.msra.mxu0 0
      %3010 = vmatprep.subr.bf16.mxu0 0
      %3011 = vmatpush1.bf16.msra.mxu0 0
      %3012 = vmatprep.subr.bf16.mxu0 0
      %3013 = vmatpush1.bf16.msra.mxu0 0
      %3014 = vmatprep.subr.bf16.mxu0 0
      %3015 = vmatpush1.bf16.msra.mxu0 0
      %3016 = vmatprep.subr.bf16.mxu0 0
      %3017 = vmatpush1.bf16.msra.mxu0 %v2998
      %3018 = vmatprep.subr.bf16.mxu0 0
      %3019 = vmatpush2.bf16.msra.mxu0 0
      %3020 = vmatprep.subr.bf16.mxu0 0
      %3021 = vmatpush2.bf16.msra.mxu0 0
      %3022 = vmatprep.subr.bf16.mxu0 0
      %3023 = vmatpush2.bf16.msra.mxu0 0
      %3024 = vmatprep.subr.bf16.mxu0 0
      %3025 = vmatpush2.bf16.msra.mxu0 0
      %3026 = vmatprep.subr.bf16.mxu0 0
      %3027 = vmatpush2.bf16.msra.mxu0 0
      %3028 = vmatprep.subr.bf16.mxu0 0
      %3029 = vmatpush2.bf16.msra.mxu0 0
      %3030 = vmatprep.subr.bf16.mxu0 0
      %3031 = vmatpush2.bf16.msra.mxu0 0
      %3032 = vmatprep.subr.bf16.mxu0 0
      %3033 = vmatpush2.bf16.msra.mxu0 0
      %3034 = vmatprep.mubr.bf16.mxu0 0
      %3035 = vmatmul.mubr.bf16.gmra.mxu0 %v3000
      %v3036 = vpop.f32.mrf.mxu0
      %v3037 = vadd.f32 0.0, %v3036
      %v3038 = vpop.f32.mrf.mxu0
      %v3039 = vpop.f32.mrf.mxu0
      %v3040 = vadd.f32 0.0, %v3039
      %v3041 = vpop.f32.mrf.mxu0
      %3042 = vdwg.mxu0
      %v3043 = vpack.c.bf16 %v3040, %v3037
      %s3044 = scalar_lea.vmem %s41, 32
      %v3045 = vld [vmem:[%s3044] sm:$0xf]
      %v3046 = vld [vmem:[%s3044 + $0x4] sm:$0xf]
      %v3047 = vld [vmem:[%s3044 + $0x8] sm:$0xf]
      %v3048 = vld [vmem:[%s3044 + $0xc] sm:$0xf]
      %v3049 = vld [vmem:[%s3044 + $0x10] sm:$0xf]
      %v3050 = vld [vmem:[%s3044 + $0x14] sm:$0xf]
      %v3051 = vld [vmem:[%s3044 + $0x18] sm:$0xf]
      %v3052 = vld [vmem:[%s3044 + $0x1c] sm:$0xf]
      %v3061 = vunpack.c.l.b16 %v3045
      %v3062 = vunpack.c.l.b16 %v3046
      %v3063 = vunpack.c.l.b16 %v3047
      %v3064 = vunpack.c.l.b16 %v3048
      %v3065 = vunpack.c.l.b16 %v3049
      %v3066 = vunpack.c.l.b16 %v3050
      %v3067 = vunpack.c.l.b16 %v3051
      %v3068 = vunpack.c.l.b16 %v3052
      %v3069 = vpack.c.b16 %v3062, %v3061
      %v3070 = vpack.c.b16 %v3064, %v3063
      %v3071 = vpack.c.b16 %v3066, %v3065
      %v3072 = vpack.c.b16 %v3068, %v3067
      %v3078 = vsel %vm2458, %v3043, 0
      %3080 = vmatprep.subr.bf16.mxu0 0
      %3081 = vmatpush1.bf16.msra.mxu0 0
      %3082 = vmatprep.subr.bf16.mxu0 0
      %3083 = vmatpush1.bf16.msra.mxu0 0
      %3084 = vmatprep.subr.bf16.mxu0 0
      %3085 = vmatpush1.bf16.msra.mxu0 0
      %3086 = vmatprep.subr.bf16.mxu0 0
      %3087 = vmatpush1.bf16.msra.mxu0 0
      %3088 = vmatprep.subr.bf16.mxu0 0
      %3089 = vmatpush1.bf16.msra.mxu0 %v3072
      %3090 = vmatprep.subr.bf16.mxu0 0
      %3091 = vmatpush1.bf16.msra.mxu0 %v3071
      %3092 = vmatprep.subr.bf16.mxu0 0
      %3093 = vmatpush1.bf16.msra.mxu0 %v3070
      %3094 = vmatprep.subr.bf16.mxu0 0
      %3095 = vmatpush1.bf16.msra.mxu0 %v3069
      %3096 = vmatprep.subr.bf16.mxu0 0
      %3097 = vmatpush2.bf16.msra.mxu0 0
      %3098 = vmatprep.subr.bf16.mxu0 0
      %3099 = vmatpush2.bf16.msra.mxu0 0
      %3100 = vmatprep.subr.bf16.mxu0 0
      %3101 = vmatpush2.bf16.msra.mxu0 0
      %3102 = vmatprep.subr.bf16.mxu0 0
      %3103 = vmatpush2.bf16.msra.mxu0 0
      %3104 = vmatprep.subr.bf16.mxu0 0
      %3105 = vmatpush2.bf16.msra.mxu0 0
      %3106 = vmatprep.subr.bf16.mxu0 0
      %3107 = vmatpush2.bf16.msra.mxu0 0
      %3108 = vmatprep.subr.bf16.mxu0 0
      %3109 = vmatpush2.bf16.msra.mxu0 0
      %3110 = vmatprep.subr.bf16.mxu0 0
      %3111 = vmatpush2.bf16.msra.mxu0 0
      %3112 = vmatprep.mubr.bf16.mxu0 0
      %3113 = vmatmul.mubr.bf16.gmra.mxu0 %v3078
      %v3114 = vpop.f32.mrf.mxu0
      %v3115 = vadd.f32 0.0, %v3114
      %v3116 = vpop.f32.mrf.mxu0
      %v3117 = vpop.f32.mrf.mxu0
      %v3118 = vadd.f32 0.0, %v3117
      %v3119 = vpop.f32.mrf.mxu0
      %3120 = vdwg.mxu0
      %v3129 = vunpack.c.l.b16 %v2576
      %v3130 = vunpack.c.l.b16 %v2577
      %v3131 = vunpack.c.l.b16 %v2578
      %v3132 = vunpack.c.l.b16 %v2579
      %v3133 = vunpack.c.l.b16 %v2580
      %v3134 = vunpack.c.l.b16 %v2581
      %v3135 = vunpack.c.l.b16 %v2582
      %v3136 = vunpack.c.l.b16 %v2583
      %v3137 = vpack.c.b16 %v3130, %v3129
      %v3138 = vpack.c.b16 %v3132, %v3131
      %v3139 = vpack.c.b16 %v3134, %v3133
      %v3140 = vpack.c.b16 %v3136, %v3135
      %v3146 = vsel %vm2458, %v2575, 0
      %3148 = vmatprep.subr.bf16.mxu0 0
      %3149 = vmatpush1.bf16.msra.mxu0 0
      %3150 = vmatprep.subr.bf16.mxu0 0
      %3151 = vmatpush1.bf16.msra.mxu0 0
      %3152 = vmatprep.subr.bf16.mxu0 0
      %3153 = vmatpush1.bf16.msra.mxu0 0
      %3154 = vmatprep.subr.bf16.mxu0 0
      %3155 = vmatpush1.bf16.msra.mxu0 0
      %3156 = vmatprep.subr.bf16.mxu0 0
      %3157 = vmatpush1.bf16.msra.mxu0 %v3140
      %3158 = vmatprep.subr.bf16.mxu0 0
      %3159 = vmatpush1.bf16.msra.mxu0 %v3139
      %3160 = vmatprep.subr.bf16.mxu0 0
      %3161 = vmatpush1.bf16.msra.mxu0 %v3138
      %3162 = vmatprep.subr.bf16.mxu0 0
      %3163 = vmatpush1.bf16.msra.mxu0 %v3137
      %3164 = vmatprep.subr.bf16.mxu0 0
      %3165 = vmatpush2.bf16.msra.mxu0 0
      %3166 = vmatprep.subr.bf16.mxu0 0
      %3167 = vmatpush2.bf16.msra.mxu0 0
      %3168 = vmatprep.subr.bf16.mxu0 0
      %3169 = vmatpush2.bf16.msra.mxu0 0
      %3170 = vmatprep.subr.bf16.mxu0 0
      %3171 = vmatpush2.bf16.msra.mxu0 0
      %3172 = vmatprep.subr.bf16.mxu0 0
      %3173 = vmatpush2.bf16.msra.mxu0 0
      %3174 = vmatprep.subr.bf16.mxu0 0
      %3175 = vmatpush2.bf16.msra.mxu0 0
      %3176 = vmatprep.subr.bf16.mxu0 0
      %3177 = vmatpush2.bf16.msra.mxu0 0
      %3178 = vmatprep.subr.bf16.mxu0 0
      %3179 = vmatpush2.bf16.msra.mxu0 0
      %3180 = vmatprep.mubr.bf16.mxu0 0
      %3181 = vmatmul.mubr.bf16.gmra.mxu0 %v3146
      %v3182 = vpop.f32.mrf.mxu0
      %v3183 = vadd.f32 %v3115, %v3182
      %v3184 = vpop.f32.mrf.mxu0
      %v3185 = vpop.f32.mrf.mxu0
      %v3186 = vadd.f32 %v3118, %v3185
      %v3187 = vpop.f32.mrf.mxu0
      %3188 = vdwg.mxu0
      %v3189 = vld [vmem:[%s43] sm:$0x1]
      %v3191 = vlaneseq
      %v3192 = vshrl.u32 %v3191, 7
      %v3193 = vsub.s32 0, %v3192
      %v3194 = vrot.slane %v3189, %v3193
      %v3196 = vadd.f32 %v3183, %v3194
      %v3197 = vadd.f32 %v3186, %v3194
      %v3198 = vadd.f32 %v2113, %v3196
      %v3199 = vadd.f32 %v2114, %v3197
      %3200 = vadd.xlane.f32.xlu0 %v3198
      %v3201 = vpop.xlane.xlu0 %3200
      %3202 = vadd.xlane.f32.xlu0 %v3199
      %v3203 = vpop.xlane.xlu0 %3202
      %v3204 = vmul.f32 %v3201, %v2096
      %v3205 = vmul.f32 %v3203, %v2096
      %v3206 = vsub.f32 %v3198, %v3204
      %v3207 = vsub.f32 %v3199, %v3205
      %v3208 = vmul.f32 %v3206, %v3206
      %v3209 = vmul.f32 %v3207, %v3207
      %3210 = vadd.xlane.f32.xlu0 %v3208
      %v3211 = vpop.xlane.xlu0 %3210
      %3212 = vadd.xlane.f32.xlu0 %v3209
      %v3213 = vpop.xlane.xlu0 %3212
      %v3214 = vmul.f32 %v3211, %v2096
      %v3215 = vmul.f32 %v3213, %v2096
      %v3216 = vadd.f32 %v3214, 1e-05
      %v3217 = vadd.f32 %v3215, 1e-05
      %v3218 = vrsqrt.pop %v3216
      %v3219 = vrsqrt.pop %v3217
      %v3220 = vmul.f32 %v3206, %v3218
      %v3221 = vmul.f32 %v3207, %v3219
      %v3222 = vld [vmem:[%s45] sm:$0xf]
      %v3223 = vld [vmem:[%s45 + $0x4] sm:$0xf]
      %v3224 = vld [vmem:[%s45 + $0x8] sm:$0xf]
      %v3225 = vld [vmem:[%s45 + $0xc] sm:$0xf]
      %v3226 = vld [vmem:[%s45 + $0x10] sm:$0xf]
      %v3227 = vld [vmem:[%s45 + $0x14] sm:$0xf]
      %v3228 = vld [vmem:[%s45 + $0x18] sm:$0xf]
      %v3229 = vld [vmem:[%s45 + $0x1c] sm:$0xf]
      %v3230 = vld [vmem:[%s45 + $0x20] sm:$0xf]
      %v3231 = vld [vmem:[%s45 + $0x24] sm:$0xf]
      %v3232 = vld [vmem:[%s45 + $0x28] sm:$0xf]
      %v3233 = vld [vmem:[%s45 + $0x2c] sm:$0xf]
      %v3234 = vld [vmem:[%s45 + $0x30] sm:$0xf]
      %v3235 = vld [vmem:[%s45 + $0x34] sm:$0xf]
      %v3236 = vld [vmem:[%s45 + $0x38] sm:$0xf]
      %v3237 = vld [vmem:[%s45 + $0x3c] sm:$0xf]
      %v3238 = vpack.c.bf16 %v3221, %v3220
      %v3239 = vld [vmem:[%s47] sm:$0x1]
      %v3241 = vlaneseq
      %v3242 = vshrl.u32 %v3241, 7
      %v3243 = vsub.s32 0, %v3242
      %v3244 = vrot.slane %v3239, %v3243
      %v3262 = vunpack.c.l.b16 %v3222
      %v3263 = vunpack.c.l.b16 %v3223
      %v3264 = vunpack.c.l.b16 %v3224
      %v3265 = vunpack.c.l.b16 %v3225
      %v3266 = vunpack.c.l.b16 %v3226
      %v3267 = vunpack.c.l.b16 %v3227
      %v3268 = vunpack.c.l.b16 %v3228
      %v3269 = vunpack.c.l.b16 %v3229
      %v3270 = vunpack.c.l.b16 %v3230
      %v3271 = vunpack.c.l.b16 %v3231
      %v3272 = vunpack.c.l.b16 %v3232
      %v3273 = vunpack.c.l.b16 %v3233
      %v3274 = vunpack.c.l.b16 %v3234
      %v3275 = vunpack.c.l.b16 %v3235
      %v3276 = vunpack.c.l.b16 %v3236
      %v3277 = vunpack.c.l.b16 %v3237
      %v3278 = vpack.c.b16 %v3263, %v3262
      %v3279 = vpack.c.b16 %v3265, %v3264
      %v3280 = vpack.c.b16 %v3267, %v3266
      %v3281 = vpack.c.b16 %v3269, %v3268
      %v3282 = vpack.c.b16 %v3271, %v3270
      %v3283 = vpack.c.b16 %v3273, %v3272
      %v3284 = vpack.c.b16 %v3275, %v3274
      %v3285 = vpack.c.b16 %v3277, %v3276
      %3294 = vmatprep.subr.bf16.mxu0 0
      %3295 = vmatpush1.bf16.msra.mxu0 %v3285
      %3296 = vmatprep.subr.bf16.mxu0 0
      %3297 = vmatpush1.bf16.msra.mxu0 %v3284
      %3298 = vmatprep.subr.bf16.mxu0 0
      %3299 = vmatpush1.bf16.msra.mxu0 %v3283
      %3300 = vmatprep.subr.bf16.mxu0 0
      %3301 = vmatpush1.bf16.msra.mxu0 %v3282
      %3302 = vmatprep.subr.bf16.mxu0 0
      %3303 = vmatpush1.bf16.msra.mxu0 %v3281
      %3304 = vmatprep.subr.bf16.mxu0 0
      %3305 = vmatpush1.bf16.msra.mxu0 %v3280
      %3306 = vmatprep.subr.bf16.mxu0 0
      %3307 = vmatpush1.bf16.msra.mxu0 %v3279
      %3308 = vmatprep.subr.bf16.mxu0 0
      %3309 = vmatpush1.bf16.msra.mxu0 %v3278
      %3310 = vmatprep.subr.bf16.mxu0 0
      %3311 = vmatpush2.bf16.msra.mxu0 0
      %3312 = vmatprep.subr.bf16.mxu0 0
      %3313 = vmatpush2.bf16.msra.mxu0 0
      %3314 = vmatprep.subr.bf16.mxu0 0
      %3315 = vmatpush2.bf16.msra.mxu0 0
      %3316 = vmatprep.subr.bf16.mxu0 0
      %3317 = vmatpush2.bf16.msra.mxu0 0
      %3318 = vmatprep.subr.bf16.mxu0 0
      %3319 = vmatpush2.bf16.msra.mxu0 0
      %3320 = vmatprep.subr.bf16.mxu0 0
      %3321 = vmatpush2.bf16.msra.mxu0 0
      %3322 = vmatprep.subr.bf16.mxu0 0
      %3323 = vmatpush2.bf16.msra.mxu0 0
      %3324 = vmatprep.subr.bf16.mxu0 0
      %3325 = vmatpush2.bf16.msra.mxu0 0
      %3326 = vmatprep.mubr.bf16.mxu0 0
      %3327 = vmatmul.mubr.bf16.gmra.mxu0 %v3238
      %v3328 = vpop.f32.mrf.mxu0
      %v3329 = vadd.f32 %v3244, %v3328
      %v3330 = vpop.f32.mrf.mxu0
      %v3331 = vpop.f32.mrf.mxu0
      %v3332 = vadd.f32 %v3244, %v3331
      %v3333 = vpop.f32.mrf.mxu0
      %3334 = vdwg.mxu0
      %v3335 = vmax.f32 %v3329, 0.0
      %v3336 = vmax.f32 %v3332, 0.0
      %v3337 = vld [vmem:[%s49] sm:$0xf]
      %v3338 = vld [vmem:[%s49 + $0x4] sm:$0xf]
      %v3339 = vld [vmem:[%s49 + $0x8] sm:$0xf]
      %v3340 = vld [vmem:[%s49 + $0xc] sm:$0xf]
      %v3341 = vld [vmem:[%s49 + $0x10] sm:$0xf]
      %v3342 = vld [vmem:[%s49 + $0x14] sm:$0xf]
      %v3343 = vld [vmem:[%s49 + $0x18] sm:$0xf]
      %v3344 = vld [vmem:[%s49 + $0x1c] sm:$0xf]
      %v3345 = vld [vmem:[%s49 + $0x20] sm:$0xf]
      %v3346 = vld [vmem:[%s49 + $0x24] sm:$0xf]
      %v3347 = vld [vmem:[%s49 + $0x28] sm:$0xf]
      %v3348 = vld [vmem:[%s49 + $0x2c] sm:$0xf]
      %v3349 = vld [vmem:[%s49 + $0x30] sm:$0xf]
      %v3350 = vld [vmem:[%s49 + $0x34] sm:$0xf]
      %v3351 = vld [vmem:[%s49 + $0x38] sm:$0xf]
      %v3352 = vld [vmem:[%s49 + $0x3c] sm:$0xf]
      %v3353 = vpack.c.bf16 %v3336, %v3335
      %v3354 = vld [vmem:[%s51] sm:$0x1]
      %v3356 = vlaneseq
      %v3357 = vshrl.u32 %v3356, 7
      %v3358 = vsub.s32 0, %v3357
      %v3359 = vrot.slane %v3354, %v3358
      %v3377 = vunpack.c.l.b16 %v3337
      %v3378 = vunpack.c.l.b16 %v3338
      %v3379 = vunpack.c.l.b16 %v3339
      %v3380 = vunpack.c.l.b16 %v3340
      %v3381 = vunpack.c.l.b16 %v3341
      %v3382 = vunpack.c.l.b16 %v3342
      %v3383 = vunpack.c.l.b16 %v3343
      %v3384 = vunpack.c.l.b16 %v3344
      %v3385 = vunpack.c.l.b16 %v3345
      %v3386 = vunpack.c.l.b16 %v3346
      %v3387 = vunpack.c.l.b16 %v3347
      %v3388 = vunpack.c.l.b16 %v3348
      %v3389 = vunpack.c.l.b16 %v3349
      %v3390 = vunpack.c.l.b16 %v3350
      %v3391 = vunpack.c.l.b16 %v3351
      %v3392 = vunpack.c.l.b16 %v3352
      %v3393 = vpack.c.b16 %v3378, %v3377
      %v3394 = vpack.c.b16 %v3380, %v3379
      %v3395 = vpack.c.b16 %v3382, %v3381
      %v3396 = vpack.c.b16 %v3384, %v3383
      %v3397 = vpack.c.b16 %v3386, %v3385
      %v3398 = vpack.c.b16 %v3388, %v3387
      %v3399 = vpack.c.b16 %v3390, %v3389
      %v3400 = vpack.c.b16 %v3392, %v3391
      %3409 = vmatprep.subr.bf16.mxu0 0
      %3410 = vmatpush1.bf16.msra.mxu0 %v3400
      %3411 = vmatprep.subr.bf16.mxu0 0
      %3412 = vmatpush1.bf16.msra.mxu0 %v3399
      %3413 = vmatprep.subr.bf16.mxu0 0
      %3414 = vmatpush1.bf16.msra.mxu0 %v3398
      %3415 = vmatprep.subr.bf16.mxu0 0
      %3416 = vmatpush1.bf16.msra.mxu0 %v3397
      %3417 = vmatprep.subr.bf16.mxu0 0
      %3418 = vmatpush1.bf16.msra.mxu0 %v3396
      %3419 = vmatprep.subr.bf16.mxu0 0
      %3420 = vmatpush1.bf16.msra.mxu0 %v3395
      %3421 = vmatprep.subr.bf16.mxu0 0
      %3422 = vmatpush1.bf16.msra.mxu0 %v3394
      %3423 = vmatprep.subr.bf16.mxu0 0
      %3424 = vmatpush1.bf16.msra.mxu0 %v3393
      %3425 = vmatprep.subr.bf16.mxu0 0
      %3426 = vmatpush2.bf16.msra.mxu0 0
      %3427 = vmatprep.subr.bf16.mxu0 0
      %3428 = vmatpush2.bf16.msra.mxu0 0
      %3429 = vmatprep.subr.bf16.mxu0 0
      %3430 = vmatpush2.bf16.msra.mxu0 0
      %3431 = vmatprep.subr.bf16.mxu0 0
      %3432 = vmatpush2.bf16.msra.mxu0 0
      %3433 = vmatprep.subr.bf16.mxu0 0
      %3434 = vmatpush2.bf16.msra.mxu0 0
      %3435 = vmatprep.subr.bf16.mxu0 0
      %3436 = vmatpush2.bf16.msra.mxu0 0
      %3437 = vmatprep.subr.bf16.mxu0 0
      %3438 = vmatpush2.bf16.msra.mxu0 0
      %3439 = vmatprep.subr.bf16.mxu0 0
      %3440 = vmatpush2.bf16.msra.mxu0 0
      %3441 = vmatprep.mubr.bf16.mxu0 0
      %3442 = vmatmul.mubr.bf16.gmra.mxu0 %v3353
      %v3443 = vpop.f32.mrf.mxu0
      %v3444 = vadd.f32 %v3359, %v3443
      %v3445 = vpop.f32.mrf.mxu0
      %v3446 = vpop.f32.mrf.mxu0
      %v3447 = vadd.f32 %v3359, %v3446
      %v3448 = vpop.f32.mrf.mxu0
      %3449 = vdwg.mxu0
      %v3450 = vmax.f32 %v3444, 0.0
      %v3451 = vmax.f32 %v3447, 0.0
      %v3452 = vadd.f32 %v3450, %v3220
      %v3453 = vadd.f32 %v3451, %v3221
      %3454 = vadd.xlane.f32.xlu0 %v3452
      %v3455 = vpop.xlane.xlu0 %3454
      %3456 = vadd.xlane.f32.xlu0 %v3453
      %v3457 = vpop.xlane.xlu0 %3456
      %v3458 = vmul.f32 %v3455, %v2096
      %v3459 = vmul.f32 %v3457, %v2096
      %v3460 = vsub.f32 %v3452, %v3458
      %v3461 = vsub.f32 %v3453, %v3459
      %v3462 = vmul.f32 %v3460, %v3460
      %v3463 = vmul.f32 %v3461, %v3461
      %3464 = vadd.xlane.f32.xlu0 %v3462
      %v3465 = vpop.xlane.xlu0 %3464
      %3466 = vadd.xlane.f32.xlu0 %v3463
      %v3467 = vpop.xlane.xlu0 %3466
      %v3468 = vmul.f32 %v3465, %v2096
      %v3469 = vmul.f32 %v3467, %v2096
      %v3470 = vadd.f32 %v3468, 1e-05
      %v3471 = vadd.f32 %v3469, 1e-05
      %v3472 = vrsqrt.pop %v3470
      %v3473 = vrsqrt.pop %v3471
      %v3474 = vmul.f32 %v3460, %v3472
      %v3475 = vmul.f32 %v3461, %v3473
      %v3476 = vld [vmem:[%s53] sm:$0xf]
      %v3477 = vld [vmem:[%s53 + $0x4] sm:$0xf]
      %v3478 = vld [vmem:[%s53 + $0x8] sm:$0xf]
      %v3479 = vld [vmem:[%s53 + $0xc] sm:$0xf]
      %v3480 = vld [vmem:[%s53 + $0x10] sm:$0xf]
      %v3481 = vld [vmem:[%s53 + $0x14] sm:$0xf]
      %v3482 = vld [vmem:[%s53 + $0x18] sm:$0xf]
      %v3483 = vld [vmem:[%s53 + $0x1c] sm:$0xf]
      %v3484 = vld [vmem:[%s53 + $0x20] sm:$0xf]
      %v3485 = vld [vmem:[%s53 + $0x24] sm:$0xf]
      %v3486 = vld [vmem:[%s53 + $0x28] sm:$0xf]
      %v3487 = vld [vmem:[%s53 + $0x2c] sm:$0xf]
      %v3488 = vld [vmem:[%s53 + $0x30] sm:$0xf]
      %v3489 = vld [vmem:[%s53 + $0x34] sm:$0xf]
      %v3490 = vld [vmem:[%s53 + $0x38] sm:$0xf]
      %v3491 = vld [vmem:[%s53 + $0x3c] sm:$0xf]
      %v3492 = vpack.c.bf16 %v3475, %v3474
      %v3493 = vld [vmem:[%s55] sm:$0xf]
      %v3494 = vld [vmem:[%s55 + $0x4] sm:$0xf]
      %v3495 = vld [vmem:[%s55 + $0x8] sm:$0xf]
      %v3496 = vld [vmem:[%s55 + $0xc] sm:$0xf]
      %v3497 = vld [vmem:[%s55 + $0x10] sm:$0xf]
      %v3498 = vld [vmem:[%s55 + $0x14] sm:$0xf]
      %v3499 = vld [vmem:[%s55 + $0x18] sm:$0xf]
      %v3500 = vld [vmem:[%s55 + $0x1c] sm:$0xf]
      %v3501 = vld [vmem:[%s55 + $0x20] sm:$0xf]
      %v3502 = vld [vmem:[%s55 + $0x24] sm:$0xf]
      %v3503 = vld [vmem:[%s55 + $0x28] sm:$0xf]
      %v3504 = vld [vmem:[%s55 + $0x2c] sm:$0xf]
      %v3505 = vld [vmem:[%s55 + $0x30] sm:$0xf]
      %v3506 = vld [vmem:[%s55 + $0x34] sm:$0xf]
      %v3507 = vld [vmem:[%s55 + $0x38] sm:$0xf]
      %v3508 = vld [vmem:[%s55 + $0x3c] sm:$0xf]
      %v3525 = vunpack.c.l.b16 %v3493
      %v3526 = vunpack.c.l.b16 %v3494
      %v3527 = vunpack.c.l.b16 %v3495
      %v3528 = vunpack.c.l.b16 %v3496
      %v3529 = vunpack.c.l.b16 %v3497
      %v3530 = vunpack.c.l.b16 %v3498
      %v3531 = vunpack.c.l.b16 %v3499
      %v3532 = vunpack.c.l.b16 %v3500
      %v3533 = vunpack.c.l.b16 %v3501
      %v3534 = vunpack.c.l.b16 %v3502
      %v3535 = vunpack.c.l.b16 %v3503
      %v3536 = vunpack.c.l.b16 %v3504
      %v3537 = vunpack.c.l.b16 %v3505
      %v3538 = vunpack.c.l.b16 %v3506
      %v3539 = vunpack.c.l.b16 %v3507
      %v3540 = vunpack.c.l.b16 %v3508
      %v3541 = vpack.c.b16 %v3526, %v3525
      %v3542 = vpack.c.b16 %v3528, %v3527
      %v3543 = vpack.c.b16 %v3530, %v3529
      %v3544 = vpack.c.b16 %v3532, %v3531
      %v3545 = vpack.c.b16 %v3534, %v3533
      %v3546 = vpack.c.b16 %v3536, %v3535
      %v3547 = vpack.c.b16 %v3538, %v3537
      %v3548 = vpack.c.b16 %v3540, %v3539
      %3557 = vmatprep.subr.bf16.mxu0 0
      %3558 = vmatpush1.bf16.msra.mxu0 %v3548
      %3559 = vmatprep.subr.bf16.mxu0 0
      %3560 = vmatpush1.bf16.msra.mxu0 %v3547
      %3561 = vmatprep.subr.bf16.mxu0 0
      %3562 = vmatpush1.bf16.msra.mxu0 %v3546
      %3563 = vmatprep.subr.bf16.mxu0 0
      %3564 = vmatpush1.bf16.msra.mxu0 %v3545
      %3565 = vmatprep.subr.bf16.mxu0 0
      %3566 = vmatpush1.bf16.msra.mxu0 %v3544
      %3567 = vmatprep.subr.bf16.mxu0 0
      %3568 = vmatpush1.bf16.msra.mxu0 %v3543
      %3569 = vmatprep.subr.bf16.mxu0 0
      %3570 = vmatpush1.bf16.msra.mxu0 %v3542
      %3571 = vmatprep.subr.bf16.mxu0 0
      %3572 = vmatpush1.bf16.msra.mxu0 %v3541
      %3573 = vmatprep.subr.bf16.mxu0 0
      %3574 = vmatpush2.bf16.msra.mxu0 0
      %3575 = vmatprep.subr.bf16.mxu0 0
      %3576 = vmatpush2.bf16.msra.mxu0 0
      %3577 = vmatprep.subr.bf16.mxu0 0
      %3578 = vmatpush2.bf16.msra.mxu0 0
      %3579 = vmatprep.subr.bf16.mxu0 0
      %3580 = vmatpush2.bf16.msra.mxu0 0
      %3581 = vmatprep.subr.bf16.mxu0 0
      %3582 = vmatpush2.bf16.msra.mxu0 0
      %3583 = vmatprep.subr.bf16.mxu0 0
      %3584 = vmatpush2.bf16.msra.mxu0 0
      %3585 = vmatprep.subr.bf16.mxu0 0
      %3586 = vmatpush2.bf16.msra.mxu0 0
      %3587 = vmatprep.subr.bf16.mxu0 0
      %3588 = vmatpush2.bf16.msra.mxu0 0
      %3589 = vmatprep.mubr.bf16.mxu0 0
      %3590 = vmatmul.mubr.bf16.gmra.mxu0 %v2115
      %v3591 = vpop.f32.mrf.mxu0
      %v3592 = vadd.f32 0.0, %v3591
      %v3593 = vpop.f32.mrf.mxu0
      %v3594 = vpop.f32.mrf.mxu0
      %v3595 = vadd.f32 0.0, %v3594
      %v3596 = vpop.f32.mrf.mxu0
      %3597 = vdwg.mxu0
      %v3614 = vunpack.c.l.b16 %v3476
      %v3615 = vunpack.c.l.b16 %v3477
      %v3616 = vunpack.c.l.b16 %v3478
      %v3617 = vunpack.c.l.b16 %v3479
      %v3618 = vunpack.c.l.b16 %v3480
      %v3619 = vunpack.c.l.b16 %v3481
      %v3620 = vunpack.c.l.b16 %v3482
      %v3621 = vunpack.c.l.b16 %v3483
      %v3622 = vunpack.c.l.b16 %v3484
      %v3623 = vunpack.c.l.b16 %v3485
      %v3624 = vunpack.c.l.b16 %v3486
      %v3625 = vunpack.c.l.b16 %v3487
      %v3626 = vunpack.c.l.b16 %v3488
      %v3627 = vunpack.c.l.b16 %v3489
      %v3628 = vunpack.c.l.b16 %v3490
      %v3629 = vunpack.c.l.b16 %v3491
      %v3630 = vpack.c.b16 %v3615, %v3614
      %v3631 = vpack.c.b16 %v3617, %v3616
      %v3632 = vpack.c.b16 %v3619, %v3618
      %v3633 = vpack.c.b16 %v3621, %v3620
      %v3634 = vpack.c.b16 %v3623, %v3622
      %v3635 = vpack.c.b16 %v3625, %v3624
      %v3636 = vpack.c.b16 %v3627, %v3626
      %v3637 = vpack.c.b16 %v3629, %v3628
      %3646 = vmatprep.subr.bf16.mxu0 0
      %3647 = vmatpush1.bf16.msra.mxu0 %v3637
      %3648 = vmatprep.subr.bf16.mxu0 0
      %3649 = vmatpush1.bf16.msra.mxu0 %v3636
      %3650 = vmatprep.subr.bf16.mxu0 0
      %3651 = vmatpush1.bf16.msra.mxu0 %v3635
      %3652 = vmatprep.subr.bf16.mxu0 0
      %3653 = vmatpush1.bf16.msra.mxu0 %v3634
      %3654 = vmatprep.subr.bf16.mxu0 0
      %3655 = vmatpush1.bf16.msra.mxu0 %v3633
      %3656 = vmatprep.subr.bf16.mxu0 0
      %3657 = vmatpush1.bf16.msra.mxu0 %v3632
      %3658 = vmatprep.subr.bf16.mxu0 0
      %3659 = vmatpush1.bf16.msra.mxu0 %v3631
      %3660 = vmatprep.subr.bf16.mxu0 0
      %3661 = vmatpush1.bf16.msra.mxu0 %v3630
      %3662 = vmatprep.subr.bf16.mxu0 0
      %3663 = vmatpush2.bf16.msra.mxu0 0
      %3664 = vmatprep.subr.bf16.mxu0 0
      %3665 = vmatpush2.bf16.msra.mxu0 0
      %3666 = vmatprep.subr.bf16.mxu0 0
      %3667 = vmatpush2.bf16.msra.mxu0 0
      %3668 = vmatprep.subr.bf16.mxu0 0
      %3669 = vmatpush2.bf16.msra.mxu0 0
      %3670 = vmatprep.subr.bf16.mxu0 0
      %3671 = vmatpush2.bf16.msra.mxu0 0
      %3672 = vmatprep.subr.bf16.mxu0 0
      %3673 = vmatpush2.bf16.msra.mxu0 0
      %3674 = vmatprep.subr.bf16.mxu0 0
      %3675 = vmatpush2.bf16.msra.mxu0 0
      %3676 = vmatprep.subr.bf16.mxu0 0
      %3677 = vmatpush2.bf16.msra.mxu0 0
      %3678 = vmatprep.mubr.bf16.mxu0 0
      %3679 = vmatmul.mubr.bf16.gmra.mxu0 %v3492
      %v3680 = vpop.f32.mrf.mxu0
      %v3681 = vadd.f32 %v3592, %v3680
      %v3682 = vpop.f32.mrf.mxu0
      %v3683 = vpop.f32.mrf.mxu0
      %v3684 = vadd.f32 %v3595, %v3683
      %v3685 = vpop.f32.mrf.mxu0
      %3686 = vdwg.mxu0
      %v3687 = vld [vmem:[%s57] sm:$0x1]
      %v3689 = vlaneseq
      %v3690 = vshrl.u32 %v3689, 7
      %v3691 = vsub.s32 0, %v3690
      %v3692 = vrot.slane %v3687, %v3691
      %v3694 = vadd.f32 %v3681, %v3692
      %v3695 = vadd.f32 %v3684, %v3692
      %v3696 = vxor.u32 %v3694, 2147483648
      %v3697 = vxor.u32 %v3695, 2147483648
      %v3698 = vmul.f32 %v3696, 1.442695
      %v3699 = vpow.pop %v3698
      %v3700 = vmul.f32 %v3697, 1.442695
      %v3701 = vpow.pop %v3700
      %v3702 = vadd.f32 %v3699, 1.0
      %v3703 = vadd.f32 %v3701, 1.0
      %v3704 = vrcp.pop %v3702
      %v3705 = vmul.f32 1.0, %v3704
      %v3706 = vrcp.pop %v3703
      %v3707 = vmul.f32 1.0, %v3706
      %v3708 = vmul.f32 %v3705, %v3474
      %v3709 = vmul.f32 %v3707, %v3475
      %v3710 = vsub.f32 1.0, %v3705
      %v3711 = vsub.f32 1.0, %v3707
      %v3712 = vmul.f32 %v3710, %v2113
      %v3713 = vmul.f32 %v3711, %v2114
      %v3714 = vadd.f32 %v3708, %v3712
      %v3715 = vadd.f32 %v3709, %v3713
      %v3716 = vpack.c.bf16 %v3715, %v3714
      %s3717 = scalar_lea.vmem %s37, 384
      %v3718 = vld [vmem:[%s3717] sm:$0xf]
      %v3719 = vld [vmem:[%s3717 + $0x4] sm:$0xf]
      %v3720 = vld [vmem:[%s3717 + $0x8] sm:$0xf]
      %v3721 = vld [vmem:[%s3717 + $0xc] sm:$0xf]
      %v3722 = vld [vmem:[%s3717 + $0x10] sm:$0xf]
      %v3723 = vld [vmem:[%s3717 + $0x14] sm:$0xf]
      %v3724 = vld [vmem:[%s3717 + $0x18] sm:$0xf]
      %v3725 = vld [vmem:[%s3717 + $0x1c] sm:$0xf]
      %v3726 = vld [vmem:[%s3717 + $0x20] sm:$0xf]
      %v3727 = vld [vmem:[%s3717 + $0x24] sm:$0xf]
      %v3728 = vld [vmem:[%s3717 + $0x28] sm:$0xf]
      %v3729 = vld [vmem:[%s3717 + $0x2c] sm:$0xf]
      %v3730 = vld [vmem:[%s3717 + $0x30] sm:$0xf]
      %v3731 = vld [vmem:[%s3717 + $0x34] sm:$0xf]
      %v3732 = vld [vmem:[%s3717 + $0x38] sm:$0xf]
      %v3733 = vld [vmem:[%s3717 + $0x3c] sm:$0xf]
      %s3734 = scalar_lea.vmem %s39, 6
      %v3735 = vld [vmem:[%s3734] sm:$0x1]
      %v3737 = vlaneseq
      %v3738 = vshrl.u32 %v3737, 7
      %v3739 = vsub.s32 0, %v3738
      %v3740 = vrot.slane %v3735, %v3739
      %v3758 = vunpack.c.l.b16 %v3718
      %v3759 = vunpack.c.l.b16 %v3719
      %v3760 = vunpack.c.l.b16 %v3720
      %v3761 = vunpack.c.l.b16 %v3721
      %v3762 = vunpack.c.l.b16 %v3722
      %v3763 = vunpack.c.l.b16 %v3723
      %v3764 = vunpack.c.l.b16 %v3724
      %v3765 = vunpack.c.l.b16 %v3725
      %v3766 = vunpack.c.l.b16 %v3726
      %v3767 = vunpack.c.l.b16 %v3727
      %v3768 = vunpack.c.l.b16 %v3728
      %v3769 = vunpack.c.l.b16 %v3729
      %v3770 = vunpack.c.l.b16 %v3730
      %v3771 = vunpack.c.l.b16 %v3731
      %v3772 = vunpack.c.l.b16 %v3732
      %v3773 = vunpack.c.l.b16 %v3733
      %v3774 = vpack.c.b16 %v3759, %v3758
      %v3775 = vpack.c.b16 %v3761, %v3760
      %v3776 = vpack.c.b16 %v3763, %v3762
      %v3777 = vpack.c.b16 %v3765, %v3764
      %v3778 = vpack.c.b16 %v3767, %v3766
      %v3779 = vpack.c.b16 %v3769, %v3768
      %v3780 = vpack.c.b16 %v3771, %v3770
      %v3781 = vpack.c.b16 %v3773, %v3772
      %3790 = vmatprep.subr.bf16.mxu0 0
      %3791 = vmatpush1.bf16.msra.mxu0 %v3781
      %3792 = vmatprep.subr.bf16.mxu0 0
      %3793 = vmatpush1.bf16.msra.mxu0 %v3780
      %3794 = vmatprep.subr.bf16.mxu0 0
      %3795 = vmatpush1.bf16.msra.mxu0 %v3779
      %3796 = vmatprep.subr.bf16.mxu0 0
      %3797 = vmatpush1.bf16.msra.mxu0 %v3778
      %3798 = vmatprep.subr.bf16.mxu0 0
      %3799 = vmatpush1.bf16.msra.mxu0 %v3777
      %3800 = vmatprep.subr.bf16.mxu0 0
      %3801 = vmatpush1.bf16.msra.mxu0 %v3776
      %3802 = vmatprep.subr.bf16.mxu0 0
      %3803 = vmatpush1.bf16.msra.mxu0 %v3775
      %3804 = vmatprep.subr.bf16.mxu0 0
      %3805 = vmatpush1.bf16.msra.mxu0 %v3774
      %3806 = vmatprep.subr.bf16.mxu0 0
      %3807 = vmatpush2.bf16.msra.mxu0 0
      %3808 = vmatprep.subr.bf16.mxu0 0
      %3809 = vmatpush2.bf16.msra.mxu0 0
      %3810 = vmatprep.subr.bf16.mxu0 0
      %3811 = vmatpush2.bf16.msra.mxu0 0
      %3812 = vmatprep.subr.bf16.mxu0 0
      %3813 = vmatpush2.bf16.msra.mxu0 0
      %3814 = vmatprep.subr.bf16.mxu0 0
      %3815 = vmatpush2.bf16.msra.mxu0 0
      %3816 = vmatprep.subr.bf16.mxu0 0
      %3817 = vmatpush2.bf16.msra.mxu0 0
      %3818 = vmatprep.subr.bf16.mxu0 0
      %3819 = vmatpush2.bf16.msra.mxu0 0
      %3820 = vmatprep.subr.bf16.mxu0 0
      %3821 = vmatpush2.bf16.msra.mxu0 0
      %3822 = vmatprep.mubr.bf16.mxu0 0
      %3823 = vmatmul.mubr.bf16.gmra.mxu0 %v3716
      %v3824 = vpop.f32.mrf.mxu0
      %v3825 = vadd.f32 %v3740, %v3824
      %v3826 = vpop.f32.mrf.mxu0
      %v3827 = vpop.f32.mrf.mxu0
      %v3828 = vadd.f32 %v3740, %v3827
      %v3829 = vpop.f32.mrf.mxu0
      %3830 = vdwg.mxu0
      %s3831 = scalar_lea.vmem %s37, 512
      %v3832 = vld [vmem:[%s3831] sm:$0xf]
      %v3833 = vld [vmem:[%s3831 + $0x4] sm:$0xf]
      %v3834 = vld [vmem:[%s3831 + $0x8] sm:$0xf]
      %v3835 = vld [vmem:[%s3831 + $0xc] sm:$0xf]
      %v3836 = vld [vmem:[%s3831 + $0x10] sm:$0xf]
      %v3837 = vld [vmem:[%s3831 + $0x14] sm:$0xf]
      %v3838 = vld [vmem:[%s3831 + $0x18] sm:$0xf]
      %v3839 = vld [vmem:[%s3831 + $0x1c] sm:$0xf]
      %v3840 = vld [vmem:[%s3831 + $0x20] sm:$0xf]
      %v3841 = vld [vmem:[%s3831 + $0x24] sm:$0xf]
      %v3842 = vld [vmem:[%s3831 + $0x28] sm:$0xf]
      %v3843 = vld [vmem:[%s3831 + $0x2c] sm:$0xf]
      %v3844 = vld [vmem:[%s3831 + $0x30] sm:$0xf]
      %v3845 = vld [vmem:[%s3831 + $0x34] sm:$0xf]
      %v3846 = vld [vmem:[%s3831 + $0x38] sm:$0xf]
      %v3847 = vld [vmem:[%s3831 + $0x3c] sm:$0xf]
      %s3848 = scalar_lea.vmem %s39, 8
      %v3849 = vld [vmem:[%s3848] sm:$0x1]
      %v3851 = vlaneseq
      %v3852 = vshrl.u32 %v3851, 7
      %v3853 = vsub.s32 0, %v3852
      %v3854 = vrot.slane %v3849, %v3853
      %v3872 = vunpack.c.l.b16 %v3832
      %v3873 = vunpack.c.l.b16 %v3833
      %v3874 = vunpack.c.l.b16 %v3834
      %v3875 = vunpack.c.l.b16 %v3835
      %v3876 = vunpack.c.l.b16 %v3836
      %v3877 = vunpack.c.l.b16 %v3837
      %v3878 = vunpack.c.l.b16 %v3838
      %v3879 = vunpack.c.l.b16 %v3839
      %v3880 = vunpack.c.l.b16 %v3840
      %v3881 = vunpack.c.l.b16 %v3841
      %v3882 = vunpack.c.l.b16 %v3842
      %v3883 = vunpack.c.l.b16 %v3843
      %v3884 = vunpack.c.l.b16 %v3844
      %v3885 = vunpack.c.l.b16 %v3845
      %v3886 = vunpack.c.l.b16 %v3846
      %v3887 = vunpack.c.l.b16 %v3847
      %v3888 = vpack.c.b16 %v3873, %v3872
      %v3889 = vpack.c.b16 %v3875, %v3874
      %v3890 = vpack.c.b16 %v3877, %v3876
      %v3891 = vpack.c.b16 %v3879, %v3878
      %v3892 = vpack.c.b16 %v3881, %v3880
      %v3893 = vpack.c.b16 %v3883, %v3882
      %v3894 = vpack.c.b16 %v3885, %v3884
      %v3895 = vpack.c.b16 %v3887, %v3886
      %3904 = vmatprep.subr.bf16.mxu0 0
      %3905 = vmatpush1.bf16.msra.mxu0 %v3895
      %3906 = vmatprep.subr.bf16.mxu0 0
      %3907 = vmatpush1.bf16.msra.mxu0 %v3894
      %3908 = vmatprep.subr.bf16.mxu0 0
      %3909 = vmatpush1.bf16.msra.mxu0 %v3893
      %3910 = vmatprep.subr.bf16.mxu0 0
      %3911 = vmatpush1.bf16.msra.mxu0 %v3892
      %3912 = vmatprep.subr.bf16.mxu0 0
      %3913 = vmatpush1.bf16.msra.mxu0 %v3891
      %3914 = vmatprep.subr.bf16.mxu0 0
      %3915 = vmatpush1.bf16.msra.mxu0 %v3890
      %3916 = vmatprep.subr.bf16.mxu0 0
      %3917 = vmatpush1.bf16.msra.mxu0 %v3889
      %3918 = vmatprep.subr.bf16.mxu0 0
      %3919 = vmatpush1.bf16.msra.mxu0 %v3888
      %3920 = vmatprep.subr.bf16.mxu0 0
      %3921 = vmatpush2.bf16.msra.mxu0 0
      %3922 = vmatprep.subr.bf16.mxu0 0
      %3923 = vmatpush2.bf16.msra.mxu0 0
      %3924 = vmatprep.subr.bf16.mxu0 0
      %3925 = vmatpush2.bf16.msra.mxu0 0
      %3926 = vmatprep.subr.bf16.mxu0 0
      %3927 = vmatpush2.bf16.msra.mxu0 0
      %3928 = vmatprep.subr.bf16.mxu0 0
      %3929 = vmatpush2.bf16.msra.mxu0 0
      %3930 = vmatprep.subr.bf16.mxu0 0
      %3931 = vmatpush2.bf16.msra.mxu0 0
      %3932 = vmatprep.subr.bf16.mxu0 0
      %3933 = vmatpush2.bf16.msra.mxu0 0
      %3934 = vmatprep.subr.bf16.mxu0 0
      %3935 = vmatpush2.bf16.msra.mxu0 0
      %3936 = vmatprep.mubr.bf16.mxu0 0
      %3937 = vmatmul.mubr.bf16.gmra.mxu0 %v3716
      %v3938 = vpop.f32.mrf.mxu0
      %v3939 = vadd.f32 %v3854, %v3938
      %v3940 = vpop.f32.mrf.mxu0
      %v3941 = vpop.f32.mrf.mxu0
      %v3942 = vadd.f32 %v3854, %v3941
      %v3943 = vpop.f32.mrf.mxu0
      %3944 = vdwg.mxu0
      %s3945 = scalar_lea.vmem %s37, 640
      %v3946 = vld [vmem:[%s3945] sm:$0xf]
      %v3947 = vld [vmem:[%s3945 + $0x4] sm:$0xf]
      %v3948 = vld [vmem:[%s3945 + $0x8] sm:$0xf]
      %v3949 = vld [vmem:[%s3945 + $0xc] sm:$0xf]
      %v3950 = vld [vmem:[%s3945 + $0x10] sm:$0xf]
      %v3951 = vld [vmem:[%s3945 + $0x14] sm:$0xf]
      %v3952 = vld [vmem:[%s3945 + $0x18] sm:$0xf]
      %v3953 = vld [vmem:[%s3945 + $0x1c] sm:$0xf]
      %v3954 = vld [vmem:[%s3945 + $0x20] sm:$0xf]
      %v3955 = vld [vmem:[%s3945 + $0x24] sm:$0xf]
      %v3956 = vld [vmem:[%s3945 + $0x28] sm:$0xf]
      %v3957 = vld [vmem:[%s3945 + $0x2c] sm:$0xf]
      %v3958 = vld [vmem:[%s3945 + $0x30] sm:$0xf]
      %v3959 = vld [vmem:[%s3945 + $0x34] sm:$0xf]
      %v3960 = vld [vmem:[%s3945 + $0x38] sm:$0xf]
      %v3961 = vld [vmem:[%s3945 + $0x3c] sm:$0xf]
      %s3962 = scalar_lea.vmem %s39, 10
      %v3963 = vld [vmem:[%s3962] sm:$0x1]
      %v3965 = vlaneseq
      %v3966 = vshrl.u32 %v3965, 7
      %v3967 = vsub.s32 0, %v3966
      %v3968 = vrot.slane %v3963, %v3967
      %v3986 = vunpack.c.l.b16 %v3946
      %v3987 = vunpack.c.l.b16 %v3947
      %v3988 = vunpack.c.l.b16 %v3948
      %v3989 = vunpack.c.l.b16 %v3949
      %v3990 = vunpack.c.l.b16 %v3950
      %v3991 = vunpack.c.l.b16 %v3951
      %v3992 = vunpack.c.l.b16 %v3952
      %v3993 = vunpack.c.l.b16 %v3953
      %v3994 = vunpack.c.l.b16 %v3954
      %v3995 = vunpack.c.l.b16 %v3955
      %v3996 = vunpack.c.l.b16 %v3956
      %v3997 = vunpack.c.l.b16 %v3957
      %v3998 = vunpack.c.l.b16 %v3958
      %v3999 = vunpack.c.l.b16 %v3959
      %v4000 = vunpack.c.l.b16 %v3960
      %v4001 = vunpack.c.l.b16 %v3961
      %v4002 = vpack.c.b16 %v3987, %v3986
      %v4003 = vpack.c.b16 %v3989, %v3988
      %v4004 = vpack.c.b16 %v3991, %v3990
      %v4005 = vpack.c.b16 %v3993, %v3992
      %v4006 = vpack.c.b16 %v3995, %v3994
      %v4007 = vpack.c.b16 %v3997, %v3996
      %v4008 = vpack.c.b16 %v3999, %v3998
      %v4009 = vpack.c.b16 %v4001, %v4000
      %4018 = vmatprep.subr.bf16.mxu0 0
      %4019 = vmatpush1.bf16.msra.mxu0 %v4009
      %4020 = vmatprep.subr.bf16.mxu0 0
      %4021 = vmatpush1.bf16.msra.mxu0 %v4008
      %4022 = vmatprep.subr.bf16.mxu0 0
      %4023 = vmatpush1.bf16.msra.mxu0 %v4007
      %4024 = vmatprep.subr.bf16.mxu0 0
      %4025 = vmatpush1.bf16.msra.mxu0 %v4006
      %4026 = vmatprep.subr.bf16.mxu0 0
      %4027 = vmatpush1.bf16.msra.mxu0 %v4005
      %4028 = vmatprep.subr.bf16.mxu0 0
      %4029 = vmatpush1.bf16.msra.mxu0 %v4004
      %4030 = vmatprep.subr.bf16.mxu0 0
      %4031 = vmatpush1.bf16.msra.mxu0 %v4003
      %4032 = vmatprep.subr.bf16.mxu0 0
      %4033 = vmatpush1.bf16.msra.mxu0 %v4002
      %4034 = vmatprep.subr.bf16.mxu0 0
      %4035 = vmatpush2.bf16.msra.mxu0 0
      %4036 = vmatprep.subr.bf16.mxu0 0
      %4037 = vmatpush2.bf16.msra.mxu0 0
      %4038 = vmatprep.subr.bf16.mxu0 0
      %4039 = vmatpush2.bf16.msra.mxu0 0
      %4040 = vmatprep.subr.bf16.mxu0 0
      %4041 = vmatpush2.bf16.msra.mxu0 0
      %4042 = vmatprep.subr.bf16.mxu0 0
      %4043 = vmatpush2.bf16.msra.mxu0 0
      %4044 = vmatprep.subr.bf16.mxu0 0
      %4045 = vmatpush2.bf16.msra.mxu0 0
      %4046 = vmatprep.subr.bf16.mxu0 0
      %4047 = vmatpush2.bf16.msra.mxu0 0
      %4048 = vmatprep.subr.bf16.mxu0 0
      %4049 = vmatpush2.bf16.msra.mxu0 0
      %4050 = vmatprep.mubr.bf16.mxu0 0
      %4051 = vmatmul.mubr.bf16.gmra.mxu0 %v3716
      %v4052 = vpop.f32.mrf.mxu0
      %v4053 = vadd.f32 %v3968, %v4052
      %v4054 = vpop.f32.mrf.mxu0
      %v4055 = vpop.f32.mrf.mxu0
      %v4056 = vadd.f32 %v3968, %v4055
      %v4057 = vpop.f32.mrf.mxu0
      %4058 = vdwg.mxu0
      %v4059 = vpack.c.bf16 %v3828, %v3825
      %v4060 = vpack.c.bf16 %v3942, %v3939
      %v4062 = vsel %vm2458, %v4059, 0
      %v4065 = vsel %vm2458, %v4060, 0
      %4067 = vmatprep.subr.bf16.mxu0 0
      %4068 = vmatpush1.bf16.xpose.msra.mxu0 0
      %4069 = vmatprep.subr.bf16.mxu0 0
      %4070 = vmatpush1.bf16.xpose.msra.mxu0 0
      %4071 = vmatprep.subr.bf16.mxu0 0
      %4072 = vmatpush1.bf16.xpose.msra.mxu0 0
      %4073 = vmatprep.subr.bf16.mxu0 0
      %4074 = vmatpush1.bf16.xpose.msra.mxu0 0
      %4075 = vmatprep.subr.bf16.mxu0 0
      %4076 = vmatpush1.bf16.xpose.msra.mxu0 0
      %4077 = vmatprep.subr.bf16.mxu0 0
      %4078 = vmatpush1.bf16.xpose.msra.mxu0 0
      %4079 = vmatprep.subr.bf16.mxu0 0
      %4080 = vmatpush1.bf16.xpose.msra.mxu0 0
      %4081 = vmatprep.subr.bf16.mxu0 0
      %4082 = vmatpush1.bf16.xpose.msra.mxu0 %v4065
      %4083 = vmatprep.subr.bf16.mxu0 0
      %4084 = vmatpush2.bf16.xpose.msra.mxu0 0
      %4085 = vmatprep.subr.bf16.mxu0 0
      %4086 = vmatpush2.bf16.xpose.msra.mxu0 0
      %4087 = vmatprep.subr.bf16.mxu0 0
      %4088 = vmatpush2.bf16.xpose.msra.mxu0 0
      %4089 = vmatprep.subr.bf16.mxu0 0
      %4090 = vmatpush2.bf16.xpose.msra.mxu0 0
      %4091 = vmatprep.subr.bf16.mxu0 0
      %4092 = vmatpush2.bf16.xpose.msra.mxu0 0
      %4093 = vmatprep.subr.bf16.mxu0 0
      %4094 = vmatpush2.bf16.xpose.msra.mxu0 0
      %4095 = vmatprep.subr.bf16.mxu0 0
      %4096 = vmatpush2.bf16.xpose.msra.mxu0 0
      %4097 = vmatprep.subr.bf16.mxu0 0
      %4098 = vmatpush2.bf16.xpose.msra.mxu0 0
      %4099 = vmatprep.mubr.bf16.mxu0 0
      %4100 = vmatmul.mubr.bf16.gmra.mxu0 %v4062
      %v4101 = vpop.f32.mrf.mxu0
      %v4102 = vadd.f32 0.0, %v4101
      %v4103 = vpop.f32.mrf.mxu0
      %v4104 = vpop.f32.mrf.mxu0
      %v4105 = vadd.f32 0.0, %v4104
      %v4106 = vpop.f32.mrf.mxu0
      %4107 = vdwg.mxu0
      %v4108 = vsel %vm2506, %v4102, -inf
      %4109 = vmax.xlane.f32.xlu0 %v4108
      %v4110 = vpop.xlane.xlu0 %4109
      %v4111 = vsel %vm2506, %v4105, -inf
      %4112 = vmax.xlane.f32.xlu0 %v4111
      %v4113 = vpop.xlane.xlu0 %4112
      %v4114 = vsub.f32 %v4102, %v4110
      %v4115 = vsub.f32 %v4105, %v4113
      %v4116 = vmul.f32 %v4114, 1.442695
      %v4117 = vpow.pop %v4116
      %v4118 = vmul.f32 %v4115, 1.442695
      %v4119 = vpow.pop %v4118
      %v4120 = vsel %vm2506, %v4117, 0.0
      %4121 = vadd.xlane.f32.xlu0 %v4120
      %v4122 = vpop.xlane.xlu0 %4121
      %v4123 = vsel %vm2506, %v4119, 0.0
      %4124 = vadd.xlane.f32.xlu0 %v4123
      %v4125 = vpop.xlane.xlu0 %4124
      %v4126 = vrcp.pop %v4122
      %v4127 = vrcp.pop %v4125
      %v4128 = vmul.f32 %v4117, %v4126
      %v4129 = vmul.f32 %v4119, %v4127
      %v4130 = vpack.c.bf16 %v4129, %v4128
      %v4131 = vpack.c.bf16 %v4056, %v4053
      %v4133 = vsel %vm2506, %v4130, 0
      %4135 = vmatprep.subr.bf16.mxu0 0
      %4136 = vmatpush1.bf16.msra.mxu0 0
      %4137 = vmatprep.subr.bf16.mxu0 0
      %4138 = vmatpush1.bf16.msra.mxu0 0
      %4139 = vmatprep.subr.bf16.mxu0 0
      %4140 = vmatpush1.bf16.msra.mxu0 0
      %4141 = vmatprep.subr.bf16.mxu0 0
      %4142 = vmatpush1.bf16.msra.mxu0 0
      %4143 = vmatprep.subr.bf16.mxu0 0
      %4144 = vmatpush1.bf16.msra.mxu0 0
      %4145 = vmatprep.subr.bf16.mxu0 0
      %4146 = vmatpush1.bf16.msra.mxu0 0
      %4147 = vmatprep.subr.bf16.mxu0 0
      %4148 = vmatpush1.bf16.msra.mxu0 0
      %4149 = vmatprep.subr.bf16.mxu0 0
      %4150 = vmatpush1.bf16.msra.mxu0 %v4131
      %4151 = vmatprep.subr.bf16.mxu0 0
      %4152 = vmatpush2.bf16.msra.mxu0 0
      %4153 = vmatprep.subr.bf16.mxu0 0
      %4154 = vmatpush2.bf16.msra.mxu0 0
      %4155 = vmatprep.subr.bf16.mxu0 0
      %4156 = vmatpush2.bf16.msra.mxu0 0
      %4157 = vmatprep.subr.bf16.mxu0 0
      %4158 = vmatpush2.bf16.msra.mxu0 0
      %4159 = vmatprep.subr.bf16.mxu0 0
      %4160 = vmatpush2.bf16.msra.mxu0 0
      %4161 = vmatprep.subr.bf16.mxu0 0
      %4162 = vmatpush2.bf16.msra.mxu0 0
      %4163 = vmatprep.subr.bf16.mxu0 0
      %4164 = vmatpush2.bf16.msra.mxu0 0
      %4165 = vmatprep.subr.bf16.mxu0 0
      %4166 = vmatpush2.bf16.msra.mxu0 0
      %4167 = vmatprep.mubr.bf16.mxu0 0
      %4168 = vmatmul.mubr.bf16.gmra.mxu0 %v4133
      %v4169 = vpop.f32.mrf.mxu0
      %v4170 = vadd.f32 0.0, %v4169
      %v4171 = vpop.f32.mrf.mxu0
      %v4172 = vpop.f32.mrf.mxu0
      %v4173 = vadd.f32 0.0, %v4172
      %v4174 = vpop.f32.mrf.mxu0
      %4175 = vdwg.mxu0
      %v4176 = vpack.c.bf16 %v4173, %v4170
      %s4177 = scalar_lea.vmem %s41, 64
      %v4178 = vld [vmem:[%s4177] sm:$0xf]
      %v4179 = vld [vmem:[%s4177 + $0x4] sm:$0xf]
      %v4180 = vld [vmem:[%s4177 + $0x8] sm:$0xf]
      %v4181 = vld [vmem:[%s4177 + $0xc] sm:$0xf]
      %v4182 = vld [vmem:[%s4177 + $0x10] sm:$0xf]
      %v4183 = vld [vmem:[%s4177 + $0x14] sm:$0xf]
      %v4184 = vld [vmem:[%s4177 + $0x18] sm:$0xf]
      %v4185 = vld [vmem:[%s4177 + $0x1c] sm:$0xf]
      %s4186 = scalar_lea.vmem %s37, 448
      %v4187 = vld [vmem:[%s4186] sm:$0xf]
      %v4188 = vld [vmem:[%s4186 + $0x4] sm:$0xf]
      %v4189 = vld [vmem:[%s4186 + $0x8] sm:$0xf]
      %v4190 = vld [vmem:[%s4186 + $0xc] sm:$0xf]
      %v4191 = vld [vmem:[%s4186 + $0x10] sm:$0xf]
      %v4192 = vld [vmem:[%s4186 + $0x14] sm:$0xf]
      %v4193 = vld [vmem:[%s4186 + $0x18] sm:$0xf]
      %v4194 = vld [vmem:[%s4186 + $0x1c] sm:$0xf]
      %v4195 = vld [vmem:[%s4186 + $0x20] sm:$0xf]
      %v4196 = vld [vmem:[%s4186 + $0x24] sm:$0xf]
      %v4197 = vld [vmem:[%s4186 + $0x28] sm:$0xf]
      %v4198 = vld [vmem:[%s4186 + $0x2c] sm:$0xf]
      %v4199 = vld [vmem:[%s4186 + $0x30] sm:$0xf]
      %v4200 = vld [vmem:[%s4186 + $0x34] sm:$0xf]
      %v4201 = vld [vmem:[%s4186 + $0x38] sm:$0xf]
      %v4202 = vld [vmem:[%s4186 + $0x3c] sm:$0xf]
      %s4203 = scalar_lea.vmem %s39, 7
      %v4204 = vld [vmem:[%s4203] sm:$0x1]
      %v4206 = vlaneseq
      %v4207 = vshrl.u32 %v4206, 7
      %v4208 = vsub.s32 0, %v4207
      %v4209 = vrot.slane %v4204, %v4208
      %v4227 = vunpack.c.l.b16 %v4187
      %v4228 = vunpack.c.l.b16 %v4188
      %v4229 = vunpack.c.l.b16 %v4189
      %v4230 = vunpack.c.l.b16 %v4190
      %v4231 = vunpack.c.l.b16 %v4191
      %v4232 = vunpack.c.l.b16 %v4192
      %v4233 = vunpack.c.l.b16 %v4193
      %v4234 = vunpack.c.l.b16 %v4194
      %v4235 = vunpack.c.l.b16 %v4195
      %v4236 = vunpack.c.l.b16 %v4196
      %v4237 = vunpack.c.l.b16 %v4197
      %v4238 = vunpack.c.l.b16 %v4198
      %v4239 = vunpack.c.l.b16 %v4199
      %v4240 = vunpack.c.l.b16 %v4200
      %v4241 = vunpack.c.l.b16 %v4201
      %v4242 = vunpack.c.l.b16 %v4202
      %v4243 = vpack.c.b16 %v4228, %v4227
      %v4244 = vpack.c.b16 %v4230, %v4229
      %v4245 = vpack.c.b16 %v4232, %v4231
      %v4246 = vpack.c.b16 %v4234, %v4233
      %v4247 = vpack.c.b16 %v4236, %v4235
      %v4248 = vpack.c.b16 %v4238, %v4237
      %v4249 = vpack.c.b16 %v4240, %v4239
      %v4250 = vpack.c.b16 %v4242, %v4241
      %4259 = vmatprep.subr.bf16.mxu0 0
      %4260 = vmatpush1.bf16.msra.mxu0 %v4250
      %4261 = vmatprep.subr.bf16.mxu0 0
      %4262 = vmatpush1.bf16.msra.mxu0 %v4249
      %4263 = vmatprep.subr.bf16.mxu0 0
      %4264 = vmatpush1.bf16.msra.mxu0 %v4248
      %4265 = vmatprep.subr.bf16.mxu0 0
      %4266 = vmatpush1.bf16.msra.mxu0 %v4247
      %4267 = vmatprep.subr.bf16.mxu0 0
      %4268 = vmatpush1.bf16.msra.mxu0 %v4246
      %4269 = vmatprep.subr.bf16.mxu0 0
      %4270 = vmatpush1.bf16.msra.mxu0 %v4245
      %4271 = vmatprep.subr.bf16.mxu0 0
      %4272 = vmatpush1.bf16.msra.mxu0 %v4244
      %4273 = vmatprep.subr.bf16.mxu0 0
      %4274 = vmatpush1.bf16.msra.mxu0 %v4243
      %4275 = vmatprep.subr.bf16.mxu0 0
      %4276 = vmatpush2.bf16.msra.mxu0 0
      %4277 = vmatprep.subr.bf16.mxu0 0
      %4278 = vmatpush2.bf16.msra.mxu0 0
      %4279 = vmatprep.subr.bf16.mxu0 0
      %4280 = vmatpush2.bf16.msra.mxu0 0
      %4281 = vmatprep.subr.bf16.mxu0 0
      %4282 = vmatpush2.bf16.msra.mxu0 0
      %4283 = vmatprep.subr.bf16.mxu0 0
      %4284 = vmatpush2.bf16.msra.mxu0 0
      %4285 = vmatprep.subr.bf16.mxu0 0
      %4286 = vmatpush2.bf16.msra.mxu0 0
      %4287 = vmatprep.subr.bf16.mxu0 0
      %4288 = vmatpush2.bf16.msra.mxu0 0
      %4289 = vmatprep.subr.bf16.mxu0 0
      %4290 = vmatpush2.bf16.msra.mxu0 0
      %4291 = vmatprep.mubr.bf16.mxu0 0
      %4292 = vmatmul.mubr.bf16.gmra.mxu0 %v3716
      %v4293 = vpop.f32.mrf.mxu0
      %v4294 = vadd.f32 %v4209, %v4293
      %v4295 = vpop.f32.mrf.mxu0
      %v4296 = vpop.f32.mrf.mxu0
      %v4297 = vadd.f32 %v4209, %v4296
      %v4298 = vpop.f32.mrf.mxu0
      %4299 = vdwg.mxu0
      %s4300 = scalar_lea.vmem %s37, 576
      %v4301 = vld [vmem:[%s4300] sm:$0xf]
      %v4302 = vld [vmem:[%s4300 + $0x4] sm:$0xf]
      %v4303 = vld [vmem:[%s4300 + $0x8] sm:$0xf]
      %v4304 = vld [vmem:[%s4300 + $0xc] sm:$0xf]
      %v4305 = vld [vmem:[%s4300 + $0x10] sm:$0xf]
      %v4306 = vld [vmem:[%s4300 + $0x14] sm:$0xf]
      %v4307 = vld [vmem:[%s4300 + $0x18] sm:$0xf]
      %v4308 = vld [vmem:[%s4300 + $0x1c] sm:$0xf]
      %v4309 = vld [vmem:[%s4300 + $0x20] sm:$0xf]
      %v4310 = vld [vmem:[%s4300 + $0x24] sm:$0xf]
      %v4311 = vld [vmem:[%s4300 + $0x28] sm:$0xf]
      %v4312 = vld [vmem:[%s4300 + $0x2c] sm:$0xf]
      %v4313 = vld [vmem:[%s4300 + $0x30] sm:$0xf]
      %v4314 = vld [vmem:[%s4300 + $0x34] sm:$0xf]
      %v4315 = vld [vmem:[%s4300 + $0x38] sm:$0xf]
      %v4316 = vld [vmem:[%s4300 + $0x3c] sm:$0xf]
      %s4317 = scalar_lea.vmem %s39, 9
      %v4318 = vld [vmem:[%s4317] sm:$0x1]
      %v4320 = vlaneseq
      %v4321 = vshrl.u32 %v4320, 7
      %v4322 = vsub.s32 0, %v4321
      %v4323 = vrot.slane %v4318, %v4322
      %v4341 = vunpack.c.l.b16 %v4301
      %v4342 = vunpack.c.l.b16 %v4302
      %v4343 = vunpack.c.l.b16 %v4303
      %v4344 = vunpack.c.l.b16 %v4304
      %v4345 = vunpack.c.l.b16 %v4305
      %v4346 = vunpack.c.l.b16 %v4306
      %v4347 = vunpack.c.l.b16 %v4307
      %v4348 = vunpack.c.l.b16 %v4308
      %v4349 = vunpack.c.l.b16 %v4309
      %v4350 = vunpack.c.l.b16 %v4310
      %v4351 = vunpack.c.l.b16 %v4311
      %v4352 = vunpack.c.l.b16 %v4312
      %v4353 = vunpack.c.l.b16 %v4313
      %v4354 = vunpack.c.l.b16 %v4314
      %v4355 = vunpack.c.l.b16 %v4315
      %v4356 = vunpack.c.l.b16 %v4316
      %v4357 = vpack.c.b16 %v4342, %v4341
      %v4358 = vpack.c.b16 %v4344, %v4343
      %v4359 = vpack.c.b16 %v4346, %v4345
      %v4360 = vpack.c.b16 %v4348, %v4347
      %v4361 = vpack.c.b16 %v4350, %v4349
      %v4362 = vpack.c.b16 %v4352, %v4351
      %v4363 = vpack.c.b16 %v4354, %v4353
      %v4364 = vpack.c.b16 %v4356, %v4355
      %4373 = vmatprep.subr.bf16.mxu0 0
      %4374 = vmatpush1.bf16.msra.mxu0 %v4364
      %4375 = vmatprep.subr.bf16.mxu0 0
      %4376 = vmatpush1.bf16.msra.mxu0 %v4363
      %4377 = vmatprep.subr.bf16.mxu0 0
      %4378 = vmatpush1.bf16.msra.mxu0 %v4362
      %4379 = vmatprep.subr.bf16.mxu0 0
      %4380 = vmatpush1.bf16.msra.mxu0 %v4361
      %4381 = vmatprep.subr.bf16.mxu0 0
      %4382 = vmatpush1.bf16.msra.mxu0 %v4360
      %4383 = vmatprep.subr.bf16.mxu0 0
      %4384 = vmatpush1.bf16.msra.mxu0 %v4359
      %4385 = vmatprep.subr.bf16.mxu0 0
      %4386 = vmatpush1.bf16.msra.mxu0 %v4358
      %4387 = vmatprep.subr.bf16.mxu0 0
      %4388 = vmatpush1.bf16.msra.mxu0 %v4357
      %4389 = vmatprep.subr.bf16.mxu0 0
      %4390 = vmatpush2.bf16.msra.mxu0 0
      %4391 = vmatprep.subr.bf16.mxu0 0
      %4392 = vmatpush2.bf16.msra.mxu0 0
      %4393 = vmatprep.subr.bf16.mxu0 0
      %4394 = vmatpush2.bf16.msra.mxu0 0
      %4395 = vmatprep.subr.bf16.mxu0 0
      %4396 = vmatpush2.bf16.msra.mxu0 0
      %4397 = vmatprep.subr.bf16.mxu0 0
      %4398 = vmatpush2.bf16.msra.mxu0 0
      %4399 = vmatprep.subr.bf16.mxu0 0
      %4400 = vmatpush2.bf16.msra.mxu0 0
      %4401 = vmatprep.subr.bf16.mxu0 0
      %4402 = vmatpush2.bf16.msra.mxu0 0
      %4403 = vmatprep.subr.bf16.mxu0 0
      %4404 = vmatpush2.bf16.msra.mxu0 0
      %4405 = vmatprep.mubr.bf16.mxu0 0
      %4406 = vmatmul.mubr.bf16.gmra.mxu0 %v3716
      %v4407 = vpop.f32.mrf.mxu0
      %v4408 = vadd.f32 %v4323, %v4407
      %v4409 = vpop.f32.mrf.mxu0
      %v4410 = vpop.f32.mrf.mxu0
      %v4411 = vadd.f32 %v4323, %v4410
      %v4412 = vpop.f32.mrf.mxu0
      %4413 = vdwg.mxu0
      %s4414 = scalar_lea.vmem %s37, 704
      %v4415 = vld [vmem:[%s4414] sm:$0xf]
      %v4416 = vld [vmem:[%s4414 + $0x4] sm:$0xf]
      %v4417 = vld [vmem:[%s4414 + $0x8] sm:$0xf]
      %v4418 = vld [vmem:[%s4414 + $0xc] sm:$0xf]
      %v4419 = vld [vmem:[%s4414 + $0x10] sm:$0xf]
      %v4420 = vld [vmem:[%s4414 + $0x14] sm:$0xf]
      %v4421 = vld [vmem:[%s4414 + $0x18] sm:$0xf]
      %v4422 = vld [vmem:[%s4414 + $0x1c] sm:$0xf]
      %v4423 = vld [vmem:[%s4414 + $0x20] sm:$0xf]
      %v4424 = vld [vmem:[%s4414 + $0x24] sm:$0xf]
      %v4425 = vld [vmem:[%s4414 + $0x28] sm:$0xf]
      %v4426 = vld [vmem:[%s4414 + $0x2c] sm:$0xf]
      %v4427 = vld [vmem:[%s4414 + $0x30] sm:$0xf]
      %v4428 = vld [vmem:[%s4414 + $0x34] sm:$0xf]
      %v4429 = vld [vmem:[%s4414 + $0x38] sm:$0xf]
      %v4430 = vld [vmem:[%s4414 + $0x3c] sm:$0xf]
      %s4431 = scalar_lea.vmem %s39, 11
      %v4432 = vld [vmem:[%s4431] sm:$0x1]
      %v4434 = vlaneseq
      %v4435 = vshrl.u32 %v4434, 7
      %v4436 = vsub.s32 0, %v4435
      %v4437 = vrot.slane %v4432, %v4436
      %v4455 = vunpack.c.l.b16 %v4415
      %v4456 = vunpack.c.l.b16 %v4416
      %v4457 = vunpack.c.l.b16 %v4417
      %v4458 = vunpack.c.l.b16 %v4418
      %v4459 = vunpack.c.l.b16 %v4419
      %v4460 = vunpack.c.l.b16 %v4420
      %v4461 = vunpack.c.l.b16 %v4421
      %v4462 = vunpack.c.l.b16 %v4422
      %v4463 = vunpack.c.l.b16 %v4423
      %v4464 = vunpack.c.l.b16 %v4424
      %v4465 = vunpack.c.l.b16 %v4425
      %v4466 = vunpack.c.l.b16 %v4426
      %v4467 = vunpack.c.l.b16 %v4427
      %v4468 = vunpack.c.l.b16 %v4428
      %v4469 = vunpack.c.l.b16 %v4429
      %v4470 = vunpack.c.l.b16 %v4430
      %v4471 = vpack.c.b16 %v4456, %v4455
      %v4472 = vpack.c.b16 %v4458, %v4457
      %v4473 = vpack.c.b16 %v4460, %v4459
      %v4474 = vpack.c.b16 %v4462, %v4461
      %v4475 = vpack.c.b16 %v4464, %v4463
      %v4476 = vpack.c.b16 %v4466, %v4465
      %v4477 = vpack.c.b16 %v4468, %v4467
      %v4478 = vpack.c.b16 %v4470, %v4469
      %4487 = vmatprep.subr.bf16.mxu0 0
      %4488 = vmatpush1.bf16.msra.mxu0 %v4478
      %4489 = vmatprep.subr.bf16.mxu0 0
      %4490 = vmatpush1.bf16.msra.mxu0 %v4477
      %4491 = vmatprep.subr.bf16.mxu0 0
      %4492 = vmatpush1.bf16.msra.mxu0 %v4476
      %4493 = vmatprep.subr.bf16.mxu0 0
      %4494 = vmatpush1.bf16.msra.mxu0 %v4475
      %4495 = vmatprep.subr.bf16.mxu0 0
      %4496 = vmatpush1.bf16.msra.mxu0 %v4474
      %4497 = vmatprep.subr.bf16.mxu0 0
      %4498 = vmatpush1.bf16.msra.mxu0 %v4473
      %4499 = vmatprep.subr.bf16.mxu0 0
      %4500 = vmatpush1.bf16.msra.mxu0 %v4472
      %4501 = vmatprep.subr.bf16.mxu0 0
      %4502 = vmatpush1.bf16.msra.mxu0 %v4471
      %4503 = vmatprep.subr.bf16.mxu0 0
      %4504 = vmatpush2.bf16.msra.mxu0 0
      %4505 = vmatprep.subr.bf16.mxu0 0
      %4506 = vmatpush2.bf16.msra.mxu0 0
      %4507 = vmatprep.subr.bf16.mxu0 0
      %4508 = vmatpush2.bf16.msra.mxu0 0
      %4509 = vmatprep.subr.bf16.mxu0 0
      %4510 = vmatpush2.bf16.msra.mxu0 0
      %4511 = vmatprep.subr.bf16.mxu0 0
      %4512 = vmatpush2.bf16.msra.mxu0 0
      %4513 = vmatprep.subr.bf16.mxu0 0
      %4514 = vmatpush2.bf16.msra.mxu0 0
      %4515 = vmatprep.subr.bf16.mxu0 0
      %4516 = vmatpush2.bf16.msra.mxu0 0
      %4517 = vmatprep.subr.bf16.mxu0 0
      %4518 = vmatpush2.bf16.msra.mxu0 0
      %4519 = vmatprep.mubr.bf16.mxu0 0
      %4520 = vmatmul.mubr.bf16.gmra.mxu0 %v3716
      %v4521 = vpop.f32.mrf.mxu0
      %v4522 = vadd.f32 %v4437, %v4521
      %v4523 = vpop.f32.mrf.mxu0
      %v4524 = vpop.f32.mrf.mxu0
      %v4525 = vadd.f32 %v4437, %v4524
      %v4526 = vpop.f32.mrf.mxu0
      %4527 = vdwg.mxu0
      %v4528 = vpack.c.bf16 %v4297, %v4294
      %v4529 = vpack.c.bf16 %v4411, %v4408
      %v4531 = vsel %vm2458, %v4528, 0
      %v4534 = vsel %vm2458, %v4529, 0
      %4536 = vmatprep.subr.bf16.mxu0 0
      %4537 = vmatpush1.bf16.xpose.msra.mxu0 0
      %4538 = vmatprep.subr.bf16.mxu0 0
      %4539 = vmatpush1.bf16.xpose.msra.mxu0 0
      %4540 = vmatprep.subr.bf16.mxu0 0
      %4541 = vmatpush1.bf16.xpose.msra.mxu0 0
      %4542 = vmatprep.subr.bf16.mxu0 0
      %4543 = vmatpush1.bf16.xpose.msra.mxu0 0
      %4544 = vmatprep.subr.bf16.mxu0 0
      %4545 = vmatpush1.bf16.xpose.msra.mxu0 0
      %4546 = vmatprep.subr.bf16.mxu0 0
      %4547 = vmatpush1.bf16.xpose.msra.mxu0 0
      %4548 = vmatprep.subr.bf16.mxu0 0
      %4549 = vmatpush1.bf16.xpose.msra.mxu0 0
      %4550 = vmatprep.subr.bf16.mxu0 0
      %4551 = vmatpush1.bf16.xpose.msra.mxu0 %v4534
      %4552 = vmatprep.subr.bf16.mxu0 0
      %4553 = vmatpush2.bf16.xpose.msra.mxu0 0
      %4554 = vmatprep.subr.bf16.mxu0 0
      %4555 = vmatpush2.bf16.xpose.msra.mxu0 0
      %4556 = vmatprep.subr.bf16.mxu0 0
      %4557 = vmatpush2.bf16.xpose.msra.mxu0 0
      %4558 = vmatprep.subr.bf16.mxu0 0
      %4559 = vmatpush2.bf16.xpose.msra.mxu0 0
      %4560 = vmatprep.subr.bf16.mxu0 0
      %4561 = vmatpush2.bf16.xpose.msra.mxu0 0
      %4562 = vmatprep.subr.bf16.mxu0 0
      %4563 = vmatpush2.bf16.xpose.msra.mxu0 0
      %4564 = vmatprep.subr.bf16.mxu0 0
      %4565 = vmatpush2.bf16.xpose.msra.mxu0 0
      %4566 = vmatprep.subr.bf16.mxu0 0
      %4567 = vmatpush2.bf16.xpose.msra.mxu0 0
      %4568 = vmatprep.mubr.bf16.mxu0 0
      %4569 = vmatmul.mubr.bf16.gmra.mxu0 %v4531
      %v4570 = vpop.f32.mrf.mxu0
      %v4571 = vadd.f32 0.0, %v4570
      %v4572 = vpop.f32.mrf.mxu0
      %v4573 = vpop.f32.mrf.mxu0
      %v4574 = vadd.f32 0.0, %v4573
      %v4575 = vpop.f32.mrf.mxu0
      %4576 = vdwg.mxu0
      %v4577 = vsel %vm2506, %v4571, -inf
      %4578 = vmax.xlane.f32.xlu0 %v4577
      %v4579 = vpop.xlane.xlu0 %4578
      %v4580 = vsel %vm2506, %v4574, -inf
      %4581 = vmax.xlane.f32.xlu0 %v4580
      %v4582 = vpop.xlane.xlu0 %4581
      %v4583 = vsub.f32 %v4571, %v4579
      %v4584 = vsub.f32 %v4574, %v4582
      %v4585 = vmul.f32 %v4583, 1.442695
      %v4586 = vpow.pop %v4585
      %v4587 = vmul.f32 %v4584, 1.442695
      %v4588 = vpow.pop %v4587
      %v4589 = vsel %vm2506, %v4586, 0.0
      %4590 = vadd.xlane.f32.xlu0 %v4589
      %v4591 = vpop.xlane.xlu0 %4590
      %v4592 = vsel %vm2506, %v4588, 0.0
      %4593 = vadd.xlane.f32.xlu0 %v4592
      %v4594 = vpop.xlane.xlu0 %4593
      %v4595 = vrcp.pop %v4591
      %v4596 = vrcp.pop %v4594
      %v4597 = vmul.f32 %v4586, %v4595
      %v4598 = vmul.f32 %v4588, %v4596
      %v4599 = vpack.c.bf16 %v4598, %v4597
      %v4600 = vpack.c.bf16 %v4525, %v4522
      %v4602 = vsel %vm2506, %v4599, 0
      %4604 = vmatprep.subr.bf16.mxu0 0
      %4605 = vmatpush1.bf16.msra.mxu0 0
      %4606 = vmatprep.subr.bf16.mxu0 0
      %4607 = vmatpush1.bf16.msra.mxu0 0
      %4608 = vmatprep.subr.bf16.mxu0 0
      %4609 = vmatpush1.bf16.msra.mxu0 0
      %4610 = vmatprep.subr.bf16.mxu0 0
      %4611 = vmatpush1.bf16.msra.mxu0 0
      %4612 = vmatprep.subr.bf16.mxu0 0
      %4613 = vmatpush1.bf16.msra.mxu0 0
      %4614 = vmatprep.subr.bf16.mxu0 0
      %4615 = vmatpush1.bf16.msra.mxu0 0
      %4616 = vmatprep.subr.bf16.mxu0 0
      %4617 = vmatpush1.bf16.msra.mxu0 0
      %4618 = vmatprep.subr.bf16.mxu0 0
      %4619 = vmatpush1.bf16.msra.mxu0 %v4600
      %4620 = vmatprep.subr.bf16.mxu0 0
      %4621 = vmatpush2.bf16.msra.mxu0 0
      %4622 = vmatprep.subr.bf16.mxu0 0
      %4623 = vmatpush2.bf16.msra.mxu0 0
      %4624 = vmatprep.subr.bf16.mxu0 0
      %4625 = vmatpush2.bf16.msra.mxu0 0
      %4626 = vmatprep.subr.bf16.mxu0 0
      %4627 = vmatpush2.bf16.msra.mxu0 0
      %4628 = vmatprep.subr.bf16.mxu0 0
      %4629 = vmatpush2.bf16.msra.mxu0 0
      %4630 = vmatprep.subr.bf16.mxu0 0
      %4631 = vmatpush2.bf16.msra.mxu0 0
      %4632 = vmatprep.subr.bf16.mxu0 0
      %4633 = vmatpush2.bf16.msra.mxu0 0
      %4634 = vmatprep.subr.bf16.mxu0 0
      %4635 = vmatpush2.bf16.msra.mxu0 0
      %4636 = vmatprep.mubr.bf16.mxu0 0
      %4637 = vmatmul.mubr.bf16.gmra.mxu0 %v4602
      %v4638 = vpop.f32.mrf.mxu0
      %v4639 = vadd.f32 0.0, %v4638
      %v4640 = vpop.f32.mrf.mxu0
      %v4641 = vpop.f32.mrf.mxu0
      %v4642 = vadd.f32 0.0, %v4641
      %v4643 = vpop.f32.mrf.mxu0
      %4644 = vdwg.mxu0
      %v4645 = vpack.c.bf16 %v4642, %v4639
      %s4646 = scalar_lea.vmem %s41, 96
      %v4647 = vld [vmem:[%s4646] sm:$0xf]
      %v4648 = vld [vmem:[%s4646 + $0x4] sm:$0xf]
      %v4649 = vld [vmem:[%s4646 + $0x8] sm:$0xf]
      %v4650 = vld [vmem:[%s4646 + $0xc] sm:$0xf]
      %v4651 = vld [vmem:[%s4646 + $0x10] sm:$0xf]
      %v4652 = vld [vmem:[%s4646 + $0x14] sm:$0xf]
      %v4653 = vld [vmem:[%s4646 + $0x18] sm:$0xf]
      %v4654 = vld [vmem:[%s4646 + $0x1c] sm:$0xf]
      %v4663 = vunpack.c.l.b16 %v4647
      %v4664 = vunpack.c.l.b16 %v4648
      %v4665 = vunpack.c.l.b16 %v4649
      %v4666 = vunpack.c.l.b16 %v4650
      %v4667 = vunpack.c.l.b16 %v4651
      %v4668 = vunpack.c.l.b16 %v4652
      %v4669 = vunpack.c.l.b16 %v4653
      %v4670 = vunpack.c.l.b16 %v4654
      %v4671 = vpack.c.b16 %v4664, %v4663
      %v4672 = vpack.c.b16 %v4666, %v4665
      %v4673 = vpack.c.b16 %v4668, %v4667
      %v4674 = vpack.c.b16 %v4670, %v4669
      %v4680 = vsel %vm2458, %v4645, 0
      %4682 = vmatprep.subr.bf16.mxu0 0
      %4683 = vmatpush1.bf16.msra.mxu0 0
      %4684 = vmatprep.subr.bf16.mxu0 0
      %4685 = vmatpush1.bf16.msra.mxu0 0
      %4686 = vmatprep.subr.bf16.mxu0 0
      %4687 = vmatpush1.bf16.msra.mxu0 0
      %4688 = vmatprep.subr.bf16.mxu0 0
      %4689 = vmatpush1.bf16.msra.mxu0 0
      %4690 = vmatprep.subr.bf16.mxu0 0
      %4691 = vmatpush1.bf16.msra.mxu0 %v4674
      %4692 = vmatprep.subr.bf16.mxu0 0
      %4693 = vmatpush1.bf16.msra.mxu0 %v4673
      %4694 = vmatprep.subr.bf16.mxu0 0
      %4695 = vmatpush1.bf16.msra.mxu0 %v4672
      %4696 = vmatprep.subr.bf16.mxu0 0
      %4697 = vmatpush1.bf16.msra.mxu0 %v4671
      %4698 = vmatprep.subr.bf16.mxu0 0
      %4699 = vmatpush2.bf16.msra.mxu0 0
      %4700 = vmatprep.subr.bf16.mxu0 0
      %4701 = vmatpush2.bf16.msra.mxu0 0
      %4702 = vmatprep.subr.bf16.mxu0 0
      %4703 = vmatpush2.bf16.msra.mxu0 0
      %4704 = vmatprep.subr.bf16.mxu0 0
      %4705 = vmatpush2.bf16.msra.mxu0 0
      %4706 = vmatprep.subr.bf16.mxu0 0
      %4707 = vmatpush2.bf16.msra.mxu0 0
      %4708 = vmatprep.subr.bf16.mxu0 0
      %4709 = vmatpush2.bf16.msra.mxu0 0
      %4710 = vmatprep.subr.bf16.mxu0 0
      %4711 = vmatpush2.bf16.msra.mxu0 0
      %4712 = vmatprep.subr.bf16.mxu0 0
      %4713 = vmatpush2.bf16.msra.mxu0 0
      %4714 = vmatprep.mubr.bf16.mxu0 0
      %4715 = vmatmul.mubr.bf16.gmra.mxu0 %v4680
      %v4716 = vpop.f32.mrf.mxu0
      %v4717 = vadd.f32 0.0, %v4716
      %v4718 = vpop.f32.mrf.mxu0
      %v4719 = vpop.f32.mrf.mxu0
      %v4720 = vadd.f32 0.0, %v4719
      %v4721 = vpop.f32.mrf.mxu0
      %4722 = vdwg.mxu0
      %v4731 = vunpack.c.l.b16 %v4178
      %v4732 = vunpack.c.l.b16 %v4179
      %v4733 = vunpack.c.l.b16 %v4180
      %v4734 = vunpack.c.l.b16 %v4181
      %v4735 = vunpack.c.l.b16 %v4182
      %v4736 = vunpack.c.l.b16 %v4183
      %v4737 = vunpack.c.l.b16 %v4184
      %v4738 = vunpack.c.l.b16 %v4185
      %v4739 = vpack.c.b16 %v4732, %v4731
      %v4740 = vpack.c.b16 %v4734, %v4733
      %v4741 = vpack.c.b16 %v4736, %v4735
      %v4742 = vpack.c.b16 %v4738, %v4737
      %v4748 = vsel %vm2458, %v4176, 0
      %4750 = vmatprep.subr.bf16.mxu0 0
      %4751 = vmatpush1.bf16.msra.mxu0 0
      %4752 = vmatprep.subr.bf16.mxu0 0
      %4753 = vmatpush1.bf16.msra.mxu0 0
      %4754 = vmatprep.subr.bf16.mxu0 0
      %4755 = vmatpush1.bf16.msra.mxu0 0
      %4756 = vmatprep.subr.bf16.mxu0 0
      %4757 = vmatpush1.bf16.msra.mxu0 0
      %4758 = vmatprep.subr.bf16.mxu0 0
      %4759 = vmatpush1.bf16.msra.mxu0 %v4742
      %4760 = vmatprep.subr.bf16.mxu0 0
      %4761 = vmatpush1.bf16.msra.mxu0 %v4741
      %4762 = vmatprep.subr.bf16.mxu0 0
      %4763 = vmatpush1.bf16.msra.mxu0 %v4740
      %4764 = vmatprep.subr.bf16.mxu0 0
      %4765 = vmatpush1.bf16.msra.mxu0 %v4739
      %4766 = vmatprep.subr.bf16.mxu0 0
      %4767 = vmatpush2.bf16.msra.mxu0 0
      %4768 = vmatprep.subr.bf16.mxu0 0
      %4769 = vmatpush2.bf16.msra.mxu0 0
      %4770 = vmatprep.subr.bf16.mxu0 0
      %4771 = vmatpush2.bf16.msra.mxu0 0
      %4772 = vmatprep.subr.bf16.mxu0 0
      %4773 = vmatpush2.bf16.msra.mxu0 0
      %4774 = vmatprep.subr.bf16.mxu0 0
      %4775 = vmatpush2.bf16.msra.mxu0 0
      %4776 = vmatprep.subr.bf16.mxu0 0
      %4777 = vmatpush2.bf16.msra.mxu0 0
      %4778 = vmatprep.subr.bf16.mxu0 0
      %4779 = vmatpush2.bf16.msra.mxu0 0
      %4780 = vmatprep.subr.bf16.mxu0 0
      %4781 = vmatpush2.bf16.msra.mxu0 0
      %4782 = vmatprep.mubr.bf16.mxu0 0
      %4783 = vmatmul.mubr.bf16.gmra.mxu0 %v4748
      %v4784 = vpop.f32.mrf.mxu0
      %v4785 = vadd.f32 %v4717, %v4784
      %v4786 = vpop.f32.mrf.mxu0
      %v4787 = vpop.f32.mrf.mxu0
      %v4788 = vadd.f32 %v4720, %v4787
      %v4789 = vpop.f32.mrf.mxu0
      %4790 = vdwg.mxu0
      %s4791 = scalar_lea.vmem %s43, 1
      %v4792 = vld [vmem:[%s4791] sm:$0x1]
      %v4794 = vlaneseq
      %v4795 = vshrl.u32 %v4794, 7
      %v4796 = vsub.s32 0, %v4795
      %v4797 = vrot.slane %v4792, %v4796
      %v4799 = vadd.f32 %v4785, %v4797
      %v4800 = vadd.f32 %v4788, %v4797
      %v4801 = vadd.f32 %v3714, %v4799
      %v4802 = vadd.f32 %v3715, %v4800
      %4803 = vadd.xlane.f32.xlu0 %v4801
      %v4804 = vpop.xlane.xlu0 %4803
      %4805 = vadd.xlane.f32.xlu0 %v4802
      %v4806 = vpop.xlane.xlu0 %4805
      %v4807 = vmul.f32 %v4804, %v2096
      %v4808 = vmul.f32 %v4806, %v2096
      %v4809 = vsub.f32 %v4801, %v4807
      %v4810 = vsub.f32 %v4802, %v4808
      %v4811 = vmul.f32 %v4809, %v4809
      %v4812 = vmul.f32 %v4810, %v4810
      %4813 = vadd.xlane.f32.xlu0 %v4811
      %v4814 = vpop.xlane.xlu0 %4813
      %4815 = vadd.xlane.f32.xlu0 %v4812
      %v4816 = vpop.xlane.xlu0 %4815
      %v4817 = vmul.f32 %v4814, %v2096
      %v4818 = vmul.f32 %v4816, %v2096
      %v4819 = vadd.f32 %v4817, 1e-05
      %v4820 = vadd.f32 %v4818, 1e-05
      %v4821 = vrsqrt.pop %v4819
      %v4822 = vrsqrt.pop %v4820
      %v4823 = vmul.f32 %v4809, %v4821
      %v4824 = vmul.f32 %v4810, %v4822
      %s4825 = scalar_lea.vmem %s45, 64
      %v4826 = vld [vmem:[%s4825] sm:$0xf]
      %v4827 = vld [vmem:[%s4825 + $0x4] sm:$0xf]
      %v4828 = vld [vmem:[%s4825 + $0x8] sm:$0xf]
      %v4829 = vld [vmem:[%s4825 + $0xc] sm:$0xf]
      %v4830 = vld [vmem:[%s4825 + $0x10] sm:$0xf]
      %v4831 = vld [vmem:[%s4825 + $0x14] sm:$0xf]
      %v4832 = vld [vmem:[%s4825 + $0x18] sm:$0xf]
      %v4833 = vld [vmem:[%s4825 + $0x1c] sm:$0xf]
      %v4834 = vld [vmem:[%s4825 + $0x20] sm:$0xf]
      %v4835 = vld [vmem:[%s4825 + $0x24] sm:$0xf]
      %v4836 = vld [vmem:[%s4825 + $0x28] sm:$0xf]
      %v4837 = vld [vmem:[%s4825 + $0x2c] sm:$0xf]
      %v4838 = vld [vmem:[%s4825 + $0x30] sm:$0xf]
      %v4839 = vld [vmem:[%s4825 + $0x34] sm:$0xf]
      %v4840 = vld [vmem:[%s4825 + $0x38] sm:$0xf]
      %v4841 = vld [vmem:[%s4825 + $0x3c] sm:$0xf]
      %v4842 = vpack.c.bf16 %v4824, %v4823
      %s4843 = scalar_lea.vmem %s47, 1
      %v4844 = vld [vmem:[%s4843] sm:$0x1]
      %v4846 = vlaneseq
      %v4847 = vshrl.u32 %v4846, 7
      %v4848 = vsub.s32 0, %v4847
      %v4849 = vrot.slane %v4844, %v4848
      %v4867 = vunpack.c.l.b16 %v4826
      %v4868 = vunpack.c.l.b16 %v4827
      %v4869 = vunpack.c.l.b16 %v4828
      %v4870 = vunpack.c.l.b16 %v4829
      %v4871 = vunpack.c.l.b16 %v4830
      %v4872 = vunpack.c.l.b16 %v4831
      %v4873 = vunpack.c.l.b16 %v4832
      %v4874 = vunpack.c.l.b16 %v4833
      %v4875 = vunpack.c.l.b16 %v4834
      %v4876 = vunpack.c.l.b16 %v4835
      %v4877 = vunpack.c.l.b16 %v4836
      %v4878 = vunpack.c.l.b16 %v4837
      %v4879 = vunpack.c.l.b16 %v4838
      %v4880 = vunpack.c.l.b16 %v4839
      %v4881 = vunpack.c.l.b16 %v4840
      %v4882 = vunpack.c.l.b16 %v4841
      %v4883 = vpack.c.b16 %v4868, %v4867
      %v4884 = vpack.c.b16 %v4870, %v4869
      %v4885 = vpack.c.b16 %v4872, %v4871
      %v4886 = vpack.c.b16 %v4874, %v4873
      %v4887 = vpack.c.b16 %v4876, %v4875
      %v4888 = vpack.c.b16 %v4878, %v4877
      %v4889 = vpack.c.b16 %v4880, %v4879
      %v4890 = vpack.c.b16 %v4882, %v4881
      %4899 = vmatprep.subr.bf16.mxu0 0
      %4900 = vmatpush1.bf16.msra.mxu0 %v4890
      %4901 = vmatprep.subr.bf16.mxu0 0
      %4902 = vmatpush1.bf16.msra.mxu0 %v4889
      %4903 = vmatprep.subr.bf16.mxu0 0
      %4904 = vmatpush1.bf16.msra.mxu0 %v4888
      %4905 = vmatprep.subr.bf16.mxu0 0
      %4906 = vmatpush1.bf16.msra.mxu0 %v4887
      %4907 = vmatprep.subr.bf16.mxu0 0
      %4908 = vmatpush1.bf16.msra.mxu0 %v4886
      %4909 = vmatprep.subr.bf16.mxu0 0
      %4910 = vmatpush1.bf16.msra.mxu0 %v4885
      %4911 = vmatprep.subr.bf16.mxu0 0
      %4912 = vmatpush1.bf16.msra.mxu0 %v4884
      %4913 = vmatprep.subr.bf16.mxu0 0
      %4914 = vmatpush1.bf16.msra.mxu0 %v4883
      %4915 = vmatprep.subr.bf16.mxu0 0
      %4916 = vmatpush2.bf16.msra.mxu0 0
      %4917 = vmatprep.subr.bf16.mxu0 0
      %4918 = vmatpush2.bf16.msra.mxu0 0
      %4919 = vmatprep.subr.bf16.mxu0 0
      %4920 = vmatpush2.bf16.msra.mxu0 0
      %4921 = vmatprep.subr.bf16.mxu0 0
      %4922 = vmatpush2.bf16.msra.mxu0 0
      %4923 = vmatprep.subr.bf16.mxu0 0
      %4924 = vmatpush2.bf16.msra.mxu0 0
      %4925 = vmatprep.subr.bf16.mxu0 0
      %4926 = vmatpush2.bf16.msra.mxu0 0
      %4927 = vmatprep.subr.bf16.mxu0 0
      %4928 = vmatpush2.bf16.msra.mxu0 0
      %4929 = vmatprep.subr.bf16.mxu0 0
      %4930 = vmatpush2.bf16.msra.mxu0 0
      %4931 = vmatprep.mubr.bf16.mxu0 0
      %4932 = vmatmul.mubr.bf16.gmra.mxu0 %v4842
      %v4933 = vpop.f32.mrf.mxu0
      %v4934 = vadd.f32 %v4849, %v4933
      %v4935 = vpop.f32.mrf.mxu0
      %v4936 = vpop.f32.mrf.mxu0
      %v4937 = vadd.f32 %v4849, %v4936
      %v4938 = vpop.f32.mrf.mxu0
      %4939 = vdwg.mxu0
      %v4940 = vmax.f32 %v4934, 0.0
      %v4941 = vmax.f32 %v4937, 0.0
      %s4942 = scalar_lea.vmem %s49, 64
      %v4943 = vld [vmem:[%s4942] sm:$0xf]
      %v4944 = vld [vmem:[%s4942 + $0x4] sm:$0xf]
      %v4945 = vld [vmem:[%s4942 + $0x8] sm:$0xf]
      %v4946 = vld [vmem:[%s4942 + $0xc] sm:$0xf]
      %v4947 = vld [vmem:[%s4942 + $0x10] sm:$0xf]
      %v4948 = vld [vmem:[%s4942 + $0x14] sm:$0xf]
      %v4949 = vld [vmem:[%s4942 + $0x18] sm:$0xf]
      %v4950 = vld [vmem:[%s4942 + $0x1c] sm:$0xf]
      %v4951 = vld [vmem:[%s4942 + $0x20] sm:$0xf]
      %v4952 = vld [vmem:[%s4942 + $0x24] sm:$0xf]
      %v4953 = vld [vmem:[%s4942 + $0x28] sm:$0xf]
      %v4954 = vld [vmem:[%s4942 + $0x2c] sm:$0xf]
      %v4955 = vld [vmem:[%s4942 + $0x30] sm:$0xf]
      %v4956 = vld [vmem:[%s4942 + $0x34] sm:$0xf]
      %v4957 = vld [vmem:[%s4942 + $0x38] sm:$0xf]
      %v4958 = vld [vmem:[%s4942 + $0x3c] sm:$0xf]
      %v4959 = vpack.c.bf16 %v4941, %v4940
      %s4960 = scalar_lea.vmem %s51, 1
      %v4961 = vld [vmem:[%s4960] sm:$0x1]
      %v4963 = vlaneseq
      %v4964 = vshrl.u32 %v4963, 7
      %v4965 = vsub.s32 0, %v4964
      %v4966 = vrot.slane %v4961, %v4965
      %v4984 = vunpack.c.l.b16 %v4943
      %v4985 = vunpack.c.l.b16 %v4944
      %v4986 = vunpack.c.l.b16 %v4945
      %v4987 = vunpack.c.l.b16 %v4946
      %v4988 = vunpack.c.l.b16 %v4947
      %v4989 = vunpack.c.l.b16 %v4948
      %v4990 = vunpack.c.l.b16 %v4949
      %v4991 = vunpack.c.l.b16 %v4950
      %v4992 = vunpack.c.l.b16 %v4951
      %v4993 = vunpack.c.l.b16 %v4952
      %v4994 = vunpack.c.l.b16 %v4953
      %v4995 = vunpack.c.l.b16 %v4954
      %v4996 = vunpack.c.l.b16 %v4955
      %v4997 = vunpack.c.l.b16 %v4956
      %v4998 = vunpack.c.l.b16 %v4957
      %v4999 = vunpack.c.l.b16 %v4958
      %v5000 = vpack.c.b16 %v4985, %v4984
      %v5001 = vpack.c.b16 %v4987, %v4986
      %v5002 = vpack.c.b16 %v4989, %v4988
      %v5003 = vpack.c.b16 %v4991, %v4990
      %v5004 = vpack.c.b16 %v4993, %v4992
      %v5005 = vpack.c.b16 %v4995, %v4994
      %v5006 = vpack.c.b16 %v4997, %v4996
      %v5007 = vpack.c.b16 %v4999, %v4998
      %5016 = vmatprep.subr.bf16.mxu0 0
      %5017 = vmatpush1.bf16.msra.mxu0 %v5007
      %5018 = vmatprep.subr.bf16.mxu0 0
      %5019 = vmatpush1.bf16.msra.mxu0 %v5006
      %5020 = vmatprep.subr.bf16.mxu0 0
      %5021 = vmatpush1.bf16.msra.mxu0 %v5005
      %5022 = vmatprep.subr.bf16.mxu0 0
      %5023 = vmatpush1.bf16.msra.mxu0 %v5004
      %5024 = vmatprep.subr.bf16.mxu0 0
      %5025 = vmatpush1.bf16.msra.mxu0 %v5003
      %5026 = vmatprep.subr.bf16.mxu0 0
      %5027 = vmatpush1.bf16.msra.mxu0 %v5002
      %5028 = vmatprep.subr.bf16.mxu0 0
      %5029 = vmatpush1.bf16.msra.mxu0 %v5001
      %5030 = vmatprep.subr.bf16.mxu0 0
      %5031 = vmatpush1.bf16.msra.mxu0 %v5000
      %5032 = vmatprep.subr.bf16.mxu0 0
      %5033 = vmatpush2.bf16.msra.mxu0 0
      %5034 = vmatprep.subr.bf16.mxu0 0
      %5035 = vmatpush2.bf16.msra.mxu0 0
      %5036 = vmatprep.subr.bf16.mxu0 0
      %5037 = vmatpush2.bf16.msra.mxu0 0
      %5038 = vmatprep.subr.bf16.mxu0 0
      %5039 = vmatpush2.bf16.msra.mxu0 0
      %5040 = vmatprep.subr.bf16.mxu0 0
      %5041 = vmatpush2.bf16.msra.mxu0 0
      %5042 = vmatprep.subr.bf16.mxu0 0
      %5043 = vmatpush2.bf16.msra.mxu0 0
      %5044 = vmatprep.subr.bf16.mxu0 0
      %5045 = vmatpush2.bf16.msra.mxu0 0
      %5046 = vmatprep.subr.bf16.mxu0 0
      %5047 = vmatpush2.bf16.msra.mxu0 0
      %5048 = vmatprep.mubr.bf16.mxu0 0
      %5049 = vmatmul.mubr.bf16.gmra.mxu0 %v4959
      %v5050 = vpop.f32.mrf.mxu0
      %v5051 = vadd.f32 %v4966, %v5050
      %v5052 = vpop.f32.mrf.mxu0
      %v5053 = vpop.f32.mrf.mxu0
      %v5054 = vadd.f32 %v4966, %v5053
      %v5055 = vpop.f32.mrf.mxu0
      %5056 = vdwg.mxu0
      %v5057 = vmax.f32 %v5051, 0.0
      %v5058 = vmax.f32 %v5054, 0.0
      %v5059 = vadd.f32 %v5057, %v4823
      %v5060 = vadd.f32 %v5058, %v4824
      %5061 = vadd.xlane.f32.xlu0 %v5059
      %v5062 = vpop.xlane.xlu0 %5061
      %5063 = vadd.xlane.f32.xlu0 %v5060
      %v5064 = vpop.xlane.xlu0 %5063
      %v5065 = vmul.f32 %v5062, %v2096
      %v5066 = vmul.f32 %v5064, %v2096
      %v5067 = vsub.f32 %v5059, %v5065
      %v5068 = vsub.f32 %v5060, %v5066
      %v5069 = vmul.f32 %v5067, %v5067
      %v5070 = vmul.f32 %v5068, %v5068
      %5071 = vadd.xlane.f32.xlu0 %v5069
      %v5072 = vpop.xlane.xlu0 %5071
      %5073 = vadd.xlane.f32.xlu0 %v5070
      %v5074 = vpop.xlane.xlu0 %5073
      %v5075 = vmul.f32 %v5072, %v2096
      %v5076 = vmul.f32 %v5074, %v2096
      %v5077 = vadd.f32 %v5075, 1e-05
      %v5078 = vadd.f32 %v5076, 1e-05
      %v5079 = vrsqrt.pop %v5077
      %v5080 = vrsqrt.pop %v5078
      %v5081 = vmul.f32 %v5067, %v5079
      %v5082 = vmul.f32 %v5068, %v5080
      %v5083 = vpack.c.bf16 %v5082, %v5081
      %5084 = vmatprep.subr.bf16.mxu0 0
      %5085 = vmatpush1.bf16.msra.mxu0 %v3548
      %5086 = vmatprep.subr.bf16.mxu0 0
      %5087 = vmatpush1.bf16.msra.mxu0 %v3547
      %5088 = vmatprep.subr.bf16.mxu0 0
      %5089 = vmatpush1.bf16.msra.mxu0 %v3546
      %5090 = vmatprep.subr.bf16.mxu0 0
      %5091 = vmatpush1.bf16.msra.mxu0 %v3545
      %5092 = vmatprep.subr.bf16.mxu0 0
      %5093 = vmatpush1.bf16.msra.mxu0 %v3544
      %5094 = vmatprep.subr.bf16.mxu0 0
      %5095 = vmatpush1.bf16.msra.mxu0 %v3543
      %5096 = vmatprep.subr.bf16.mxu0 0
      %5097 = vmatpush1.bf16.msra.mxu0 %v3542
      %5098 = vmatprep.subr.bf16.mxu0 0
      %5099 = vmatpush1.bf16.msra.mxu0 %v3541
      %5100 = vmatprep.subr.bf16.mxu0 0
      %5101 = vmatpush2.bf16.msra.mxu0 0
      %5102 = vmatprep.subr.bf16.mxu0 0
      %5103 = vmatpush2.bf16.msra.mxu0 0
      %5104 = vmatprep.subr.bf16.mxu0 0
      %5105 = vmatpush2.bf16.msra.mxu0 0
      %5106 = vmatprep.subr.bf16.mxu0 0
      %5107 = vmatpush2.bf16.msra.mxu0 0
      %5108 = vmatprep.subr.bf16.mxu0 0
      %5109 = vmatpush2.bf16.msra.mxu0 0
      %5110 = vmatprep.subr.bf16.mxu0 0
      %5111 = vmatpush2.bf16.msra.mxu0 0
      %5112 = vmatprep.subr.bf16.mxu0 0
      %5113 = vmatpush2.bf16.msra.mxu0 0
      %5114 = vmatprep.subr.bf16.mxu0 0
      %5115 = vmatpush2.bf16.msra.mxu0 0
      %5116 = vmatprep.mubr.bf16.mxu0 0
      %5117 = vmatmul.mubr.bf16.gmra.mxu0 %v3716
      %v5118 = vpop.f32.mrf.mxu0
      %v5119 = vadd.f32 0.0, %v5118
      %v5120 = vpop.f32.mrf.mxu0
      %v5121 = vpop.f32.mrf.mxu0
      %v5122 = vadd.f32 0.0, %v5121
      %v5123 = vpop.f32.mrf.mxu0
      %5124 = vdwg.mxu0
      %5125 = vmatprep.subr.bf16.mxu0 0
      %5126 = vmatpush1.bf16.msra.mxu0 %v3637
      %5127 = vmatprep.subr.bf16.mxu0 0
      %5128 = vmatpush1.bf16.msra.mxu0 %v3636
      %5129 = vmatprep.subr.bf16.mxu0 0
      %5130 = vmatpush1.bf16.msra.mxu0 %v3635
      %5131 = vmatprep.subr.bf16.mxu0 0
      %5132 = vmatpush1.bf16.msra.mxu0 %v3634
      %5133 = vmatprep.subr.bf16.mxu0 0
      %5134 = vmatpush1.bf16.msra.mxu0 %v3633
      %5135 = vmatprep.subr.bf16.mxu0 0
      %5136 = vmatpush1.bf16.msra.mxu0 %v3632
      %5137 = vmatprep.subr.bf16.mxu0 0
      %5138 = vmatpush1.bf16.msra.mxu0 %v3631
      %5139 = vmatprep.subr.bf16.mxu0 0
      %5140 = vmatpush1.bf16.msra.mxu0 %v3630
      %5141 = vmatprep.subr.bf16.mxu0 0
      %5142 = vmatpush2.bf16.msra.mxu0 0
      %5143 = vmatprep.subr.bf16.mxu0 0
      %5144 = vmatpush2.bf16.msra.mxu0 0
      %5145 = vmatprep.subr.bf16.mxu0 0
      %5146 = vmatpush2.bf16.msra.mxu0 0
      %5147 = vmatprep.subr.bf16.mxu0 0
      %5148 = vmatpush2.bf16.msra.mxu0 0
      %5149 = vmatprep.subr.bf16.mxu0 0
      %5150 = vmatpush2.bf16.msra.mxu0 0
      %5151 = vmatprep.subr.bf16.mxu0 0
      %5152 = vmatpush2.bf16.msra.mxu0 0
      %5153 = vmatprep.subr.bf16.mxu0 0
      %5154 = vmatpush2.bf16.msra.mxu0 0
      %5155 = vmatprep.subr.bf16.mxu0 0
      %5156 = vmatpush2.bf16.msra.mxu0 0
      %5157 = vmatprep.mubr.bf16.mxu0 0
      %5158 = vmatmul.mubr.bf16.gmra.mxu0 %v5083
      %v5159 = vpop.f32.mrf.mxu0
      %v5160 = vadd.f32 %v5119, %v5159
      %v5161 = vpop.f32.mrf.mxu0
      %v5162 = vpop.f32.mrf.mxu0
      %v5163 = vadd.f32 %v5122, %v5162
      %v5164 = vpop.f32.mrf.mxu0
      %5165 = vdwg.mxu0
      %v5166 = vadd.f32 %v5160, %v3692
      %v5167 = vadd.f32 %v5163, %v3692
      %v5168 = vxor.u32 %v5166, 2147483648
      %v5169 = vxor.u32 %v5167, 2147483648
      %v5170 = vmul.f32 %v5168, 1.442695
      %v5171 = vpow.pop %v5170
      %v5172 = vmul.f32 %v5169, 1.442695
      %v5173 = vpow.pop %v5172
      %v5174 = vadd.f32 %v5171, 1.0
      %v5175 = vadd.f32 %v5173, 1.0
      %v5176 = vrcp.pop %v5174
      %v5177 = vmul.f32 1.0, %v5176
      %v5178 = vrcp.pop %v5175
      %v5179 = vmul.f32 1.0, %v5178
      %v5180 = vmul.f32 %v5177, %v5081
      %v5181 = vmul.f32 %v5179, %v5082
      %v5182 = vsub.f32 1.0, %v5177
      %v5183 = vsub.f32 1.0, %v5179
      %v5184 = vmul.f32 %v5182, %v3714
      %v5185 = vmul.f32 %v5183, %v3715
      %v5186 = vadd.f32 %v5180, %v5184
      %v5187 = vadd.f32 %v5181, %v5185
      %v5188 = vld [vmem:[%s23] sm:$0xff]
      %v5190 = vsel %vm2506, %v5188, 0
      %5192 = vmatprep.subr.mxu0 0.0
      %5193 = vmatpush1.msra.mxu0 0.0
      %5194 = vmatprep.subr.mxu0 0.0
      %5195 = vmatpush1.msra.mxu0 0.0
      %5196 = vmatprep.subr.mxu0 0.0
      %5197 = vmatpush1.msra.mxu0 0.0
      %5198 = vmatprep.subr.mxu0 0.0
      %5199 = vmatpush1.msra.mxu0 0.0
      %5200 = vmatprep.subr.mxu0 0.0
      %5201 = vmatpush1.msra.mxu0 0.0
      %5202 = vmatprep.subr.mxu0 0.0
      %5203 = vmatpush1.msra.mxu0 0.0
      %5204 = vmatprep.subr.mxu0 0.0
      %5205 = vmatpush1.msra.mxu0 0.0
      %5206 = vmatprep.subr.mxu0 0.0
      %5207 = vmatpush1.msra.mxu0 0.0
      %5208 = vmatprep.subr.mxu0 0.0
      %5209 = vmatpush1.msra.mxu0 0.0
      %5210 = vmatprep.subr.mxu0 0.0
      %5211 = vmatpush1.msra.mxu0 0.0
      %5212 = vmatprep.subr.mxu0 0.0
      %5213 = vmatpush1.msra.mxu0 0.0
      %5214 = vmatprep.subr.mxu0 0.0
      %5215 = vmatpush1.msra.mxu0 0.0
      %5216 = vmatprep.subr.mxu0 0.0
      %5217 = vmatpush1.msra.mxu0 0.0
      %5218 = vmatprep.subr.mxu0 0.0
      %5219 = vmatpush1.msra.mxu0 0.0
      %5220 = vmatprep.subr.mxu0 0.0
      %5221 = vmatpush1.msra.mxu0 %v5187
      %5222 = vmatprep.subr.mxu0 0.0
      %5223 = vmatpush1.msra.mxu0 %v5186
      %5224 = vmatprep.subr.mxu0 0.0
      %5225 = vmatpush2.msra.mxu0 0.0
      %5226 = vmatprep.subr.mxu0 0.0
      %5227 = vmatpush2.msra.mxu0 0.0
      %5228 = vmatprep.subr.mxu0 0.0
      %5229 = vmatpush2.msra.mxu0 0.0
      %5230 = vmatprep.subr.mxu0 0.0
      %5231 = vmatpush2.msra.mxu0 0.0
      %5232 = vmatprep.subr.mxu0 0.0
      %5233 = vmatpush2.msra.mxu0 0.0
      %5234 = vmatprep.subr.mxu0 0.0
      %5235 = vmatpush2.msra.mxu0 0.0
      %5236 = vmatprep.subr.mxu0 0.0
      %5237 = vmatpush2.msra.mxu0 0.0
      %5238 = vmatprep.subr.mxu0 0.0
      %5239 = vmatpush2.msra.mxu0 0.0
      %5240 = vmatprep.subr.mxu0 0.0
      %5241 = vmatpush2.msra.mxu0 0.0
      %5242 = vmatprep.subr.mxu0 0.0
      %5243 = vmatpush2.msra.mxu0 0.0
      %5244 = vmatprep.subr.mxu0 0.0
      %5245 = vmatpush2.msra.mxu0 0.0
      %5246 = vmatprep.subr.mxu0 0.0
      %5247 = vmatpush2.msra.mxu0 0.0
      %5248 = vmatprep.subr.mxu0 0.0
      %5249 = vmatpush2.msra.mxu0 0.0
      %5250 = vmatprep.subr.mxu0 0.0
      %5251 = vmatpush2.msra.mxu0 0.0
      %5252 = vmatprep.subr.mxu0 0.0
      %5253 = vmatpush2.msra.mxu0 0.0
      %5254 = vmatprep.subr.mxu0 0.0
      %5255 = vmatpush2.msra.mxu0 0.0
      %5256 = vmatprep.mubr.f32.mxu0 0.0
      %5257 = vmatmul.mubr.f32.gmra.mxu0 %v5190
      %v5258 = vpop.f32.mrf.mxu0
      %v5259 = vadd.f32 0.0, %v5258
      %v5260 = vpop.f32.mrf.mxu0
      %5261 = vdwg.mxu0
      %5262 = vadd.xlane.f32.xlu0 %v5259
      %v5263 = vpop.xlane.xlu0 %5262
      %v5264 = vmul.f32 %v5263, %v2096
      %v5265 = vsub.f32 %v5259, %v5264
      %v5266 = vmul.f32 %v5265, %v5265
      %5267 = vadd.xlane.f32.xlu0 %v5266
      %v5268 = vpop.xlane.xlu0 %5267
      %v5269 = vmul.f32 %v5268, %v2096
      %v5270 = vadd.f32 %v5269, 1e-05
      %v5271 = vrsqrt.pop %v5270
      %v5272 = vmul.f32 %v5265, %v5271
      %v5273 = vpack.c.bf16 %v5272, %v5272
      %v5274 = vld [vmem:[%s59] sm:$0xf]
      %v5275 = vld [vmem:[%s59 + $0x4] sm:$0xf]
      %v5276 = vld [vmem:[%s59 + $0x8] sm:$0xf]
      %v5277 = vld [vmem:[%s59 + $0xc] sm:$0xf]
      %v5278 = vld [vmem:[%s59 + $0x10] sm:$0xf]
      %v5279 = vld [vmem:[%s59 + $0x14] sm:$0xf]
      %v5280 = vld [vmem:[%s59 + $0x18] sm:$0xf]
      %v5281 = vld [vmem:[%s59 + $0x1c] sm:$0xf]
      %v5282 = vld [vmem:[%s59 + $0x20] sm:$0xf]
      %v5283 = vld [vmem:[%s59 + $0x24] sm:$0xf]
      %v5284 = vld [vmem:[%s59 + $0x28] sm:$0xf]
      %v5285 = vld [vmem:[%s59 + $0x2c] sm:$0xf]
      %v5286 = vld [vmem:[%s59 + $0x30] sm:$0xf]
      %v5287 = vld [vmem:[%s59 + $0x34] sm:$0xf]
      %v5288 = vld [vmem:[%s59 + $0x38] sm:$0xf]
      %v5289 = vld [vmem:[%s59 + $0x3c] sm:$0xf]
      %v5290 = vld [vmem:[%s61] sm:$0x1]
      %v5292 = vlaneseq
      %v5293 = vshrl.u32 %v5292, 7
      %v5294 = vsub.s32 0, %v5293
      %v5295 = vrot.slane %v5290, %v5294
      %v5313 = vunpack.c.l.b16 %v5274
      %v5314 = vunpack.c.l.b16 %v5275
      %v5315 = vunpack.c.l.b16 %v5276
      %v5316 = vunpack.c.l.b16 %v5277
      %v5317 = vunpack.c.l.b16 %v5278
      %v5318 = vunpack.c.l.b16 %v5279
      %v5319 = vunpack.c.l.b16 %v5280
      %v5320 = vunpack.c.l.b16 %v5281
      %v5321 = vunpack.c.l.b16 %v5282
      %v5322 = vunpack.c.l.b16 %v5283
      %v5323 = vunpack.c.l.b16 %v5284
      %v5324 = vunpack.c.l.b16 %v5285
      %v5325 = vunpack.c.l.b16 %v5286
      %v5326 = vunpack.c.l.b16 %v5287
      %v5327 = vunpack.c.l.b16 %v5288
      %v5328 = vunpack.c.l.b16 %v5289
      %v5329 = vpack.c.b16 %v5314, %v5313
      %v5330 = vpack.c.b16 %v5316, %v5315
      %v5331 = vpack.c.b16 %v5318, %v5317
      %v5332 = vpack.c.b16 %v5320, %v5319
      %v5333 = vpack.c.b16 %v5322, %v5321
      %v5334 = vpack.c.b16 %v5324, %v5323
      %v5335 = vpack.c.b16 %v5326, %v5325
      %v5336 = vpack.c.b16 %v5328, %v5327
      %5345 = vmatprep.subr.bf16.mxu0 0
      %5346 = vmatpush1.bf16.msra.mxu0 %v5336
      %5347 = vmatprep.subr.bf16.mxu0 0
      %5348 = vmatpush1.bf16.msra.mxu0 %v5335
      %5349 = vmatprep.subr.bf16.mxu0 0
      %5350 = vmatpush1.bf16.msra.mxu0 %v5334
      %5351 = vmatprep.subr.bf16.mxu0 0
      %5352 = vmatpush1.bf16.msra.mxu0 %v5333
      %5353 = vmatprep.subr.bf16.mxu0 0
      %5354 = vmatpush1.bf16.msra.mxu0 %v5332
      %5355 = vmatprep.subr.bf16.mxu0 0
      %5356 = vmatpush1.bf16.msra.mxu0 %v5331
      %5357 = vmatprep.subr.bf16.mxu0 0
      %5358 = vmatpush1.bf16.msra.mxu0 %v5330
      %5359 = vmatprep.subr.bf16.mxu0 0
      %5360 = vmatpush1.bf16.msra.mxu0 %v5329
      %5361 = vmatprep.subr.bf16.mxu0 0
      %5362 = vmatpush2.bf16.msra.mxu0 0
      %5363 = vmatprep.subr.bf16.mxu0 0
      %5364 = vmatpush2.bf16.msra.mxu0 0
      %5365 = vmatprep.subr.bf16.mxu0 0
      %5366 = vmatpush2.bf16.msra.mxu0 0
      %5367 = vmatprep.subr.bf16.mxu0 0
      %5368 = vmatpush2.bf16.msra.mxu0 0
      %5369 = vmatprep.subr.bf16.mxu0 0
      %5370 = vmatpush2.bf16.msra.mxu0 0
      %5371 = vmatprep.subr.bf16.mxu0 0
      %5372 = vmatpush2.bf16.msra.mxu0 0
      %5373 = vmatprep.subr.bf16.mxu0 0
      %5374 = vmatpush2.bf16.msra.mxu0 0
      %5375 = vmatprep.subr.bf16.mxu0 0
      %5376 = vmatpush2.bf16.msra.mxu0 0
      %5377 = vmatprep.mubr.bf16.mxu0 0
      %5378 = vmatmul.mubr.bf16.gmra.mxu0 %v5273
      %v5379 = vpop.f32.mrf.mxu0
      %v5380 = vadd.f32 %v5295, %v5379
      %v5381 = vpop.f32.mrf.mxu0
      %v5382 = vpop.f32.mrf.mxu0
      %v5383 = vpop.f32.mrf.mxu0
      %5384 = vdwg.mxu0
      %s5385 = scalar_lea.vmem %s59, 128
      %v5386 = vld [vmem:[%s5385] sm:$0xf]
      %v5387 = vld [vmem:[%s5385 + $0x4] sm:$0xf]
      %v5388 = vld [vmem:[%s5385 + $0x8] sm:$0xf]
      %v5389 = vld [vmem:[%s5385 + $0xc] sm:$0xf]
      %v5390 = vld [vmem:[%s5385 + $0x10] sm:$0xf]
      %v5391 = vld [vmem:[%s5385 + $0x14] sm:$0xf]
      %v5392 = vld [vmem:[%s5385 + $0x18] sm:$0xf]
      %v5393 = vld [vmem:[%s5385 + $0x1c] sm:$0xf]
      %v5394 = vld [vmem:[%s5385 + $0x20] sm:$0xf]
      %v5395 = vld [vmem:[%s5385 + $0x24] sm:$0xf]
      %v5396 = vld [vmem:[%s5385 + $0x28] sm:$0xf]
      %v5397 = vld [vmem:[%s5385 + $0x2c] sm:$0xf]
      %v5398 = vld [vmem:[%s5385 + $0x30] sm:$0xf]
      %v5399 = vld [vmem:[%s5385 + $0x34] sm:$0xf]
      %v5400 = vld [vmem:[%s5385 + $0x38] sm:$0xf]
      %v5401 = vld [vmem:[%s5385 + $0x3c] sm:$0xf]
      %s5402 = scalar_lea.vmem %s61, 2
      %v5403 = vld [vmem:[%s5402] sm:$0x1]
      %v5405 = vlaneseq
      %v5406 = vshrl.u32 %v5405, 7
      %v5407 = vsub.s32 0, %v5406
      %v5408 = vrot.slane %v5403, %v5407
      %v5426 = vunpack.c.l.b16 %v5386
      %v5427 = vunpack.c.l.b16 %v5387
      %v5428 = vunpack.c.l.b16 %v5388
      %v5429 = vunpack.c.l.b16 %v5389
      %v5430 = vunpack.c.l.b16 %v5390
      %v5431 = vunpack.c.l.b16 %v5391
      %v5432 = vunpack.c.l.b16 %v5392
      %v5433 = vunpack.c.l.b16 %v5393
      %v5434 = vunpack.c.l.b16 %v5394
      %v5435 = vunpack.c.l.b16 %v5395
      %v5436 = vunpack.c.l.b16 %v5396
      %v5437 = vunpack.c.l.b16 %v5397
      %v5438 = vunpack.c.l.b16 %v5398
      %v5439 = vunpack.c.l.b16 %v5399
      %v5440 = vunpack.c.l.b16 %v5400
      %v5441 = vunpack.c.l.b16 %v5401
      %v5442 = vpack.c.b16 %v5427, %v5426
      %v5443 = vpack.c.b16 %v5429, %v5428
      %v5444 = vpack.c.b16 %v5431, %v5430
      %v5445 = vpack.c.b16 %v5433, %v5432
      %v5446 = vpack.c.b16 %v5435, %v5434
      %v5447 = vpack.c.b16 %v5437, %v5436
      %v5448 = vpack.c.b16 %v5439, %v5438
      %v5449 = vpack.c.b16 %v5441, %v5440
      %5458 = vmatprep.subr.bf16.mxu0 0
      %5459 = vmatpush1.bf16.msra.mxu0 %v5449
      %5460 = vmatprep.subr.bf16.mxu0 0
      %5461 = vmatpush1.bf16.msra.mxu0 %v5448
      %5462 = vmatprep.subr.bf16.mxu0 0
      %5463 = vmatpush1.bf16.msra.mxu0 %v5447
      %5464 = vmatprep.subr.bf16.mxu0 0
      %5465 = vmatpush1.bf16.msra.mxu0 %v5446
      %5466 = vmatprep.subr.bf16.mxu0 0
      %5467 = vmatpush1.bf16.msra.mxu0 %v5445
      %5468 = vmatprep.subr.bf16.mxu0 0
      %5469 = vmatpush1.bf16.msra.mxu0 %v5444
      %5470 = vmatprep.subr.bf16.mxu0 0
      %5471 = vmatpush1.bf16.msra.mxu0 %v5443
      %5472 = vmatprep.subr.bf16.mxu0 0
      %5473 = vmatpush1.bf16.msra.mxu0 %v5442
      %5474 = vmatprep.subr.bf16.mxu0 0
      %5475 = vmatpush2.bf16.msra.mxu0 0
      %5476 = vmatprep.subr.bf16.mxu0 0
      %5477 = vmatpush2.bf16.msra.mxu0 0
      %5478 = vmatprep.subr.bf16.mxu0 0
      %5479 = vmatpush2.bf16.msra.mxu0 0
      %5480 = vmatprep.subr.bf16.mxu0 0
      %5481 = vmatpush2.bf16.msra.mxu0 0
      %5482 = vmatprep.subr.bf16.mxu0 0
      %5483 = vmatpush2.bf16.msra.mxu0 0
      %5484 = vmatprep.subr.bf16.mxu0 0
      %5485 = vmatpush2.bf16.msra.mxu0 0
      %5486 = vmatprep.subr.bf16.mxu0 0
      %5487 = vmatpush2.bf16.msra.mxu0 0
      %5488 = vmatprep.subr.bf16.mxu0 0
      %5489 = vmatpush2.bf16.msra.mxu0 0
      %5490 = vmatprep.mubr.bf16.mxu0 0
      %5491 = vmatmul.mubr.bf16.gmra.mxu0 %v5273
      %v5492 = vpop.f32.mrf.mxu0
      %v5493 = vadd.f32 %v5408, %v5492
      %v5494 = vpop.f32.mrf.mxu0
      %v5495 = vpop.f32.mrf.mxu0
      %v5496 = vpop.f32.mrf.mxu0
      %5497 = vdwg.mxu0
      %s5498 = scalar_lea.vmem %s59, 256
      %v5499 = vld [vmem:[%s5498] sm:$0xf]
      %v5500 = vld [vmem:[%s5498 + $0x4] sm:$0xf]
      %v5501 = vld [vmem:[%s5498 + $0x8] sm:$0xf]
      %v5502 = vld [vmem:[%s5498 + $0xc] sm:$0xf]
      %v5503 = vld [vmem:[%s5498 + $0x10] sm:$0xf]
      %v5504 = vld [vmem:[%s5498 + $0x14] sm:$0xf]
      %v5505 = vld [vmem:[%s5498 + $0x18] sm:$0xf]
      %v5506 = vld [vmem:[%s5498 + $0x1c] sm:$0xf]
      %v5507 = vld [vmem:[%s5498 + $0x20] sm:$0xf]
      %v5508 = vld [vmem:[%s5498 + $0x24] sm:$0xf]
      %v5509 = vld [vmem:[%s5498 + $0x28] sm:$0xf]
      %v5510 = vld [vmem:[%s5498 + $0x2c] sm:$0xf]
      %v5511 = vld [vmem:[%s5498 + $0x30] sm:$0xf]
      %v5512 = vld [vmem:[%s5498 + $0x34] sm:$0xf]
      %v5513 = vld [vmem:[%s5498 + $0x38] sm:$0xf]
      %v5514 = vld [vmem:[%s5498 + $0x3c] sm:$0xf]
      %s5515 = scalar_lea.vmem %s61, 4
      %v5516 = vld [vmem:[%s5515] sm:$0x1]
      %v5518 = vlaneseq
      %v5519 = vshrl.u32 %v5518, 7
      %v5520 = vsub.s32 0, %v5519
      %v5521 = vrot.slane %v5516, %v5520
      %v5539 = vunpack.c.l.b16 %v5499
      %v5540 = vunpack.c.l.b16 %v5500
      %v5541 = vunpack.c.l.b16 %v5501
      %v5542 = vunpack.c.l.b16 %v5502
      %v5543 = vunpack.c.l.b16 %v5503
      %v5544 = vunpack.c.l.b16 %v5504
      %v5545 = vunpack.c.l.b16 %v5505
      %v5546 = vunpack.c.l.b16 %v5506
      %v5547 = vunpack.c.l.b16 %v5507
      %v5548 = vunpack.c.l.b16 %v5508
      %v5549 = vunpack.c.l.b16 %v5509
      %v5550 = vunpack.c.l.b16 %v5510
      %v5551 = vunpack.c.l.b16 %v5511
      %v5552 = vunpack.c.l.b16 %v5512
      %v5553 = vunpack.c.l.b16 %v5513
      %v5554 = vunpack.c.l.b16 %v5514
      %v5555 = vpack.c.b16 %v5540, %v5539
      %v5556 = vpack.c.b16 %v5542, %v5541
      %v5557 = vpack.c.b16 %v5544, %v5543
      %v5558 = vpack.c.b16 %v5546, %v5545
      %v5559 = vpack.c.b16 %v5548, %v5547
      %v5560 = vpack.c.b16 %v5550, %v5549
      %v5561 = vpack.c.b16 %v5552, %v5551
      %v5562 = vpack.c.b16 %v5554, %v5553
      %5571 = vmatprep.subr.bf16.mxu0 0
      %5572 = vmatpush1.bf16.msra.mxu0 %v5562
      %5573 = vmatprep.subr.bf16.mxu0 0
      %5574 = vmatpush1.bf16.msra.mxu0 %v5561
      %5575 = vmatprep.subr.bf16.mxu0 0
      %5576 = vmatpush1.bf16.msra.mxu0 %v5560
      %5577 = vmatprep.subr.bf16.mxu0 0
      %5578 = vmatpush1.bf16.msra.mxu0 %v5559
      %5579 = vmatprep.subr.bf16.mxu0 0
      %5580 = vmatpush1.bf16.msra.mxu0 %v5558
      %5581 = vmatprep.subr.bf16.mxu0 0
      %5582 = vmatpush1.bf16.msra.mxu0 %v5557
      %5583 = vmatprep.subr.bf16.mxu0 0
      %5584 = vmatpush1.bf16.msra.mxu0 %v5556
      %5585 = vmatprep.subr.bf16.mxu0 0
      %5586 = vmatpush1.bf16.msra.mxu0 %v5555
      %5587 = vmatprep.subr.bf16.mxu0 0
      %5588 = vmatpush2.bf16.msra.mxu0 0
      %5589 = vmatprep.subr.bf16.mxu0 0
      %5590 = vmatpush2.bf16.msra.mxu0 0
      %5591 = vmatprep.subr.bf16.mxu0 0
      %5592 = vmatpush2.bf16.msra.mxu0 0
      %5593 = vmatprep.subr.bf16.mxu0 0
      %5594 = vmatpush2.bf16.msra.mxu0 0
      %5595 = vmatprep.subr.bf16.mxu0 0
      %5596 = vmatpush2.bf16.msra.mxu0 0
      %5597 = vmatprep.subr.bf16.mxu0 0
      %5598 = vmatpush2.bf16.msra.mxu0 0
      %5599 = vmatprep.subr.bf16.mxu0 0
      %5600 = vmatpush2.bf16.msra.mxu0 0
      %5601 = vmatprep.subr.bf16.mxu0 0
      %5602 = vmatpush2.bf16.msra.mxu0 0
      %5603 = vmatprep.mubr.bf16.mxu0 0
      %5604 = vmatmul.mubr.bf16.gmra.mxu0 %v5273
      %v5605 = vpop.f32.mrf.mxu0
      %v5606 = vadd.f32 %v5521, %v5605
      %v5607 = vpop.f32.mrf.mxu0
      %v5608 = vpop.f32.mrf.mxu0
      %v5609 = vpop.f32.mrf.mxu0
      %5610 = vdwg.mxu0
      %v5611 = vpack.c.bf16 %v5380, %v5380
      %v5612 = vpack.c.bf16 %v5493, %v5493
      %v5614 = vsel %vm2458, %v5611, 0
      %v5617 = vsel %vm2458, %v5612, 0
      %5619 = vmatprep.subr.bf16.mxu0 0
      %5620 = vmatpush1.bf16.xpose.msra.mxu0 0
      %5621 = vmatprep.subr.bf16.mxu0 0
      %5622 = vmatpush1.bf16.xpose.msra.mxu0 0
      %5623 = vmatprep.subr.bf16.mxu0 0
      %5624 = vmatpush1.bf16.xpose.msra.mxu0 0
      %5625 = vmatprep.subr.bf16.mxu0 0
      %5626 = vmatpush1.bf16.xpose.msra.mxu0 0
      %5627 = vmatprep.subr.bf16.mxu0 0
      %5628 = vmatpush1.bf16.xpose.msra.mxu0 0
      %5629 = vmatprep.subr.bf16.mxu0 0
      %5630 = vmatpush1.bf16.xpose.msra.mxu0 0
      %5631 = vmatprep.subr.bf16.mxu0 0
      %5632 = vmatpush1.bf16.xpose.msra.mxu0 0
      %5633 = vmatprep.subr.bf16.mxu0 0
      %5634 = vmatpush1.bf16.xpose.msra.mxu0 %v5617
      %5635 = vmatprep.subr.bf16.mxu0 0
      %5636 = vmatpush2.bf16.xpose.msra.mxu0 0
      %5637 = vmatprep.subr.bf16.mxu0 0
      %5638 = vmatpush2.bf16.xpose.msra.mxu0 0
      %5639 = vmatprep.subr.bf16.mxu0 0
      %5640 = vmatpush2.bf16.xpose.msra.mxu0 0
      %5641 = vmatprep.subr.bf16.mxu0 0
      %5642 = vmatpush2.bf16.xpose.msra.mxu0 0
      %5643 = vmatprep.subr.bf16.mxu0 0
      %5644 = vmatpush2.bf16.xpose.msra.mxu0 0
      %5645 = vmatprep.subr.bf16.mxu0 0
      %5646 = vmatpush2.bf16.xpose.msra.mxu0 0
      %5647 = vmatprep.subr.bf16.mxu0 0
      %5648 = vmatpush2.bf16.xpose.msra.mxu0 0
      %5649 = vmatprep.subr.bf16.mxu0 0
      %5650 = vmatpush2.bf16.xpose.msra.mxu0 0
      %5651 = vmatprep.mubr.bf16.mxu0 0
      %5652 = vmatmul.mubr.bf16.gmra.mxu0 %v5614
      %v5653 = vpop.f32.mrf.mxu0
      %v5654 = vadd.f32 0.0, %v5653
      %v5655 = vpop.f32.mrf.mxu0
      %v5656 = vpop.f32.mrf.mxu0
      %v5657 = vpop.f32.mrf.mxu0
      %5658 = vdwg.mxu0
      %v5659 = vsel %vm1479, %v5654, -inf
      %5660 = vmax.xlane.f32.xlu0 %v5659
      %v5661 = vpop.xlane.xlu0 %5660
      %v5662 = vsub.f32 %v5654, %v5661
      %v5663 = vmul.f32 %v5662, 1.442695
      %v5664 = vpow.pop %v5663
      %v5665 = vsel %vm1479, %v5664, 0.0
      %5666 = vadd.xlane.f32.xlu0 %v5665
      %v5667 = vpop.xlane.xlu0 %5666
      %v5668 = vrcp.pop %v5667
      %v5669 = vmul.f32 %v5664, %v5668
      %v5670 = vpack.c.bf16 %v5669, %v5669
      %v5671 = vpack.c.bf16 %v5606, %v5606
      %v5673 = vsel %vm1479, %v5670, 0
      %vm5675 = vcmask 1043456
      %v5677 = vsel %vm5675, %v5671, 0
      %5679 = vmatprep.subr.bf16.mxu0 0
      %5680 = vmatpush1.bf16.msra.mxu0 0
      %5681 = vmatprep.subr.bf16.mxu0 0
      %5682 = vmatpush1.bf16.msra.mxu0 0
      %5683 = vmatprep.subr.bf16.mxu0 0
      %5684 = vmatpush1.bf16.msra.mxu0 0
      %5685 = vmatprep.subr.bf16.mxu0 0
      %5686 = vmatpush1.bf16.msra.mxu0 0
      %5687 = vmatprep.subr.bf16.mxu0 0
      %5688 = vmatpush1.bf16.msra.mxu0 0
      %5689 = vmatprep.subr.bf16.mxu0 0
      %5690 = vmatpush1.bf16.msra.mxu0 0
      %5691 = vmatprep.subr.bf16.mxu0 0
      %5692 = vmatpush1.bf16.msra.mxu0 0
      %5693 = vmatprep.subr.bf16.mxu0 0
      %5694 = vmatpush1.bf16.msra.mxu0 %v5677
      %5695 = vmatprep.subr.bf16.mxu0 0
      %5696 = vmatpush2.bf16.msra.mxu0 0
      %5697 = vmatprep.subr.bf16.mxu0 0
      %5698 = vmatpush2.bf16.msra.mxu0 0
      %5699 = vmatprep.subr.bf16.mxu0 0
      %5700 = vmatpush2.bf16.msra.mxu0 0
      %5701 = vmatprep.subr.bf16.mxu0 0
      %5702 = vmatpush2.bf16.msra.mxu0 0
      %5703 = vmatprep.subr.bf16.mxu0 0
      %5704 = vmatpush2.bf16.msra.mxu0 0
      %5705 = vmatprep.subr.bf16.mxu0 0
      %5706 = vmatpush2.bf16.msra.mxu0 0
      %5707 = vmatprep.subr.bf16.mxu0 0
      %5708 = vmatpush2.bf16.msra.mxu0 0
      %5709 = vmatprep.subr.bf16.mxu0 0
      %5710 = vmatpush2.bf16.msra.mxu0 0
      %5711 = vmatprep.mubr.bf16.mxu0 0
      %5712 = vmatmul.mubr.bf16.gmra.mxu0 %v5673
      %v5713 = vpop.f32.mrf.mxu0
      %v5714 = vadd.f32 0.0, %v5713
      %v5715 = vpop.f32.mrf.mxu0
      %v5716 = vpop.f32.mrf.mxu0
      %v5717 = vpop.f32.mrf.mxu0
      %5718 = vdwg.mxu0
      %v5719 = vpack.c.bf16 %v5714, %v5714
      %v5720 = vld [vmem:[%s63] sm:$0xf]
      %v5721 = vld [vmem:[%s63 + $0x4] sm:$0xf]
      %v5722 = vld [vmem:[%s63 + $0x8] sm:$0xf]
      %v5723 = vld [vmem:[%s63 + $0xc] sm:$0xf]
      %v5724 = vld [vmem:[%s63 + $0x10] sm:$0xf]
      %v5725 = vld [vmem:[%s63 + $0x14] sm:$0xf]
      %v5726 = vld [vmem:[%s63 + $0x18] sm:$0xf]
      %v5727 = vld [vmem:[%s63 + $0x1c] sm:$0xf]
      %s5728 = scalar_lea.vmem %s59, 64
      %v5729 = vld [vmem:[%s5728] sm:$0xf]
      %v5730 = vld [vmem:[%s5728 + $0x4] sm:$0xf]
      %v5731 = vld [vmem:[%s5728 + $0x8] sm:$0xf]
      %v5732 = vld [vmem:[%s5728 + $0xc] sm:$0xf]
      %v5733 = vld [vmem:[%s5728 + $0x10] sm:$0xf]
      %v5734 = vld [vmem:[%s5728 + $0x14] sm:$0xf]
      %v5735 = vld [vmem:[%s5728 + $0x18] sm:$0xf]
      %v5736 = vld [vmem:[%s5728 + $0x1c] sm:$0xf]
      %v5737 = vld [vmem:[%s5728 + $0x20] sm:$0xf]
      %v5738 = vld [vmem:[%s5728 + $0x24] sm:$0xf]
      %v5739 = vld [vmem:[%s5728 + $0x28] sm:$0xf]
      %v5740 = vld [vmem:[%s5728 + $0x2c] sm:$0xf]
      %v5741 = vld [vmem:[%s5728 + $0x30] sm:$0xf]
      %v5742 = vld [vmem:[%s5728 + $0x34] sm:$0xf]
      %v5743 = vld [vmem:[%s5728 + $0x38] sm:$0xf]
      %v5744 = vld [vmem:[%s5728 + $0x3c] sm:$0xf]
      %s5745 = scalar_lea.vmem %s61, 1
      %v5746 = vld [vmem:[%s5745] sm:$0x1]
      %v5748 = vlaneseq
      %v5749 = vshrl.u32 %v5748, 7
      %v5750 = vsub.s32 0, %v5749
      %v5751 = vrot.slane %v5746, %v5750
      %v5769 = vunpack.c.l.b16 %v5729
      %v5770 = vunpack.c.l.b16 %v5730
      %v5771 = vunpack.c.l.b16 %v5731
      %v5772 = vunpack.c.l.b16 %v5732
      %v5773 = vunpack.c.l.b16 %v5733
      %v5774 = vunpack.c.l.b16 %v5734
      %v5775 = vunpack.c.l.b16 %v5735
      %v5776 = vunpack.c.l.b16 %v5736
      %v5777 = vunpack.c.l.b16 %v5737
      %v5778 = vunpack.c.l.b16 %v5738
      %v5779 = vunpack.c.l.b16 %v5739
      %v5780 = vunpack.c.l.b16 %v5740
      %v5781 = vunpack.c.l.b16 %v5741
      %v5782 = vunpack.c.l.b16 %v5742
      %v5783 = vunpack.c.l.b16 %v5743
      %v5784 = vunpack.c.l.b16 %v5744
      %v5785 = vpack.c.b16 %v5770, %v5769
      %v5786 = vpack.c.b16 %v5772, %v5771
      %v5787 = vpack.c.b16 %v5774, %v5773
      %v5788 = vpack.c.b16 %v5776, %v5775
      %v5789 = vpack.c.b16 %v5778, %v5777
      %v5790 = vpack.c.b16 %v5780, %v5779
      %v5791 = vpack.c.b16 %v5782, %v5781
      %v5792 = vpack.c.b16 %v5784, %v5783
      %5801 = vmatprep.subr.bf16.mxu0 0
      %5802 = vmatpush1.bf16.msra.mxu0 %v5792
      %5803 = vmatprep.subr.bf16.mxu0 0
      %5804 = vmatpush1.bf16.msra.mxu0 %v5791
      %5805 = vmatprep.subr.bf16.mxu0 0
      %5806 = vmatpush1.bf16.msra.mxu0 %v5790
      %5807 = vmatprep.subr.bf16.mxu0 0
      %5808 = vmatpush1.bf16.msra.mxu0 %v5789
      %5809 = vmatprep.subr.bf16.mxu0 0
      %5810 = vmatpush1.bf16.msra.mxu0 %v5788
      %5811 = vmatprep.subr.bf16.mxu0 0
      %5812 = vmatpush1.bf16.msra.mxu0 %v5787
      %5813 = vmatprep.subr.bf16.mxu0 0
      %5814 = vmatpush1.bf16.msra.mxu0 %v5786
      %5815 = vmatprep.subr.bf16.mxu0 0
      %5816 = vmatpush1.bf16.msra.mxu0 %v5785
      %5817 = vmatprep.subr.bf16.mxu0 0
      %5818 = vmatpush2.bf16.msra.mxu0 0
      %5819 = vmatprep.subr.bf16.mxu0 0
      %5820 = vmatpush2.bf16.msra.mxu0 0
      %5821 = vmatprep.subr.bf16.mxu0 0
      %5822 = vmatpush2.bf16.msra.mxu0 0
      %5823 = vmatprep.subr.bf16.mxu0 0
      %5824 = vmatpush2.bf16.msra.mxu0 0
      %5825 = vmatprep.subr.bf16.mxu0 0
      %5826 = vmatpush2.bf16.msra.mxu0 0
      %5827 = vmatprep.subr.bf16.mxu0 0
      %5828 = vmatpush2.bf16.msra.mxu0 0
      %5829 = vmatprep.subr.bf16.mxu0 0
      %5830 = vmatpush2.bf16.msra.mxu0 0
      %5831 = vmatprep.subr.bf16.mxu0 0
      %5832 = vmatpush2.bf16.msra.mxu0 0
      %5833 = vmatprep.mubr.bf16.mxu0 0
      %5834 = vmatmul.mubr.bf16.gmra.mxu0 %v5273
      %v5835 = vpop.f32.mrf.mxu0
      %v5836 = vadd.f32 %v5751, %v5835
      %v5837 = vpop.f32.mrf.mxu0
      %v5838 = vpop.f32.mrf.mxu0
      %v5839 = vpop.f32.mrf.mxu0
      %5840 = vdwg.mxu0
      %s5841 = scalar_lea.vmem %s59, 192
      %v5842 = vld [vmem:[%s5841] sm:$0xf]
      %v5843 = vld [vmem:[%s5841 + $0x4] sm:$0xf]
      %v5844 = vld [vmem:[%s5841 + $0x8] sm:$0xf]
      %v5845 = vld [vmem:[%s5841 + $0xc] sm:$0xf]
      %v5846 = vld [vmem:[%s5841 + $0x10] sm:$0xf]
      %v5847 = vld [vmem:[%s5841 + $0x14] sm:$0xf]
      %v5848 = vld [vmem:[%s5841 + $0x18] sm:$0xf]
      %v5849 = vld [vmem:[%s5841 + $0x1c] sm:$0xf]
      %v5850 = vld [vmem:[%s5841 + $0x20] sm:$0xf]
      %v5851 = vld [vmem:[%s5841 + $0x24] sm:$0xf]
      %v5852 = vld [vmem:[%s5841 + $0x28] sm:$0xf]
      %v5853 = vld [vmem:[%s5841 + $0x2c] sm:$0xf]
      %v5854 = vld [vmem:[%s5841 + $0x30] sm:$0xf]
      %v5855 = vld [vmem:[%s5841 + $0x34] sm:$0xf]
      %v5856 = vld [vmem:[%s5841 + $0x38] sm:$0xf]
      %v5857 = vld [vmem:[%s5841 + $0x3c] sm:$0xf]
      %s5858 = scalar_lea.vmem %s61, 3
      %v5859 = vld [vmem:[%s5858] sm:$0x1]
      %v5861 = vlaneseq
      %v5862 = vshrl.u32 %v5861, 7
      %v5863 = vsub.s32 0, %v5862
      %v5864 = vrot.slane %v5859, %v5863
      %v5882 = vunpack.c.l.b16 %v5842
      %v5883 = vunpack.c.l.b16 %v5843
      %v5884 = vunpack.c.l.b16 %v5844
      %v5885 = vunpack.c.l.b16 %v5845
      %v5886 = vunpack.c.l.b16 %v5846
      %v5887 = vunpack.c.l.b16 %v5847
      %v5888 = vunpack.c.l.b16 %v5848
      %v5889 = vunpack.c.l.b16 %v5849
      %v5890 = vunpack.c.l.b16 %v5850
      %v5891 = vunpack.c.l.b16 %v5851
      %v5892 = vunpack.c.l.b16 %v5852
      %v5893 = vunpack.c.l.b16 %v5853
      %v5894 = vunpack.c.l.b16 %v5854
      %v5895 = vunpack.c.l.b16 %v5855
      %v5896 = vunpack.c.l.b16 %v5856
      %v5897 = vunpack.c.l.b16 %v5857
      %v5898 = vpack.c.b16 %v5883, %v5882
      %v5899 = vpack.c.b16 %v5885, %v5884
      %v5900 = vpack.c.b16 %v5887, %v5886
      %v5901 = vpack.c.b16 %v5889, %v5888
      %v5902 = vpack.c.b16 %v5891, %v5890
      %v5903 = vpack.c.b16 %v5893, %v5892
      %v5904 = vpack.c.b16 %v5895, %v5894
      %v5905 = vpack.c.b16 %v5897, %v5896
      %5914 = vmatprep.subr.bf16.mxu0 0
      %5915 = vmatpush1.bf16.msra.mxu0 %v5905
      %5916 = vmatprep.subr.bf16.mxu0 0
      %5917 = vmatpush1.bf16.msra.mxu0 %v5904
      %5918 = vmatprep.subr.bf16.mxu0 0
      %5919 = vmatpush1.bf16.msra.mxu0 %v5903
      %5920 = vmatprep.subr.bf16.mxu0 0
      %5921 = vmatpush1.bf16.msra.mxu0 %v5902
      %5922 = vmatprep.subr.bf16.mxu0 0
      %5923 = vmatpush1.bf16.msra.mxu0 %v5901
      %5924 = vmatprep.subr.bf16.mxu0 0
      %5925 = vmatpush1.bf16.msra.mxu0 %v5900
      %5926 = vmatprep.subr.bf16.mxu0 0
      %5927 = vmatpush1.bf16.msra.mxu0 %v5899
      %5928 = vmatprep.subr.bf16.mxu0 0
      %5929 = vmatpush1.bf16.msra.mxu0 %v5898
      %5930 = vmatprep.subr.bf16.mxu0 0
      %5931 = vmatpush2.bf16.msra.mxu0 0
      %5932 = vmatprep.subr.bf16.mxu0 0
      %5933 = vmatpush2.bf16.msra.mxu0 0
      %5934 = vmatprep.subr.bf16.mxu0 0
      %5935 = vmatpush2.bf16.msra.mxu0 0
      %5936 = vmatprep.subr.bf16.mxu0 0
      %5937 = vmatpush2.bf16.msra.mxu0 0
      %5938 = vmatprep.subr.bf16.mxu0 0
      %5939 = vmatpush2.bf16.msra.mxu0 0
      %5940 = vmatprep.subr.bf16.mxu0 0
      %5941 = vmatpush2.bf16.msra.mxu0 0
      %5942 = vmatprep.subr.bf16.mxu0 0
      %5943 = vmatpush2.bf16.msra.mxu0 0
      %5944 = vmatprep.subr.bf16.mxu0 0
      %5945 = vmatpush2.bf16.msra.mxu0 0
      %5946 = vmatprep.mubr.bf16.mxu0 0
      %5947 = vmatmul.mubr.bf16.gmra.mxu0 %v5273
      %v5948 = vpop.f32.mrf.mxu0
      %v5949 = vadd.f32 %v5864, %v5948
      %v5950 = vpop.f32.mrf.mxu0
      %v5951 = vpop.f32.mrf.mxu0
      %v5952 = vpop.f32.mrf.mxu0
      %5953 = vdwg.mxu0
      %s5954 = scalar_lea.vmem %s59, 320
      %v5955 = vld [vmem:[%s5954] sm:$0xf]
      %v5956 = vld [vmem:[%s5954 + $0x4] sm:$0xf]
      %v5957 = vld [vmem:[%s5954 + $0x8] sm:$0xf]
      %v5958 = vld [vmem:[%s5954 + $0xc] sm:$0xf]
      %v5959 = vld [vmem:[%s5954 + $0x10] sm:$0xf]
      %v5960 = vld [vmem:[%s5954 + $0x14] sm:$0xf]
      %v5961 = vld [vmem:[%s5954 + $0x18] sm:$0xf]
      %v5962 = vld [vmem:[%s5954 + $0x1c] sm:$0xf]
      %v5963 = vld [vmem:[%s5954 + $0x20] sm:$0xf]
      %v5964 = vld [vmem:[%s5954 + $0x24] sm:$0xf]
      %v5965 = vld [vmem:[%s5954 + $0x28] sm:$0xf]
      %v5966 = vld [vmem:[%s5954 + $0x2c] sm:$0xf]
      %v5967 = vld [vmem:[%s5954 + $0x30] sm:$0xf]
      %v5968 = vld [vmem:[%s5954 + $0x34] sm:$0xf]
      %v5969 = vld [vmem:[%s5954 + $0x38] sm:$0xf]
      %v5970 = vld [vmem:[%s5954 + $0x3c] sm:$0xf]
      %s5971 = scalar_lea.vmem %s61, 5
      %v5972 = vld [vmem:[%s5971] sm:$0x1]
      %v5974 = vlaneseq
      %v5975 = vshrl.u32 %v5974, 7
      %v5976 = vsub.s32 0, %v5975
      %v5977 = vrot.slane %v5972, %v5976
      %v5995 = vunpack.c.l.b16 %v5955
      %v5996 = vunpack.c.l.b16 %v5956
      %v5997 = vunpack.c.l.b16 %v5957
      %v5998 = vunpack.c.l.b16 %v5958
      %v5999 = vunpack.c.l.b16 %v5959
      %v6000 = vunpack.c.l.b16 %v5960
      %v6001 = vunpack.c.l.b16 %v5961
      %v6002 = vunpack.c.l.b16 %v5962
      %v6003 = vunpack.c.l.b16 %v5963
      %v6004 = vunpack.c.l.b16 %v5964
      %v6005 = vunpack.c.l.b16 %v5965
      %v6006 = vunpack.c.l.b16 %v5966
      %v6007 = vunpack.c.l.b16 %v5967
      %v6008 = vunpack.c.l.b16 %v5968
      %v6009 = vunpack.c.l.b16 %v5969
      %v6010 = vunpack.c.l.b16 %v5970
      %v6011 = vpack.c.b16 %v5996, %v5995
      %v6012 = vpack.c.b16 %v5998, %v5997
      %v6013 = vpack.c.b16 %v6000, %v5999
      %v6014 = vpack.c.b16 %v6002, %v6001
      %v6015 = vpack.c.b16 %v6004, %v6003
      %v6016 = vpack.c.b16 %v6006, %v6005
      %v6017 = vpack.c.b16 %v6008, %v6007
      %v6018 = vpack.c.b16 %v6010, %v6009
      %6027 = vmatprep.subr.bf16.mxu0 0
      %6028 = vmatpush1.bf16.msra.mxu0 %v6018
      %6029 = vmatprep.subr.bf16.mxu0 0
      %6030 = vmatpush1.bf16.msra.mxu0 %v6017
      %6031 = vmatprep.subr.bf16.mxu0 0
      %6032 = vmatpush1.bf16.msra.mxu0 %v6016
      %6033 = vmatprep.subr.bf16.mxu0 0
      %6034 = vmatpush1.bf16.msra.mxu0 %v6015
      %6035 = vmatprep.subr.bf16.mxu0 0
      %6036 = vmatpush1.bf16.msra.mxu0 %v6014
      %6037 = vmatprep.subr.bf16.mxu0 0
      %6038 = vmatpush1.bf16.msra.mxu0 %v6013
      %6039 = vmatprep.subr.bf16.mxu0 0
      %6040 = vmatpush1.bf16.msra.mxu0 %v6012
      %6041 = vmatprep.subr.bf16.mxu0 0
      %6042 = vmatpush1.bf16.msra.mxu0 %v6011
      %6043 = vmatprep.subr.bf16.mxu0 0
      %6044 = vmatpush2.bf16.msra.mxu0 0
      %6045 = vmatprep.subr.bf16.mxu0 0
      %6046 = vmatpush2.bf16.msra.mxu0 0
      %6047 = vmatprep.subr.bf16.mxu0 0
      %6048 = vmatpush2.bf16.msra.mxu0 0
      %6049 = vmatprep.subr.bf16.mxu0 0
      %6050 = vmatpush2.bf16.msra.mxu0 0
      %6051 = vmatprep.subr.bf16.mxu0 0
      %6052 = vmatpush2.bf16.msra.mxu0 0
      %6053 = vmatprep.subr.bf16.mxu0 0
      %6054 = vmatpush2.bf16.msra.mxu0 0
      %6055 = vmatprep.subr.bf16.mxu0 0
      %6056 = vmatpush2.bf16.msra.mxu0 0
      %6057 = vmatprep.subr.bf16.mxu0 0
      %6058 = vmatpush2.bf16.msra.mxu0 0
      %6059 = vmatprep.mubr.bf16.mxu0 0
      %6060 = vmatmul.mubr.bf16.gmra.mxu0 %v5273
      %v6061 = vpop.f32.mrf.mxu0
      %v6062 = vadd.f32 %v5977, %v6061
      %v6063 = vpop.f32.mrf.mxu0
      %v6064 = vpop.f32.mrf.mxu0
      %v6065 = vpop.f32.mrf.mxu0
      %6066 = vdwg.mxu0
      %v6067 = vpack.c.bf16 %v5836, %v5836
      %v6068 = vpack.c.bf16 %v5949, %v5949
      %v6070 = vsel %vm2458, %v6067, 0
      %v6073 = vsel %vm2458, %v6068, 0
      %6075 = vmatprep.subr.bf16.mxu0 0
      %6076 = vmatpush1.bf16.xpose.msra.mxu0 0
      %6077 = vmatprep.subr.bf16.mxu0 0
      %6078 = vmatpush1.bf16.xpose.msra.mxu0 0
      %6079 = vmatprep.subr.bf16.mxu0 0
      %6080 = vmatpush1.bf16.xpose.msra.mxu0 0
      %6081 = vmatprep.subr.bf16.mxu0 0
      %6082 = vmatpush1.bf16.xpose.msra.mxu0 0
      %6083 = vmatprep.subr.bf16.mxu0 0
      %6084 = vmatpush1.bf16.xpose.msra.mxu0 0
      %6085 = vmatprep.subr.bf16.mxu0 0
      %6086 = vmatpush1.bf16.xpose.msra.mxu0 0
      %6087 = vmatprep.subr.bf16.mxu0 0
      %6088 = vmatpush1.bf16.xpose.msra.mxu0 0
      %6089 = vmatprep.subr.bf16.mxu0 0
      %6090 = vmatpush1.bf16.xpose.msra.mxu0 %v6073
      %6091 = vmatprep.subr.bf16.mxu0 0
      %6092 = vmatpush2.bf16.xpose.msra.mxu0 0
      %6093 = vmatprep.subr.bf16.mxu0 0
      %6094 = vmatpush2.bf16.xpose.msra.mxu0 0
      %6095 = vmatprep.subr.bf16.mxu0 0
      %6096 = vmatpush2.bf16.xpose.msra.mxu0 0
      %6097 = vmatprep.subr.bf16.mxu0 0
      %6098 = vmatpush2.bf16.xpose.msra.mxu0 0
      %6099 = vmatprep.subr.bf16.mxu0 0
      %6100 = vmatpush2.bf16.xpose.msra.mxu0 0
      %6101 = vmatprep.subr.bf16.mxu0 0
      %6102 = vmatpush2.bf16.xpose.msra.mxu0 0
      %6103 = vmatprep.subr.bf16.mxu0 0
      %6104 = vmatpush2.bf16.xpose.msra.mxu0 0
      %6105 = vmatprep.subr.bf16.mxu0 0
      %6106 = vmatpush2.bf16.xpose.msra.mxu0 0
      %6107 = vmatprep.mubr.bf16.mxu0 0
      %6108 = vmatmul.mubr.bf16.gmra.mxu0 %v6070
      %v6109 = vpop.f32.mrf.mxu0
      %v6110 = vadd.f32 0.0, %v6109
      %v6111 = vpop.f32.mrf.mxu0
      %v6112 = vpop.f32.mrf.mxu0
      %v6113 = vpop.f32.mrf.mxu0
      %6114 = vdwg.mxu0
      %v6115 = vsel %vm1479, %v6110, -inf
      %6116 = vmax.xlane.f32.xlu0 %v6115
      %v6117 = vpop.xlane.xlu0 %6116
      %v6118 = vsub.f32 %v6110, %v6117
      %v6119 = vmul.f32 %v6118, 1.442695
      %v6120 = vpow.pop %v6119
      %v6121 = vsel %vm1479, %v6120, 0.0
      %6122 = vadd.xlane.f32.xlu0 %v6121
      %v6123 = vpop.xlane.xlu0 %6122
      %v6124 = vrcp.pop %v6123
      %v6125 = vmul.f32 %v6120, %v6124
      %v6126 = vpack.c.bf16 %v6125, %v6125
      %v6127 = vpack.c.bf16 %v6062, %v6062
      %v6129 = vsel %vm1479, %v6126, 0
      %v6132 = vsel %vm5675, %v6127, 0
      %6134 = vmatprep.subr.bf16.mxu0 0
      %6135 = vmatpush1.bf16.msra.mxu0 0
      %6136 = vmatprep.subr.bf16.mxu0 0
      %6137 = vmatpush1.bf16.msra.mxu0 0
      %6138 = vmatprep.subr.bf16.mxu0 0
      %6139 = vmatpush1.bf16.msra.mxu0 0
      %6140 = vmatprep.subr.bf16.mxu0 0
      %6141 = vmatpush1.bf16.msra.mxu0 0
      %6142 = vmatprep.subr.bf16.mxu0 0
      %6143 = vmatpush1.bf16.msra.mxu0 0
      %6144 = vmatprep.subr.bf16.mxu0 0
      %6145 = vmatpush1.bf16.msra.mxu0 0
      %6146 = vmatprep.subr.bf16.mxu0 0
      %6147 = vmatpush1.bf16.msra.mxu0 0
      %6148 = vmatprep.subr.bf16.mxu0 0
      %6149 = vmatpush1.bf16.msra.mxu0 %v6132
      %6150 = vmatprep.subr.bf16.mxu0 0
      %6151 = vmatpush2.bf16.msra.mxu0 0
      %6152 = vmatprep.subr.bf16.mxu0 0
      %6153 = vmatpush2.bf16.msra.mxu0 0
      %6154 = vmatprep.subr.bf16.mxu0 0
      %6155 = vmatpush2.bf16.msra.mxu0 0
      %6156 = vmatprep.subr.bf16.mxu0 0
      %6157 = vmatpush2.bf16.msra.mxu0 0
      %6158 = vmatprep.subr.bf16.mxu0 0
      %6159 = vmatpush2.bf16.msra.mxu0 0
      %6160 = vmatprep.subr.bf16.mxu0 0
      %6161 = vmatpush2.bf16.msra.mxu0 0
      %6162 = vmatprep.subr.bf16.mxu0 0
      %6163 = vmatpush2.bf16.msra.mxu0 0
      %6164 = vmatprep.subr.bf16.mxu0 0
      %6165 = vmatpush2.bf16.msra.mxu0 0
      %6166 = vmatprep.mubr.bf16.mxu0 0
      %6167 = vmatmul.mubr.bf16.gmra.mxu0 %v6129
      %v6168 = vpop.f32.mrf.mxu0
      %v6169 = vadd.f32 0.0, %v6168
      %v6170 = vpop.f32.mrf.mxu0
      %v6171 = vpop.f32.mrf.mxu0
      %v6172 = vpop.f32.mrf.mxu0
      %6173 = vdwg.mxu0
      %v6174 = vpack.c.bf16 %v6169, %v6169
      %s6175 = scalar_lea.vmem %s63, 32
      %v6176 = vld [vmem:[%s6175] sm:$0xf]
      %v6177 = vld [vmem:[%s6175 + $0x4] sm:$0xf]
      %v6178 = vld [vmem:[%s6175 + $0x8] sm:$0xf]
      %v6179 = vld [vmem:[%s6175 + $0xc] sm:$0xf]
      %v6180 = vld [vmem:[%s6175 + $0x10] sm:$0xf]
      %v6181 = vld [vmem:[%s6175 + $0x14] sm:$0xf]
      %v6182 = vld [vmem:[%s6175 + $0x18] sm:$0xf]
      %v6183 = vld [vmem:[%s6175 + $0x1c] sm:$0xf]
      %v6192 = vunpack.c.l.b16 %v6176
      %v6193 = vunpack.c.l.b16 %v6177
      %v6194 = vunpack.c.l.b16 %v6178
      %v6195 = vunpack.c.l.b16 %v6179
      %v6196 = vunpack.c.l.b16 %v6180
      %v6197 = vunpack.c.l.b16 %v6181
      %v6198 = vunpack.c.l.b16 %v6182
      %v6199 = vunpack.c.l.b16 %v6183
      %v6200 = vpack.c.b16 %v6193, %v6192
      %v6201 = vpack.c.b16 %v6195, %v6194
      %v6202 = vpack.c.b16 %v6197, %v6196
      %v6203 = vpack.c.b16 %v6199, %v6198
      %v6209 = vsel %vm2458, %v6174, 0
      %6211 = vmatprep.subr.bf16.mxu0 0
      %6212 = vmatpush1.bf16.msra.mxu0 0
      %6213 = vmatprep.subr.bf16.mxu0 0
      %6214 = vmatpush1.bf16.msra.mxu0 0
      %6215 = vmatprep.subr.bf16.mxu0 0
      %6216 = vmatpush1.bf16.msra.mxu0 0
      %6217 = vmatprep.subr.bf16.mxu0 0
      %6218 = vmatpush1.bf16.msra.mxu0 0
      %6219 = vmatprep.subr.bf16.mxu0 0
      %6220 = vmatpush1.bf16.msra.mxu0 %v6203
      %6221 = vmatprep.subr.bf16.mxu0 0
      %6222 = vmatpush1.bf16.msra.mxu0 %v6202
      %6223 = vmatprep.subr.bf16.mxu0 0
      %6224 = vmatpush1.bf16.msra.mxu0 %v6201
      %6225 = vmatprep.subr.bf16.mxu0 0
      %6226 = vmatpush1.bf16.msra.mxu0 %v6200
      %6227 = vmatprep.subr.bf16.mxu0 0
      %6228 = vmatpush2.bf16.msra.mxu0 0
      %6229 = vmatprep.subr.bf16.mxu0 0
      %6230 = vmatpush2.bf16.msra.mxu0 0
      %6231 = vmatprep.subr.bf16.mxu0 0
      %6232 = vmatpush2.bf16.msra.mxu0 0
      %6233 = vmatprep.subr.bf16.mxu0 0
      %6234 = vmatpush2.bf16.msra.mxu0 0
      %6235 = vmatprep.subr.bf16.mxu0 0
      %6236 = vmatpush2.bf16.msra.mxu0 0
      %6237 = vmatprep.subr.bf16.mxu0 0
      %6238 = vmatpush2.bf16.msra.mxu0 0
      %6239 = vmatprep.subr.bf16.mxu0 0
      %6240 = vmatpush2.bf16.msra.mxu0 0
      %6241 = vmatprep.subr.bf16.mxu0 0
      %6242 = vmatpush2.bf16.msra.mxu0 0
      %6243 = vmatprep.mubr.bf16.mxu0 0
      %6244 = vmatmul.mubr.bf16.gmra.mxu0 %v6209
      %v6245 = vpop.f32.mrf.mxu0
      %v6246 = vadd.f32 0.0, %v6245
      %v6247 = vpop.f32.mrf.mxu0
      %v6248 = vpop.f32.mrf.mxu0
      %v6249 = vpop.f32.mrf.mxu0
      %6250 = vdwg.mxu0
      %v6259 = vunpack.c.l.b16 %v5720
      %v6260 = vunpack.c.l.b16 %v5721
      %v6261 = vunpack.c.l.b16 %v5722
      %v6262 = vunpack.c.l.b16 %v5723
      %v6263 = vunpack.c.l.b16 %v5724
      %v6264 = vunpack.c.l.b16 %v5725
      %v6265 = vunpack.c.l.b16 %v5726
      %v6266 = vunpack.c.l.b16 %v5727
      %v6267 = vpack.c.b16 %v6260, %v6259
      %v6268 = vpack.c.b16 %v6262, %v6261
      %v6269 = vpack.c.b16 %v6264, %v6263
      %v6270 = vpack.c.b16 %v6266, %v6265
      %v6276 = vsel %vm2458, %v5719, 0
      %6278 = vmatprep.subr.bf16.mxu0 0
      %6279 = vmatpush1.bf16.msra.mxu0 0
      %6280 = vmatprep.subr.bf16.mxu0 0
      %6281 = vmatpush1.bf16.msra.mxu0 0
      %6282 = vmatprep.subr.bf16.mxu0 0
      %6283 = vmatpush1.bf16.msra.mxu0 0
      %6284 = vmatprep.subr.bf16.mxu0 0
      %6285 = vmatpush1.bf16.msra.mxu0 0
      %6286 = vmatprep.subr.bf16.mxu0 0
      %6287 = vmatpush1.bf16.msra.mxu0 %v6270
      %6288 = vmatprep.subr.bf16.mxu0 0
      %6289 = vmatpush1.bf16.msra.mxu0 %v6269
      %6290 = vmatprep.subr.bf16.mxu0 0
      %6291 = vmatpush1.bf16.msra.mxu0 %v6268
      %6292 = vmatprep.subr.bf16.mxu0 0
      %6293 = vmatpush1.bf16.msra.mxu0 %v6267
      %6294 = vmatprep.subr.bf16.mxu0 0
      %6295 = vmatpush2.bf16.msra.mxu0 0
      %6296 = vmatprep.subr.bf16.mxu0 0
      %6297 = vmatpush2.bf16.msra.mxu0 0
      %6298 = vmatprep.subr.bf16.mxu0 0
      %6299 = vmatpush2.bf16.msra.mxu0 0
      %6300 = vmatprep.subr.bf16.mxu0 0
      %6301 = vmatpush2.bf16.msra.mxu0 0
      %6302 = vmatprep.subr.bf16.mxu0 0
      %6303 = vmatpush2.bf16.msra.mxu0 0
      %6304 = vmatprep.subr.bf16.mxu0 0
      %6305 = vmatpush2.bf16.msra.mxu0 0
      %6306 = vmatprep.subr.bf16.mxu0 0
      %6307 = vmatpush2.bf16.msra.mxu0 0
      %6308 = vmatprep.subr.bf16.mxu0 0
      %6309 = vmatpush2.bf16.msra.mxu0 0
      %6310 = vmatprep.mubr.bf16.mxu0 0
      %6311 = vmatmul.mubr.bf16.gmra.mxu0 %v6276
      %v6312 = vpop.f32.mrf.mxu0
      %v6313 = vadd.f32 %v6246, %v6312
      %v6314 = vpop.f32.mrf.mxu0
      %v6315 = vpop.f32.mrf.mxu0
      %v6316 = vpop.f32.mrf.mxu0
      %6317 = vdwg.mxu0
      %v6318 = vld [vmem:[%s65] sm:$0x1]
      %v6320 = vlaneseq
      %v6321 = vshrl.u32 %v6320, 7
      %v6322 = vsub.s32 0, %v6321
      %v6323 = vrot.slane %v6318, %v6322
      %v6325 = vadd.f32 %v6313, %v6323
      %v6326 = vadd.f32 %v6325, %v5272
      %6327 = vadd.xlane.f32.xlu0 %v6326
      %v6328 = vpop.xlane.xlu0 %6327
      %v6329 = vmul.f32 %v6328, %v2096
      %v6330 = vsub.f32 %v6326, %v6329
      %v6331 = vmul.f32 %v6330, %v6330
      %6332 = vadd.xlane.f32.xlu0 %v6331
      %v6333 = vpop.xlane.xlu0 %6332
      %v6334 = vmul.f32 %v6333, %v2096
      %v6335 = vadd.f32 %v6334, 1e-05
      %v6336 = vrsqrt.pop %v6335
      %v6337 = vmul.f32 %v6330, %v6336
      %6338 = vst [vmem:[%s1063] sm:$0xff] %v6337
      %p6339 = scmp.lt.s32.totalorder %s78, 1
      %s6340 = scalar_select %p6339, %s78, 1
      %s6341 = smul.addr %s6340, 8
      %s6342 = scalar_lea.vmem %s67, %s6341
      // Predicated region
      $region153: #{denoiser_forward.1} parent=151 // pred_check
        %p6343 = pneg %p809
      $region154: #{denoiser_forward.1} parent=151 // pred_check_branch
        %6345 = sbr.rel (%p6343) target = $region156
      $region155: #{denoiser_forward.1} parent=151 // pred_region
        _
      $region156: #{denoiser_forward.1} parent=151 // pred_fallthru
        _
    $region152: #{denoiser_forward.1} parent=5 // pred_fallthru
      _
    %p6346 = scmp.le.s32.totalorder 2, %s73
    // Predicated region
    $region157: #{denoiser_forward.1} parent=5 // pred_check
      %p6347 = pneg %p6346
    $region158: #{denoiser_forward.1} parent=5 // pred_check_branch
      %6349 = sbr.rel (%p6347) target = $region160
    $region159: #{denoiser_forward.1} parent=5 // pred_region
      %s6350 = ssub.s32 %s73, 2
      // Predicated region
      $region161: #{denoiser_forward.1} parent=159 // pred_check
        %p6351 = pneg %p815
      $region162: #{denoiser_forward.1} parent=159 // pred_check_branch
        %6353 = sbr.rel (%p6351) target = $region164
      $region163: #{denoiser_forward.1} parent=159 // pred_region
        %p6354 = scmp.lt.s32.totalorder %s79, 1
        %s6355 = scalar_select %p6354, %s79, 1
        %s6356 = smul.addr %s6355, 8
        %s6357 = scalar_lea.vmem %s67, %s6356
      $region164: #{denoiser_forward.1} parent=159 // pred_fallthru
        _
    $region160: #{denoiser_forward.1} parent=5 // pred_fallthru
      _
  $region6: #{denoiser_forward.1} parent=0 // loop_footer
    %s77 = sadd.s32 1, %s73
  $region7: #{denoiser_forward.1} parent=0 // loop_footer_branch
    %72 = sbr.rel target = $region3
  $region8: #{denoiser_forward.1} parent=0 // loop_exit
    _

</llo_original>
